<compile_context>
chip_gen: v5e
topology: v5e:2x2
jax: 0.10.0
libtpu: 0.0.40
codegen_flags: <defaults>
</compile_context>

<pallas_src>
import functools
import math

import numpy as np
import jax
import jax.numpy as jnp
from jax import lax
from jax.experimental import pallas as pl
from jax.experimental.pallas import tpu as pltpu

F32 = jnp.float32


# ----------------------------------------------------------------------------
# in-kernel helpers
# ----------------------------------------------------------------------------
def _ln(x, g, b, eps=1e-5):
    m = jnp.mean(x, axis=-1, keepdims=True)
    v = jnp.mean(jnp.square(x - m), axis=-1, keepdims=True)
    return (x - m) * lax.rsqrt(v + eps) * g + b


def _conv1d_same(y, w_flat, b_row, K, pad, T):
    """'same' 1D conv over time (channels-last) as ONE im2col matmul.

    y      : (T, Cin) value
    w_flat : (K*Cin, Cout) tap-major flattened weight (trace-time reshape of torch (Cout,Cin,K))
    b_row  : (1, Cout)
    Taps are built with pltpu.roll (XLU) + edge-row masking; a single MXU matmul per conv.
    """
    if K == 1:
        return jnp.dot(y, w_flat, preferred_element_type=F32) + b_row
    rows = lax.broadcasted_iota(jnp.int32, (T, 1), 0)
    taps = []
    for k in range(K):
        s = pad - k                          # output row t reads y[t - s]
        if s == 0:
            t = y
        else:
            t = pltpu.roll(y, s % T, axis=0)
            if s > 0:
                t = jnp.where(rows >= s, t, 0.0)
            else:
                t = jnp.where(rows < T + s, t, 0.0)
        taps.append(t)
    col = jnp.concatenate(taps, axis=1)      # (T, K*Cin)
    return jnp.dot(col, w_flat, preferred_element_type=F32) + b_row


def _seq_masks(seq_len, T):
    rows = lax.broadcasted_iota(jnp.int32, (T, 1), 0)
    cols = lax.broadcasted_iota(jnp.int32, (1, T), 1)
    keep = (rows < seq_len).astype(F32)              # (T,1)  1.0 = real frame
    kbias = jnp.where(cols < seq_len, 0.0, -1e9)     # (1,T)  additive key mask
    return keep, kbias


def _fft_layer(x, keep, kbias, wqkv, bqkv, wfc, bfc, g1, b1, wc1, bc1, wc2, bc2, g2, b2,
               *, n_head, d_k, T, K1, P1, K2, P2):
    """One FFT block: MHA (masked softmax) + conv-FFN, residuals, LayerNorms, pad mask."""
    D = n_head * d_k
    scale = 1.0 / math.sqrt(d_k)
    qkv = jnp.dot(x, wqkv, preferred_element_type=F32) + bqkv          # (T, 3D)
    heads = []
    for h in range(n_head):                                            # static unroll
        c = h * d_k
        q = qkv[:, c:c + d_k]
        k = qkv[:, D + c:D + c + d_k]
        v = qkv[:, 2 * D + c:2 * D + c + d_k]
        s = lax.dot_general(q, k, (((1,), (1,)), ((), ())),
                            preferred_element_type=F32) * scale + kbias
        s = s - jnp.max(s, axis=-1, keepdims=True)
        p = jnp.exp(s)
        p = p * pl.reciprocal(jnp.sum(p, axis=-1, keepdims=True), approx=True)
        heads.append(jnp.dot(p, v, preferred_element_type=F32))
    attn = jnp.concatenate(heads, axis=1)                              # (T, D)
    attn = jnp.dot(attn, wfc, preferred_element_type=F32) + bfc
    y = _ln(attn + x, g1, b1) * keep
    z = jnp.maximum(_conv1d_same(y, wc1, bc1, K1, P1, T), 0.0)
    z = _conv1d_same(z, wc2, bc2, K2, P2, T)
    return _ln(z + y, g2, b2) * keep


# param slab rows per FFT layer:
#   0 bqkv(3D) 1 bfc(H) 2 ln1_g(H) 3 ln1_b(H) 4 bconv1(Cf) 5 bconv2(H) 6 ln2_g(H) 7 ln2_b(H)
def _fft_layer_from_refs(x, keep, kbias, l, wqkv_ref, wfc_ref, wc1_ref, wc2_ref, vecs_ref,
                         *, H, D, Cf, n_head, d_k, T, K1, P1, K2, P2):
    vec = vecs_ref[l]
    return _fft_layer(
        x, keep, kbias,
        wqkv_ref[l], vec[0:1, :3 * D],
        wfc_ref[l], vec[1:2, :H],
        vec[2:3, :H], vec[3:4, :H],
        wc1_ref[l], vec[4:5, :Cf],
        wc2_ref[l], vec[5:6, :H],
        vec[6:7, :H], vec[7:8, :H],
        n_head=n_head, d_k=d_k, T=T, K1=K1, P1=P1, K2=K2, P2=P2)


# ----------------------------------------------------------------------------
# fused kernels
# ----------------------------------------------------------------------------
def _encoder_stack_kernel(lens_ref, x_ref, spk_ref, wqkv_ref, wfc_ref, wc1_ref, wc2_ref,
                          vecs_ref, wph_ref, bph_ref, ox_ref, oph_ref,
                          *, L, T, H, D, Cf, n_head, d_k, K1, P1, K2, P2):
    b = pl.program_id(0)
    keep, kbias = _seq_masks(lens_ref[b], T)
    x = x_ref[0]
    for l in range(L):                                                  # all layers fused
        x = _fft_layer_from_refs(x, keep, kbias, l, wqkv_ref, wfc_ref, wc1_ref, wc2_ref,
                                 vecs_ref, H=H, D=D, Cf=Cf, n_head=n_head, d_k=d_k,
                                 T=T, K1=K1, P1=P1, K2=K2, P2=P2)
    x = x + spk_ref[0]                          # speaker embedding broadcast over time
    ox_ref[0] = x
    # phonetize head, 128-lane-dense slab (padded weight columns)
    oph_ref[0] = jnp.dot(x, wph_ref[...], preferred_element_type=F32) + bph_ref[...]


def _decoder_stack_kernel(lens_ref, x_ref, wqkv_ref, wfc_ref, wc1_ref, wc2_ref, vecs_ref,
                          wmel_ref, bmel_ref, pw_ref, pb_ref, omel_ref, opost_ref,
                          *, L, T, H, D, Cf, n_head, d_k, K1, P1, K2, P2,
                          KP, PP, n_post, CPIN):
    b = pl.program_id(0)
    keep, kbias = _seq_masks(lens_ref[b], T)
    x = x_ref[0]
    for l in range(L):
        x = _fft_layer_from_refs(x, keep, kbias, l, wqkv_ref, wfc_ref, wc1_ref, wc2_ref,
                                 vecs_ref, H=H, D=D, Cf=Cf, n_head=n_head, d_k=d_k,
                                 T=T, K1=K1, P1=P1, K2=K2, P2=P2)
    # mel head: 128-lane-dense slab; lanes >= n_mel are exactly zero (padded weight/bias)
    mel = jnp.dot(x, wmel_ref[...], preferred_element_type=F32) + bmel_ref[...]   # (T,128)
    omel_ref[0] = mel
    # postnet: n_post convs with eval-BatchNorm folded into the weights, tanh on all
    # but the last, residual added in-kernel.
    y = mel[:, :CPIN]                            # lanes [n_mel, CPIN) already zero
    z = y
    for i in range(n_post):
        z = _conv1d_same(y, pw_ref[i], pb_ref[i], KP, PP, T)            # (T, 128)
        if i < n_post - 1:
            z = jnp.tanh(z)
            y = z[:, :CPIN]
    opost_ref[0] = z + mel                       # postnet_output = postnet(mel) + mel


# param slab rows per variance predictor:
#   0 bconv1(F) 1 ln1_g(F) 2 ln1_b(F) 3 bconv2(F) 4 ln2_g(F) 5 ln2_b(F) 6 w_lin(F) 7 b_lin(lane0)
def _variance_adaptor_kernel(lens_ref, x_ref, wc1_ref, wc2_ref, vecs_ref,
                             pbins_ref, pemb_ref, ebins_ref, eemb_ref,
                             ox_ref, op_ref,
                             *, T, F, K, P, NB, p_control, e_control):
    b = pl.program_id(0)
    rows = lax.broadcasted_iota(jnp.int32, (T, 1), 0)
    keep = (rows < lens_ref[b]).astype(F32)
    x = x_ref[0]

    def predictor(xin, i):
        vec = vecs_ref[i]
        z = _conv1d_same(xin, wc1_ref[i], vec[0:1, :F], K, P, T)
        z = _ln(jnp.maximum(z, 0.0), vec[1:2, :F], vec[2:3, :F])
        z = _conv1d_same(z, wc2_ref[i], vec[3:4, :F], K, P, T)
        z = _ln(jnp.maximum(z, 0.0), vec[4:5, :F], vec[5:6, :F])
        pred = jnp.sum(z * vec[6:7, :F], axis=1, keepdims=True) + vec[7:8, 0:1]
        return pred * keep                       # masked_fill(mask, 0)

    def embed(pred, bins_ref, emb_ref):
        # torch.bucketize (right=False): index = #boundaries strictly below the value
        idx = jnp.sum((pred > bins_ref[0:1, :NB - 1]).astype(jnp.int32),
                      axis=1, keepdims=True)                             # (T, 1)
        lanes = lax.broadcasted_iota(jnp.int32, (1, NB), 1)
        onehot = (idx == lanes).astype(F32)                              # (T, NB)
        return jnp.dot(onehot, emb_ref[...], preferred_element_type=F32)  # (T, H)

    log_d = predictor(x, 0)
    # TODO(synk): this fork uses additive pitch/energy controls (defaults 0.0);
    # upstream FastSpeech2 multiplies instead.
    p_pred = predictor(x, 1) + p_control
    x = x + embed(p_pred, pbins_ref, pemb_ref)
    e_pred = predictor(x, 2) + e_control
    x = x + embed(e_pred, ebins_ref, eemb_ref)

    ox_ref[0] = x
    # 128-lane-dense prediction slab: lane 0 = log_d, 1 = pitch, 2 = energy
    lanes128 = lax.broadcasted_iota(jnp.int32, (1, 128), 1)
    op_ref[0] = (log_d * (lanes128 == 0).astype(F32)
                 + p_pred * (lanes128 == 1).astype(F32)
                 + e_pred * (lanes128 == 2).astype(F32))


# ----------------------------------------------------------------------------
# trace-time weight packing + pallas_call wrappers
# ----------------------------------------------------------------------------
def _full(shape):
    zeros = (0,) * len(shape)
    return pl.BlockSpec(shape, lambda b, lens: zeros)


def _pack_rows(vectors, width):
    rows = []
    for v in vectors:
        v = jnp.asarray(v, F32).reshape(-1)
        rows.append(jnp.pad(v, (0, width - v.shape[0])))
    return jnp.stack(rows)                       # (n_rows, width)


def _fft_stack_inputs(layers, H, n_head, d_k):
    D = n_head * d_k
    Cf, _, K1 = layers[0]["conv1"]["w"].shape
    _, _, K2 = layers[0]["conv2"]["w"].shape
    VW = max(128, -(-max(3 * D, H, Cf) // 128) * 128)
    wqkv, wfc, wc1, wc2, vecs = [], [], [], [], []
    for lp in layers:
        wqkv.append(jnp.concatenate([lp["wq"]["w"], lp["wk"]["w"], lp["wv"]["w"]], axis=1))
        wfc.append(lp["fc"]["w"])
        wc1.append(jnp.transpose(lp["conv1"]["w"], (2, 1, 0)).reshape(K1 * H, Cf))
        wc2.append(jnp.transpose(lp["conv2"]["w"], (2, 1, 0)).reshape(K2 * Cf, H))
        vecs.append(_pack_rows(
            [jnp.concatenate([lp["wq"]["b"], lp["wk"]["b"], lp["wv"]["b"]]),
             lp["fc"]["b"], lp["ln_attn"]["g"], lp["ln_attn"]["b"],
             lp["conv1"]["b"], lp["conv2"]["b"], lp["ln_ffn"]["g"], lp["ln_ffn"]["b"]], VW))
    stacks = (jnp.stack(wqkv), jnp.stack(wfc), jnp.stack(wc1), jnp.stack(wc2),
              jnp.stack(vecs))
    dims = dict(L=len(layers), H=H, D=D, Cf=Cf, n_head=n_head, d_k=d_k,
                K1=K1, P1=(K1 - 1) // 2, K2=K2, P2=(K2 - 1) // 2)
    return stacks, dims


def encoder_stack_pallas(x, spk, src_lens, layers, phon_w, phon_b, cfg):
    B, T, H = x.shape
    (wqkv, wfc, wc1, wc2, vecs), d = _fft_stack_inputs(layers, H, cfg["n_head"], cfg["d_k"])
    n_out = phon_w.shape[1]
    NP = max(128, -(-n_out // 128) * 128)
    wph = jnp.pad(phon_w.astype(F32), ((0, 0), (0, NP - n_out)))
    bph = jnp.pad(phon_b.astype(F32), (0, NP - n_out))[None, :]
    kernel = functools.partial(_encoder_stack_kernel, T=T, **d)
    x_out, phon = pl.pallas_call(
        kernel,
        out_shape=[jax.ShapeDtypeStruct((B, T, H), F32),
                   jax.ShapeDtypeStruct((B, T, NP), F32)],
        grid_spec=pltpu.PrefetchScalarGridSpec(
            num_scalar_prefetch=1,
            grid=(B,),
            in_specs=[pl.BlockSpec((1, T, H), lambda b, lens: (b, 0, 0)),
                      pl.BlockSpec((1, 1, H), lambda b, lens: (b, 0, 0)),
                      _full(wqkv.shape), _full(wfc.shape),
                      _full(wc1.shape), _full(wc2.shape), _full(vecs.shape),
                      _full(wph.shape), _full(bph.shape)],
            out_specs=[pl.BlockSpec((1, T, H), lambda b, lens: (b, 0, 0)),
                       pl.BlockSpec((1, T, NP), lambda b, lens: (b, 0, 0))]),
        compiler_params=pltpu.CompilerParams(dimension_semantics=("parallel",)),
    )(src_lens.astype(jnp.int32), x.astype(F32), spk.astype(F32),
      wqkv, wfc, wc1, wc2, vecs, wph, bph)
    return x_out, phon[:, :, :n_out]


def _postnet_stack_inputs(postnet):
    convs = postnet["convs"]
    n = len(convs)
    K = convs[0]["w"].shape[2]
    cin_max = max(c["w"].shape[1] for c in convs)
    COUT = 128
    pws, pbs = [], []
    for c in convs:
        cout, cin, _ = c["w"].shape
        scale = c["bn_g"] * lax.rsqrt(c["bn_var"] + 1e-5)     # fold eval BatchNorm1d
        w = c["w"] * scale[:, None, None]
        bias = (c["b"] - c["bn_mean"]) * scale + c["bn_b"]
        wt = jnp.transpose(w, (2, 1, 0))                       # (K, Cin, Cout)
        wt = jnp.pad(wt, ((0, 0), (0, cin_max - cin), (0, COUT - cout)))
        pws.append(wt.reshape(K * cin_max, COUT))
        pbs.append(jnp.pad(bias, (0, COUT - cout))[None, :])
    return jnp.stack(pws), jnp.stack(pbs), dict(KP=K, PP=(K - 1) // 2,
                                                n_post=n, CPIN=cin_max)


def decoder_stack_pallas(x, mel_lens, layers, mel_w, mel_b, postnet, cfg):
    B, T, H = x.shape
    (wqkv, wfc, wc1, wc2, vecs), d = _fft_stack_inputs(layers, H, cfg["n_head"], cfg["d_k"])
    n_mel = mel_w.shape[1]
    NM = 128
    wmel = jnp.pad(mel_w.astype(F32), ((0, 0), (0, NM - n_mel)))
    bmel = jnp.pad(mel_b.astype(F32), (0, NM - n_mel))[None, :]
    pw, pb, pdim = _postnet_stack_inputs(postnet)
    kernel = functools.partial(_decoder_stack_kernel, T=T, **d, **pdim)
    mel, post = pl.pallas_call(
        kernel,
        out_shape=[jax.ShapeDtypeStruct((B, T, NM), F32),
                   jax.ShapeDtypeStruct((B, T, NM), F32)],
        grid_spec=pltpu.PrefetchScalarGridSpec(
            num_scalar_prefetch=1,
            grid=(B,),
            in_specs=[pl.BlockSpec((1, T, H), lambda b, lens: (b, 0, 0)),
                      _full(wqkv.shape), _full(wfc.shape),
                      _full(wc1.shape), _full(wc2.shape), _full(vecs.shape),
                      _full(wmel.shape), _full(bmel.shape),
                      _full(pw.shape), _full(pb.shape)],
            out_specs=[pl.BlockSpec((1, T, NM), lambda b, lens: (b, 0, 0)),
                       pl.BlockSpec((1, T, NM), lambda b, lens: (b, 0, 0))]),
        compiler_params=pltpu.CompilerParams(dimension_semantics=("parallel",)),
    )(mel_lens.astype(jnp.int32), x.astype(F32),
      wqkv, wfc, wc1, wc2, vecs, wmel, bmel, pw, pb)
    return mel[:, :, :n_mel], post[:, :, :n_mel]


def variance_adaptor_pallas(x, src_lens, va, cfg, p_control, e_control):
    B, T, H = x.shape
    Fdim = cfg["vp_filter"]
    K = cfg["vp_kernel"]
    NB = va["pitch_emb"].shape[0]
    wc1s, wc2s, vecs = [], [], []
    for nm in ("duration_predictor", "pitch_predictor", "energy_predictor"):
        p = va[nm]
        wc1s.append(jnp.transpose(p["conv1"]["w"], (2, 1, 0)).reshape(K * H, Fdim))
        wc2s.append(jnp.transpose(p["conv2"]["w"], (2, 1, 0)).reshape(K * Fdim, Fdim))
        vecs.append(_pack_rows(
            [p["conv1"]["b"], p["ln1"]["g"], p["ln1"]["b"],
             p["conv2"]["b"], p["ln2"]["g"], p["ln2"]["b"],
             p["lin"]["w"][:, 0], p["lin"]["b"]], 128))
    wc1s, wc2s, vecs = jnp.stack(wc1s), jnp.stack(wc2s), jnp.stack(vecs)
    pbins = jnp.pad(va["pitch_bins"].astype(F32), (0, 1))[None, :]      # (1, NB)
    ebins = jnp.pad(va["energy_bins"].astype(F32), (0, 1))[None, :]
    pemb = va["pitch_emb"].astype(F32)
    eemb = va["energy_emb"].astype(F32)
    kernel = functools.partial(_variance_adaptor_kernel, T=T, F=Fdim, K=K,
                               P=(K - 1) // 2, NB=NB,
                               p_control=float(p_control), e_control=float(e_control))
    x_out, preds = pl.pallas_call(
        kernel,
        out_shape=[jax.ShapeDtypeStruct((B, T, H), F32),
                   jax.ShapeDtypeStruct((B, T, 128), F32)],
        grid_spec=pltpu.PrefetchScalarGridSpec(
            num_scalar_prefetch=1,
            grid=(B,),
            in_specs=[pl.BlockSpec((1, T, H), lambda b, lens: (b, 0, 0)),
                      _full(wc1s.shape), _full(wc2s.shape), _full(vecs.shape),
                      _full(pbins.shape), _full(pemb.shape),
                      _full(ebins.shape), _full(eemb.shape)],
            out_specs=[pl.BlockSpec((1, T, H), lambda b, lens: (b, 0, 0)),
                       pl.BlockSpec((1, T, 128), lambda b, lens: (b, 0, 0))]),
        compiler_params=pltpu.CompilerParams(dimension_semantics=("parallel",)),
    )(src_lens.astype(jnp.int32), x.astype(F32),
      wc1s, wc2s, vecs, pbins, pemb, ebins, eemb)
    return x_out, preds[:, :, 0], preds[:, :, 1], preds[:, :, 2]


# ----------------------------------------------------------------------------
# synthetic parameter init (deterministic)
# ----------------------------------------------------------------------------
def _dense(key, k_in, k_out):
    kw, kb = jax.random.split(key)
    lim = 1.0 / math.sqrt(k_in)
    return {"w": jax.random.uniform(kw, (k_in, k_out), F32, -lim, lim),
            "b": jax.random.uniform(kb, (k_out,), F32, -lim, lim)}


def _conv1d_params(key, c_in, c_out, k):
    kw, kb = jax.random.split(key)
    lim = 1.0 / math.sqrt(c_in * k)
    return {"w": jax.random.uniform(kw, (c_out, c_in, k), F32, -lim, lim),
            "b": jax.random.uniform(kb, (c_out,), F32, -lim, lim)}


def _layernorm_params(h):
    return {"g": jnp.ones((h,), F32), "b": jnp.zeros((h,), F32)}


def _fft_block_params(key, d_model, n_head, d_k, d_conv, kernel):
    ks = jax.random.split(key, 6)
    return {"wq": _dense(ks[0], d_model, n_head * d_k),
            "wk": _dense(ks[1], d_model, n_head * d_k),
            "wv": _dense(ks[2], d_model, n_head * d_k),
            "fc": _dense(ks[3], n_head * d_k, d_model),
            "ln_attn": _layernorm_params(d_model),
            "conv1": _conv1d_params(ks[4], d_model, d_conv, kernel[0]),
            "conv2": _conv1d_params(ks[5], d_conv, d_model, kernel[1]),
            "ln_ffn": _layernorm_params(d_model)}


def sinusoid_table(n_pos, d_hid):
    pos = np.arange(n_pos)[:, None].astype(np.float64)
    i = np.arange(d_hid)[None, :]
    angle = pos / np.power(10000.0, 2 * (i // 2) / d_hid)
    table = np.zeros((n_pos, d_hid))
    table[:, 0::2] = np.sin(angle[:, 0::2])
    table[:, 1::2] = np.cos(angle[:, 1::2])
    return jnp.asarray(table, F32)


CFG = dict(
    vocab=20, n_hidden=32, n_head=2, d_k=16,
    enc_layers=2, dec_layers=2, conv_filter=64, ffn_kernel=(3, 1),
    vp_filter=32, vp_kernel=3, n_bins=8,
    n_mel=16, postnet_ch=32, postnet_layers=5, postnet_kernel=5,
    n_speaker=4, n_out_symbols=10,
    max_src_len=8, max_mel_len=40, max_seq_len=64,
)


def init_params(key, cfg):
    keys = iter(jax.random.split(key, 64))
    H = cfg["n_hidden"]

    def fft_stack(n):
        return [_fft_block_params(next(keys), H, cfg["n_head"], cfg["d_k"],
                                  cfg["conv_filter"], cfg["ffn_kernel"]) for _ in range(n)]

    word_emb = jax.random.normal(next(keys), (cfg["vocab"], H), F32) * 0.1
    word_emb = word_emb.at[0].set(0.0)                      # padding_idx=0

    def variance_predictor_params(k):
        ks = jax.random.split(k, 3)
        return {"conv1": _conv1d_params(ks[0], H, cfg["vp_filter"], cfg["vp_kernel"]),
                "ln1": _layernorm_params(cfg["vp_filter"]),
                "conv2": _conv1d_params(ks[1], cfg["vp_filter"], cfg["vp_filter"], cfg["vp_kernel"]),
                "ln2": _layernorm_params(cfg["vp_filter"]),
                "lin": _dense(ks[2], cfg["vp_filter"], 1)}

    postnet_convs = []
    chans = [cfg["n_mel"]] + [cfg["postnet_ch"]] * (cfg["postnet_layers"] - 1) + [cfg["n_mel"]]
    for i in range(cfg["postnet_layers"]):
        c = _conv1d_params(next(keys), chans[i], chans[i + 1], cfg["postnet_kernel"])
        c.update({"bn_g": jnp.ones((chans[i + 1],), F32),
                  "bn_b": jnp.zeros((chans[i + 1],), F32),
                  "bn_mean": jnp.zeros((chans[i + 1],), F32),
                  "bn_var": jnp.ones((chans[i + 1],), F32)})
        postnet_convs.append(c)

    return {
        "encoder": {"word_emb": word_emb,
                    "pos_enc": sinusoid_table(cfg["max_seq_len"], H),
                    "layers": fft_stack(cfg["enc_layers"])},
        "decoder": {"pos_enc": sinusoid_table(cfg["max_seq_len"], H),
                    "layers": fft_stack(cfg["dec_layers"])},
        "variance_adaptor": {
            "duration_predictor": variance_predictor_params(next(keys)),
            "pitch_predictor": variance_predictor_params(next(keys)),
            "energy_predictor": variance_predictor_params(next(keys)),
            "pitch_bins": jnp.linspace(-1.0, 1.0, cfg["n_bins"] - 1),
            "pitch_emb": jax.random.normal(next(keys), (cfg["n_bins"], H), F32) * 0.1,
            "energy_bins": jnp.linspace(-1.0, 1.0, cfg["n_bins"] - 1),
            "energy_emb": jax.random.normal(next(keys), (cfg["n_bins"], H), F32) * 0.1,
        },
        "mel_linear": _dense(next(keys), H, cfg["n_mel"]),
        "phonetize": _dense(next(keys), H, cfg["n_out_symbols"]),       # compute_phon_prediction
        # TODO(synk): n_speaker comes from speakers.json in the original; fixed synthetically here.
        "speaker_emb": jax.random.normal(next(keys), (cfg["n_speaker"], H), F32) * 0.1,
        "postnet": {"convs": postnet_convs},
    }


# ----------------------------------------------------------------------------
# model forward (eval mode; dropout == identity; no targets -> inference path)
# ----------------------------------------------------------------------------
def get_mask_from_lengths(lengths, max_len):
    ids = jnp.arange(max_len)
    return ids[None, :] >= lengths[:, None]           # True == padded


def length_regulate(x, d_rounded, max_mel):
    B, T, _ = x.shape
    mel_lens = jnp.clip(jnp.sum(d_rounded, axis=1), 0, max_mel).astype(jnp.int32)
    cum = jnp.cumsum(d_rounded, axis=1)                                   # (B, T)
    frames = jnp.arange(max_mel)
    idx = jnp.sum((frames[None, :, None] >= cum[:, None, :]).astype(jnp.int32), axis=-1)
    idx = jnp.clip(idx, 0, T - 1)
    out = jax.vmap(lambda xb, ib: xb[ib])(x, idx)                         # (B, max_mel, H)
    mel_mask = frames[None, :] >= mel_lens[:, None]
    out = jnp.where(mel_mask[:, :, None], 0.0, out)
    return out, mel_lens, mel_mask


def _fastspeech2_forward(params, speakers, texts, src_lens, max_src_len,
                         p_control=0.0, e_control=0.0, d_control=1.0, no_spectro=False):
    cfg = CFG
    src_masks = get_mask_from_lengths(src_lens, max_src_len)
    # TODO(synk): get_mask_from_lengths_noSpectro is repo-custom; with mel_lens=None it
    # reduces to the plain source mask.
    src_masks_noSpectro = src_masks

    B, T = texts.shape
    x = (jnp.take(params["encoder"]["word_emb"], texts, axis=0)
         + params["encoder"]["pos_enc"][None, :T, :])
    spk = jnp.take(params["speaker_emb"], speakers, axis=0)[:, None, :]

    # launch 1: full encoder stack + speaker-emb add + phonetize head
    enc_out, phon = encoder_stack_pallas(
        x, spk, src_lens, params["encoder"]["layers"],
        params["phonetize"]["w"], params["phonetize"]["b"], cfg)
    phon_outputs = jnp.transpose(phon, (0, 2, 1))       # (B, n_out_symbols, T)

    if no_spectro:
        return (None, None, None, None, None, None,
                src_masks, None, src_lens, None, phon_outputs, src_masks_noSpectro)

    # launch 2: fused variance adaptor core (3 predictors + bucketize + embedding add)
    va_out, log_d, p_pred, e_pred = variance_adaptor_pallas(
        enc_out, src_lens, params["variance_adaptor"], cfg, p_control, e_control)

    # duration rounding (scale by d_control before rounding, matching upstream FastSpeech2)
    d_rounded = jnp.maximum(jnp.round((jnp.exp(log_d) - 1.0) * d_control), 0.0).astype(jnp.int32)
    d_rounded = jnp.where(src_masks, 0, d_rounded)

    dec_in, mel_lens, mel_masks = length_regulate(va_out, d_rounded, cfg["max_mel_len"])
    dec_in = dec_in + params["decoder"]["pos_enc"][None, :cfg["max_mel_len"], :]

    # launch 3: full decoder stack + mel_linear + postnet (+ residual)
    mel, postnet_mel = decoder_stack_pallas(
        dec_in, mel_lens, params["decoder"]["layers"],
        params["mel_linear"]["w"], params["mel_linear"]["b"],
        params["postnet"], cfg)

    return (mel, postnet_mel, p_pred, e_pred, log_d, d_rounded,
            src_masks, mel_masks, src_lens, mel_lens, phon_outputs, src_masks_noSpectro)


fastspeech2_forward = jax.jit(
    _fastspeech2_forward,
    static_argnames=("max_src_len", "no_spectro", "p_control", "e_control", "d_control"))


# ----------------------------------------------------------------------------
if __name__ == "__main__":
    cfg = CFG
    key = jax.random.PRNGKey(0)
    kp, ks, kt = jax.random.split(key, 3)
    params = init_params(kp, cfg)

    B = 2
    speakers = jax.random.randint(ks, (B,), 0, cfg["n_speaker"])
    texts = jax.random.randint(kt, (B, cfg["max_src_len"]), 1, cfg["vocab"])
    src_lens = jnp.array([cfg["max_src_len"], cfg["max_src_len"] - 2], jnp.int32)
    texts = jnp.where(get_mask_from_lengths(src_lens, cfg["max_src_len"]), 0, texts)  # pad id 0

    outputs = fastspeech2_forward(params, speakers, texts, src_lens,
                                  max_src_len=cfg["max_src_len"])
    jax.block_until_ready(outputs)

    mel, postnet_mel = outputs[0], outputs[1]
    assert mel.shape == (B, cfg["max_mel_len"], cfg["n_mel"])
    assert postnet_mel.shape == mel.shape
    assert outputs[2].shape == (B, cfg["max_src_len"])                   # pitch predictions
    assert outputs[10].shape == (B, cfg["n_out_symbols"], cfg["max_src_len"])
    assert bool(jnp.all(jnp.isfinite(mel))) and bool(jnp.all(jnp.isfinite(postnet_mel)))
    print("KERNEL_OK")
</pallas_src>

<mosaic_0001>
module attributes {stable_mosaic.version = 11 : i64} {
  func.func @_encoder_stack_kernel(%arg0: i32, %arg1: memref<2xi32, #tpu.memory_space<smem>>, %arg2: memref<1x8x32xf32, #tpu.memory_space<vmem>>, %arg3: memref<1x1x32xf32, #tpu.memory_space<vmem>>, %arg4: memref<2x32x96xf32, #tpu.memory_space<vmem>>, %arg5: memref<2x32x32xf32, #tpu.memory_space<vmem>>, %arg6: memref<2x96x64xf32, #tpu.memory_space<vmem>>, %arg7: memref<2x64x32xf32, #tpu.memory_space<vmem>>, %arg8: memref<2x8x128xf32, #tpu.memory_space<vmem>>, %arg9: memref<32x128xf32, #tpu.memory_space<vmem>>, %arg10: memref<1x128xf32, #tpu.memory_space<vmem>>, %arg11: memref<1x8x32xf32, #tpu.memory_space<vmem>>, %arg12: memref<1x8x128xf32, #tpu.memory_space<vmem>>) attributes {dimension_semantics = [#tpu.dimension_semantics<parallel>], iteration_bounds = array<i64: 2>, scalar_prefetch = 1 : i64, scratch_operands = 0 : i64, tpu.core_type = #tpu.core_type<tc>, window_params = [{transform_indices = @transform_0, window_bounds = array<i64: 1, 8, 32>}, {transform_indices = @transform_1, window_bounds = array<i64: 1, 1, 32>}, {pipeline_mode = #tpu.pipeline_mode<synchronous>, transform_indices = @transform_2, window_bounds = array<i64: 2, 32, 96>}, {pipeline_mode = #tpu.pipeline_mode<synchronous>, transform_indices = @transform_3, window_bounds = array<i64: 2, 32, 32>}, {pipeline_mode = #tpu.pipeline_mode<synchronous>, transform_indices = @transform_4, window_bounds = array<i64: 2, 96, 64>}, {pipeline_mode = #tpu.pipeline_mode<synchronous>, transform_indices = @transform_5, window_bounds = array<i64: 2, 64, 32>}, {pipeline_mode = #tpu.pipeline_mode<synchronous>, transform_indices = @transform_6, window_bounds = array<i64: 2, 8, 128>}, {pipeline_mode = #tpu.pipeline_mode<synchronous>, transform_indices = @transform_7, window_bounds = array<i64: 32, 128>}, {pipeline_mode = #tpu.pipeline_mode<synchronous>, transform_indices = @transform_8, window_bounds = array<i64: 1, 128>}, {transform_indices = @transform_9, window_bounds = array<i64: 1, 8, 32>}, {transform_indices = @transform_10, window_bounds = array<i64: 1, 8, 128>}]} {
    %0 = arith.index_cast %arg0 : i32 to index
    %1 = memref.load %arg1[%0] : memref<2xi32, #tpu.memory_space<smem>>
    %2 = tpu.iota {dimensions = array<i32: 0>} : vector<8x1xi32>
    %3 = tpu.iota {dimensions = array<i32: 1>} : vector<1x8xi32>
    %4 = vector.broadcast %1 : i32 to vector<8x1xi32>
    %5 = arith.cmpi slt, %2, %4 : vector<8x1xi32>
    %6 = arith.extui %5 : vector<8x1xi1> to vector<8x1xi32>
    %7 = arith.sitofp %6 : vector<8x1xi32> to vector<8x1xf32>
    %8 = vector.broadcast %1 : i32 to vector<1x8xi32>
    %9 = arith.cmpi slt, %3, %8 : vector<1x8xi32>
    %cst = arith.constant 0.000000e+00 : f32
    %cst_0 = arith.constant -1.000000e+09 : f32
    %10 = vector.broadcast %cst : f32 to vector<1x8xf32>
    %11 = vector.broadcast %cst_0 : f32 to vector<1x8xf32>
    %12 = arith.select %9, %10, %11 : vector<1x8xi1>, vector<1x8xf32>
    %c0 = arith.constant 0 : index
    %c0_1 = arith.constant 0 : index
    %c0_2 = arith.constant 0 : index
    %13 = vector.load %arg2[%c0, %c0_1, %c0_2] : memref<1x8x32xf32, #tpu.memory_space<vmem>>, vector<1x8x32xf32>
    %14 = vector.shape_cast %13 : vector<1x8x32xf32> to vector<8x32xf32>
    %c0_3 = arith.constant 0 : index
    %c0_4 = arith.constant 0 : index
    %c0_5 = arith.constant 0 : index
    %15 = vector.load %arg8[%c0_3, %c0_4, %c0_5] : memref<2x8x128xf32, #tpu.memory_space<vmem>>, vector<1x8x128xf32>
    %16 = vector.shape_cast %15 : vector<1x8x128xf32> to vector<8x128xf32>
    %c0_6 = arith.constant 0 : index
    %c0_7 = arith.constant 0 : index
    %c0_8 = arith.constant 0 : index
    %17 = vector.load %arg4[%c0_6, %c0_7, %c0_8] : memref<2x32x96xf32, #tpu.memory_space<vmem>>, vector<1x32x96xf32>
    %18 = vector.shape_cast %17 : vector<1x32x96xf32> to vector<32x96xf32>
    %19 = vector.extract_strided_slice %16 {offsets = [0, 0], sizes = [1, 96], strides = [1, 1]} : vector<8x128xf32> to vector<1x96xf32>
    %c0_9 = arith.constant 0 : index
    %c0_10 = arith.constant 0 : index
    %c0_11 = arith.constant 0 : index
    %20 = vector.load %arg5[%c0_9, %c0_10, %c0_11] : memref<2x32x32xf32, #tpu.memory_space<vmem>>, vector<1x32x32xf32>
    %21 = vector.shape_cast %20 : vector<1x32x32xf32> to vector<32x32xf32>
    %22 = vector.extract_strided_slice %16 {offsets = [1, 0], sizes = [1, 32], strides = [1, 1]} : vector<8x128xf32> to vector<1x32xf32>
    %23 = vector.extract_strided_slice %16 {offsets = [2, 0], sizes = [1, 32], strides = [1, 1]} : vector<8x128xf32> to vector<1x32xf32>
    %24 = vector.extract_strided_slice %16 {offsets = [3, 0], sizes = [1, 32], strides = [1, 1]} : vector<8x128xf32> to vector<1x32xf32>
    %c0_12 = arith.constant 0 : index
    %c0_13 = arith.constant 0 : index
    %c0_14 = arith.constant 0 : index
    %25 = vector.load %arg6[%c0_12, %c0_13, %c0_14] : memref<2x96x64xf32, #tpu.memory_space<vmem>>, vector<1x96x64xf32>
    %26 = vector.shape_cast %25 : vector<1x96x64xf32> to vector<96x64xf32>
    %27 = vector.extract_strided_slice %16 {offsets = [4, 0], sizes = [1, 64], strides = [1, 1]} : vector<8x128xf32> to vector<1x64xf32>
    %c0_15 = arith.constant 0 : index
    %c0_16 = arith.constant 0 : index
    %c0_17 = arith.constant 0 : index
    %28 = vector.load %arg7[%c0_15, %c0_16, %c0_17] : memref<2x64x32xf32, #tpu.memory_space<vmem>>, vector<1x64x32xf32>
    %29 = vector.shape_cast %28 : vector<1x64x32xf32> to vector<64x32xf32>
    %30 = vector.extract_strided_slice %16 {offsets = [5, 0], sizes = [1, 32], strides = [1, 1]} : vector<8x128xf32> to vector<1x32xf32>
    %31 = vector.extract_strided_slice %16 {offsets = [6, 0], sizes = [1, 32], strides = [1, 1]} : vector<8x128xf32> to vector<1x32xf32>
    %32 = vector.extract_strided_slice %16 {offsets = [7, 0], sizes = [1, 32], strides = [1, 1]} : vector<8x128xf32> to vector<1x32xf32>
    %cst_18 = arith.constant dense<0.000000e+00> : vector<8x96xf32>
    %33 = tpu.matmul %14, %18, %cst_18 {dimension_numbers = #tpu.dot_dimension_numbers<[1], [0], [0], [1], [0, 0, 1, 1], [], []>} : vector<8x32xf32>, vector<32x96xf32>, vector<8x96xf32> -> vector<8x96xf32>
    %34 = vector.broadcast %19 : vector<1x96xf32> to vector<8x96xf32>
    %35 = arith.addf %33, %34 : vector<8x96xf32>
    %36 = vector.extract_strided_slice %35 {offsets = [0, 0], sizes = [8, 16], strides = [1, 1]} : vector<8x96xf32> to vector<8x16xf32>
    %37 = vector.extract_strided_slice %35 {offsets = [0, 32], sizes = [8, 16], strides = [1, 1]} : vector<8x96xf32> to vector<8x16xf32>
    %38 = vector.extract_strided_slice %35 {offsets = [0, 64], sizes = [8, 16], strides = [1, 1]} : vector<8x96xf32> to vector<8x16xf32>
    %cst_19 = arith.constant dense<0.000000e+00> : vector<8x8xf32>
    %39 = tpu.matmul %36, %37, %cst_19 {dimension_numbers = #tpu.dot_dimension_numbers<[1], [1], [0], [0], [0, 0, 1, 0], [], []>} : vector<8x16xf32>, vector<8x16xf32>, vector<8x8xf32> -> vector<8x8xf32>
    %cst_20 = arith.constant 2.500000e-01 : f32
    %40 = vector.broadcast %cst_20 : f32 to vector<8x8xf32>
    %41 = arith.mulf %39, %40 : vector<8x8xf32>
    %42 = vector.broadcast %12 : vector<1x8xf32> to vector<8x8xf32>
    %43 = arith.addf %41, %42 : vector<8x8xf32>
    %cst_21 = arith.constant dense<0xFF800000> : vector<8xf32>
    %44 = vector.multi_reduction <maximumf>, %43, %cst_21 [1] : vector<8x8xf32> to vector<8xf32>
    %45 = vector.shape_cast %44 : vector<8xf32> to vector<8x1xf32>
    %46 = vector.broadcast %45 : vector<8x1xf32> to vector<8x8xf32>
    %47 = arith.subf %43, %46 : vector<8x8xf32>
    %48 = math.exp %47 : vector<8x8xf32>
    %cst_22 = arith.constant dense<0.000000e+00> : vector<8xf32>
    %49 = vector.multi_reduction <add>, %48, %cst_22 [1] : vector<8x8xf32> to vector<8xf32>
    %50 = vector.shape_cast %49 : vector<8xf32> to vector<8x1xf32>
    %51 = tpu.reciprocal %50 {approx = true} : vector<8x1xf32> -> vector<8x1xf32>
    %52 = vector.broadcast %51 : vector<8x1xf32> to vector<8x8xf32>
    %53 = arith.mulf %48, %52 : vector<8x8xf32>
    %cst_23 = arith.constant dense<0.000000e+00> : vector<8x16xf32>
    %54 = tpu.matmul %53, %38, %cst_23 {dimension_numbers = #tpu.dot_dimension_numbers<[1], [0], [0], [1], [0, 0, 1, 1], [], []>} : vector<8x8xf32>, vector<8x16xf32>, vector<8x16xf32> -> vector<8x16xf32>
    %55 = vector.extract_strided_slice %35 {offsets = [0, 16], sizes = [8, 16], strides = [1, 1]} : vector<8x96xf32> to vector<8x16xf32>
    %56 = vector.extract_strided_slice %35 {offsets = [0, 48], sizes = [8, 16], strides = [1, 1]} : vector<8x96xf32> to vector<8x16xf32>
    %57 = vector.extract_strided_slice %35 {offsets = [0, 80], sizes = [8, 16], strides = [1, 1]} : vector<8x96xf32> to vector<8x16xf32>
    %cst_24 = arith.constant dense<0.000000e+00> : vector<8x8xf32>
    %58 = tpu.matmul %55, %56, %cst_24 {dimension_numbers = #tpu.dot_dimension_numbers<[1], [1], [0], [0], [0, 0, 1, 0], [], []>} : vector<8x16xf32>, vector<8x16xf32>, vector<8x8xf32> -> vector<8x8xf32>
    %cst_25 = arith.constant 2.500000e-01 : f32
    %59 = vector.broadcast %cst_25 : f32 to vector<8x8xf32>
    %60 = arith.mulf %58, %59 : vector<8x8xf32>
    %61 = vector.broadcast %12 : vector<1x8xf32> to vector<8x8xf32>
    %62 = arith.addf %60, %61 : vector<8x8xf32>
    %cst_26 = arith.constant dense<0xFF800000> : vector<8xf32>
    %63 = vector.multi_reduction <maximumf>, %62, %cst_26 [1] : vector<8x8xf32> to vector<8xf32>
    %64 = vector.shape_cast %63 : vector<8xf32> to vector<8x1xf32>
    %65 = vector.broadcast %64 : vector<8x1xf32> to vector<8x8xf32>
    %66 = arith.subf %62, %65 : vector<8x8xf32>
    %67 = math.exp %66 : vector<8x8xf32>
    %cst_27 = arith.constant dense<0.000000e+00> : vector<8xf32>
    %68 = vector.multi_reduction <add>, %67, %cst_27 [1] : vector<8x8xf32> to vector<8xf32>
    %69 = vector.shape_cast %68 : vector<8xf32> to vector<8x1xf32>
    %70 = tpu.reciprocal %69 {approx = true} : vector<8x1xf32> -> vector<8x1xf32>
    %71 = vector.broadcast %70 : vector<8x1xf32> to vector<8x8xf32>
    %72 = arith.mulf %67, %71 : vector<8x8xf32>
    %cst_28 = arith.constant dense<0.000000e+00> : vector<8x16xf32>
    %73 = tpu.matmul %72, %57, %cst_28 {dimension_numbers = #tpu.dot_dimension_numbers<[1], [0], [0], [1], [0, 0, 1, 1], [], []>} : vector<8x8xf32>, vector<8x16xf32>, vector<8x16xf32> -> vector<8x16xf32>
    %74 = tpu.concatenate %54, %73 in 1 : vector<8x16xf32>, vector<8x16xf32> -> vector<8x32xf32>
    %cst_29 = arith.constant dense<0.000000e+00> : vector<8x32xf32>
    %75 = tpu.matmul %74, %21, %cst_29 {dimension_numbers = #tpu.dot_dimension_numbers<[1], [0], [0], [1], [0, 0, 1, 1], [], []>} : vector<8x32xf32>, vector<32x32xf32>, vector<8x32xf32> -> vector<8x32xf32>
    %76 = vector.broadcast %22 : vector<1x32xf32> to vector<8x32xf32>
    %77 = arith.addf %75, %76 : vector<8x32xf32>
    %78 = arith.addf %77, %14 : vector<8x32xf32>
    %cst_30 = arith.constant dense<0.000000e+00> : vector<8xf32>
    %79 = vector.multi_reduction <add>, %78, %cst_30 [1] : vector<8x32xf32> to vector<8xf32>
    %80 = vector.shape_cast %79 : vector<8xf32> to vector<8x1xf32>
    %cst_31 = arith.constant 3.200000e+01 : f32
    %81 = vector.broadcast %cst_31 : f32 to vector<8x1xf32>
    %82 = arith.divf %80, %81 : vector<8x1xf32>
    %83 = vector.broadcast %82 : vector<8x1xf32> to vector<8x32xf32>
    %84 = arith.subf %78, %83 : vector<8x32xf32>
    %85 = arith.mulf %84, %84 : vector<8x32xf32>
    %cst_32 = arith.constant dense<0.000000e+00> : vector<8xf32>
    %86 = vector.multi_reduction <add>, %85, %cst_32 [1] : vector<8x32xf32> to vector<8xf32>
    %87 = vector.shape_cast %86 : vector<8xf32> to vector<8x1xf32>
    %cst_33 = arith.constant 3.200000e+01 : f32
    %88 = vector.broadcast %cst_33 : f32 to vector<8x1xf32>
    %89 = arith.divf %87, %88 : vector<8x1xf32>
    %90 = vector.broadcast %82 : vector<8x1xf32> to vector<8x32xf32>
    %91 = arith.subf %78, %90 : vector<8x32xf32>
    %cst_34 = arith.constant 9.99999974E-6 : f32
    %92 = vector.broadcast %cst_34 : f32 to vector<8x1xf32>
    %93 = arith.addf %89, %92 : vector<8x1xf32>
    %94 = math.rsqrt %93 : vector<8x1xf32>
    %95 = vector.broadcast %94 : vector<8x1xf32> to vector<8x32xf32>
    %96 = arith.mulf %91, %95 : vector<8x32xf32>
    %97 = vector.broadcast %23 : vector<1x32xf32> to vector<8x32xf32>
    %98 = arith.mulf %96, %97 : vector<8x32xf32>
    %99 = vector.broadcast %24 : vector<1x32xf32> to vector<8x32xf32>
    %100 = arith.addf %98, %99 : vector<8x32xf32>
    %101 = vector.broadcast %7 : vector<8x1xf32> to vector<8x32xf32>
    %102 = arith.mulf %100, %101 : vector<8x32xf32>
    %103 = tpu.iota {dimensions = array<i32: 0>} : vector<8x1xi32>
    %c1_i32 = arith.constant 1 : i32
    %104 = tpu.dynamic_rotate %102 by %c1_i32 dim 0 : vector<8x32xf32>, i32 -> vector<8x32xf32>
    %c1_i32_35 = arith.constant 1 : i32
    %105 = vector.broadcast %c1_i32_35 : i32 to vector<8x1xi32>
    %106 = arith.cmpi sge, %103, %105 : vector<8x1xi32>
    %cst_36 = arith.constant 0.000000e+00 : f32
    %107 = vector.shape_cast %106 : vector<8x1xi1> to vector<8x1xi1>
    %108 = vector.broadcast %107 : vector<8x1xi1> to vector<8x32xi1>
    %109 = vector.broadcast %cst_36 : f32 to vector<8x32xf32>
    %110 = arith.select %108, %104, %109 : vector<8x32xi1>, vector<8x32xf32>
    %c7_i32 = arith.constant 7 : i32
    %111 = tpu.dynamic_rotate %102 by %c7_i32 dim 0 : vector<8x32xf32>, i32 -> vector<8x32xf32>
    %c7_i32_37 = arith.constant 7 : i32
    %112 = vector.broadcast %c7_i32_37 : i32 to vector<8x1xi32>
    %113 = arith.cmpi slt, %103, %112 : vector<8x1xi32>
    %cst_38 = arith.constant 0.000000e+00 : f32
    %114 = vector.shape_cast %113 : vector<8x1xi1> to vector<8x1xi1>
    %115 = vector.broadcast %114 : vector<8x1xi1> to vector<8x32xi1>
    %116 = vector.broadcast %cst_38 : f32 to vector<8x32xf32>
    %117 = arith.select %115, %111, %116 : vector<8x32xi1>, vector<8x32xf32>
    %118 = tpu.concatenate %110, %102, %117 in 1 : vector<8x32xf32>, vector<8x32xf32>, vector<8x32xf32> -> vector<8x96xf32>
    %cst_39 = arith.constant dense<0.000000e+00> : vector<8x64xf32>
    %119 = tpu.matmul %118, %26, %cst_39 {dimension_numbers = #tpu.dot_dimension_numbers<[1], [0], [0], [1], [0, 0, 1, 1], [], []>} : vector<8x96xf32>, vector<96x64xf32>, vector<8x64xf32> -> vector<8x64xf32>
    %120 = vector.broadcast %27 : vector<1x64xf32> to vector<8x64xf32>
    %121 = arith.addf %119, %120 : vector<8x64xf32>
    %cst_40 = arith.constant 0.000000e+00 : f32
    %122 = vector.broadcast %cst_40 : f32 to vector<8x64xf32>
    %123 = arith.maximumf %121, %122 : vector<8x64xf32>
    %cst_41 = arith.constant dense<0.000000e+00> : vector<8x32xf32>
    %124 = tpu.matmul %123, %29, %cst_41 {dimension_numbers = #tpu.dot_dimension_numbers<[1], [0], [0], [1], [0, 0, 1, 1], [], []>} : vector<8x64xf32>, vector<64x32xf32>, vector<8x32xf32> -> vector<8x32xf32>
    %125 = vector.broadcast %30 : vector<1x32xf32> to vector<8x32xf32>
    %126 = arith.addf %124, %125 : vector<8x32xf32>
    %127 = arith.addf %126, %102 : vector<8x32xf32>
    %cst_42 = arith.constant dense<0.000000e+00> : vector<8xf32>
    %128 = vector.multi_reduction <add>, %127, %cst_42 [1] : vector<8x32xf32> to vector<8xf32>
    %129 = vector.shape_cast %128 : vector<8xf32> to vector<8x1xf32>
    %cst_43 = arith.constant 3.200000e+01 : f32
    %130 = vector.broadcast %cst_43 : f32 to vector<8x1xf32>
    %131 = arith.divf %129, %130 : vector<8x1xf32>
    %132 = vector.broadcast %131 : vector<8x1xf32> to vector<8x32xf32>
    %133 = arith.subf %127, %132 : vector<8x32xf32>
    %134 = arith.mulf %133, %133 : vector<8x32xf32>
    %cst_44 = arith.constant dense<0.000000e+00> : vector<8xf32>
    %135 = vector.multi_reduction <add>, %134, %cst_44 [1] : vector<8x32xf32> to vector<8xf32>
    %136 = vector.shape_cast %135 : vector<8xf32> to vector<8x1xf32>
    %cst_45 = arith.constant 3.200000e+01 : f32
    %137 = vector.broadcast %cst_45 : f32 to vector<8x1xf32>
    %138 = arith.divf %136, %137 : vector<8x1xf32>
    %139 = vector.broadcast %131 : vector<8x1xf32> to vector<8x32xf32>
    %140 = arith.subf %127, %139 : vector<8x32xf32>
    %cst_46 = arith.constant 9.99999974E-6 : f32
    %141 = vector.broadcast %cst_46 : f32 to vector<8x1xf32>
    %142 = arith.addf %138, %141 : vector<8x1xf32>
    %143 = math.rsqrt %142 : vector<8x1xf32>
    %144 = vector.broadcast %143 : vector<8x1xf32> to vector<8x32xf32>
    %145 = arith.mulf %140, %144 : vector<8x32xf32>
    %146 = vector.broadcast %31 : vector<1x32xf32> to vector<8x32xf32>
    %147 = arith.mulf %145, %146 : vector<8x32xf32>
    %148 = vector.broadcast %32 : vector<1x32xf32> to vector<8x32xf32>
    %149 = arith.addf %147, %148 : vector<8x32xf32>
    %150 = vector.broadcast %7 : vector<8x1xf32> to vector<8x32xf32>
    %151 = arith.mulf %149, %150 : vector<8x32xf32>
    %c1 = arith.constant 1 : index
    %c0_47 = arith.constant 0 : index
    %c0_48 = arith.constant 0 : index
    %152 = vector.load %arg8[%c1, %c0_47, %c0_48] : memref<2x8x128xf32, #tpu.memory_space<vmem>>, vector<1x8x128xf32>
    %153 = vector.shape_cast %152 : vector<1x8x128xf32> to vector<8x128xf32>
    %c1_49 = arith.constant 1 : index
    %c0_50 = arith.constant 0 : index
    %c0_51 = arith.constant 0 : index
    %154 = vector.load %arg4[%c1_49, %c0_50, %c0_51] : memref<2x32x96xf32, #tpu.memory_space<vmem>>, vector<1x32x96xf32>
    %155 = vector.shape_cast %154 : vector<1x32x96xf32> to vector<32x96xf32>
    %156 = vector.extract_strided_slice %153 {offsets = [0, 0], sizes = [1, 96], strides = [1, 1]} : vector<8x128xf32> to vector<1x96xf32>
    %c1_52 = arith.constant 1 : index
    %c0_53 = arith.constant 0 : index
    %c0_54 = arith.constant 0 : index
    %157 = vector.load %arg5[%c1_52, %c0_53, %c0_54] : memref<2x32x32xf32, #tpu.memory_space<vmem>>, vector<1x32x32xf32>
    %158 = vector.shape_cast %157 : vector<1x32x32xf32> to vector<32x32xf32>
    %159 = vector.extract_strided_slice %153 {offsets = [1, 0], sizes = [1, 32], strides = [1, 1]} : vector<8x128xf32> to vector<1x32xf32>
    %160 = vector.extract_strided_slice %153 {offsets = [2, 0], sizes = [1, 32], strides = [1, 1]} : vector<8x128xf32> to vector<1x32xf32>
    %161 = vector.extract_strided_slice %153 {offsets = [3, 0], sizes = [1, 32], strides = [1, 1]} : vector<8x128xf32> to vector<1x32xf32>
    %c1_55 = arith.constant 1 : index
    %c0_56 = arith.constant 0 : index
    %c0_57 = arith.constant 0 : index
    %162 = vector.load %arg6[%c1_55, %c0_56, %c0_57] : memref<2x96x64xf32, #tpu.memory_space<vmem>>, vector<1x96x64xf32>
    %163 = vector.shape_cast %162 : vector<1x96x64xf32> to vector<96x64xf32>
    %164 = vector.extract_strided_slice %153 {offsets = [4, 0], sizes = [1, 64], strides = [1, 1]} : vector<8x128xf32> to vector<1x64xf32>
    %c1_58 = arith.constant 1 : index
    %c0_59 = arith.constant 0 : index
    %c0_60 = arith.constant 0 : index
    %165 = vector.load %arg7[%c1_58, %c0_59, %c0_60] : memref<2x64x32xf32, #tpu.memory_space<vmem>>, vector<1x64x32xf32>
    %166 = vector.shape_cast %165 : vector<1x64x32xf32> to vector<64x32xf32>
    %167 = vector.extract_strided_slice %153 {offsets = [5, 0], sizes = [1, 32], strides = [1, 1]} : vector<8x128xf32> to vector<1x32xf32>
    %168 = vector.extract_strided_slice %153 {offsets = [6, 0], sizes = [1, 32], strides = [1, 1]} : vector<8x128xf32> to vector<1x32xf32>
    %169 = vector.extract_strided_slice %153 {offsets = [7, 0], sizes = [1, 32], strides = [1, 1]} : vector<8x128xf32> to vector<1x32xf32>
    %cst_61 = arith.constant dense<0.000000e+00> : vector<8x96xf32>
    %170 = tpu.matmul %151, %155, %cst_61 {dimension_numbers = #tpu.dot_dimension_numbers<[1], [0], [0], [1], [0, 0, 1, 1], [], []>} : vector<8x32xf32>, vector<32x96xf32>, vector<8x96xf32> -> vector<8x96xf32>
    %171 = vector.broadcast %156 : vector<1x96xf32> to vector<8x96xf32>
    %172 = arith.addf %170, %171 : vector<8x96xf32>
    %173 = vector.extract_strided_slice %172 {offsets = [0, 0], sizes = [8, 16], strides = [1, 1]} : vector<8x96xf32> to vector<8x16xf32>
    %174 = vector.extract_strided_slice %172 {offsets = [0, 32], sizes = [8, 16], strides = [1, 1]} : vector<8x96xf32> to vector<8x16xf32>
    %175 = vector.extract_strided_slice %172 {offsets = [0, 64], sizes = [8, 16], strides = [1, 1]} : vector<8x96xf32> to vector<8x16xf32>
    %cst_62 = arith.constant dense<0.000000e+00> : vector<8x8xf32>
    %176 = tpu.matmul %173, %174, %cst_62 {dimension_numbers = #tpu.dot_dimension_numbers<[1], [1], [0], [0], [0, 0, 1, 0], [], []>} : vector<8x16xf32>, vector<8x16xf32>, vector<8x8xf32> -> vector<8x8xf32>
    %cst_63 = arith.constant 2.500000e-01 : f32
    %177 = vector.broadcast %cst_63 : f32 to vector<8x8xf32>
    %178 = arith.mulf %176, %177 : vector<8x8xf32>
    %179 = vector.broadcast %12 : vector<1x8xf32> to vector<8x8xf32>
    %180 = arith.addf %178, %179 : vector<8x8xf32>
    %cst_64 = arith.constant dense<0xFF800000> : vector<8xf32>
    %181 = vector.multi_reduction <maximumf>, %180, %cst_64 [1] : vector<8x8xf32> to vector<8xf32>
    %182 = vector.shape_cast %181 : vector<8xf32> to vector<8x1xf32>
    %183 = vector.broadcast %182 : vector<8x1xf32> to vector<8x8xf32>
    %184 = arith.subf %180, %183 : vector<8x8xf32>
    %185 = math.exp %184 : vector<8x8xf32>
    %cst_65 = arith.constant dense<0.000000e+00> : vector<8xf32>
    %186 = vector.multi_reduction <add>, %185, %cst_65 [1] : vector<8x8xf32> to vector<8xf32>
    %187 = vector.shape_cast %186 : vector<8xf32> to vector<8x1xf32>
    %188 = tpu.reciprocal %187 {approx = true} : vector<8x1xf32> -> vector<8x1xf32>
    %189 = vector.broadcast %188 : vector<8x1xf32> to vector<8x8xf32>
    %190 = arith.mulf %185, %189 : vector<8x8xf32>
    %cst_66 = arith.constant dense<0.000000e+00> : vector<8x16xf32>
    %191 = tpu.matmul %190, %175, %cst_66 {dimension_numbers = #tpu.dot_dimension_numbers<[1], [0], [0], [1], [0, 0, 1, 1], [], []>} : vector<8x8xf32>, vector<8x16xf32>, vector<8x16xf32> -> vector<8x16xf32>
    %192 = vector.extract_strided_slice %172 {offsets = [0, 16], sizes = [8, 16], strides = [1, 1]} : vector<8x96xf32> to vector<8x16xf32>
    %193 = vector.extract_strided_slice %172 {offsets = [0, 48], sizes = [8, 16], strides = [1, 1]} : vector<8x96xf32> to vector<8x16xf32>
    %194 = vector.extract_strided_slice %172 {offsets = [0, 80], sizes = [8, 16], strides = [1, 1]} : vector<8x96xf32> to vector<8x16xf32>
    %cst_67 = arith.constant dense<0.000000e+00> : vector<8x8xf32>
    %195 = tpu.matmul %192, %193, %cst_67 {dimension_numbers = #tpu.dot_dimension_numbers<[1], [1], [0], [0], [0, 0, 1, 0], [], []>} : vector<8x16xf32>, vector<8x16xf32>, vector<8x8xf32> -> vector<8x8xf32>
    %cst_68 = arith.constant 2.500000e-01 : f32
    %196 = vector.broadcast %cst_68 : f32 to vector<8x8xf32>
    %197 = arith.mulf %195, %196 : vector<8x8xf32>
    %198 = vector.broadcast %12 : vector<1x8xf32> to vector<8x8xf32>
    %199 = arith.addf %197, %198 : vector<8x8xf32>
    %cst_69 = arith.constant dense<0xFF800000> : vector<8xf32>
    %200 = vector.multi_reduction <maximumf>, %199, %cst_69 [1] : vector<8x8xf32> to vector<8xf32>
    %201 = vector.shape_cast %200 : vector<8xf32> to vector<8x1xf32>
    %202 = vector.broadcast %201 : vector<8x1xf32> to vector<8x8xf32>
    %203 = arith.subf %199, %202 : vector<8x8xf32>
    %204 = math.exp %203 : vector<8x8xf32>
    %cst_70 = arith.constant dense<0.000000e+00> : vector<8xf32>
    %205 = vector.multi_reduction <add>, %204, %cst_70 [1] : vector<8x8xf32> to vector<8xf32>
    %206 = vector.shape_cast %205 : vector<8xf32> to vector<8x1xf32>
    %207 = tpu.reciprocal %206 {approx = true} : vector<8x1xf32> -> vector<8x1xf32>
    %208 = vector.broadcast %207 : vector<8x1xf32> to vector<8x8xf32>
    %209 = arith.mulf %204, %208 : vector<8x8xf32>
    %cst_71 = arith.constant dense<0.000000e+00> : vector<8x16xf32>
    %210 = tpu.matmul %209, %194, %cst_71 {dimension_numbers = #tpu.dot_dimension_numbers<[1], [0], [0], [1], [0, 0, 1, 1], [], []>} : vector<8x8xf32>, vector<8x16xf32>, vector<8x16xf32> -> vector<8x16xf32>
    %211 = tpu.concatenate %191, %210 in 1 : vector<8x16xf32>, vector<8x16xf32> -> vector<8x32xf32>
    %cst_72 = arith.constant dense<0.000000e+00> : vector<8x32xf32>
    %212 = tpu.matmul %211, %158, %cst_72 {dimension_numbers = #tpu.dot_dimension_numbers<[1], [0], [0], [1], [0, 0, 1, 1], [], []>} : vector<8x32xf32>, vector<32x32xf32>, vector<8x32xf32> -> vector<8x32xf32>
    %213 = vector.broadcast %159 : vector<1x32xf32> to vector<8x32xf32>
    %214 = arith.addf %212, %213 : vector<8x32xf32>
    %215 = arith.addf %214, %151 : vector<8x32xf32>
    %cst_73 = arith.constant dense<0.000000e+00> : vector<8xf32>
    %216 = vector.multi_reduction <add>, %215, %cst_73 [1] : vector<8x32xf32> to vector<8xf32>
    %217 = vector.shape_cast %216 : vector<8xf32> to vector<8x1xf32>
    %cst_74 = arith.constant 3.200000e+01 : f32
    %218 = vector.broadcast %cst_74 : f32 to vector<8x1xf32>
    %219 = arith.divf %217, %218 : vector<8x1xf32>
    %220 = vector.broadcast %219 : vector<8x1xf32> to vector<8x32xf32>
    %221 = arith.subf %215, %220 : vector<8x32xf32>
    %222 = arith.mulf %221, %221 : vector<8x32xf32>
    %cst_75 = arith.constant dense<0.000000e+00> : vector<8xf32>
    %223 = vector.multi_reduction <add>, %222, %cst_75 [1] : vector<8x32xf32> to vector<8xf32>
    %224 = vector.shape_cast %223 : vector<8xf32> to vector<8x1xf32>
    %cst_76 = arith.constant 3.200000e+01 : f32
    %225 = vector.broadcast %cst_76 : f32 to vector<8x1xf32>
    %226 = arith.divf %224, %225 : vector<8x1xf32>
    %227 = vector.broadcast %219 : vector<8x1xf32> to vector<8x32xf32>
    %228 = arith.subf %215, %227 : vector<8x32xf32>
    %cst_77 = arith.constant 9.99999974E-6 : f32
    %229 = vector.broadcast %cst_77 : f32 to vector<8x1xf32>
    %230 = arith.addf %226, %229 : vector<8x1xf32>
    %231 = math.rsqrt %230 : vector<8x1xf32>
    %232 = vector.broadcast %231 : vector<8x1xf32> to vector<8x32xf32>
    %233 = arith.mulf %228, %232 : vector<8x32xf32>
    %234 = vector.broadcast %160 : vector<1x32xf32> to vector<8x32xf32>
    %235 = arith.mulf %233, %234 : vector<8x32xf32>
    %236 = vector.broadcast %161 : vector<1x32xf32> to vector<8x32xf32>
    %237 = arith.addf %235, %236 : vector<8x32xf32>
    %238 = vector.broadcast %7 : vector<8x1xf32> to vector<8x32xf32>
    %239 = arith.mulf %237, %238 : vector<8x32xf32>
    %240 = tpu.iota {dimensions = array<i32: 0>} : vector<8x1xi32>
    %c1_i32_78 = arith.constant 1 : i32
    %241 = tpu.dynamic_rotate %239 by %c1_i32_78 dim 0 : vector<8x32xf32>, i32 -> vector<8x32xf32>
    %c1_i32_79 = arith.constant 1 : i32
    %242 = vector.broadcast %c1_i32_79 : i32 to vector<8x1xi32>
    %243 = arith.cmpi sge, %240, %242 : vector<8x1xi32>
    %cst_80 = arith.constant 0.000000e+00 : f32
    %244 = vector.shape_cast %243 : vector<8x1xi1> to vector<8x1xi1>
    %245 = vector.broadcast %244 : vector<8x1xi1> to vector<8x32xi1>
    %246 = vector.broadcast %cst_80 : f32 to vector<8x32xf32>
    %247 = arith.select %245, %241, %246 : vector<8x32xi1>, vector<8x32xf32>
    %c7_i32_81 = arith.constant 7 : i32
    %248 = tpu.dynamic_rotate %239 by %c7_i32_81 dim 0 : vector<8x32xf32>, i32 -> vector<8x32xf32>
    %c7_i32_82 = arith.constant 7 : i32
    %249 = vector.broadcast %c7_i32_82 : i32 to vector<8x1xi32>
    %250 = arith.cmpi slt, %240, %249 : vector<8x1xi32>
    %cst_83 = arith.constant 0.000000e+00 : f32
    %251 = vector.shape_cast %250 : vector<8x1xi1> to vector<8x1xi1>
    %252 = vector.broadcast %251 : vector<8x1xi1> to vector<8x32xi1>
    %253 = vector.broadcast %cst_83 : f32 to vector<8x32xf32>
    %254 = arith.select %252, %248, %253 : vector<8x32xi1>, vector<8x32xf32>
    %255 = tpu.concatenate %247, %239, %254 in 1 : vector<8x32xf32>, vector<8x32xf32>, vector<8x32xf32> -> vector<8x96xf32>
    %cst_84 = arith.constant dense<0.000000e+00> : vector<8x64xf32>
    %256 = tpu.matmul %255, %163, %cst_84 {dimension_numbers = #tpu.dot_dimension_numbers<[1], [0], [0], [1], [0, 0, 1, 1], [], []>} : vector<8x96xf32>, vector<96x64xf32>, vector<8x64xf32> -> vector<8x64xf32>
    %257 = vector.broadcast %164 : vector<1x64xf32> to vector<8x64xf32>
    %258 = arith.addf %256, %257 : vector<8x64xf32>
    %cst_85 = arith.constant 0.000000e+00 : f32
    %259 = vector.broadcast %cst_85 : f32 to vector<8x64xf32>
    %260 = arith.maximumf %258, %259 : vector<8x64xf32>
    %cst_86 = arith.constant dense<0.000000e+00> : vector<8x32xf32>
    %261 = tpu.matmul %260, %166, %cst_86 {dimension_numbers = #tpu.dot_dimension_numbers<[1], [0], [0], [1], [0, 0, 1, 1], [], []>} : vector<8x64xf32>, vector<64x32xf32>, vector<8x32xf32> -> vector<8x32xf32>
    %262 = vector.broadcast %167 : vector<1x32xf32> to vector<8x32xf32>
    %263 = arith.addf %261, %262 : vector<8x32xf32>
    %264 = arith.addf %263, %239 : vector<8x32xf32>
    %cst_87 = arith.constant dense<0.000000e+00> : vector<8xf32>
    %265 = vector.multi_reduction <add>, %264, %cst_87 [1] : vector<8x32xf32> to vector<8xf32>
    %266 = vector.shape_cast %265 : vector<8xf32> to vector<8x1xf32>
    %cst_88 = arith.constant 3.200000e+01 : f32
    %267 = vector.broadcast %cst_88 : f32 to vector<8x1xf32>
    %268 = arith.divf %266, %267 : vector<8x1xf32>
    %269 = vector.broadcast %268 : vector<8x1xf32> to vector<8x32xf32>
    %270 = arith.subf %264, %269 : vector<8x32xf32>
    %271 = arith.mulf %270, %270 : vector<8x32xf32>
    %cst_89 = arith.constant dense<0.000000e+00> : vector<8xf32>
    %272 = vector.multi_reduction <add>, %271, %cst_89 [1] : vector<8x32xf32> to vector<8xf32>
    %273 = vector.shape_cast %272 : vector<8xf32> to vector<8x1xf32>
    %cst_90 = arith.constant 3.200000e+01 : f32
    %274 = vector.broadcast %cst_90 : f32 to vector<8x1xf32>
    %275 = arith.divf %273, %274 : vector<8x1xf32>
    %276 = vector.broadcast %268 : vector<8x1xf32> to vector<8x32xf32>
    %277 = arith.subf %264, %276 : vector<8x32xf32>
    %cst_91 = arith.constant 9.99999974E-6 : f32
    %278 = vector.broadcast %cst_91 : f32 to vector<8x1xf32>
    %279 = arith.addf %275, %278 : vector<8x1xf32>
    %280 = math.rsqrt %279 : vector<8x1xf32>
    %281 = vector.broadcast %280 : vector<8x1xf32> to vector<8x32xf32>
    %282 = arith.mulf %277, %281 : vector<8x32xf32>
    %283 = vector.broadcast %168 : vector<1x32xf32> to vector<8x32xf32>
    %284 = arith.mulf %282, %283 : vector<8x32xf32>
    %285 = vector.broadcast %169 : vector<1x32xf32> to vector<8x32xf32>
    %286 = arith.addf %284, %285 : vector<8x32xf32>
    %287 = vector.broadcast %7 : vector<8x1xf32> to vector<8x32xf32>
    %288 = arith.mulf %286, %287 : vector<8x32xf32>
    %c0_92 = arith.constant 0 : index
    %c0_93 = arith.constant 0 : index
    %c0_94 = arith.constant 0 : index
    %289 = vector.load %arg3[%c0_92, %c0_93, %c0_94] : memref<1x1x32xf32, #tpu.memory_space<vmem>>, vector<1x1x32xf32>
    %290 = vector.shape_cast %289 : vector<1x1x32xf32> to vector<1x32xf32>
    %291 = vector.broadcast %290 : vector<1x32xf32> to vector<8x32xf32>
    %292 = arith.addf %288, %291 : vector<8x32xf32>
    %c0_95 = arith.constant 0 : index
    %c0_96 = arith.constant 0 : index
    %c0_97 = arith.constant 0 : index
    %293 = vector.load %arg11[%c0_95, %c0_96, %c0_97] : memref<1x8x32xf32, #tpu.memory_space<vmem>>, vector<1x8x32xf32>
    %294 = vector.shape_cast %293 : vector<1x8x32xf32> to vector<8x32xf32>
    %295 = vector.shape_cast %292 : vector<8x32xf32> to vector<1x8x32xf32>
    tpu.vector_store %arg11[%c0_95, %c0_96, %c0_97], %295 {strides = array<i32>} : memref<1x8x32xf32, #tpu.memory_space<vmem>>, vector<1x8x32xf32>,
    %c0_98 = arith.constant 0 : index
    %c0_99 = arith.constant 0 : index
    %296 = vector.load %arg9[%c0_98, %c0_99] : memref<32x128xf32, #tpu.memory_space<vmem>>, vector<32x128xf32>
    %cst_100 = arith.constant dense<0.000000e+00> : vector<8x128xf32>
    %297 = tpu.matmul %292, %296, %cst_100 {dimension_numbers = #tpu.dot_dimension_numbers<[1], [0], [0], [1], [0, 0, 1, 1], [], []>} : vector<8x32xf32>, vector<32x128xf32>, vector<8x128xf32> -> vector<8x128xf32>
    %c0_101 = arith.constant 0 : index
    %c0_102 = arith.constant 0 : index
    %298 = vector.load %arg10[%c0_101, %c0_102] : memref<1x128xf32, #tpu.memory_space<vmem>>, vector<1x128xf32>
    %299 = vector.broadcast %298 : vector<1x128xf32> to vector<8x128xf32>
    %300 = arith.addf %297, %299 : vector<8x128xf32>
    %c0_103 = arith.constant 0 : index
    %c0_104 = arith.constant 0 : index
    %c0_105 = arith.constant 0 : index
    %301 = vector.load %arg12[%c0_103, %c0_104, %c0_105] : memref<1x8x128xf32, #tpu.memory_space<vmem>>, vector<1x8x128xf32>
    %302 = vector.shape_cast %301 : vector<1x8x128xf32> to vector<8x128xf32>
    %303 = vector.shape_cast %300 : vector<8x128xf32> to vector<1x8x128xf32>
    tpu.vector_store %arg12[%c0_103, %c0_104, %c0_105], %303 {strides = array<i32>} : memref<1x8x128xf32, #tpu.memory_space<vmem>>, vector<1x8x128xf32>,
    return
  }
  func.func @transform_0(%arg0: i32, %arg1: memref<2xi32, #tpu.memory_space<smem>>) -> (i32, i32, i32) {
    %c0_i32 = arith.constant 0 : i32
    %c0_i32_0 = arith.constant 0 : i32
    %c0_i32_1 = arith.constant 0 : i32
    return %arg0, %c0_i32, %c0_i32_0 : i32, i32, i32
  }
  func.func @transform_1(%arg0: i32, %arg1: memref<2xi32, #tpu.memory_space<smem>>) -> (i32, i32, i32) {
    %c0_i32 = arith.constant 0 : i32
    %c0_i32_0 = arith.constant 0 : i32
    %c0_i32_1 = arith.constant 0 : i32
    return %arg0, %c0_i32, %c0_i32_0 : i32, i32, i32
  }
  func.func @transform_2(%arg0: i32, %arg1: memref<2xi32, #tpu.memory_space<smem>>) -> (i32, i32, i32) {
    %c0_i32 = arith.constant 0 : i32
    %c0_i32_0 = arith.constant 0 : i32
    %c0_i32_1 = arith.constant 0 : i32
    %c0_i32_2 = arith.constant 0 : i32
    return %c0_i32, %c0_i32_0, %c0_i32_1 : i32, i32, i32
  }
  func.func @transform_3(%arg0: i32, %arg1: memref<2xi32, #tpu.memory_space<smem>>) -> (i32, i32, i32) {
    %c0_i32 = arith.constant 0 : i32
    %c0_i32_0 = arith.constant 0 : i32
    %c0_i32_1 = arith.constant 0 : i32
    %c0_i32_2 = arith.constant 0 : i32
    return %c0_i32, %c0_i32_0, %c0_i32_1 : i32, i32, i32
  }
  func.func @transform_4(%arg0: i32, %arg1: memref<2xi32, #tpu.memory_space<smem>>) -> (i32, i32, i32) {
    %c0_i32 = arith.constant 0 : i32
    %c0_i32_0 = arith.constant 0 : i32
    %c0_i32_1 = arith.constant 0 : i32
    %c0_i32_2 = arith.constant 0 : i32
    return %c0_i32, %c0_i32_0, %c0_i32_1 : i32, i32, i32
  }
  func.func @transform_5(%arg0: i32, %arg1: memref<2xi32, #tpu.memory_space<smem>>) -> (i32, i32, i32) {
    %c0_i32 = arith.constant 0 : i32
    %c0_i32_0 = arith.constant 0 : i32
    %c0_i32_1 = arith.constant 0 : i32
    %c0_i32_2 = arith.constant 0 : i32
    return %c0_i32, %c0_i32_0, %c0_i32_1 : i32, i32, i32
  }
  func.func @transform_6(%arg0: i32, %arg1: memref<2xi32, #tpu.memory_space<smem>>) -> (i32, i32, i32) {
    %c0_i32 = arith.constant 0 : i32
    %c0_i32_0 = arith.constant 0 : i32
    %c0_i32_1 = arith.constant 0 : i32
    %c0_i32_2 = arith.constant 0 : i32
    return %c0_i32, %c0_i32_0, %c0_i32_1 : i32, i32, i32
  }
  func.func @transform_7(%arg0: i32, %arg1: memref<2xi32, #tpu.memory_space<smem>>) -> (i32, i32) {
    %c0_i32 = arith.constant 0 : i32
    %c0_i32_0 = arith.constant 0 : i32
    %c0_i32_1 = arith.constant 0 : i32
    return %c0_i32, %c0_i32_0 : i32, i32
  }
  func.func @transform_8(%arg0: i32, %arg1: memref<2xi32, #tpu.memory_space<smem>>) -> (i32, i32) {
    %c0_i32 = arith.constant 0 : i32
    %c0_i32_0 = arith.constant 0 : i32
    %c0_i32_1 = arith.constant 0 : i32
    return %c0_i32, %c0_i32_0 : i32, i32
  }
  func.func @transform_9(%arg0: i32, %arg1: memref<2xi32, #tpu.memory_space<smem>>) -> (i32, i32, i32) {
    %c0_i32 = arith.constant 0 : i32
    %c0_i32_0 = arith.constant 0 : i32
    %c0_i32_1 = arith.constant 0 : i32
    return %arg0, %c0_i32, %c0_i32_0 : i32, i32, i32
  }
  func.func @transform_10(%arg0: i32, %arg1: memref<2xi32, #tpu.memory_space<smem>>) -> (i32, i32, i32) {
    %c0_i32 = arith.constant 0 : i32
    %c0_i32_0 = arith.constant 0 : i32
    %c0_i32_1 = arith.constant 0 : i32
    return %arg0, %c0_i32, %c0_i32_0 : i32, i32, i32
  }
}

module attributes {stable_mosaic.version = 11 : i64} {
  func.func @_variance_adaptor_kernel(%arg0: i32, %arg1: memref<2xi32, #tpu.memory_space<smem>>, %arg2: memref<1x8x32xf32, #tpu.memory_space<vmem>>, %arg3: memref<3x96x32xf32, #tpu.memory_space<vmem>>, %arg4: memref<3x96x32xf32, #tpu.memory_space<vmem>>, %arg5: memref<3x8x128xf32, #tpu.memory_space<vmem>>, %arg6: memref<1x8xf32, #tpu.memory_space<vmem>>, %arg7: memref<8x32xf32, #tpu.memory_space<vmem>>, %arg8: memref<1x8xf32, #tpu.memory_space<vmem>>, %arg9: memref<8x32xf32, #tpu.memory_space<vmem>>, %arg10: memref<1x8x32xf32, #tpu.memory_space<vmem>>, %arg11: memref<1x8x128xf32, #tpu.memory_space<vmem>>) attributes {dimension_semantics = [#tpu.dimension_semantics<parallel>], iteration_bounds = array<i64: 2>, scalar_prefetch = 1 : i64, scratch_operands = 0 : i64, tpu.core_type = #tpu.core_type<tc>, window_params = [{transform_indices = @transform_0, window_bounds = array<i64: 1, 8, 32>}, {pipeline_mode = #tpu.pipeline_mode<synchronous>, transform_indices = @transform_1, window_bounds = array<i64: 3, 96, 32>}, {pipeline_mode = #tpu.pipeline_mode<synchronous>, transform_indices = @transform_2, window_bounds = array<i64: 3, 96, 32>}, {pipeline_mode = #tpu.pipeline_mode<synchronous>, transform_indices = @transform_3, window_bounds = array<i64: 3, 8, 128>}, {pipeline_mode = #tpu.pipeline_mode<synchronous>, transform_indices = @transform_4, window_bounds = array<i64: 1, 8>}, {pipeline_mode = #tpu.pipeline_mode<synchronous>, transform_indices = @transform_5, window_bounds = array<i64: 8, 32>}, {pipeline_mode = #tpu.pipeline_mode<synchronous>, transform_indices = @transform_6, window_bounds = array<i64: 1, 8>}, {pipeline_mode = #tpu.pipeline_mode<synchronous>, transform_indices = @transform_7, window_bounds = array<i64: 8, 32>}, {transform_indices = @transform_8, window_bounds = array<i64: 1, 8, 32>}, {transform_indices = @transform_9, window_bounds = array<i64: 1, 8, 128>}]} {
    %0 = tpu.iota {dimensions = array<i32: 0>} : vector<8x1xi32>
    %1 = arith.index_cast %arg0 : i32 to index
    %2 = memref.load %arg1[%1] : memref<2xi32, #tpu.memory_space<smem>>
    %3 = vector.broadcast %2 : i32 to vector<8x1xi32>
    %4 = arith.cmpi slt, %0, %3 : vector<8x1xi32>
    %5 = arith.extui %4 : vector<8x1xi1> to vector<8x1xi32>
    %6 = arith.sitofp %5 : vector<8x1xi32> to vector<8x1xf32>
    %c0 = arith.constant 0 : index
    %c0_0 = arith.constant 0 : index
    %c0_1 = arith.constant 0 : index
    %7 = vector.load %arg2[%c0, %c0_0, %c0_1] : memref<1x8x32xf32, #tpu.memory_space<vmem>>, vector<1x8x32xf32>
    %8 = vector.shape_cast %7 : vector<1x8x32xf32> to vector<8x32xf32>
    %c0_2 = arith.constant 0 : index
    %c0_3 = arith.constant 0 : index
    %c0_4 = arith.constant 0 : index
    %9 = vector.load %arg5[%c0_2, %c0_3, %c0_4] : memref<3x8x128xf32, #tpu.memory_space<vmem>>, vector<1x8x128xf32>
    %10 = vector.shape_cast %9 : vector<1x8x128xf32> to vector<8x128xf32>
    %c0_5 = arith.constant 0 : index
    %c0_6 = arith.constant 0 : index
    %c0_7 = arith.constant 0 : index
    %11 = vector.load %arg3[%c0_5, %c0_6, %c0_7] : memref<3x96x32xf32, #tpu.memory_space<vmem>>, vector<1x96x32xf32>
    %12 = vector.shape_cast %11 : vector<1x96x32xf32> to vector<96x32xf32>
    %13 = vector.extract_strided_slice %10 {offsets = [0, 0], sizes = [1, 32], strides = [1, 1]} : vector<8x128xf32> to vector<1x32xf32>
    %14 = tpu.iota {dimensions = array<i32: 0>} : vector<8x1xi32>
    %c1_i32 = arith.constant 1 : i32
    %15 = tpu.dynamic_rotate %8 by %c1_i32 dim 0 : vector<8x32xf32>, i32 -> vector<8x32xf32>
    %c1_i32_8 = arith.constant 1 : i32
    %16 = vector.broadcast %c1_i32_8 : i32 to vector<8x1xi32>
    %17 = arith.cmpi sge, %14, %16 : vector<8x1xi32>
    %cst = arith.constant 0.000000e+00 : f32
    %18 = vector.shape_cast %17 : vector<8x1xi1> to vector<8x1xi1>
    %19 = vector.broadcast %18 : vector<8x1xi1> to vector<8x32xi1>
    %20 = vector.broadcast %cst : f32 to vector<8x32xf32>
    %21 = arith.select %19, %15, %20 : vector<8x32xi1>, vector<8x32xf32>
    %c7_i32 = arith.constant 7 : i32
    %22 = tpu.dynamic_rotate %8 by %c7_i32 dim 0 : vector<8x32xf32>, i32 -> vector<8x32xf32>
    %c7_i32_9 = arith.constant 7 : i32
    %23 = vector.broadcast %c7_i32_9 : i32 to vector<8x1xi32>
    %24 = arith.cmpi slt, %14, %23 : vector<8x1xi32>
    %cst_10 = arith.constant 0.000000e+00 : f32
    %25 = vector.shape_cast %24 : vector<8x1xi1> to vector<8x1xi1>
    %26 = vector.broadcast %25 : vector<8x1xi1> to vector<8x32xi1>
    %27 = vector.broadcast %cst_10 : f32 to vector<8x32xf32>
    %28 = arith.select %26, %22, %27 : vector<8x32xi1>, vector<8x32xf32>
    %29 = tpu.concatenate %21, %8, %28 in 1 : vector<8x32xf32>, vector<8x32xf32>, vector<8x32xf32> -> vector<8x96xf32>
    %cst_11 = arith.constant dense<0.000000e+00> : vector<8x32xf32>
    %30 = tpu.matmul %29, %12, %cst_11 {dimension_numbers = #tpu.dot_dimension_numbers<[1], [0], [0], [1], [0, 0, 1, 1], [], []>} : vector<8x96xf32>, vector<96x32xf32>, vector<8x32xf32> -> vector<8x32xf32>
    %31 = vector.broadcast %13 : vector<1x32xf32> to vector<8x32xf32>
    %32 = arith.addf %30, %31 : vector<8x32xf32>
    %cst_12 = arith.constant 0.000000e+00 : f32
    %33 = vector.broadcast %cst_12 : f32 to vector<8x32xf32>
    %34 = arith.maximumf %32, %33 : vector<8x32xf32>
    %35 = vector.extract_strided_slice %10 {offsets = [1, 0], sizes = [1, 32], strides = [1, 1]} : vector<8x128xf32> to vector<1x32xf32>
    %36 = vector.extract_strided_slice %10 {offsets = [2, 0], sizes = [1, 32], strides = [1, 1]} : vector<8x128xf32> to vector<1x32xf32>
    %cst_13 = arith.constant dense<0.000000e+00> : vector<8xf32>
    %37 = vector.multi_reduction <add>, %34, %cst_13 [1] : vector<8x32xf32> to vector<8xf32>
    %38 = vector.shape_cast %37 : vector<8xf32> to vector<8x1xf32>
    %cst_14 = arith.constant 3.200000e+01 : f32
    %39 = vector.broadcast %cst_14 : f32 to vector<8x1xf32>
    %40 = arith.divf %38, %39 : vector<8x1xf32>
    %41 = vector.broadcast %40 : vector<8x1xf32> to vector<8x32xf32>
    %42 = arith.subf %34, %41 : vector<8x32xf32>
    %43 = arith.mulf %42, %42 : vector<8x32xf32>
    %cst_15 = arith.constant dense<0.000000e+00> : vector<8xf32>
    %44 = vector.multi_reduction <add>, %43, %cst_15 [1] : vector<8x32xf32> to vector<8xf32>
    %45 = vector.shape_cast %44 : vector<8xf32> to vector<8x1xf32>
    %cst_16 = arith.constant 3.200000e+01 : f32
    %46 = vector.broadcast %cst_16 : f32 to vector<8x1xf32>
    %47 = arith.divf %45, %46 : vector<8x1xf32>
    %48 = vector.broadcast %40 : vector<8x1xf32> to vector<8x32xf32>
    %49 = arith.subf %34, %48 : vector<8x32xf32>
    %cst_17 = arith.constant 9.99999974E-6 : f32
    %50 = vector.broadcast %cst_17 : f32 to vector<8x1xf32>
    %51 = arith.addf %47, %50 : vector<8x1xf32>
    %52 = math.rsqrt %51 : vector<8x1xf32>
    %53 = vector.broadcast %52 : vector<8x1xf32> to vector<8x32xf32>
    %54 = arith.mulf %49, %53 : vector<8x32xf32>
    %55 = vector.broadcast %35 : vector<1x32xf32> to vector<8x32xf32>
    %56 = arith.mulf %54, %55 : vector<8x32xf32>
    %57 = vector.broadcast %36 : vector<1x32xf32> to vector<8x32xf32>
    %58 = arith.addf %56, %57 : vector<8x32xf32>
    %c0_18 = arith.constant 0 : index
    %c0_19 = arith.constant 0 : index
    %c0_20 = arith.constant 0 : index
    %59 = vector.load %arg4[%c0_18, %c0_19, %c0_20] : memref<3x96x32xf32, #tpu.memory_space<vmem>>, vector<1x96x32xf32>
    %60 = vector.shape_cast %59 : vector<1x96x32xf32> to vector<96x32xf32>
    %61 = vector.extract_strided_slice %10 {offsets = [3, 0], sizes = [1, 32], strides = [1, 1]} : vector<8x128xf32> to vector<1x32xf32>
    %62 = tpu.iota {dimensions = array<i32: 0>} : vector<8x1xi32>
    %c1_i32_21 = arith.constant 1 : i32
    %63 = tpu.dynamic_rotate %58 by %c1_i32_21 dim 0 : vector<8x32xf32>, i32 -> vector<8x32xf32>
    %c1_i32_22 = arith.constant 1 : i32
    %64 = vector.broadcast %c1_i32_22 : i32 to vector<8x1xi32>
    %65 = arith.cmpi sge, %62, %64 : vector<8x1xi32>
    %cst_23 = arith.constant 0.000000e+00 : f32
    %66 = vector.shape_cast %65 : vector<8x1xi1> to vector<8x1xi1>
    %67 = vector.broadcast %66 : vector<8x1xi1> to vector<8x32xi1>
    %68 = vector.broadcast %cst_23 : f32 to vector<8x32xf32>
    %69 = arith.select %67, %63, %68 : vector<8x32xi1>, vector<8x32xf32>
    %c7_i32_24 = arith.constant 7 : i32
    %70 = tpu.dynamic_rotate %58 by %c7_i32_24 dim 0 : vector<8x32xf32>, i32 -> vector<8x32xf32>
    %c7_i32_25 = arith.constant 7 : i32
    %71 = vector.broadcast %c7_i32_25 : i32 to vector<8x1xi32>
    %72 = arith.cmpi slt, %62, %71 : vector<8x1xi32>
    %cst_26 = arith.constant 0.000000e+00 : f32
    %73 = vector.shape_cast %72 : vector<8x1xi1> to vector<8x1xi1>
    %74 = vector.broadcast %73 : vector<8x1xi1> to vector<8x32xi1>
    %75 = vector.broadcast %cst_26 : f32 to vector<8x32xf32>
    %76 = arith.select %74, %70, %75 : vector<8x32xi1>, vector<8x32xf32>
    %77 = tpu.concatenate %69, %58, %76 in 1 : vector<8x32xf32>, vector<8x32xf32>, vector<8x32xf32> -> vector<8x96xf32>
    %cst_27 = arith.constant dense<0.000000e+00> : vector<8x32xf32>
    %78 = tpu.matmul %77, %60, %cst_27 {dimension_numbers = #tpu.dot_dimension_numbers<[1], [0], [0], [1], [0, 0, 1, 1], [], []>} : vector<8x96xf32>, vector<96x32xf32>, vector<8x32xf32> -> vector<8x32xf32>
    %79 = vector.broadcast %61 : vector<1x32xf32> to vector<8x32xf32>
    %80 = arith.addf %78, %79 : vector<8x32xf32>
    %cst_28 = arith.constant 0.000000e+00 : f32
    %81 = vector.broadcast %cst_28 : f32 to vector<8x32xf32>
    %82 = arith.maximumf %80, %81 : vector<8x32xf32>
    %83 = vector.extract_strided_slice %10 {offsets = [4, 0], sizes = [1, 32], strides = [1, 1]} : vector<8x128xf32> to vector<1x32xf32>
    %84 = vector.extract_strided_slice %10 {offsets = [5, 0], sizes = [1, 32], strides = [1, 1]} : vector<8x128xf32> to vector<1x32xf32>
    %cst_29 = arith.constant dense<0.000000e+00> : vector<8xf32>
    %85 = vector.multi_reduction <add>, %82, %cst_29 [1] : vector<8x32xf32> to vector<8xf32>
    %86 = vector.shape_cast %85 : vector<8xf32> to vector<8x1xf32>
    %cst_30 = arith.constant 3.200000e+01 : f32
    %87 = vector.broadcast %cst_30 : f32 to vector<8x1xf32>
    %88 = arith.divf %86, %87 : vector<8x1xf32>
    %89 = vector.broadcast %88 : vector<8x1xf32> to vector<8x32xf32>
    %90 = arith.subf %82, %89 : vector<8x32xf32>
    %91 = arith.mulf %90, %90 : vector<8x32xf32>
    %cst_31 = arith.constant dense<0.000000e+00> : vector<8xf32>
    %92 = vector.multi_reduction <add>, %91, %cst_31 [1] : vector<8x32xf32> to vector<8xf32>
    %93 = vector.shape_cast %92 : vector<8xf32> to vector<8x1xf32>
    %cst_32 = arith.constant 3.200000e+01 : f32
    %94 = vector.broadcast %cst_32 : f32 to vector<8x1xf32>
    %95 = arith.divf %93, %94 : vector<8x1xf32>
    %96 = vector.broadcast %88 : vector<8x1xf32> to vector<8x32xf32>
    %97 = arith.subf %82, %96 : vector<8x32xf32>
    %cst_33 = arith.constant 9.99999974E-6 : f32
    %98 = vector.broadcast %cst_33 : f32 to vector<8x1xf32>
    %99 = arith.addf %95, %98 : vector<8x1xf32>
    %100 = math.rsqrt %99 : vector<8x1xf32>
    %101 = vector.broadcast %100 : vector<8x1xf32> to vector<8x32xf32>
    %102 = arith.mulf %97, %101 : vector<8x32xf32>
    %103 = vector.broadcast %83 : vector<1x32xf32> to vector<8x32xf32>
    %104 = arith.mulf %102, %103 : vector<8x32xf32>
    %105 = vector.broadcast %84 : vector<1x32xf32> to vector<8x32xf32>
    %106 = arith.addf %104, %105 : vector<8x32xf32>
    %107 = vector.extract_strided_slice %10 {offsets = [6, 0], sizes = [1, 32], strides = [1, 1]} : vector<8x128xf32> to vector<1x32xf32>
    %108 = vector.broadcast %107 : vector<1x32xf32> to vector<8x32xf32>
    %109 = arith.mulf %106, %108 : vector<8x32xf32>
    %cst_34 = arith.constant dense<0.000000e+00> : vector<8xf32>
    %110 = vector.multi_reduction <add>, %109, %cst_34 [1] : vector<8x32xf32> to vector<8xf32>
    %111 = vector.shape_cast %110 : vector<8xf32> to vector<8x1xf32>
    %112 = vector.extract_strided_slice %10 {offsets = [7, 0], sizes = [1, 1], strides = [1, 1]} : vector<8x128xf32> to vector<1x1xf32>
    %113 = vector.broadcast %112 : vector<1x1xf32> to vector<8x1xf32>
    %114 = arith.addf %111, %113 : vector<8x1xf32>
    %115 = arith.mulf %114, %6 : vector<8x1xf32>
    %c1 = arith.constant 1 : index
    %c0_35 = arith.constant 0 : index
    %c0_36 = arith.constant 0 : index
    %116 = vector.load %arg5[%c1, %c0_35, %c0_36] : memref<3x8x128xf32, #tpu.memory_space<vmem>>, vector<1x8x128xf32>
    %117 = vector.shape_cast %116 : vector<1x8x128xf32> to vector<8x128xf32>
    %c1_37 = arith.constant 1 : index
    %c0_38 = arith.constant 0 : index
    %c0_39 = arith.constant 0 : index
    %118 = vector.load %arg3[%c1_37, %c0_38, %c0_39] : memref<3x96x32xf32, #tpu.memory_space<vmem>>, vector<1x96x32xf32>
    %119 = vector.shape_cast %118 : vector<1x96x32xf32> to vector<96x32xf32>
    %120 = vector.extract_strided_slice %117 {offsets = [0, 0], sizes = [1, 32], strides = [1, 1]} : vector<8x128xf32> to vector<1x32xf32>
    %121 = tpu.iota {dimensions = array<i32: 0>} : vector<8x1xi32>
    %c1_i32_40 = arith.constant 1 : i32
    %122 = tpu.dynamic_rotate %8 by %c1_i32_40 dim 0 : vector<8x32xf32>, i32 -> vector<8x32xf32>
    %c1_i32_41 = arith.constant 1 : i32
    %123 = vector.broadcast %c1_i32_41 : i32 to vector<8x1xi32>
    %124 = arith.cmpi sge, %121, %123 : vector<8x1xi32>
    %cst_42 = arith.constant 0.000000e+00 : f32
    %125 = vector.shape_cast %124 : vector<8x1xi1> to vector<8x1xi1>
    %126 = vector.broadcast %125 : vector<8x1xi1> to vector<8x32xi1>
    %127 = vector.broadcast %cst_42 : f32 to vector<8x32xf32>
    %128 = arith.select %126, %122, %127 : vector<8x32xi1>, vector<8x32xf32>
    %c7_i32_43 = arith.constant 7 : i32
    %129 = tpu.dynamic_rotate %8 by %c7_i32_43 dim 0 : vector<8x32xf32>, i32 -> vector<8x32xf32>
    %c7_i32_44 = arith.constant 7 : i32
    %130 = vector.broadcast %c7_i32_44 : i32 to vector<8x1xi32>
    %131 = arith.cmpi slt, %121, %130 : vector<8x1xi32>
    %cst_45 = arith.constant 0.000000e+00 : f32
    %132 = vector.shape_cast %131 : vector<8x1xi1> to vector<8x1xi1>
    %133 = vector.broadcast %132 : vector<8x1xi1> to vector<8x32xi1>
    %134 = vector.broadcast %cst_45 : f32 to vector<8x32xf32>
    %135 = arith.select %133, %129, %134 : vector<8x32xi1>, vector<8x32xf32>
    %136 = tpu.concatenate %128, %8, %135 in 1 : vector<8x32xf32>, vector<8x32xf32>, vector<8x32xf32> -> vector<8x96xf32>
    %cst_46 = arith.constant dense<0.000000e+00> : vector<8x32xf32>
    %137 = tpu.matmul %136, %119, %cst_46 {dimension_numbers = #tpu.dot_dimension_numbers<[1], [0], [0], [1], [0, 0, 1, 1], [], []>} : vector<8x96xf32>, vector<96x32xf32>, vector<8x32xf32> -> vector<8x32xf32>
    %138 = vector.broadcast %120 : vector<1x32xf32> to vector<8x32xf32>
    %139 = arith.addf %137, %138 : vector<8x32xf32>
    %cst_47 = arith.constant 0.000000e+00 : f32
    %140 = vector.broadcast %cst_47 : f32 to vector<8x32xf32>
    %141 = arith.maximumf %139, %140 : vector<8x32xf32>
    %142 = vector.extract_strided_slice %117 {offsets = [1, 0], sizes = [1, 32], strides = [1, 1]} : vector<8x128xf32> to vector<1x32xf32>
    %143 = vector.extract_strided_slice %117 {offsets = [2, 0], sizes = [1, 32], strides = [1, 1]} : vector<8x128xf32> to vector<1x32xf32>
    %cst_48 = arith.constant dense<0.000000e+00> : vector<8xf32>
    %144 = vector.multi_reduction <add>, %141, %cst_48 [1] : vector<8x32xf32> to vector<8xf32>
    %145 = vector.shape_cast %144 : vector<8xf32> to vector<8x1xf32>
    %cst_49 = arith.constant 3.200000e+01 : f32
    %146 = vector.broadcast %cst_49 : f32 to vector<8x1xf32>
    %147 = arith.divf %145, %146 : vector<8x1xf32>
    %148 = vector.broadcast %147 : vector<8x1xf32> to vector<8x32xf32>
    %149 = arith.subf %141, %148 : vector<8x32xf32>
    %150 = arith.mulf %149, %149 : vector<8x32xf32>
    %cst_50 = arith.constant dense<0.000000e+00> : vector<8xf32>
    %151 = vector.multi_reduction <add>, %150, %cst_50 [1] : vector<8x32xf32> to vector<8xf32>
    %152 = vector.shape_cast %151 : vector<8xf32> to vector<8x1xf32>
    %cst_51 = arith.constant 3.200000e+01 : f32
    %153 = vector.broadcast %cst_51 : f32 to vector<8x1xf32>
    %154 = arith.divf %152, %153 : vector<8x1xf32>
    %155 = vector.broadcast %147 : vector<8x1xf32> to vector<8x32xf32>
    %156 = arith.subf %141, %155 : vector<8x32xf32>
    %cst_52 = arith.constant 9.99999974E-6 : f32
    %157 = vector.broadcast %cst_52 : f32 to vector<8x1xf32>
    %158 = arith.addf %154, %157 : vector<8x1xf32>
    %159 = math.rsqrt %158 : vector<8x1xf32>
    %160 = vector.broadcast %159 : vector<8x1xf32> to vector<8x32xf32>
    %161 = arith.mulf %156, %160 : vector<8x32xf32>
    %162 = vector.broadcast %142 : vector<1x32xf32> to vector<8x32xf32>
    %163 = arith.mulf %161, %162 : vector<8x32xf32>
    %164 = vector.broadcast %143 : vector<1x32xf32> to vector<8x32xf32>
    %165 = arith.addf %163, %164 : vector<8x32xf32>
    %c1_53 = arith.constant 1 : index
    %c0_54 = arith.constant 0 : index
    %c0_55 = arith.constant 0 : index
    %166 = vector.load %arg4[%c1_53, %c0_54, %c0_55] : memref<3x96x32xf32, #tpu.memory_space<vmem>>, vector<1x96x32xf32>
    %167 = vector.shape_cast %166 : vector<1x96x32xf32> to vector<96x32xf32>
    %168 = vector.extract_strided_slice %117 {offsets = [3, 0], sizes = [1, 32], strides = [1, 1]} : vector<8x128xf32> to vector<1x32xf32>
    %169 = tpu.iota {dimensions = array<i32: 0>} : vector<8x1xi32>
    %c1_i32_56 = arith.constant 1 : i32
    %170 = tpu.dynamic_rotate %165 by %c1_i32_56 dim 0 : vector<8x32xf32>, i32 -> vector<8x32xf32>
    %c1_i32_57 = arith.constant 1 : i32
    %171 = vector.broadcast %c1_i32_57 : i32 to vector<8x1xi32>
    %172 = arith.cmpi sge, %169, %171 : vector<8x1xi32>
    %cst_58 = arith.constant 0.000000e+00 : f32
    %173 = vector.shape_cast %172 : vector<8x1xi1> to vector<8x1xi1>
    %174 = vector.broadcast %173 : vector<8x1xi1> to vector<8x32xi1>
    %175 = vector.broadcast %cst_58 : f32 to vector<8x32xf32>
    %176 = arith.select %174, %170, %175 : vector<8x32xi1>, vector<8x32xf32>
    %c7_i32_59 = arith.constant 7 : i32
    %177 = tpu.dynamic_rotate %165 by %c7_i32_59 dim 0 : vector<8x32xf32>, i32 -> vector<8x32xf32>
    %c7_i32_60 = arith.constant 7 : i32
    %178 = vector.broadcast %c7_i32_60 : i32 to vector<8x1xi32>
    %179 = arith.cmpi slt, %169, %178 : vector<8x1xi32>
    %cst_61 = arith.constant 0.000000e+00 : f32
    %180 = vector.shape_cast %179 : vector<8x1xi1> to vector<8x1xi1>
    %181 = vector.broadcast %180 : vector<8x1xi1> to vector<8x32xi1>
    %182 = vector.broadcast %cst_61 : f32 to vector<8x32xf32>
    %183 = arith.select %181, %177, %182 : vector<8x32xi1>, vector<8x32xf32>
    %184 = tpu.concatenate %176, %165, %183 in 1 : vector<8x32xf32>, vector<8x32xf32>, vector<8x32xf32> -> vector<8x96xf32>
    %cst_62 = arith.constant dense<0.000000e+00> : vector<8x32xf32>
    %185 = tpu.matmul %184, %167, %cst_62 {dimension_numbers = #tpu.dot_dimension_numbers<[1], [0], [0], [1], [0, 0, 1, 1], [], []>} : vector<8x96xf32>, vector<96x32xf32>, vector<8x32xf32> -> vector<8x32xf32>
    %186 = vector.broadcast %168 : vector<1x32xf32> to vector<8x32xf32>
    %187 = arith.addf %185, %186 : vector<8x32xf32>
    %cst_63 = arith.constant 0.000000e+00 : f32
    %188 = vector.broadcast %cst_63 : f32 to vector<8x32xf32>
    %189 = arith.maximumf %187, %188 : vector<8x32xf32>
    %190 = vector.extract_strided_slice %117 {offsets = [4, 0], sizes = [1, 32], strides = [1, 1]} : vector<8x128xf32> to vector<1x32xf32>
    %191 = vector.extract_strided_slice %117 {offsets = [5, 0], sizes = [1, 32], strides = [1, 1]} : vector<8x128xf32> to vector<1x32xf32>
    %cst_64 = arith.constant dense<0.000000e+00> : vector<8xf32>
    %192 = vector.multi_reduction <add>, %189, %cst_64 [1] : vector<8x32xf32> to vector<8xf32>
    %193 = vector.shape_cast %192 : vector<8xf32> to vector<8x1xf32>
    %cst_65 = arith.constant 3.200000e+01 : f32
    %194 = vector.broadcast %cst_65 : f32 to vector<8x1xf32>
    %195 = arith.divf %193, %194 : vector<8x1xf32>
    %196 = vector.broadcast %195 : vector<8x1xf32> to vector<8x32xf32>
    %197 = arith.subf %189, %196 : vector<8x32xf32>
    %198 = arith.mulf %197, %197 : vector<8x32xf32>
    %cst_66 = arith.constant dense<0.000000e+00> : vector<8xf32>
    %199 = vector.multi_reduction <add>, %198, %cst_66 [1] : vector<8x32xf32> to vector<8xf32>
    %200 = vector.shape_cast %199 : vector<8xf32> to vector<8x1xf32>
    %cst_67 = arith.constant 3.200000e+01 : f32
    %201 = vector.broadcast %cst_67 : f32 to vector<8x1xf32>
    %202 = arith.divf %200, %201 : vector<8x1xf32>
    %203 = vector.broadcast %195 : vector<8x1xf32> to vector<8x32xf32>
    %204 = arith.subf %189, %203 : vector<8x32xf32>
    %cst_68 = arith.constant 9.99999974E-6 : f32
    %205 = vector.broadcast %cst_68 : f32 to vector<8x1xf32>
    %206 = arith.addf %202, %205 : vector<8x1xf32>
    %207 = math.rsqrt %206 : vector<8x1xf32>
    %208 = vector.broadcast %207 : vector<8x1xf32> to vector<8x32xf32>
    %209 = arith.mulf %204, %208 : vector<8x32xf32>
    %210 = vector.broadcast %190 : vector<1x32xf32> to vector<8x32xf32>
    %211 = arith.mulf %209, %210 : vector<8x32xf32>
    %212 = vector.broadcast %191 : vector<1x32xf32> to vector<8x32xf32>
    %213 = arith.addf %211, %212 : vector<8x32xf32>
    %214 = vector.extract_strided_slice %117 {offsets = [6, 0], sizes = [1, 32], strides = [1, 1]} : vector<8x128xf32> to vector<1x32xf32>
    %215 = vector.broadcast %214 : vector<1x32xf32> to vector<8x32xf32>
    %216 = arith.mulf %213, %215 : vector<8x32xf32>
    %cst_69 = arith.constant dense<0.000000e+00> : vector<8xf32>
    %217 = vector.multi_reduction <add>, %216, %cst_69 [1] : vector<8x32xf32> to vector<8xf32>
    %218 = vector.shape_cast %217 : vector<8xf32> to vector<8x1xf32>
    %219 = vector.extract_strided_slice %117 {offsets = [7, 0], sizes = [1, 1], strides = [1, 1]} : vector<8x128xf32> to vector<1x1xf32>
    %220 = vector.broadcast %219 : vector<1x1xf32> to vector<8x1xf32>
    %221 = arith.addf %218, %220 : vector<8x1xf32>
    %222 = arith.mulf %221, %6 : vector<8x1xf32>
    %cst_70 = arith.constant 0.000000e+00 : f32
    %223 = vector.broadcast %cst_70 : f32 to vector<8x1xf32>
    %224 = arith.addf %222, %223 : vector<8x1xf32>
    %c0_71 = arith.constant 0 : index
    %c0_72 = arith.constant 0 : index
    %225 = vector.load %arg6[%c0_71, %c0_72] : memref<1x8xf32, #tpu.memory_space<vmem>>, vector<1x7xf32>
    %226 = vector.broadcast %224 : vector<8x1xf32> to vector<8x7xf32>
    %227 = vector.broadcast %225 : vector<1x7xf32> to vector<8x7xf32>
    %228 = arith.cmpf ogt, %226, %227 : vector<8x7xf32>
    %229 = arith.extui %228 : vector<8x7xi1> to vector<8x7xi32>
    %cst_73 = arith.constant dense<0> : vector<8xi32>
    %230 = vector.multi_reduction <add>, %229, %cst_73 [1] : vector<8x7xi32> to vector<8xi32>
    %231 = vector.shape_cast %230 : vector<8xi32> to vector<8x1xi32>
    %232 = tpu.iota {dimensions = array<i32: 1>} : vector<1x8xi32>
    %233 = vector.broadcast %231 : vector<8x1xi32> to vector<8x8xi32>
    %234 = vector.broadcast %232 : vector<1x8xi32> to vector<8x8xi32>
    %235 = arith.cmpi eq, %233, %234 : vector<8x8xi32>
    %236 = arith.extui %235 : vector<8x8xi1> to vector<8x8xi32>
    %237 = arith.sitofp %236 : vector<8x8xi32> to vector<8x8xf32>
    %c0_74 = arith.constant 0 : index
    %c0_75 = arith.constant 0 : index
    %238 = vector.load %arg7[%c0_74, %c0_75] : memref<8x32xf32, #tpu.memory_space<vmem>>, vector<8x32xf32>
    %cst_76 = arith.constant dense<0.000000e+00> : vector<8x32xf32>
    %239 = tpu.matmul %237, %238, %cst_76 {dimension_numbers = #tpu.dot_dimension_numbers<[1], [0], [0], [1], [0, 0, 1, 1], [], []>} : vector<8x8xf32>, vector<8x32xf32>, vector<8x32xf32> -> vector<8x32xf32>
    %240 = arith.addf %8, %239 : vector<8x32xf32>
    %c2 = arith.constant 2 : index
    %c0_77 = arith.constant 0 : index
    %c0_78 = arith.constant 0 : index
    %241 = vector.load %arg5[%c2, %c0_77, %c0_78] : memref<3x8x128xf32, #tpu.memory_space<vmem>>, vector<1x8x128xf32>
    %242 = vector.shape_cast %241 : vector<1x8x128xf32> to vector<8x128xf32>
    %c2_79 = arith.constant 2 : index
    %c0_80 = arith.constant 0 : index
    %c0_81 = arith.constant 0 : index
    %243 = vector.load %arg3[%c2_79, %c0_80, %c0_81] : memref<3x96x32xf32, #tpu.memory_space<vmem>>, vector<1x96x32xf32>
    %244 = vector.shape_cast %243 : vector<1x96x32xf32> to vector<96x32xf32>
    %245 = vector.extract_strided_slice %242 {offsets = [0, 0], sizes = [1, 32], strides = [1, 1]} : vector<8x128xf32> to vector<1x32xf32>
    %246 = tpu.iota {dimensions = array<i32: 0>} : vector<8x1xi32>
    %c1_i32_82 = arith.constant 1 : i32
    %247 = tpu.dynamic_rotate %240 by %c1_i32_82 dim 0 : vector<8x32xf32>, i32 -> vector<8x32xf32>
    %c1_i32_83 = arith.constant 1 : i32
    %248 = vector.broadcast %c1_i32_83 : i32 to vector<8x1xi32>
    %249 = arith.cmpi sge, %246, %248 : vector<8x1xi32>
    %cst_84 = arith.constant 0.000000e+00 : f32
    %250 = vector.shape_cast %249 : vector<8x1xi1> to vector<8x1xi1>
    %251 = vector.broadcast %250 : vector<8x1xi1> to vector<8x32xi1>
    %252 = vector.broadcast %cst_84 : f32 to vector<8x32xf32>
    %253 = arith.select %251, %247, %252 : vector<8x32xi1>, vector<8x32xf32>
    %c7_i32_85 = arith.constant 7 : i32
    %254 = tpu.dynamic_rotate %240 by %c7_i32_85 dim 0 : vector<8x32xf32>, i32 -> vector<8x32xf32>
    %c7_i32_86 = arith.constant 7 : i32
    %255 = vector.broadcast %c7_i32_86 : i32 to vector<8x1xi32>
    %256 = arith.cmpi slt, %246, %255 : vector<8x1xi32>
    %cst_87 = arith.constant 0.000000e+00 : f32
    %257 = vector.shape_cast %256 : vector<8x1xi1> to vector<8x1xi1>
    %258 = vector.broadcast %257 : vector<8x1xi1> to vector<8x32xi1>
    %259 = vector.broadcast %cst_87 : f32 to vector<8x32xf32>
    %260 = arith.select %258, %254, %259 : vector<8x32xi1>, vector<8x32xf32>
    %261 = tpu.concatenate %253, %240, %260 in 1 : vector<8x32xf32>, vector<8x32xf32>, vector<8x32xf32> -> vector<8x96xf32>
    %cst_88 = arith.constant dense<0.000000e+00> : vector<8x32xf32>
    %262 = tpu.matmul %261, %244, %cst_88 {dimension_numbers = #tpu.dot_dimension_numbers<[1], [0], [0], [1], [0, 0, 1, 1], [], []>} : vector<8x96xf32>, vector<96x32xf32>, vector<8x32xf32> -> vector<8x32xf32>
    %263 = vector.broadcast %245 : vector<1x32xf32> to vector<8x32xf32>
    %264 = arith.addf %262, %263 : vector<8x32xf32>
    %cst_89 = arith.constant 0.000000e+00 : f32
    %265 = vector.broadcast %cst_89 : f32 to vector<8x32xf32>
    %266 = arith.maximumf %264, %265 : vector<8x32xf32>
    %267 = vector.extract_strided_slice %242 {offsets = [1, 0], sizes = [1, 32], strides = [1, 1]} : vector<8x128xf32> to vector<1x32xf32>
    %268 = vector.extract_strided_slice %242 {offsets = [2, 0], sizes = [1, 32], strides = [1, 1]} : vector<8x128xf32> to vector<1x32xf32>
    %cst_90 = arith.constant dense<0.000000e+00> : vector<8xf32>
    %269 = vector.multi_reduction <add>, %266, %cst_90 [1] : vector<8x32xf32> to vector<8xf32>
    %270 = vector.shape_cast %269 : vector<8xf32> to vector<8x1xf32>
    %cst_91 = arith.constant 3.200000e+01 : f32
    %271 = vector.broadcast %cst_91 : f32 to vector<8x1xf32>
    %272 = arith.divf %270, %271 : vector<8x1xf32>
    %273 = vector.broadcast %272 : vector<8x1xf32> to vector<8x32xf32>
    %274 = arith.subf %266, %273 : vector<8x32xf32>
    %275 = arith.mulf %274, %274 : vector<8x32xf32>
    %cst_92 = arith.constant dense<0.000000e+00> : vector<8xf32>
    %276 = vector.multi_reduction <add>, %275, %cst_92 [1] : vector<8x32xf32> to vector<8xf32>
    %277 = vector.shape_cast %276 : vector<8xf32> to vector<8x1xf32>
    %cst_93 = arith.constant 3.200000e+01 : f32
    %278 = vector.broadcast %cst_93 : f32 to vector<8x1xf32>
    %279 = arith.divf %277, %278 : vector<8x1xf32>
    %280 = vector.broadcast %272 : vector<8x1xf32> to vector<8x32xf32>
    %281 = arith.subf %266, %280 : vector<8x32xf32>
    %cst_94 = arith.constant 9.99999974E-6 : f32
    %282 = vector.broadcast %cst_94 : f32 to vector<8x1xf32>
    %283 = arith.addf %279, %282 : vector<8x1xf32>
    %284 = math.rsqrt %283 : vector<8x1xf32>
    %285 = vector.broadcast %284 : vector<8x1xf32> to vector<8x32xf32>
    %286 = arith.mulf %281, %285 : vector<8x32xf32>
    %287 = vector.broadcast %267 : vector<1x32xf32> to vector<8x32xf32>
    %288 = arith.mulf %286, %287 : vector<8x32xf32>
    %289 = vector.broadcast %268 : vector<1x32xf32> to vector<8x32xf32>
    %290 = arith.addf %288, %289 : vector<8x32xf32>
    %c2_95 = arith.constant 2 : index
    %c0_96 = arith.constant 0 : index
    %c0_97 = arith.constant 0 : index
    %291 = vector.load %arg4[%c2_95, %c0_96, %c0_97] : memref<3x96x32xf32, #tpu.memory_space<vmem>>, vector<1x96x32xf32>
    %292 = vector.shape_cast %291 : vector<1x96x32xf32> to vector<96x32xf32>
    %293 = vector.extract_strided_slice %242 {offsets = [3, 0], sizes = [1, 32], strides = [1, 1]} : vector<8x128xf32> to vector<1x32xf32>
    %294 = tpu.iota {dimensions = array<i32: 0>} : vector<8x1xi32>
    %c1_i32_98 = arith.constant 1 : i32
    %295 = tpu.dynamic_rotate %290 by %c1_i32_98 dim 0 : vector<8x32xf32>, i32 -> vector<8x32xf32>
    %c1_i32_99 = arith.constant 1 : i32
    %296 = vector.broadcast %c1_i32_99 : i32 to vector<8x1xi32>
    %297 = arith.cmpi sge, %294, %296 : vector<8x1xi32>
    %cst_100 = arith.constant 0.000000e+00 : f32
    %298 = vector.shape_cast %297 : vector<8x1xi1> to vector<8x1xi1>
    %299 = vector.broadcast %298 : vector<8x1xi1> to vector<8x32xi1>
    %300 = vector.broadcast %cst_100 : f32 to vector<8x32xf32>
    %301 = arith.select %299, %295, %300 : vector<8x32xi1>, vector<8x32xf32>
    %c7_i32_101 = arith.constant 7 : i32
    %302 = tpu.dynamic_rotate %290 by %c7_i32_101 dim 0 : vector<8x32xf32>, i32 -> vector<8x32xf32>
    %c7_i32_102 = arith.constant 7 : i32
    %303 = vector.broadcast %c7_i32_102 : i32 to vector<8x1xi32>
    %304 = arith.cmpi slt, %294, %303 : vector<8x1xi32>
    %cst_103 = arith.constant 0.000000e+00 : f32
    %305 = vector.shape_cast %304 : vector<8x1xi1> to vector<8x1xi1>
    %306 = vector.broadcast %305 : vector<8x1xi1> to vector<8x32xi1>
    %307 = vector.broadcast %cst_103 : f32 to vector<8x32xf32>
    %308 = arith.select %306, %302, %307 : vector<8x32xi1>, vector<8x32xf32>
    %309 = tpu.concatenate %301, %290, %308 in 1 : vector<8x32xf32>, vector<8x32xf32>, vector<8x32xf32> -> vector<8x96xf32>
    %cst_104 = arith.constant dense<0.000000e+00> : vector<8x32xf32>
    %310 = tpu.matmul %309, %292, %cst_104 {dimension_numbers = #tpu.dot_dimension_numbers<[1], [0], [0], [1], [0, 0, 1, 1], [], []>} : vector<8x96xf32>, vector<96x32xf32>, vector<8x32xf32> -> vector<8x32xf32>
    %311 = vector.broadcast %293 : vector<1x32xf32> to vector<8x32xf32>
    %312 = arith.addf %310, %311 : vector<8x32xf32>
    %cst_105 = arith.constant 0.000000e+00 : f32
    %313 = vector.broadcast %cst_105 : f32 to vector<8x32xf32>
    %314 = arith.maximumf %312, %313 : vector<8x32xf32>
    %315 = vector.extract_strided_slice %242 {offsets = [4, 0], sizes = [1, 32], strides = [1, 1]} : vector<8x128xf32> to vector<1x32xf32>
    %316 = vector.extract_strided_slice %242 {offsets = [5, 0], sizes = [1, 32], strides = [1, 1]} : vector<8x128xf32> to vector<1x32xf32>
    %cst_106 = arith.constant dense<0.000000e+00> : vector<8xf32>
    %317 = vector.multi_reduction <add>, %314, %cst_106 [1] : vector<8x32xf32> to vector<8xf32>
    %318 = vector.shape_cast %317 : vector<8xf32> to vector<8x1xf32>
    %cst_107 = arith.constant 3.200000e+01 : f32
    %319 = vector.broadcast %cst_107 : f32 to vector<8x1xf32>
    %320 = arith.divf %318, %319 : vector<8x1xf32>
    %321 = vector.broadcast %320 : vector<8x1xf32> to vector<8x32xf32>
    %322 = arith.subf %314, %321 : vector<8x32xf32>
    %323 = arith.mulf %322, %322 : vector<8x32xf32>
    %cst_108 = arith.constant dense<0.000000e+00> : vector<8xf32>
    %324 = vector.multi_reduction <add>, %323, %cst_108 [1] : vector<8x32xf32> to vector<8xf32>
    %325 = vector.shape_cast %324 : vector<8xf32> to vector<8x1xf32>
    %cst_109 = arith.constant 3.200000e+01 : f32
    %326 = vector.broadcast %cst_109 : f32 to vector<8x1xf32>
    %327 = arith.divf %325, %326 : vector<8x1xf32>
    %328 = vector.broadcast %320 : vector<8x1xf32> to vector<8x32xf32>
    %329 = arith.subf %314, %328 : vector<8x32xf32>
    %cst_110 = arith.constant 9.99999974E-6 : f32
    %330 = vector.broadcast %cst_110 : f32 to vector<8x1xf32>
    %331 = arith.addf %327, %330 : vector<8x1xf32>
    %332 = math.rsqrt %331 : vector<8x1xf32>
    %333 = vector.broadcast %332 : vector<8x1xf32> to vector<8x32xf32>
    %334 = arith.mulf %329, %333 : vector<8x32xf32>
    %335 = vector.broadcast %315 : vector<1x32xf32> to vector<8x32xf32>
    %336 = arith.mulf %334, %335 : vector<8x32xf32>
    %337 = vector.broadcast %316 : vector<1x32xf32> to vector<8x32xf32>
    %338 = arith.addf %336, %337 : vector<8x32xf32>
    %339 = vector.extract_strided_slice %242 {offsets = [6, 0], sizes = [1, 32], strides = [1, 1]} : vector<8x128xf32> to vector<1x32xf32>
    %340 = vector.broadcast %339 : vector<1x32xf32> to vector<8x32xf32>
    %341 = arith.mulf %338, %340 : vector<8x32xf32>
    %cst_111 = arith.constant dense<0.000000e+00> : vector<8xf32>
    %342 = vector.multi_reduction <add>, %341, %cst_111 [1] : vector<8x32xf32> to vector<8xf32>
    %343 = vector.shape_cast %342 : vector<8xf32> to vector<8x1xf32>
    %344 = vector.extract_strided_slice %242 {offsets = [7, 0], sizes = [1, 1], strides = [1, 1]} : vector<8x128xf32> to vector<1x1xf32>
    %345 = vector.broadcast %344 : vector<1x1xf32> to vector<8x1xf32>
    %346 = arith.addf %343, %345 : vector<8x1xf32>
    %347 = arith.mulf %346, %6 : vector<8x1xf32>
    %cst_112 = arith.constant 0.000000e+00 : f32
    %348 = vector.broadcast %cst_112 : f32 to vector<8x1xf32>
    %349 = arith.addf %347, %348 : vector<8x1xf32>
    %c0_113 = arith.constant 0 : index
    %c0_114 = arith.constant 0 : index
    %350 = vector.load %arg8[%c0_113, %c0_114] : memref<1x8xf32, #tpu.memory_space<vmem>>, vector<1x7xf32>
    %351 = vector.broadcast %349 : vector<8x1xf32> to vector<8x7xf32>
    %352 = vector.broadcast %350 : vector<1x7xf32> to vector<8x7xf32>
    %353 = arith.cmpf ogt, %351, %352 : vector<8x7xf32>
    %354 = arith.extui %353 : vector<8x7xi1> to vector<8x7xi32>
    %cst_115 = arith.constant dense<0> : vector<8xi32>
    %355 = vector.multi_reduction <add>, %354, %cst_115 [1] : vector<8x7xi32> to vector<8xi32>
    %356 = vector.shape_cast %355 : vector<8xi32> to vector<8x1xi32>
    %357 = tpu.iota {dimensions = array<i32: 1>} : vector<1x8xi32>
    %358 = vector.broadcast %356 : vector<8x1xi32> to vector<8x8xi32>
    %359 = vector.broadcast %357 : vector<1x8xi32> to vector<8x8xi32>
    %360 = arith.cmpi eq, %358, %359 : vector<8x8xi32>
    %361 = arith.extui %360 : vector<8x8xi1> to vector<8x8xi32>
    %362 = arith.sitofp %361 : vector<8x8xi32> to vector<8x8xf32>
    %c0_116 = arith.constant 0 : index
    %c0_117 = arith.constant 0 : index
    %363 = vector.load %arg9[%c0_116, %c0_117] : memref<8x32xf32, #tpu.memory_space<vmem>>, vector<8x32xf32>
    %cst_118 = arith.constant dense<0.000000e+00> : vector<8x32xf32>
    %364 = tpu.matmul %362, %363, %cst_118 {dimension_numbers = #tpu.dot_dimension_numbers<[1], [0], [0], [1], [0, 0, 1, 1], [], []>} : vector<8x8xf32>, vector<8x32xf32>, vector<8x32xf32> -> vector<8x32xf32>
    %365 = arith.addf %240, %364 : vector<8x32xf32>
    %c0_119 = arith.constant 0 : index
    %c0_120 = arith.constant 0 : index
    %c0_121 = arith.constant 0 : index
    %366 = vector.load %arg10[%c0_119, %c0_120, %c0_121] : memref<1x8x32xf32, #tpu.memory_space<vmem>>, vector<1x8x32xf32>
    %367 = vector.shape_cast %366 : vector<1x8x32xf32> to vector<8x32xf32>
    %368 = vector.shape_cast %365 : vector<8x32xf32> to vector<1x8x32xf32>
    tpu.vector_store %arg10[%c0_119, %c0_120, %c0_121], %368 {strides = array<i32>} : memref<1x8x32xf32, #tpu.memory_space<vmem>>, vector<1x8x32xf32>,
    %369 = tpu.iota {dimensions = array<i32: 1>} : vector<1x128xi32>
    %c0_i32 = arith.constant 0 : i32
    %370 = vector.broadcast %c0_i32 : i32 to vector<1x128xi32>
    %371 = arith.cmpi eq, %369, %370 : vector<1x128xi32>
    %372 = arith.extui %371 : vector<1x128xi1> to vector<1x128xi32>
    %373 = arith.sitofp %372 : vector<1x128xi32> to vector<1x128xf32>
    %374 = vector.broadcast %115 : vector<8x1xf32> to vector<8x128xf32>
    %375 = vector.broadcast %373 : vector<1x128xf32> to vector<8x128xf32>
    %376 = arith.mulf %374, %375 : vector<8x128xf32>
    %c1_i32_122 = arith.constant 1 : i32
    %377 = vector.broadcast %c1_i32_122 : i32 to vector<1x128xi32>
    %378 = arith.cmpi eq, %369, %377 : vector<1x128xi32>
    %379 = arith.extui %378 : vector<1x128xi1> to vector<1x128xi32>
    %380 = arith.sitofp %379 : vector<1x128xi32> to vector<1x128xf32>
    %381 = vector.broadcast %224 : vector<8x1xf32> to vector<8x128xf32>
    %382 = vector.broadcast %380 : vector<1x128xf32> to vector<8x128xf32>
    %383 = arith.mulf %381, %382 : vector<8x128xf32>
    %384 = arith.addf %376, %383 : vector<8x128xf32>
    %c2_i32 = arith.constant 2 : i32
    %385 = vector.broadcast %c2_i32 : i32 to vector<1x128xi32>
    %386 = arith.cmpi eq, %369, %385 : vector<1x128xi32>
    %387 = arith.extui %386 : vector<1x128xi1> to vector<1x128xi32>
    %388 = arith.sitofp %387 : vector<1x128xi32> to vector<1x128xf32>
    %389 = vector.broadcast %349 : vector<8x1xf32> to vector<8x128xf32>
    %390 = vector.broadcast %388 : vector<1x128xf32> to vector<8x128xf32>
    %391 = arith.mulf %389, %390 : vector<8x128xf32>
    %392 = arith.addf %384, %391 : vector<8x128xf32>
    %c0_123 = arith.constant 0 : index
    %c0_124 = arith.constant 0 : index
    %c0_125 = arith.constant 0 : index
    %393 = vector.load %arg11[%c0_123, %c0_124, %c0_125] : memref<1x8x128xf32, #tpu.memory_space<vmem>>, vector<1x8x128xf32>
    %394 = vector.shape_cast %393 : vector<1x8x128xf32> to vector<8x128xf32>
    %395 = vector.shape_cast %392 : vector<8x128xf32> to vector<1x8x128xf32>
    tpu.vector_store %arg11[%c0_123, %c0_124, %c0_125], %395 {strides = array<i32>} : memref<1x8x128xf32, #tpu.memory_space<vmem>>, vector<1x8x128xf32>,
    return
  }
  func.func @transform_0(%arg0: i32, %arg1: memref<2xi32, #tpu.memory_space<smem>>) -> (i32, i32, i32) {
    %c0_i32 = arith.constant 0 : i32
    %c0_i32_0 = arith.constant 0 : i32
    %c0_i32_1 = arith.constant 0 : i32
    return %arg0, %c0_i32, %c0_i32_0 : i32, i32, i32
  }
  func.func @transform_1(%arg0: i32, %arg1: memref<2xi32, #tpu.memory_space<smem>>) -> (i32, i32, i32) {
    %c0_i32 = arith.constant 0 : i32
    %c0_i32_0 = arith.constant 0 : i32
    %c0_i32_1 = arith.constant 0 : i32
    %c0_i32_2 = arith.constant 0 : i32
    return %c0_i32, %c0_i32_0, %c0_i32_1 : i32, i32, i32
  }
  func.func @transform_2(%arg0: i32, %arg1: memref<2xi32, #tpu.memory_space<smem>>) -> (i32, i32, i32) {
    %c0_i32 = arith.constant 0 : i32
    %c0_i32_0 = arith.constant 0 : i32
    %c0_i32_1 = arith.constant 0 : i32
    %c0_i32_2 = arith.constant 0 : i32
    return %c0_i32, %c0_i32_0, %c0_i32_1 : i32, i32, i32
  }
  func.func @transform_3(%arg0: i32, %arg1: memref<2xi32, #tpu.memory_space<smem>>) -> (i32, i32, i32) {
    %c0_i32 = arith.constant 0 : i32
    %c0_i32_0 = arith.constant 0 : i32
    %c0_i32_1 = arith.constant 0 : i32
    %c0_i32_2 = arith.constant 0 : i32
    return %c0_i32, %c0_i32_0, %c0_i32_1 : i32, i32, i32
  }
  func.func @transform_4(%arg0: i32, %arg1: memref<2xi32, #tpu.memory_space<smem>>) -> (i32, i32) {
    %c0_i32 = arith.constant 0 : i32
    %c0_i32_0 = arith.constant 0 : i32
    %c0_i32_1 = arith.constant 0 : i32
    return %c0_i32, %c0_i32_0 : i32, i32
  }
  func.func @transform_5(%arg0: i32, %arg1: memref<2xi32, #tpu.memory_space<smem>>) -> (i32, i32) {
    %c0_i32 = arith.constant 0 : i32
    %c0_i32_0 = arith.constant 0 : i32
    %c0_i32_1 = arith.constant 0 : i32
    return %c0_i32, %c0_i32_0 : i32, i32
  }
  func.func @transform_6(%arg0: i32, %arg1: memref<2xi32, #tpu.memory_space<smem>>) -> (i32, i32) {
    %c0_i32 = arith.constant 0 : i32
    %c0_i32_0 = arith.constant 0 : i32
    %c0_i32_1 = arith.constant 0 : i32
    return %c0_i32, %c0_i32_0 : i32, i32
  }
  func.func @transform_7(%arg0: i32, %arg1: memref<2xi32, #tpu.memory_space<smem>>) -> (i32, i32) {
    %c0_i32 = arith.constant 0 : i32
    %c0_i32_0 = arith.constant 0 : i32
    %c0_i32_1 = arith.constant 0 : i32
    return %c0_i32, %c0_i32_0 : i32, i32
  }
  func.func @transform_8(%arg0: i32, %arg1: memref<2xi32, #tpu.memory_space<smem>>) -> (i32, i32, i32) {
    %c0_i32 = arith.constant 0 : i32
    %c0_i32_0 = arith.constant 0 : i32
    %c0_i32_1 = arith.constant 0 : i32
    return %arg0, %c0_i32, %c0_i32_0 : i32, i32, i32
  }
  func.func @transform_9(%arg0: i32, %arg1: memref<2xi32, #tpu.memory_space<smem>>) -> (i32, i32, i32) {
    %c0_i32 = arith.constant 0 : i32
    %c0_i32_0 = arith.constant 0 : i32
    %c0_i32_1 = arith.constant 0 : i32
    return %arg0, %c0_i32, %c0_i32_0 : i32, i32, i32
  }
}

module attributes {stable_mosaic.version = 11 : i64} {
  func.func @_decoder_stack_kernel(%arg0: i32, %arg1: memref<2xi32, #tpu.memory_space<smem>>, %arg2: memref<1x40x32xf32, #tpu.memory_space<vmem>>, %arg3: memref<2x32x96xf32, #tpu.memory_space<vmem>>, %arg4: memref<2x32x32xf32, #tpu.memory_space<vmem>>, %arg5: memref<2x96x64xf32, #tpu.memory_space<vmem>>, %arg6: memref<2x64x32xf32, #tpu.memory_space<vmem>>, %arg7: memref<2x8x128xf32, #tpu.memory_space<vmem>>, %arg8: memref<32x128xf32, #tpu.memory_space<vmem>>, %arg9: memref<1x128xf32, #tpu.memory_space<vmem>>, %arg10: memref<5x160x128xf32, #tpu.memory_space<vmem>>, %arg11: memref<5x1x128xf32, #tpu.memory_space<vmem>>, %arg12: memref<1x40x128xf32, #tpu.memory_space<vmem>>, %arg13: memref<1x40x128xf32, #tpu.memory_space<vmem>>) attributes {dimension_semantics = [#tpu.dimension_semantics<parallel>], iteration_bounds = array<i64: 2>, scalar_prefetch = 1 : i64, scratch_operands = 0 : i64, tpu.core_type = #tpu.core_type<tc>, window_params = [{transform_indices = @transform_0, window_bounds = array<i64: 1, 40, 32>}, {pipeline_mode = #tpu.pipeline_mode<synchronous>, transform_indices = @transform_1, window_bounds = array<i64: 2, 32, 96>}, {pipeline_mode = #tpu.pipeline_mode<synchronous>, transform_indices = @transform_2, window_bounds = array<i64: 2, 32, 32>}, {pipeline_mode = #tpu.pipeline_mode<synchronous>, transform_indices = @transform_3, window_bounds = array<i64: 2, 96, 64>}, {pipeline_mode = #tpu.pipeline_mode<synchronous>, transform_indices = @transform_4, window_bounds = array<i64: 2, 64, 32>}, {pipeline_mode = #tpu.pipeline_mode<synchronous>, transform_indices = @transform_5, window_bounds = array<i64: 2, 8, 128>}, {pipeline_mode = #tpu.pipeline_mode<synchronous>, transform_indices = @transform_6, window_bounds = array<i64: 32, 128>}, {pipeline_mode = #tpu.pipeline_mode<synchronous>, transform_indices = @transform_7, window_bounds = array<i64: 1, 128>}, {pipeline_mode = #tpu.pipeline_mode<synchronous>, transform_indices = @transform_8, window_bounds = array<i64: 5, 160, 128>}, {pipeline_mode = #tpu.pipeline_mode<synchronous>, transform_indices = @transform_9, window_bounds = array<i64: 5, 1, 128>}, {transform_indices = @transform_10, window_bounds = array<i64: 1, 40, 128>}, {transform_indices = @transform_11, window_bounds = array<i64: 1, 40, 128>}]} {
    %0 = arith.index_cast %arg0 : i32 to index
    %1 = memref.load %arg1[%0] : memref<2xi32, #tpu.memory_space<smem>>
    %2 = tpu.iota {dimensions = array<i32: 0>} : vector<40x1xi32>
    %3 = tpu.iota {dimensions = array<i32: 1>} : vector<1x40xi32>
    %4 = vector.broadcast %1 : i32 to vector<40x1xi32>
    %5 = arith.cmpi slt, %2, %4 : vector<40x1xi32>
    %6 = arith.extui %5 : vector<40x1xi1> to vector<40x1xi32>
    %7 = arith.sitofp %6 : vector<40x1xi32> to vector<40x1xf32>
    %8 = vector.broadcast %1 : i32 to vector<1x40xi32>
    %9 = arith.cmpi slt, %3, %8 : vector<1x40xi32>
    %cst = arith.constant 0.000000e+00 : f32
    %cst_0 = arith.constant -1.000000e+09 : f32
    %10 = vector.broadcast %cst : f32 to vector<1x40xf32>
    %11 = vector.broadcast %cst_0 : f32 to vector<1x40xf32>
    %12 = arith.select %9, %10, %11 : vector<1x40xi1>, vector<1x40xf32>
    %c0 = arith.constant 0 : index
    %c0_1 = arith.constant 0 : index
    %c0_2 = arith.constant 0 : index
    %13 = vector.load %arg2[%c0, %c0_1, %c0_2] : memref<1x40x32xf32, #tpu.memory_space<vmem>>, vector<1x40x32xf32>
    %14 = vector.shape_cast %13 : vector<1x40x32xf32> to vector<40x32xf32>
    %c0_3 = arith.constant 0 : index
    %c0_4 = arith.constant 0 : index
    %c0_5 = arith.constant 0 : index
    %15 = vector.load %arg7[%c0_3, %c0_4, %c0_5] : memref<2x8x128xf32, #tpu.memory_space<vmem>>, vector<1x8x128xf32>
    %16 = vector.shape_cast %15 : vector<1x8x128xf32> to vector<8x128xf32>
    %c0_6 = arith.constant 0 : index
    %c0_7 = arith.constant 0 : index
    %c0_8 = arith.constant 0 : index
    %17 = vector.load %arg3[%c0_6, %c0_7, %c0_8] : memref<2x32x96xf32, #tpu.memory_space<vmem>>, vector<1x32x96xf32>
    %18 = vector.shape_cast %17 : vector<1x32x96xf32> to vector<32x96xf32>
    %19 = vector.extract_strided_slice %16 {offsets = [0, 0], sizes = [1, 96], strides = [1, 1]} : vector<8x128xf32> to vector<1x96xf32>
    %c0_9 = arith.constant 0 : index
    %c0_10 = arith.constant 0 : index
    %c0_11 = arith.constant 0 : index
    %20 = vector.load %arg4[%c0_9, %c0_10, %c0_11] : memref<2x32x32xf32, #tpu.memory_space<vmem>>, vector<1x32x32xf32>
    %21 = vector.shape_cast %20 : vector<1x32x32xf32> to vector<32x32xf32>
    %22 = vector.extract_strided_slice %16 {offsets = [1, 0], sizes = [1, 32], strides = [1, 1]} : vector<8x128xf32> to vector<1x32xf32>
    %23 = vector.extract_strided_slice %16 {offsets = [2, 0], sizes = [1, 32], strides = [1, 1]} : vector<8x128xf32> to vector<1x32xf32>
    %24 = vector.extract_strided_slice %16 {offsets = [3, 0], sizes = [1, 32], strides = [1, 1]} : vector<8x128xf32> to vector<1x32xf32>
    %c0_12 = arith.constant 0 : index
    %c0_13 = arith.constant 0 : index
    %c0_14 = arith.constant 0 : index
    %25 = vector.load %arg5[%c0_12, %c0_13, %c0_14] : memref<2x96x64xf32, #tpu.memory_space<vmem>>, vector<1x96x64xf32>
    %26 = vector.shape_cast %25 : vector<1x96x64xf32> to vector<96x64xf32>
    %27 = vector.extract_strided_slice %16 {offsets = [4, 0], sizes = [1, 64], strides = [1, 1]} : vector<8x128xf32> to vector<1x64xf32>
    %c0_15 = arith.constant 0 : index
    %c0_16 = arith.constant 0 : index
    %c0_17 = arith.constant 0 : index
    %28 = vector.load %arg6[%c0_15, %c0_16, %c0_17] : memref<2x64x32xf32, #tpu.memory_space<vmem>>, vector<1x64x32xf32>
    %29 = vector.shape_cast %28 : vector<1x64x32xf32> to vector<64x32xf32>
    %30 = vector.extract_strided_slice %16 {offsets = [5, 0], sizes = [1, 32], strides = [1, 1]} : vector<8x128xf32> to vector<1x32xf32>
    %31 = vector.extract_strided_slice %16 {offsets = [6, 0], sizes = [1, 32], strides = [1, 1]} : vector<8x128xf32> to vector<1x32xf32>
    %32 = vector.extract_strided_slice %16 {offsets = [7, 0], sizes = [1, 32], strides = [1, 1]} : vector<8x128xf32> to vector<1x32xf32>
    %cst_18 = arith.constant dense<0.000000e+00> : vector<40x96xf32>
    %33 = tpu.matmul %14, %18, %cst_18 {dimension_numbers = #tpu.dot_dimension_numbers<[1], [0], [0], [1], [0, 0, 1, 1], [], []>} : vector<40x32xf32>, vector<32x96xf32>, vector<40x96xf32> -> vector<40x96xf32>
    %34 = vector.broadcast %19 : vector<1x96xf32> to vector<40x96xf32>
    %35 = arith.addf %33, %34 : vector<40x96xf32>
    %36 = vector.extract_strided_slice %35 {offsets = [0, 0], sizes = [40, 16], strides = [1, 1]} : vector<40x96xf32> to vector<40x16xf32>
    %37 = vector.extract_strided_slice %35 {offsets = [0, 32], sizes = [40, 16], strides = [1, 1]} : vector<40x96xf32> to vector<40x16xf32>
    %38 = vector.extract_strided_slice %35 {offsets = [0, 64], sizes = [40, 16], strides = [1, 1]} : vector<40x96xf32> to vector<40x16xf32>
    %cst_19 = arith.constant dense<0.000000e+00> : vector<40x40xf32>
    %39 = tpu.matmul %36, %37, %cst_19 {dimension_numbers = #tpu.dot_dimension_numbers<[1], [1], [0], [0], [0, 0, 1, 0], [], []>} : vector<40x16xf32>, vector<40x16xf32>, vector<40x40xf32> -> vector<40x40xf32>
    %cst_20 = arith.constant 2.500000e-01 : f32
    %40 = vector.broadcast %cst_20 : f32 to vector<40x40xf32>
    %41 = arith.mulf %39, %40 : vector<40x40xf32>
    %42 = vector.broadcast %12 : vector<1x40xf32> to vector<40x40xf32>
    %43 = arith.addf %41, %42 : vector<40x40xf32>
    %cst_21 = arith.constant dense<0xFF800000> : vector<40xf32>
    %44 = vector.multi_reduction <maximumf>, %43, %cst_21 [1] : vector<40x40xf32> to vector<40xf32>
    %45 = vector.shape_cast %44 : vector<40xf32> to vector<40x1xf32>
    %46 = vector.broadcast %45 : vector<40x1xf32> to vector<40x40xf32>
    %47 = arith.subf %43, %46 : vector<40x40xf32>
    %48 = math.exp %47 : vector<40x40xf32>
    %cst_22 = arith.constant dense<0.000000e+00> : vector<40xf32>
    %49 = vector.multi_reduction <add>, %48, %cst_22 [1] : vector<40x40xf32> to vector<40xf32>
    %50 = vector.shape_cast %49 : vector<40xf32> to vector<40x1xf32>
    %51 = tpu.reciprocal %50 {approx = true} : vector<40x1xf32> -> vector<40x1xf32>
    %52 = vector.broadcast %51 : vector<40x1xf32> to vector<40x40xf32>
    %53 = arith.mulf %48, %52 : vector<40x40xf32>
    %cst_23 = arith.constant dense<0.000000e+00> : vector<40x16xf32>
    %54 = tpu.matmul %53, %38, %cst_23 {dimension_numbers = #tpu.dot_dimension_numbers<[1], [0], [0], [1], [0, 0, 1, 1], [], []>} : vector<40x40xf32>, vector<40x16xf32>, vector<40x16xf32> -> vector<40x16xf32>
    %55 = vector.extract_strided_slice %35 {offsets = [0, 16], sizes = [40, 16], strides = [1, 1]} : vector<40x96xf32> to vector<40x16xf32>
    %56 = vector.extract_strided_slice %35 {offsets = [0, 48], sizes = [40, 16], strides = [1, 1]} : vector<40x96xf32> to vector<40x16xf32>
    %57 = vector.extract_strided_slice %35 {offsets = [0, 80], sizes = [40, 16], strides = [1, 1]} : vector<40x96xf32> to vector<40x16xf32>
    %cst_24 = arith.constant dense<0.000000e+00> : vector<40x40xf32>
    %58 = tpu.matmul %55, %56, %cst_24 {dimension_numbers = #tpu.dot_dimension_numbers<[1], [1], [0], [0], [0, 0, 1, 0], [], []>} : vector<40x16xf32>, vector<40x16xf32>, vector<40x40xf32> -> vector<40x40xf32>
    %cst_25 = arith.constant 2.500000e-01 : f32
    %59 = vector.broadcast %cst_25 : f32 to vector<40x40xf32>
    %60 = arith.mulf %58, %59 : vector<40x40xf32>
    %61 = vector.broadcast %12 : vector<1x40xf32> to vector<40x40xf32>
    %62 = arith.addf %60, %61 : vector<40x40xf32>
    %cst_26 = arith.constant dense<0xFF800000> : vector<40xf32>
    %63 = vector.multi_reduction <maximumf>, %62, %cst_26 [1] : vector<40x40xf32> to vector<40xf32>
    %64 = vector.shape_cast %63 : vector<40xf32> to vector<40x1xf32>
    %65 = vector.broadcast %64 : vector<40x1xf32> to vector<40x40xf32>
    %66 = arith.subf %62, %65 : vector<40x40xf32>
    %67 = math.exp %66 : vector<40x40xf32>
    %cst_27 = arith.constant dense<0.000000e+00> : vector<40xf32>
    %68 = vector.multi_reduction <add>, %67, %cst_27 [1] : vector<40x40xf32> to vector<40xf32>
    %69 = vector.shape_cast %68 : vector<40xf32> to vector<40x1xf32>
    %70 = tpu.reciprocal %69 {approx = true} : vector<40x1xf32> -> vector<40x1xf32>
    %71 = vector.broadcast %70 : vector<40x1xf32> to vector<40x40xf32>
    %72 = arith.mulf %67, %71 : vector<40x40xf32>
    %cst_28 = arith.constant dense<0.000000e+00> : vector<40x16xf32>
    %73 = tpu.matmul %72, %57, %cst_28 {dimension_numbers = #tpu.dot_dimension_numbers<[1], [0], [0], [1], [0, 0, 1, 1], [], []>} : vector<40x40xf32>, vector<40x16xf32>, vector<40x16xf32> -> vector<40x16xf32>
    %74 = tpu.concatenate %54, %73 in 1 : vector<40x16xf32>, vector<40x16xf32> -> vector<40x32xf32>
    %cst_29 = arith.constant dense<0.000000e+00> : vector<40x32xf32>
    %75 = tpu.matmul %74, %21, %cst_29 {dimension_numbers = #tpu.dot_dimension_numbers<[1], [0], [0], [1], [0, 0, 1, 1], [], []>} : vector<40x32xf32>, vector<32x32xf32>, vector<40x32xf32> -> vector<40x32xf32>
    %76 = vector.broadcast %22 : vector<1x32xf32> to vector<40x32xf32>
    %77 = arith.addf %75, %76 : vector<40x32xf32>
    %78 = arith.addf %77, %14 : vector<40x32xf32>
    %cst_30 = arith.constant dense<0.000000e+00> : vector<40xf32>
    %79 = vector.multi_reduction <add>, %78, %cst_30 [1] : vector<40x32xf32> to vector<40xf32>
    %80 = vector.shape_cast %79 : vector<40xf32> to vector<40x1xf32>
    %cst_31 = arith.constant 3.200000e+01 : f32
    %81 = vector.broadcast %cst_31 : f32 to vector<40x1xf32>
    %82 = arith.divf %80, %81 : vector<40x1xf32>
    %83 = vector.broadcast %82 : vector<40x1xf32> to vector<40x32xf32>
    %84 = arith.subf %78, %83 : vector<40x32xf32>
    %85 = arith.mulf %84, %84 : vector<40x32xf32>
    %cst_32 = arith.constant dense<0.000000e+00> : vector<40xf32>
    %86 = vector.multi_reduction <add>, %85, %cst_32 [1] : vector<40x32xf32> to vector<40xf32>
    %87 = vector.shape_cast %86 : vector<40xf32> to vector<40x1xf32>
    %cst_33 = arith.constant 3.200000e+01 : f32
    %88 = vector.broadcast %cst_33 : f32 to vector<40x1xf32>
    %89 = arith.divf %87, %88 : vector<40x1xf32>
    %90 = vector.broadcast %82 : vector<40x1xf32> to vector<40x32xf32>
    %91 = arith.subf %78, %90 : vector<40x32xf32>
    %cst_34 = arith.constant 9.99999974E-6 : f32
    %92 = vector.broadcast %cst_34 : f32 to vector<40x1xf32>
    %93 = arith.addf %89, %92 : vector<40x1xf32>
    %94 = math.rsqrt %93 : vector<40x1xf32>
    %95 = vector.broadcast %94 : vector<40x1xf32> to vector<40x32xf32>
    %96 = arith.mulf %91, %95 : vector<40x32xf32>
    %97 = vector.broadcast %23 : vector<1x32xf32> to vector<40x32xf32>
    %98 = arith.mulf %96, %97 : vector<40x32xf32>
    %99 = vector.broadcast %24 : vector<1x32xf32> to vector<40x32xf32>
    %100 = arith.addf %98, %99 : vector<40x32xf32>
    %101 = vector.broadcast %7 : vector<40x1xf32> to vector<40x32xf32>
    %102 = arith.mulf %100, %101 : vector<40x32xf32>
    %103 = tpu.iota {dimensions = array<i32: 0>} : vector<40x1xi32>
    %c1_i32 = arith.constant 1 : i32
    %104 = tpu.dynamic_rotate %102 by %c1_i32 dim 0 : vector<40x32xf32>, i32 -> vector<40x32xf32>
    %c1_i32_35 = arith.constant 1 : i32
    %105 = vector.broadcast %c1_i32_35 : i32 to vector<40x1xi32>
    %106 = arith.cmpi sge, %103, %105 : vector<40x1xi32>
    %cst_36 = arith.constant 0.000000e+00 : f32
    %107 = vector.shape_cast %106 : vector<40x1xi1> to vector<40x1xi1>
    %108 = vector.broadcast %107 : vector<40x1xi1> to vector<40x32xi1>
    %109 = vector.broadcast %cst_36 : f32 to vector<40x32xf32>
    %110 = arith.select %108, %104, %109 : vector<40x32xi1>, vector<40x32xf32>
    %c39_i32 = arith.constant 39 : i32
    %111 = tpu.dynamic_rotate %102 by %c39_i32 dim 0 : vector<40x32xf32>, i32 -> vector<40x32xf32>
    %c39_i32_37 = arith.constant 39 : i32
    %112 = vector.broadcast %c39_i32_37 : i32 to vector<40x1xi32>
    %113 = arith.cmpi slt, %103, %112 : vector<40x1xi32>
    %cst_38 = arith.constant 0.000000e+00 : f32
    %114 = vector.shape_cast %113 : vector<40x1xi1> to vector<40x1xi1>
    %115 = vector.broadcast %114 : vector<40x1xi1> to vector<40x32xi1>
    %116 = vector.broadcast %cst_38 : f32 to vector<40x32xf32>
    %117 = arith.select %115, %111, %116 : vector<40x32xi1>, vector<40x32xf32>
    %118 = tpu.concatenate %110, %102, %117 in 1 : vector<40x32xf32>, vector<40x32xf32>, vector<40x32xf32> -> vector<40x96xf32>
    %cst_39 = arith.constant dense<0.000000e+00> : vector<40x64xf32>
    %119 = tpu.matmul %118, %26, %cst_39 {dimension_numbers = #tpu.dot_dimension_numbers<[1], [0], [0], [1], [0, 0, 1, 1], [], []>} : vector<40x96xf32>, vector<96x64xf32>, vector<40x64xf32> -> vector<40x64xf32>
    %120 = vector.broadcast %27 : vector<1x64xf32> to vector<40x64xf32>
    %121 = arith.addf %119, %120 : vector<40x64xf32>
    %cst_40 = arith.constant 0.000000e+00 : f32
    %122 = vector.broadcast %cst_40 : f32 to vector<40x64xf32>
    %123 = arith.maximumf %121, %122 : vector<40x64xf32>
    %cst_41 = arith.constant dense<0.000000e+00> : vector<40x32xf32>
    %124 = tpu.matmul %123, %29, %cst_41 {dimension_numbers = #tpu.dot_dimension_numbers<[1], [0], [0], [1], [0, 0, 1, 1], [], []>} : vector<40x64xf32>, vector<64x32xf32>, vector<40x32xf32> -> vector<40x32xf32>
    %125 = vector.broadcast %30 : vector<1x32xf32> to vector<40x32xf32>
    %126 = arith.addf %124, %125 : vector<40x32xf32>
    %127 = arith.addf %126, %102 : vector<40x32xf32>
    %cst_42 = arith.constant dense<0.000000e+00> : vector<40xf32>
    %128 = vector.multi_reduction <add>, %127, %cst_42 [1] : vector<40x32xf32> to vector<40xf32>
    %129 = vector.shape_cast %128 : vector<40xf32> to vector<40x1xf32>
    %cst_43 = arith.constant 3.200000e+01 : f32
    %130 = vector.broadcast %cst_43 : f32 to vector<40x1xf32>
    %131 = arith.divf %129, %130 : vector<40x1xf32>
    %132 = vector.broadcast %131 : vector<40x1xf32> to vector<40x32xf32>
    %133 = arith.subf %127, %132 : vector<40x32xf32>
    %134 = arith.mulf %133, %133 : vector<40x32xf32>
    %cst_44 = arith.constant dense<0.000000e+00> : vector<40xf32>
    %135 = vector.multi_reduction <add>, %134, %cst_44 [1] : vector<40x32xf32> to vector<40xf32>
    %136 = vector.shape_cast %135 : vector<40xf32> to vector<40x1xf32>
    %cst_45 = arith.constant 3.200000e+01 : f32
    %137 = vector.broadcast %cst_45 : f32 to vector<40x1xf32>
    %138 = arith.divf %136, %137 : vector<40x1xf32>
    %139 = vector.broadcast %131 : vector<40x1xf32> to vector<40x32xf32>
    %140 = arith.subf %127, %139 : vector<40x32xf32>
    %cst_46 = arith.constant 9.99999974E-6 : f32
    %141 = vector.broadcast %cst_46 : f32 to vector<40x1xf32>
    %142 = arith.addf %138, %141 : vector<40x1xf32>
    %143 = math.rsqrt %142 : vector<40x1xf32>
    %144 = vector.broadcast %143 : vector<40x1xf32> to vector<40x32xf32>
    %145 = arith.mulf %140, %144 : vector<40x32xf32>
    %146 = vector.broadcast %31 : vector<1x32xf32> to vector<40x32xf32>
    %147 = arith.mulf %145, %146 : vector<40x32xf32>
    %148 = vector.broadcast %32 : vector<1x32xf32> to vector<40x32xf32>
    %149 = arith.addf %147, %148 : vector<40x32xf32>
    %150 = vector.broadcast %7 : vector<40x1xf32> to vector<40x32xf32>
    %151 = arith.mulf %149, %150 : vector<40x32xf32>
    %c1 = arith.constant 1 : index
    %c0_47 = arith.constant 0 : index
    %c0_48 = arith.constant 0 : index
    %152 = vector.load %arg7[%c1, %c0_47, %c0_48] : memref<2x8x128xf32, #tpu.memory_space<vmem>>, vector<1x8x128xf32>
    %153 = vector.shape_cast %152 : vector<1x8x128xf32> to vector<8x128xf32>
    %c1_49 = arith.constant 1 : index
    %c0_50 = arith.constant 0 : index
    %c0_51 = arith.constant 0 : index
    %154 = vector.load %arg3[%c1_49, %c0_50, %c0_51] : memref<2x32x96xf32, #tpu.memory_space<vmem>>, vector<1x32x96xf32>
    %155 = vector.shape_cast %154 : vector<1x32x96xf32> to vector<32x96xf32>
    %156 = vector.extract_strided_slice %153 {offsets = [0, 0], sizes = [1, 96], strides = [1, 1]} : vector<8x128xf32> to vector<1x96xf32>
    %c1_52 = arith.constant 1 : index
    %c0_53 = arith.constant 0 : index
    %c0_54 = arith.constant 0 : index
    %157 = vector.load %arg4[%c1_52, %c0_53, %c0_54] : memref<2x32x32xf32, #tpu.memory_space<vmem>>, vector<1x32x32xf32>
    %158 = vector.shape_cast %157 : vector<1x32x32xf32> to vector<32x32xf32>
    %159 = vector.extract_strided_slice %153 {offsets = [1, 0], sizes = [1, 32], strides = [1, 1]} : vector<8x128xf32> to vector<1x32xf32>
    %160 = vector.extract_strided_slice %153 {offsets = [2, 0], sizes = [1, 32], strides = [1, 1]} : vector<8x128xf32> to vector<1x32xf32>
    %161 = vector.extract_strided_slice %153 {offsets = [3, 0], sizes = [1, 32], strides = [1, 1]} : vector<8x128xf32> to vector<1x32xf32>
    %c1_55 = arith.constant 1 : index
    %c0_56 = arith.constant 0 : index
    %c0_57 = arith.constant 0 : index
    %162 = vector.load %arg5[%c1_55, %c0_56, %c0_57] : memref<2x96x64xf32, #tpu.memory_space<vmem>>, vector<1x96x64xf32>
    %163 = vector.shape_cast %162 : vector<1x96x64xf32> to vector<96x64xf32>
    %164 = vector.extract_strided_slice %153 {offsets = [4, 0], sizes = [1, 64], strides = [1, 1]} : vector<8x128xf32> to vector<1x64xf32>
    %c1_58 = arith.constant 1 : index
    %c0_59 = arith.constant 0 : index
    %c0_60 = arith.constant 0 : index
    %165 = vector.load %arg6[%c1_58, %c0_59, %c0_60] : memref<2x64x32xf32, #tpu.memory_space<vmem>>, vector<1x64x32xf32>
    %166 = vector.shape_cast %165 : vector<1x64x32xf32> to vector<64x32xf32>
    %167 = vector.extract_strided_slice %153 {offsets = [5, 0], sizes = [1, 32], strides = [1, 1]} : vector<8x128xf32> to vector<1x32xf32>
    %168 = vector.extract_strided_slice %153 {offsets = [6, 0], sizes = [1, 32], strides = [1, 1]} : vector<8x128xf32> to vector<1x32xf32>
    %169 = vector.extract_strided_slice %153 {offsets = [7, 0], sizes = [1, 32], strides = [1, 1]} : vector<8x128xf32> to vector<1x32xf32>
    %cst_61 = arith.constant dense<0.000000e+00> : vector<40x96xf32>
    %170 = tpu.matmul %151, %155, %cst_61 {dimension_numbers = #tpu.dot_dimension_numbers<[1], [0], [0], [1], [0, 0, 1, 1], [], []>} : vector<40x32xf32>, vector<32x96xf32>, vector<40x96xf32> -> vector<40x96xf32>
    %171 = vector.broadcast %156 : vector<1x96xf32> to vector<40x96xf32>
    %172 = arith.addf %170, %171 : vector<40x96xf32>
    %173 = vector.extract_strided_slice %172 {offsets = [0, 0], sizes = [40, 16], strides = [1, 1]} : vector<40x96xf32> to vector<40x16xf32>
    %174 = vector.extract_strided_slice %172 {offsets = [0, 32], sizes = [40, 16], strides = [1, 1]} : vector<40x96xf32> to vector<40x16xf32>
    %175 = vector.extract_strided_slice %172 {offsets = [0, 64], sizes = [40, 16], strides = [1, 1]} : vector<40x96xf32> to vector<40x16xf32>
    %cst_62 = arith.constant dense<0.000000e+00> : vector<40x40xf32>
    %176 = tpu.matmul %173, %174, %cst_62 {dimension_numbers = #tpu.dot_dimension_numbers<[1], [1], [0], [0], [0, 0, 1, 0], [], []>} : vector<40x16xf32>, vector<40x16xf32>, vector<40x40xf32> -> vector<40x40xf32>
    %cst_63 = arith.constant 2.500000e-01 : f32
    %177 = vector.broadcast %cst_63 : f32 to vector<40x40xf32>
    %178 = arith.mulf %176, %177 : vector<40x40xf32>
    %179 = vector.broadcast %12 : vector<1x40xf32> to vector<40x40xf32>
    %180 = arith.addf %178, %179 : vector<40x40xf32>
    %cst_64 = arith.constant dense<0xFF800000> : vector<40xf32>
    %181 = vector.multi_reduction <maximumf>, %180, %cst_64 [1] : vector<40x40xf32> to vector<40xf32>
    %182 = vector.shape_cast %181 : vector<40xf32> to vector<40x1xf32>
    %183 = vector.broadcast %182 : vector<40x1xf32> to vector<40x40xf32>
    %184 = arith.subf %180, %183 : vector<40x40xf32>
    %185 = math.exp %184 : vector<40x40xf32>
    %cst_65 = arith.constant dense<0.000000e+00> : vector<40xf32>
    %186 = vector.multi_reduction <add>, %185, %cst_65 [1] : vector<40x40xf32> to vector<40xf32>
    %187 = vector.shape_cast %186 : vector<40xf32> to vector<40x1xf32>
    %188 = tpu.reciprocal %187 {approx = true} : vector<40x1xf32> -> vector<40x1xf32>
    %189 = vector.broadcast %188 : vector<40x1xf32> to vector<40x40xf32>
    %190 = arith.mulf %185, %189 : vector<40x40xf32>
    %cst_66 = arith.constant dense<0.000000e+00> : vector<40x16xf32>
    %191 = tpu.matmul %190, %175, %cst_66 {dimension_numbers = #tpu.dot_dimension_numbers<[1], [0], [0], [1], [0, 0, 1, 1], [], []>} : vector<40x40xf32>, vector<40x16xf32>, vector<40x16xf32> -> vector<40x16xf32>
    %192 = vector.extract_strided_slice %172 {offsets = [0, 16], sizes = [40, 16], strides = [1, 1]} : vector<40x96xf32> to vector<40x16xf32>
    %193 = vector.extract_strided_slice %172 {offsets = [0, 48], sizes = [40, 16], strides = [1, 1]} : vector<40x96xf32> to vector<40x16xf32>
    %194 = vector.extract_strided_slice %172 {offsets = [0, 80], sizes = [40, 16], strides = [1, 1]} : vector<40x96xf32> to vector<40x16xf32>
    %cst_67 = arith.constant dense<0.000000e+00> : vector<40x40xf32>
    %195 = tpu.matmul %192, %193, %cst_67 {dimension_numbers = #tpu.dot_dimension_numbers<[1], [1], [0], [0], [0, 0, 1, 0], [], []>} : vector<40x16xf32>, vector<40x16xf32>, vector<40x40xf32> -> vector<40x40xf32>
    %cst_68 = arith.constant 2.500000e-01 : f32
    %196 = vector.broadcast %cst_68 : f32 to vector<40x40xf32>
    %197 = arith.mulf %195, %196 : vector<40x40xf32>
    %198 = vector.broadcast %12 : vector<1x40xf32> to vector<40x40xf32>
    %199 = arith.addf %197, %198 : vector<40x40xf32>
    %cst_69 = arith.constant dense<0xFF800000> : vector<40xf32>
    %200 = vector.multi_reduction <maximumf>, %199, %cst_69 [1] : vector<40x40xf32> to vector<40xf32>
    %201 = vector.shape_cast %200 : vector<40xf32> to vector<40x1xf32>
    %202 = vector.broadcast %201 : vector<40x1xf32> to vector<40x40xf32>
    %203 = arith.subf %199, %202 : vector<40x40xf32>
    %204 = math.exp %203 : vector<40x40xf32>
    %cst_70 = arith.constant dense<0.000000e+00> : vector<40xf32>
    %205 = vector.multi_reduction <add>, %204, %cst_70 [1] : vector<40x40xf32> to vector<40xf32>
    %206 = vector.shape_cast %205 : vector<40xf32> to vector<40x1xf32>
    %207 = tpu.reciprocal %206 {approx = true} : vector<40x1xf32> -> vector<40x1xf32>
    %208 = vector.broadcast %207 : vector<40x1xf32> to vector<40x40xf32>
    %209 = arith.mulf %204, %208 : vector<40x40xf32>
    %cst_71 = arith.constant dense<0.000000e+00> : vector<40x16xf32>
    %210 = tpu.matmul %209, %194, %cst_71 {dimension_numbers = #tpu.dot_dimension_numbers<[1], [0], [0], [1], [0, 0, 1, 1], [], []>} : vector<40x40xf32>, vector<40x16xf32>, vector<40x16xf32> -> vector<40x16xf32>
    %211 = tpu.concatenate %191, %210 in 1 : vector<40x16xf32>, vector<40x16xf32> -> vector<40x32xf32>
    %cst_72 = arith.constant dense<0.000000e+00> : vector<40x32xf32>
    %212 = tpu.matmul %211, %158, %cst_72 {dimension_numbers = #tpu.dot_dimension_numbers<[1], [0], [0], [1], [0, 0, 1, 1], [], []>} : vector<40x32xf32>, vector<32x32xf32>, vector<40x32xf32> -> vector<40x32xf32>
    %213 = vector.broadcast %159 : vector<1x32xf32> to vector<40x32xf32>
    %214 = arith.addf %212, %213 : vector<40x32xf32>
    %215 = arith.addf %214, %151 : vector<40x32xf32>
    %cst_73 = arith.constant dense<0.000000e+00> : vector<40xf32>
    %216 = vector.multi_reduction <add>, %215, %cst_73 [1] : vector<40x32xf32> to vector<40xf32>
    %217 = vector.shape_cast %216 : vector<40xf32> to vector<40x1xf32>
    %cst_74 = arith.constant 3.200000e+01 : f32
    %218 = vector.broadcast %cst_74 : f32 to vector<40x1xf32>
    %219 = arith.divf %217, %218 : vector<40x1xf32>
    %220 = vector.broadcast %219 : vector<40x1xf32> to vector<40x32xf32>
    %221 = arith.subf %215, %220 : vector<40x32xf32>
    %222 = arith.mulf %221, %221 : vector<40x32xf32>
    %cst_75 = arith.constant dense<0.000000e+00> : vector<40xf32>
    %223 = vector.multi_reduction <add>, %222, %cst_75 [1] : vector<40x32xf32> to vector<40xf32>
    %224 = vector.shape_cast %223 : vector<40xf32> to vector<40x1xf32>
    %cst_76 = arith.constant 3.200000e+01 : f32
    %225 = vector.broadcast %cst_76 : f32 to vector<40x1xf32>
    %226 = arith.divf %224, %225 : vector<40x1xf32>
    %227 = vector.broadcast %219 : vector<40x1xf32> to vector<40x32xf32>
    %228 = arith.subf %215, %227 : vector<40x32xf32>
    %cst_77 = arith.constant 9.99999974E-6 : f32
    %229 = vector.broadcast %cst_77 : f32 to vector<40x1xf32>
    %230 = arith.addf %226, %229 : vector<40x1xf32>
    %231 = math.rsqrt %230 : vector<40x1xf32>
    %232 = vector.broadcast %231 : vector<40x1xf32> to vector<40x32xf32>
    %233 = arith.mulf %228, %232 : vector<40x32xf32>
    %234 = vector.broadcast %160 : vector<1x32xf32> to vector<40x32xf32>
    %235 = arith.mulf %233, %234 : vector<40x32xf32>
    %236 = vector.broadcast %161 : vector<1x32xf32> to vector<40x32xf32>
    %237 = arith.addf %235, %236 : vector<40x32xf32>
    %238 = vector.broadcast %7 : vector<40x1xf32> to vector<40x32xf32>
    %239 = arith.mulf %237, %238 : vector<40x32xf32>
    %240 = tpu.iota {dimensions = array<i32: 0>} : vector<40x1xi32>
    %c1_i32_78 = arith.constant 1 : i32
    %241 = tpu.dynamic_rotate %239 by %c1_i32_78 dim 0 : vector<40x32xf32>, i32 -> vector<40x32xf32>
    %c1_i32_79 = arith.constant 1 : i32
    %242 = vector.broadcast %c1_i32_79 : i32 to vector<40x1xi32>
    %243 = arith.cmpi sge, %240, %242 : vector<40x1xi32>
    %cst_80 = arith.constant 0.000000e+00 : f32
    %244 = vector.shape_cast %243 : vector<40x1xi1> to vector<40x1xi1>
    %245 = vector.broadcast %244 : vector<40x1xi1> to vector<40x32xi1>
    %246 = vector.broadcast %cst_80 : f32 to vector<40x32xf32>
    %247 = arith.select %245, %241, %246 : vector<40x32xi1>, vector<40x32xf32>
    %c39_i32_81 = arith.constant 39 : i32
    %248 = tpu.dynamic_rotate %239 by %c39_i32_81 dim 0 : vector<40x32xf32>, i32 -> vector<40x32xf32>
    %c39_i32_82 = arith.constant 39 : i32
    %249 = vector.broadcast %c39_i32_82 : i32 to vector<40x1xi32>
    %250 = arith.cmpi slt, %240, %249 : vector<40x1xi32>
    %cst_83 = arith.constant 0.000000e+00 : f32
    %251 = vector.shape_cast %250 : vector<40x1xi1> to vector<40x1xi1>
    %252 = vector.broadcast %251 : vector<40x1xi1> to vector<40x32xi1>
    %253 = vector.broadcast %cst_83 : f32 to vector<40x32xf32>
    %254 = arith.select %252, %248, %253 : vector<40x32xi1>, vector<40x32xf32>
    %255 = tpu.concatenate %247, %239, %254 in 1 : vector<40x32xf32>, vector<40x32xf32>, vector<40x32xf32> -> vector<40x96xf32>
    %cst_84 = arith.constant dense<0.000000e+00> : vector<40x64xf32>
    %256 = tpu.matmul %255, %163, %cst_84 {dimension_numbers = #tpu.dot_dimension_numbers<[1], [0], [0], [1], [0, 0, 1, 1], [], []>} : vector<40x96xf32>, vector<96x64xf32>, vector<40x64xf32> -> vector<40x64xf32>
    %257 = vector.broadcast %164 : vector<1x64xf32> to vector<40x64xf32>
    %258 = arith.addf %256, %257 : vector<40x64xf32>
    %cst_85 = arith.constant 0.000000e+00 : f32
    %259 = vector.broadcast %cst_85 : f32 to vector<40x64xf32>
    %260 = arith.maximumf %258, %259 : vector<40x64xf32>
    %cst_86 = arith.constant dense<0.000000e+00> : vector<40x32xf32>
    %261 = tpu.matmul %260, %166, %cst_86 {dimension_numbers = #tpu.dot_dimension_numbers<[1], [0], [0], [1], [0, 0, 1, 1], [], []>} : vector<40x64xf32>, vector<64x32xf32>, vector<40x32xf32> -> vector<40x32xf32>
    %262 = vector.broadcast %167 : vector<1x32xf32> to vector<40x32xf32>
    %263 = arith.addf %261, %262 : vector<40x32xf32>
    %264 = arith.addf %263, %239 : vector<40x32xf32>
    %cst_87 = arith.constant dense<0.000000e+00> : vector<40xf32>
    %265 = vector.multi_reduction <add>, %264, %cst_87 [1] : vector<40x32xf32> to vector<40xf32>
    %266 = vector.shape_cast %265 : vector<40xf32> to vector<40x1xf32>
    %cst_88 = arith.constant 3.200000e+01 : f32
    %267 = vector.broadcast %cst_88 : f32 to vector<40x1xf32>
    %268 = arith.divf %266, %267 : vector<40x1xf32>
    %269 = vector.broadcast %268 : vector<40x1xf32> to vector<40x32xf32>
    %270 = arith.subf %264, %269 : vector<40x32xf32>
    %271 = arith.mulf %270, %270 : vector<40x32xf32>
    %cst_89 = arith.constant dense<0.000000e+00> : vector<40xf32>
    %272 = vector.multi_reduction <add>, %271, %cst_89 [1] : vector<40x32xf32> to vector<40xf32>
    %273 = vector.shape_cast %272 : vector<40xf32> to vector<40x1xf32>
    %cst_90 = arith.constant 3.200000e+01 : f32
    %274 = vector.broadcast %cst_90 : f32 to vector<40x1xf32>
    %275 = arith.divf %273, %274 : vector<40x1xf32>
    %276 = vector.broadcast %268 : vector<40x1xf32> to vector<40x32xf32>
    %277 = arith.subf %264, %276 : vector<40x32xf32>
    %cst_91 = arith.constant 9.99999974E-6 : f32
    %278 = vector.broadcast %cst_91 : f32 to vector<40x1xf32>
    %279 = arith.addf %275, %278 : vector<40x1xf32>
    %280 = math.rsqrt %279 : vector<40x1xf32>
    %281 = vector.broadcast %280 : vector<40x1xf32> to vector<40x32xf32>
    %282 = arith.mulf %277, %281 : vector<40x32xf32>
    %283 = vector.broadcast %168 : vector<1x32xf32> to vector<40x32xf32>
    %284 = arith.mulf %282, %283 : vector<40x32xf32>
    %285 = vector.broadcast %169 : vector<1x32xf32> to vector<40x32xf32>
    %286 = arith.addf %284, %285 : vector<40x32xf32>
    %287 = vector.broadcast %7 : vector<40x1xf32> to vector<40x32xf32>
    %288 = arith.mulf %286, %287 : vector<40x32xf32>
    %c0_92 = arith.constant 0 : index
    %c0_93 = arith.constant 0 : index
    %289 = vector.load %arg8[%c0_92, %c0_93] : memref<32x128xf32, #tpu.memory_space<vmem>>, vector<32x128xf32>
    %cst_94 = arith.constant dense<0.000000e+00> : vector<40x128xf32>
    %290 = tpu.matmul %288, %289, %cst_94 {dimension_numbers = #tpu.dot_dimension_numbers<[1], [0], [0], [1], [0, 0, 1, 1], [], []>} : vector<40x32xf32>, vector<32x128xf32>, vector<40x128xf32> -> vector<40x128xf32>
    %c0_95 = arith.constant 0 : index
    %c0_96 = arith.constant 0 : index
    %291 = vector.load %arg9[%c0_95, %c0_96] : memref<1x128xf32, #tpu.memory_space<vmem>>, vector<1x128xf32>
    %292 = vector.broadcast %291 : vector<1x128xf32> to vector<40x128xf32>
    %293 = arith.addf %290, %292 : vector<40x128xf32>
    %c0_97 = arith.constant 0 : index
    %c0_98 = arith.constant 0 : index
    %c0_99 = arith.constant 0 : index
    %294 = vector.load %arg12[%c0_97, %c0_98, %c0_99] : memref<1x40x128xf32, #tpu.memory_space<vmem>>, vector<1x40x128xf32>
    %295 = vector.shape_cast %294 : vector<1x40x128xf32> to vector<40x128xf32>
    %296 = vector.shape_cast %293 : vector<40x128xf32> to vector<1x40x128xf32>
    tpu.vector_store %arg12[%c0_97, %c0_98, %c0_99], %296 {strides = array<i32>} : memref<1x40x128xf32, #tpu.memory_space<vmem>>, vector<1x40x128xf32>,
    %297 = vector.extract_strided_slice %293 {offsets = [0, 0], sizes = [40, 32], strides = [1, 1]} : vector<40x128xf32> to vector<40x32xf32>
    %c0_100 = arith.constant 0 : index
    %c0_101 = arith.constant 0 : index
    %c0_102 = arith.constant 0 : index
    %298 = vector.load %arg10[%c0_100, %c0_101, %c0_102] : memref<5x160x128xf32, #tpu.memory_space<vmem>>, vector<1x160x128xf32>
    %299 = vector.shape_cast %298 : vector<1x160x128xf32> to vector<160x128xf32>
    %c0_103 = arith.constant 0 : index
    %c0_104 = arith.constant 0 : index
    %c0_105 = arith.constant 0 : index
    %300 = vector.load %arg11[%c0_103, %c0_104, %c0_105] : memref<5x1x128xf32, #tpu.memory_space<vmem>>, vector<1x1x128xf32>
    %301 = vector.shape_cast %300 : vector<1x1x128xf32> to vector<1x128xf32>
    %302 = tpu.iota {dimensions = array<i32: 0>} : vector<40x1xi32>
    %c2_i32 = arith.constant 2 : i32
    %303 = tpu.dynamic_rotate %297 by %c2_i32 dim 0 : vector<40x32xf32>, i32 -> vector<40x32xf32>
    %c2_i32_106 = arith.constant 2 : i32
    %304 = vector.broadcast %c2_i32_106 : i32 to vector<40x1xi32>
    %305 = arith.cmpi sge, %302, %304 : vector<40x1xi32>
    %cst_107 = arith.constant 0.000000e+00 : f32
    %306 = vector.shape_cast %305 : vector<40x1xi1> to vector<40x1xi1>
    %307 = vector.broadcast %306 : vector<40x1xi1> to vector<40x32xi1>
    %308 = vector.broadcast %cst_107 : f32 to vector<40x32xf32>
    %309 = arith.select %307, %303, %308 : vector<40x32xi1>, vector<40x32xf32>
    %c1_i32_108 = arith.constant 1 : i32
    %310 = tpu.dynamic_rotate %297 by %c1_i32_108 dim 0 : vector<40x32xf32>, i32 -> vector<40x32xf32>
    %c1_i32_109 = arith.constant 1 : i32
    %311 = vector.broadcast %c1_i32_109 : i32 to vector<40x1xi32>
    %312 = arith.cmpi sge, %302, %311 : vector<40x1xi32>
    %cst_110 = arith.constant 0.000000e+00 : f32
    %313 = vector.shape_cast %312 : vector<40x1xi1> to vector<40x1xi1>
    %314 = vector.broadcast %313 : vector<40x1xi1> to vector<40x32xi1>
    %315 = vector.broadcast %cst_110 : f32 to vector<40x32xf32>
    %316 = arith.select %314, %310, %315 : vector<40x32xi1>, vector<40x32xf32>
    %c39_i32_111 = arith.constant 39 : i32
    %317 = tpu.dynamic_rotate %297 by %c39_i32_111 dim 0 : vector<40x32xf32>, i32 -> vector<40x32xf32>
    %c39_i32_112 = arith.constant 39 : i32
    %318 = vector.broadcast %c39_i32_112 : i32 to vector<40x1xi32>
    %319 = arith.cmpi slt, %302, %318 : vector<40x1xi32>
    %cst_113 = arith.constant 0.000000e+00 : f32
    %320 = vector.shape_cast %319 : vector<40x1xi1> to vector<40x1xi1>
    %321 = vector.broadcast %320 : vector<40x1xi1> to vector<40x32xi1>
    %322 = vector.broadcast %cst_113 : f32 to vector<40x32xf32>
    %323 = arith.select %321, %317, %322 : vector<40x32xi1>, vector<40x32xf32>
    %c38_i32 = arith.constant 38 : i32
    %324 = tpu.dynamic_rotate %297 by %c38_i32 dim 0 : vector<40x32xf32>, i32 -> vector<40x32xf32>
    %c38_i32_114 = arith.constant 38 : i32
    %325 = vector.broadcast %c38_i32_114 : i32 to vector<40x1xi32>
    %326 = arith.cmpi slt, %302, %325 : vector<40x1xi32>
    %cst_115 = arith.constant 0.000000e+00 : f32
    %327 = vector.shape_cast %326 : vector<40x1xi1> to vector<40x1xi1>
    %328 = vector.broadcast %327 : vector<40x1xi1> to vector<40x32xi1>
    %329 = vector.broadcast %cst_115 : f32 to vector<40x32xf32>
    %330 = arith.select %328, %324, %329 : vector<40x32xi1>, vector<40x32xf32>
    %331 = tpu.concatenate %309, %316, %297, %323, %330 in 1 : vector<40x32xf32>, vector<40x32xf32>, vector<40x32xf32>, vector<40x32xf32>, vector<40x32xf32> -> vector<40x160xf32>
    %cst_116 = arith.constant dense<0.000000e+00> : vector<40x128xf32>
    %332 = tpu.matmul %331, %299, %cst_116 {dimension_numbers = #tpu.dot_dimension_numbers<[1], [0], [0], [1], [0, 0, 1, 1], [], []>} : vector<40x160xf32>, vector<160x128xf32>, vector<40x128xf32> -> vector<40x128xf32>
    %333 = vector.broadcast %301 : vector<1x128xf32> to vector<40x128xf32>
    %334 = arith.addf %332, %333 : vector<40x128xf32>
    %335 = math.tanh %334 : vector<40x128xf32>
    %336 = vector.extract_strided_slice %335 {offsets = [0, 0], sizes = [40, 32], strides = [1, 1]} : vector<40x128xf32> to vector<40x32xf32>
    %c1_117 = arith.constant 1 : index
    %c0_118 = arith.constant 0 : index
    %c0_119 = arith.constant 0 : index
    %337 = vector.load %arg10[%c1_117, %c0_118, %c0_119] : memref<5x160x128xf32, #tpu.memory_space<vmem>>, vector<1x160x128xf32>
    %338 = vector.shape_cast %337 : vector<1x160x128xf32> to vector<160x128xf32>
    %c1_120 = arith.constant 1 : index
    %c0_121 = arith.constant 0 : index
    %c0_122 = arith.constant 0 : index
    %339 = vector.load %arg11[%c1_120, %c0_121, %c0_122] : memref<5x1x128xf32, #tpu.memory_space<vmem>>, vector<1x1x128xf32>
    %340 = vector.shape_cast %339 : vector<1x1x128xf32> to vector<1x128xf32>
    %341 = tpu.iota {dimensions = array<i32: 0>} : vector<40x1xi32>
    %c2_i32_123 = arith.constant 2 : i32
    %342 = tpu.dynamic_rotate %336 by %c2_i32_123 dim 0 : vector<40x32xf32>, i32 -> vector<40x32xf32>
    %c2_i32_124 = arith.constant 2 : i32
    %343 = vector.broadcast %c2_i32_124 : i32 to vector<40x1xi32>
    %344 = arith.cmpi sge, %341, %343 : vector<40x1xi32>
    %cst_125 = arith.constant 0.000000e+00 : f32
    %345 = vector.shape_cast %344 : vector<40x1xi1> to vector<40x1xi1>
    %346 = vector.broadcast %345 : vector<40x1xi1> to vector<40x32xi1>
    %347 = vector.broadcast %cst_125 : f32 to vector<40x32xf32>
    %348 = arith.select %346, %342, %347 : vector<40x32xi1>, vector<40x32xf32>
    %c1_i32_126 = arith.constant 1 : i32
    %349 = tpu.dynamic_rotate %336 by %c1_i32_126 dim 0 : vector<40x32xf32>, i32 -> vector<40x32xf32>
    %c1_i32_127 = arith.constant 1 : i32
    %350 = vector.broadcast %c1_i32_127 : i32 to vector<40x1xi32>
    %351 = arith.cmpi sge, %341, %350 : vector<40x1xi32>
    %cst_128 = arith.constant 0.000000e+00 : f32
    %352 = vector.shape_cast %351 : vector<40x1xi1> to vector<40x1xi1>
    %353 = vector.broadcast %352 : vector<40x1xi1> to vector<40x32xi1>
    %354 = vector.broadcast %cst_128 : f32 to vector<40x32xf32>
    %355 = arith.select %353, %349, %354 : vector<40x32xi1>, vector<40x32xf32>
    %c39_i32_129 = arith.constant 39 : i32
    %356 = tpu.dynamic_rotate %336 by %c39_i32_129 dim 0 : vector<40x32xf32>, i32 -> vector<40x32xf32>
    %c39_i32_130 = arith.constant 39 : i32
    %357 = vector.broadcast %c39_i32_130 : i32 to vector<40x1xi32>
    %358 = arith.cmpi slt, %341, %357 : vector<40x1xi32>
    %cst_131 = arith.constant 0.000000e+00 : f32
    %359 = vector.shape_cast %358 : vector<40x1xi1> to vector<40x1xi1>
    %360 = vector.broadcast %359 : vector<40x1xi1> to vector<40x32xi1>
    %361 = vector.broadcast %cst_131 : f32 to vector<40x32xf32>
    %362 = arith.select %360, %356, %361 : vector<40x32xi1>, vector<40x32xf32>
    %c38_i32_132 = arith.constant 38 : i32
    %363 = tpu.dynamic_rotate %336 by %c38_i32_132 dim 0 : vector<40x32xf32>, i32 -> vector<40x32xf32>
    %c38_i32_133 = arith.constant 38 : i32
    %364 = vector.broadcast %c38_i32_133 : i32 to vector<40x1xi32>
    %365 = arith.cmpi slt, %341, %364 : vector<40x1xi32>
    %cst_134 = arith.constant 0.000000e+00 : f32
    %366 = vector.shape_cast %365 : vector<40x1xi1> to vector<40x1xi1>
    %367 = vector.broadcast %366 : vector<40x1xi1> to vector<40x32xi1>
    %368 = vector.broadcast %cst_134 : f32 to vector<40x32xf32>
    %369 = arith.select %367, %363, %368 : vector<40x32xi1>, vector<40x32xf32>
    %370 = tpu.concatenate %348, %355, %336, %362, %369 in 1 : vector<40x32xf32>, vector<40x32xf32>, vector<40x32xf32>, vector<40x32xf32>, vector<40x32xf32> -> vector<40x160xf32>
    %cst_135 = arith.constant dense<0.000000e+00> : vector<40x128xf32>
    %371 = tpu.matmul %370, %338, %cst_135 {dimension_numbers = #tpu.dot_dimension_numbers<[1], [0], [0], [1], [0, 0, 1, 1], [], []>} : vector<40x160xf32>, vector<160x128xf32>, vector<40x128xf32> -> vector<40x128xf32>
    %372 = vector.broadcast %340 : vector<1x128xf32> to vector<40x128xf32>
    %373 = arith.addf %371, %372 : vector<40x128xf32>
    %374 = math.tanh %373 : vector<40x128xf32>
    %375 = vector.extract_strided_slice %374 {offsets = [0, 0], sizes = [40, 32], strides = [1, 1]} : vector<40x128xf32> to vector<40x32xf32>
    %c2 = arith.constant 2 : index
    %c0_136 = arith.constant 0 : index
    %c0_137 = arith.constant 0 : index
    %376 = vector.load %arg10[%c2, %c0_136, %c0_137] : memref<5x160x128xf32, #tpu.memory_space<vmem>>, vector<1x160x128xf32>
    %377 = vector.shape_cast %376 : vector<1x160x128xf32> to vector<160x128xf32>
    %c2_138 = arith.constant 2 : index
    %c0_139 = arith.constant 0 : index
    %c0_140 = arith.constant 0 : index
    %378 = vector.load %arg11[%c2_138, %c0_139, %c0_140] : memref<5x1x128xf32, #tpu.memory_space<vmem>>, vector<1x1x128xf32>
    %379 = vector.shape_cast %378 : vector<1x1x128xf32> to vector<1x128xf32>
    %380 = tpu.iota {dimensions = array<i32: 0>} : vector<40x1xi32>
    %c2_i32_141 = arith.constant 2 : i32
    %381 = tpu.dynamic_rotate %375 by %c2_i32_141 dim 0 : vector<40x32xf32>, i32 -> vector<40x32xf32>
    %c2_i32_142 = arith.constant 2 : i32
    %382 = vector.broadcast %c2_i32_142 : i32 to vector<40x1xi32>
    %383 = arith.cmpi sge, %380, %382 : vector<40x1xi32>
    %cst_143 = arith.constant 0.000000e+00 : f32
    %384 = vector.shape_cast %383 : vector<40x1xi1> to vector<40x1xi1>
    %385 = vector.broadcast %384 : vector<40x1xi1> to vector<40x32xi1>
    %386 = vector.broadcast %cst_143 : f32 to vector<40x32xf32>
    %387 = arith.select %385, %381, %386 : vector<40x32xi1>, vector<40x32xf32>
    %c1_i32_144 = arith.constant 1 : i32
    %388 = tpu.dynamic_rotate %375 by %c1_i32_144 dim 0 : vector<40x32xf32>, i32 -> vector<40x32xf32>
    %c1_i32_145 = arith.constant 1 : i32
    %389 = vector.broadcast %c1_i32_145 : i32 to vector<40x1xi32>
    %390 = arith.cmpi sge, %380, %389 : vector<40x1xi32>
    %cst_146 = arith.constant 0.000000e+00 : f32
    %391 = vector.shape_cast %390 : vector<40x1xi1> to vector<40x1xi1>
    %392 = vector.broadcast %391 : vector<40x1xi1> to vector<40x32xi1>
    %393 = vector.broadcast %cst_146 : f32 to vector<40x32xf32>
    %394 = arith.select %392, %388, %393 : vector<40x32xi1>, vector<40x32xf32>
    %c39_i32_147 = arith.constant 39 : i32
    %395 = tpu.dynamic_rotate %375 by %c39_i32_147 dim 0 : vector<40x32xf32>, i32 -> vector<40x32xf32>
    %c39_i32_148 = arith.constant 39 : i32
    %396 = vector.broadcast %c39_i32_148 : i32 to vector<40x1xi32>
    %397 = arith.cmpi slt, %380, %396 : vector<40x1xi32>
    %cst_149 = arith.constant 0.000000e+00 : f32
    %398 = vector.shape_cast %397 : vector<40x1xi1> to vector<40x1xi1>
    %399 = vector.broadcast %398 : vector<40x1xi1> to vector<40x32xi1>
    %400 = vector.broadcast %cst_149 : f32 to vector<40x32xf32>
    %401 = arith.select %399, %395, %400 : vector<40x32xi1>, vector<40x32xf32>
    %c38_i32_150 = arith.constant 38 : i32
    %402 = tpu.dynamic_rotate %375 by %c38_i32_150 dim 0 : vector<40x32xf32>, i32 -> vector<40x32xf32>
    %c38_i32_151 = arith.constant 38 : i32
    %403 = vector.broadcast %c38_i32_151 : i32 to vector<40x1xi32>
    %404 = arith.cmpi slt, %380, %403 : vector<40x1xi32>
    %cst_152 = arith.constant 0.000000e+00 : f32
    %405 = vector.shape_cast %404 : vector<40x1xi1> to vector<40x1xi1>
    %406 = vector.broadcast %405 : vector<40x1xi1> to vector<40x32xi1>
    %407 = vector.broadcast %cst_152 : f32 to vector<40x32xf32>
    %408 = arith.select %406, %402, %407 : vector<40x32xi1>, vector<40x32xf32>
    %409 = tpu.concatenate %387, %394, %375, %401, %408 in 1 : vector<40x32xf32>, vector<40x32xf32>, vector<40x32xf32>, vector<40x32xf32>, vector<40x32xf32> -> vector<40x160xf32>
    %cst_153 = arith.constant dense<0.000000e+00> : vector<40x128xf32>
    %410 = tpu.matmul %409, %377, %cst_153 {dimension_numbers = #tpu.dot_dimension_numbers<[1], [0], [0], [1], [0, 0, 1, 1], [], []>} : vector<40x160xf32>, vector<160x128xf32>, vector<40x128xf32> -> vector<40x128xf32>
    %411 = vector.broadcast %379 : vector<1x128xf32> to vector<40x128xf32>
    %412 = arith.addf %410, %411 : vector<40x128xf32>
    %413 = math.tanh %412 : vector<40x128xf32>
    %414 = vector.extract_strided_slice %413 {offsets = [0, 0], sizes = [40, 32], strides = [1, 1]} : vector<40x128xf32> to vector<40x32xf32>
    %c3 = arith.constant 3 : index
    %c0_154 = arith.constant 0 : index
    %c0_155 = arith.constant 0 : index
    %415 = vector.load %arg10[%c3, %c0_154, %c0_155] : memref<5x160x128xf32, #tpu.memory_space<vmem>>, vector<1x160x128xf32>
    %416 = vector.shape_cast %415 : vector<1x160x128xf32> to vector<160x128xf32>
    %c3_156 = arith.constant 3 : index
    %c0_157 = arith.constant 0 : index
    %c0_158 = arith.constant 0 : index
    %417 = vector.load %arg11[%c3_156, %c0_157, %c0_158] : memref<5x1x128xf32, #tpu.memory_space<vmem>>, vector<1x1x128xf32>
    %418 = vector.shape_cast %417 : vector<1x1x128xf32> to vector<1x128xf32>
    %419 = tpu.iota {dimensions = array<i32: 0>} : vector<40x1xi32>
    %c2_i32_159 = arith.constant 2 : i32
    %420 = tpu.dynamic_rotate %414 by %c2_i32_159 dim 0 : vector<40x32xf32>, i32 -> vector<40x32xf32>
    %c2_i32_160 = arith.constant 2 : i32
    %421 = vector.broadcast %c2_i32_160 : i32 to vector<40x1xi32>
    %422 = arith.cmpi sge, %419, %421 : vector<40x1xi32>
    %cst_161 = arith.constant 0.000000e+00 : f32
    %423 = vector.shape_cast %422 : vector<40x1xi1> to vector<40x1xi1>
    %424 = vector.broadcast %423 : vector<40x1xi1> to vector<40x32xi1>
    %425 = vector.broadcast %cst_161 : f32 to vector<40x32xf32>
    %426 = arith.select %424, %420, %425 : vector<40x32xi1>, vector<40x32xf32>
    %c1_i32_162 = arith.constant 1 : i32
    %427 = tpu.dynamic_rotate %414 by %c1_i32_162 dim 0 : vector<40x32xf32>, i32 -> vector<40x32xf32>
    %c1_i32_163 = arith.constant 1 : i32
    %428 = vector.broadcast %c1_i32_163 : i32 to vector<40x1xi32>
    %429 = arith.cmpi sge, %419, %428 : vector<40x1xi32>
    %cst_164 = arith.constant 0.000000e+00 : f32
    %430 = vector.shape_cast %429 : vector<40x1xi1> to vector<40x1xi1>
    %431 = vector.broadcast %430 : vector<40x1xi1> to vector<40x32xi1>
    %432 = vector.broadcast %cst_164 : f32 to vector<40x32xf32>
    %433 = arith.select %431, %427, %432 : vector<40x32xi1>, vector<40x32xf32>
    %c39_i32_165 = arith.constant 39 : i32
    %434 = tpu.dynamic_rotate %414 by %c39_i32_165 dim 0 : vector<40x32xf32>, i32 -> vector<40x32xf32>
    %c39_i32_166 = arith.constant 39 : i32
    %435 = vector.broadcast %c39_i32_166 : i32 to vector<40x1xi32>
    %436 = arith.cmpi slt, %419, %435 : vector<40x1xi32>
    %cst_167 = arith.constant 0.000000e+00 : f32
    %437 = vector.shape_cast %436 : vector<40x1xi1> to vector<40x1xi1>
    %438 = vector.broadcast %437 : vector<40x1xi1> to vector<40x32xi1>
    %439 = vector.broadcast %cst_167 : f32 to vector<40x32xf32>
    %440 = arith.select %438, %434, %439 : vector<40x32xi1>, vector<40x32xf32>
    %c38_i32_168 = arith.constant 38 : i32
    %441 = tpu.dynamic_rotate %414 by %c38_i32_168 dim 0 : vector<40x32xf32>, i32 -> vector<40x32xf32>
    %c38_i32_169 = arith.constant 38 : i32
    %442 = vector.broadcast %c38_i32_169 : i32 to vector<40x1xi32>
    %443 = arith.cmpi slt, %419, %442 : vector<40x1xi32>
    %cst_170 = arith.constant 0.000000e+00 : f32
    %444 = vector.shape_cast %443 : vector<40x1xi1> to vector<40x1xi1>
    %445 = vector.broadcast %444 : vector<40x1xi1> to vector<40x32xi1>
    %446 = vector.broadcast %cst_170 : f32 to vector<40x32xf32>
    %447 = arith.select %445, %441, %446 : vector<40x32xi1>, vector<40x32xf32>
    %448 = tpu.concatenate %426, %433, %414, %440, %447 in 1 : vector<40x32xf32>, vector<40x32xf32>, vector<40x32xf32>, vector<40x32xf32>, vector<40x32xf32> -> vector<40x160xf32>
    %cst_171 = arith.constant dense<0.000000e+00> : vector<40x128xf32>
    %449 = tpu.matmul %448, %416, %cst_171 {dimension_numbers = #tpu.dot_dimension_numbers<[1], [0], [0], [1], [0, 0, 1, 1], [], []>} : vector<40x160xf32>, vector<160x128xf32>, vector<40x128xf32> -> vector<40x128xf32>
    %450 = vector.broadcast %418 : vector<1x128xf32> to vector<40x128xf32>
    %451 = arith.addf %449, %450 : vector<40x128xf32>
    %452 = math.tanh %451 : vector<40x128xf32>
    %453 = vector.extract_strided_slice %452 {offsets = [0, 0], sizes = [40, 32], strides = [1, 1]} : vector<40x128xf32> to vector<40x32xf32>
    %c4 = arith.constant 4 : index
    %c0_172 = arith.constant 0 : index
    %c0_173 = arith.constant 0 : index
    %454 = vector.load %arg10[%c4, %c0_172, %c0_173] : memref<5x160x128xf32, #tpu.memory_space<vmem>>, vector<1x160x128xf32>
    %455 = vector.shape_cast %454 : vector<1x160x128xf32> to vector<160x128xf32>
    %c4_174 = arith.constant 4 : index
    %c0_175 = arith.constant 0 : index
    %c0_176 = arith.constant 0 : index
    %456 = vector.load %arg11[%c4_174, %c0_175, %c0_176] : memref<5x1x128xf32, #tpu.memory_space<vmem>>, vector<1x1x128xf32>
    %457 = vector.shape_cast %456 : vector<1x1x128xf32> to vector<1x128xf32>
    %458 = tpu.iota {dimensions = array<i32: 0>} : vector<40x1xi32>
    %c2_i32_177 = arith.constant 2 : i32
    %459 = tpu.dynamic_rotate %453 by %c2_i32_177 dim 0 : vector<40x32xf32>, i32 -> vector<40x32xf32>
    %c2_i32_178 = arith.constant 2 : i32
    %460 = vector.broadcast %c2_i32_178 : i32 to vector<40x1xi32>
    %461 = arith.cmpi sge, %458, %460 : vector<40x1xi32>
    %cst_179 = arith.constant 0.000000e+00 : f32
    %462 = vector.shape_cast %461 : vector<40x1xi1> to vector<40x1xi1>
    %463 = vector.broadcast %462 : vector<40x1xi1> to vector<40x32xi1>
    %464 = vector.broadcast %cst_179 : f32 to vector<40x32xf32>
    %465 = arith.select %463, %459, %464 : vector<40x32xi1>, vector<40x32xf32>
    %c1_i32_180 = arith.constant 1 : i32
    %466 = tpu.dynamic_rotate %453 by %c1_i32_180 dim 0 : vector<40x32xf32>, i32 -> vector<40x32xf32>
    %c1_i32_181 = arith.constant 1 : i32
    %467 = vector.broadcast %c1_i32_181 : i32 to vector<40x1xi32>
    %468 = arith.cmpi sge, %458, %467 : vector<40x1xi32>
    %cst_182 = arith.constant 0.000000e+00 : f32
    %469 = vector.shape_cast %468 : vector<40x1xi1> to vector<40x1xi1>
    %470 = vector.broadcast %469 : vector<40x1xi1> to vector<40x32xi1>
    %471 = vector.broadcast %cst_182 : f32 to vector<40x32xf32>
    %472 = arith.select %470, %466, %471 : vector<40x32xi1>, vector<40x32xf32>
    %c39_i32_183 = arith.constant 39 : i32
    %473 = tpu.dynamic_rotate %453 by %c39_i32_183 dim 0 : vector<40x32xf32>, i32 -> vector<40x32xf32>
    %c39_i32_184 = arith.constant 39 : i32
    %474 = vector.broadcast %c39_i32_184 : i32 to vector<40x1xi32>
    %475 = arith.cmpi slt, %458, %474 : vector<40x1xi32>
    %cst_185 = arith.constant 0.000000e+00 : f32
    %476 = vector.shape_cast %475 : vector<40x1xi1> to vector<40x1xi1>
    %477 = vector.broadcast %476 : vector<40x1xi1> to vector<40x32xi1>
    %478 = vector.broadcast %cst_185 : f32 to vector<40x32xf32>
    %479 = arith.select %477, %473, %478 : vector<40x32xi1>, vector<40x32xf32>
    %c38_i32_186 = arith.constant 38 : i32
    %480 = tpu.dynamic_rotate %453 by %c38_i32_186 dim 0 : vector<40x32xf32>, i32 -> vector<40x32xf32>
    %c38_i32_187 = arith.constant 38 : i32
    %481 = vector.broadcast %c38_i32_187 : i32 to vector<40x1xi32>
    %482 = arith.cmpi slt, %458, %481 : vector<40x1xi32>
    %cst_188 = arith.constant 0.000000e+00 : f32
    %483 = vector.shape_cast %482 : vector<40x1xi1> to vector<40x1xi1>
    %484 = vector.broadcast %483 : vector<40x1xi1> to vector<40x32xi1>
    %485 = vector.broadcast %cst_188 : f32 to vector<40x32xf32>
    %486 = arith.select %484, %480, %485 : vector<40x32xi1>, vector<40x32xf32>
    %487 = tpu.concatenate %465, %472, %453, %479, %486 in 1 : vector<40x32xf32>, vector<40x32xf32>, vector<40x32xf32>, vector<40x32xf32>, vector<40x32xf32> -> vector<40x160xf32>
    %cst_189 = arith.constant dense<0.000000e+00> : vector<40x128xf32>
    %488 = tpu.matmul %487, %455, %cst_189 {dimension_numbers = #tpu.dot_dimension_numbers<[1], [0], [0], [1], [0, 0, 1, 1], [], []>} : vector<40x160xf32>, vector<160x128xf32>, vector<40x128xf32> -> vector<40x128xf32>
    %489 = vector.broadcast %457 : vector<1x128xf32> to vector<40x128xf32>
    %490 = arith.addf %488, %489 : vector<40x128xf32>
    %491 = arith.addf %490, %293 : vector<40x128xf32>
    %c0_190 = arith.constant 0 : index
    %c0_191 = arith.constant 0 : index
    %c0_192 = arith.constant 0 : index
    %492 = vector.load %arg13[%c0_190, %c0_191, %c0_192] : memref<1x40x128xf32, #tpu.memory_space<vmem>>, vector<1x40x128xf32>
    %493 = vector.shape_cast %492 : vector<1x40x128xf32> to vector<40x128xf32>
    %494 = vector.shape_cast %491 : vector<40x128xf32> to vector<1x40x128xf32>
    tpu.vector_store %arg13[%c0_190, %c0_191, %c0_192], %494 {strides = array<i32>} : memref<1x40x128xf32, #tpu.memory_space<vmem>>, vector<1x40x128xf32>,
    return
  }
  func.func @transform_0(%arg0: i32, %arg1: memref<2xi32, #tpu.memory_space<smem>>) -> (i32, i32, i32) {
    %c0_i32 = arith.constant 0 : i32
    %c0_i32_0 = arith.constant 0 : i32
    %c0_i32_1 = arith.constant 0 : i32
    return %arg0, %c0_i32, %c0_i32_0 : i32, i32, i32
  }
  func.func @transform_1(%arg0: i32, %arg1: memref<2xi32, #tpu.memory_space<smem>>) -> (i32, i32, i32) {
    %c0_i32 = arith.constant 0 : i32
    %c0_i32_0 = arith.constant 0 : i32
    %c0_i32_1 = arith.constant 0 : i32
    %c0_i32_2 = arith.constant 0 : i32
    return %c0_i32, %c0_i32_0, %c0_i32_1 : i32, i32, i32
  }
  func.func @transform_2(%arg0: i32, %arg1: memref<2xi32, #tpu.memory_space<smem>>) -> (i32, i32, i32) {
    %c0_i32 = arith.constant 0 : i32
    %c0_i32_0 = arith.constant 0 : i32
    %c0_i32_1 = arith.constant 0 : i32
    %c0_i32_2 = arith.constant 0 : i32
    return %c0_i32, %c0_i32_0, %c0_i32_1 : i32, i32, i32
  }
  func.func @transform_3(%arg0: i32, %arg1: memref<2xi32, #tpu.memory_space<smem>>) -> (i32, i32, i32) {
    %c0_i32 = arith.constant 0 : i32
    %c0_i32_0 = arith.constant 0 : i32
    %c0_i32_1 = arith.constant 0 : i32
    %c0_i32_2 = arith.constant 0 : i32
    return %c0_i32, %c0_i32_0, %c0_i32_1 : i32, i32, i32
  }
  func.func @transform_4(%arg0: i32, %arg1: memref<2xi32, #tpu.memory_space<smem>>) -> (i32, i32, i32) {
    %c0_i32 = arith.constant 0 : i32
    %c0_i32_0 = arith.constant 0 : i32
    %c0_i32_1 = arith.constant 0 : i32
    %c0_i32_2 = arith.constant 0 : i32
    return %c0_i32, %c0_i32_0, %c0_i32_1 : i32, i32, i32
  }
  func.func @transform_5(%arg0: i32, %arg1: memref<2xi32, #tpu.memory_space<smem>>) -> (i32, i32, i32) {
    %c0_i32 = arith.constant 0 : i32
    %c0_i32_0 = arith.constant 0 : i32
    %c0_i32_1 = arith.constant 0 : i32
    %c0_i32_2 = arith.constant 0 : i32
    return %c0_i32, %c0_i32_0, %c0_i32_1 : i32, i32, i32
  }
  func.func @transform_6(%arg0: i32, %arg1: memref<2xi32, #tpu.memory_space<smem>>) -> (i32, i32) {
    %c0_i32 = arith.constant 0 : i32
    %c0_i32_0 = arith.constant 0 : i32
    %c0_i32_1 = arith.constant 0 : i32
    return %c0_i32, %c0_i32_0 : i32, i32
  }
  func.func @transform_7(%arg0: i32, %arg1: memref<2xi32, #tpu.memory_space<smem>>) -> (i32, i32) {
    %c0_i32 = arith.constant 0 : i32
    %c0_i32_0 = arith.constant 0 : i32
    %c0_i32_1 = arith.constant 0 : i32
    return %c0_i32, %c0_i32_0 : i32, i32
  }
  func.func @transform_8(%arg0: i32, %arg1: memref<2xi32, #tpu.memory_space<smem>>) -> (i32, i32, i32) {
    %c0_i32 = arith.constant 0 : i32
    %c0_i32_0 = arith.constant 0 : i32
    %c0_i32_1 = arith.constant 0 : i32
    %c0_i32_2 = arith.constant 0 : i32
    return %c0_i32, %c0_i32_0, %c0_i32_1 : i32, i32, i32
  }
  func.func @transform_9(%arg0: i32, %arg1: memref<2xi32, #tpu.memory_space<smem>>) -> (i32, i32, i32) {
    %c0_i32 = arith.constant 0 : i32
    %c0_i32_0 = arith.constant 0 : i32
    %c0_i32_1 = arith.constant 0 : i32
    %c0_i32_2 = arith.constant 0 : i32
    return %c0_i32, %c0_i32_0, %c0_i32_1 : i32, i32, i32
  }
  func.func @transform_10(%arg0: i32, %arg1: memref<2xi32, #tpu.memory_space<smem>>) -> (i32, i32, i32) {
    %c0_i32 = arith.constant 0 : i32
    %c0_i32_0 = arith.constant 0 : i32
    %c0_i32_1 = arith.constant 0 : i32
    return %arg0, %c0_i32, %c0_i32_0 : i32, i32, i32
  }
  func.func @transform_11(%arg0: i32, %arg1: memref<2xi32, #tpu.memory_space<smem>>) -> (i32, i32, i32) {
    %c0_i32 = arith.constant 0 : i32
    %c0_i32_0 = arith.constant 0 : i32
    %c0_i32_1 = arith.constant 0 : i32
    return %arg0, %c0_i32, %c0_i32_0 : i32, i32, i32
  }
}

</mosaic_0001>

<llo_original>
// kernel: _fastspeech2_forward.3
$region0: #{_fastspeech2_forward.3}
  #allocation0 [shape = 'u32[]', space=smem, size = 0x4, offset = 0x4, fixed_abs, tag = 'smem constant byte address 0x4 - core index']
  #allocation1 [shape = 'u32[72,128]{1,0:T(1,128)}', space=vmem, size = 0x9000, scoped, tag = 'internal scratch']
  #allocation2 [shape = 's32[1]{0}', space=sflag, size = 0x4, scoped, tag = 'scoped memory for _fastspeech2_forward.3']
  #allocation3 [shape = 'u8[512]{0}', space=smem, size = 0x200, scoped, tag = 'prefetched SMEM operand 0']
  %s0 = inlined_call_operand.vmem [shape: s32[2], index: 0, kind: input, shape index: {}]
  %s1 = inlined_call_operand.vmem [shape: f32[2,8,32], index: 1, kind: input, shape index: {}]
  %s2 = inlined_call_operand.vmem [shape: f32[2,1,32], index: 2, kind: input, shape index: {}]
  %s3 = inlined_call_operand.vmem [shape: f32[2,32,96], index: 3, kind: input, shape index: {}]
  %s4 = inlined_call_operand.vmem [shape: f32[2,32,32], index: 4, kind: input, shape index: {}]
  %s5 = inlined_call_operand.vmem [shape: f32[2,96,64], index: 5, kind: input, shape index: {}]
  %s6 = inlined_call_operand.vmem [shape: f32[2,64,32], index: 6, kind: input, shape index: {}]
  %s7 = inlined_call_operand.vmem [shape: f32[2,8,128], index: 7, kind: input, shape index: {}]
  %s8 = inlined_call_operand.vmem [shape: f32[32,128], index: 8, kind: input, shape index: {}]
  %s9 = inlined_call_operand.vmem [shape: f32[1,128], index: 9, kind: input, shape index: {}]
  %s10 = inlined_call_operand.vmem [shape: f32[2,8,32], index: 10, kind: output, shape index: {0}]
  %s11 = inlined_call_operand.vmem [shape: f32[2,8,128], index: 11, kind: output, shape index: {1}]
  %12 = xla_tuple %s10, %s11
  %s13 = sld [smem:[#allocation0]]
  $region77: #{_fastspeech2_forward.3} parent=0
    _
  %s15 = ssub.s32 1, %s13
  %s16 = scalar_select 0, %s15, %s13
  %s18 = sshll.u32 %s0, 4
  %s19 = int_to_ptr.vmem [resolvable:$true] %s18
  %21 = dma.vmem_to_smem %s19, 16, [#allocation3], [#allocation2]
  %23 = dma.done [#allocation2], 16
  %24 = sfence
  loop: start=0, step=1, limit=4
  $region2: #{_fastspeech2_forward.3} parent=0 // loop_pre_header
    _
  $region3: #{_fastspeech2_forward.3} parent=0 // loop_header
    %s26 = sphi 0, %s30
    %p27 = scmp.ge.s32.totalorder %s26, 4
    %s36 = sphi 0, %s38
    %s39 = sphi 0, %s36
    %s40 = sphi 0, %s39
    %s56 = sphi 0, %s40
    %s62 = sphi 0, %s64
    %s65 = sphi 0, %s62
    %s66 = sphi 0, %s65
    %s82 = sphi 0, %s66
    %s86 = sphi 0, %s86
    %s88 = sphi 0, %s86
    %s89 = sphi 0, %s88
    %s103 = sphi 0, %s89
    %s107 = sphi 0, %s107
    %s109 = sphi 0, %s107
    %s110 = sphi 0, %s109
    %s124 = sphi 0, %s110
    %s128 = sphi 0, %s128
    %s130 = sphi 0, %s128
    %s131 = sphi 0, %s130
    %s145 = sphi 0, %s131
    %s149 = sphi 0, %s149
    %s151 = sphi 0, %s149
    %s152 = sphi 0, %s151
    %s166 = sphi 0, %s152
    %s170 = sphi 0, %s170
    %s172 = sphi 0, %s170
    %s173 = sphi 0, %s172
    %s187 = sphi 0, %s173
    %s191 = sphi 0, %s191
    %s193 = sphi 0, %s191
    %s194 = sphi 0, %s193
    %s208 = sphi 0, %s194
    %s212 = sphi 0, %s212
    %s214 = sphi 0, %s212
    %s215 = sphi 0, %s214
    %s229 = sphi 0, %s215
    %s235 = sphi 0, %s237
    %s238 = sphi 0, %s235
    %s239 = sphi 0, %s238
    %s255 = sphi 0, %s239
    %s261 = sphi 0, %s263
    %s264 = sphi 0, %s261
    %s265 = sphi 0, %s264
    %s281 = sphi 0, %s265
  $region4: #{_fastspeech2_forward.3} parent=0 // loop_header_branch
    %29 = sbr.rel (%p27) target = $region8
  $region5: #{_fastspeech2_forward.3} parent=0 // loop_body
    %s31 = ssub.s32 %s26, 1
    %s32 = ssub.s32 %s26, 2
    %s33 = sadd.s32 %s26, 1
    %s34 = ssub.s32 %s26, %s33
    %p35 = scmp.eq.s32.totalorder %s34, 0
    %s37 = sadd.s32 %s36, 1
    %s38 = scalar_select %p35, %s36, %s37
    %p41 = pneg %p35
    %p42 = scmp.eq.s32.totalorder %s26, 1
    %p43 = por %p41, %p42
    %p44 = scmp.ne.s32.totalorder %s36, %s39
    %p45 = scmp.eq.s32.totalorder %s26, 0
    %p46 = por %p44, %p45
    %p47 = scmp.ne.s32.totalorder %s36, %s39
    %p48 = scmp.eq.s32.totalorder %s31, 1
    %p49 = por %p47, %p48
    %p50 = scmp.ne.s32.totalorder %s39, %s40
    %p51 = scmp.eq.s32.totalorder %s31, 0
    %p52 = por %p50, %p51
    %p53 = scmp.ne.s32.totalorder %s39, %s40
    %p54 = scmp.eq.s32.totalorder %s32, 1
    %p55 = por %p53, %p54
    %p57 = scmp.ne.s32.totalorder %s40, %s56
    %p58 = scmp.eq.s32.totalorder %s32, 0
    %p59 = por %p57, %p58
    %s60 = ssub.s32 %s26, %s33
    %p61 = scmp.eq.s32.totalorder %s60, 0
    %s63 = sadd.s32 %s62, 1
    %s64 = scalar_select %p61, %s62, %s63
    %p67 = pneg %p61
    %p68 = scmp.eq.s32.totalorder %s26, 1
    %p69 = por %p67, %p68
    %p70 = scmp.ne.s32.totalorder %s62, %s65
    %p71 = scmp.eq.s32.totalorder %s26, 0
    %p72 = por %p70, %p71
    %p73 = scmp.ne.s32.totalorder %s62, %s65
    %p74 = scmp.eq.s32.totalorder %s31, 1
    %p75 = por %p73, %p74
    %p76 = scmp.ne.s32.totalorder %s65, %s66
    %p77 = scmp.eq.s32.totalorder %s31, 0
    %p78 = por %p76, %p77
    %p79 = scmp.ne.s32.totalorder %s65, %s66
    %p80 = scmp.eq.s32.totalorder %s32, 1
    %p81 = por %p79, %p80
    %p83 = scmp.ne.s32.totalorder %s66, %s82
    %p84 = scmp.eq.s32.totalorder %s32, 0
    %p85 = por %p83, %p84
    %s87 = sadd.s32 %s86, 1
    %p90 = scmp.eq.s32.totalorder %s26, 1
    %p91 = scmp.ne.s32.totalorder %s86, %s88
    %p92 = scmp.eq.s32.totalorder %s26, 0
    %p93 = por %p91, %p92
    %p94 = scmp.ne.s32.totalorder %s86, %s88
    %p95 = scmp.eq.s32.totalorder %s31, 1
    %p96 = por %p94, %p95
    %p97 = scmp.ne.s32.totalorder %s88, %s89
    %p98 = scmp.eq.s32.totalorder %s31, 0
    %p99 = por %p97, %p98
    %p100 = scmp.ne.s32.totalorder %s88, %s89
    %p101 = scmp.eq.s32.totalorder %s32, 1
    %p102 = por %p100, %p101
    %p104 = scmp.ne.s32.totalorder %s89, %s103
    %p105 = scmp.eq.s32.totalorder %s32, 0
    %p106 = por %p104, %p105
    %s108 = sadd.s32 %s107, 1
    %p111 = scmp.eq.s32.totalorder %s26, 1
    %p112 = scmp.ne.s32.totalorder %s107, %s109
    %p113 = scmp.eq.s32.totalorder %s26, 0
    %p114 = por %p112, %p113
    %p115 = scmp.ne.s32.totalorder %s107, %s109
    %p116 = scmp.eq.s32.totalorder %s31, 1
    %p117 = por %p115, %p116
    %p118 = scmp.ne.s32.totalorder %s109, %s110
    %p119 = scmp.eq.s32.totalorder %s31, 0
    %p120 = por %p118, %p119
    %p121 = scmp.ne.s32.totalorder %s109, %s110
    %p122 = scmp.eq.s32.totalorder %s32, 1
    %p123 = por %p121, %p122
    %p125 = scmp.ne.s32.totalorder %s110, %s124
    %p126 = scmp.eq.s32.totalorder %s32, 0
    %p127 = por %p125, %p126
    %s129 = sadd.s32 %s128, 1
    %p132 = scmp.eq.s32.totalorder %s26, 1
    %p133 = scmp.ne.s32.totalorder %s128, %s130
    %p134 = scmp.eq.s32.totalorder %s26, 0
    %p135 = por %p133, %p134
    %p136 = scmp.ne.s32.totalorder %s128, %s130
    %p137 = scmp.eq.s32.totalorder %s31, 1
    %p138 = por %p136, %p137
    %p139 = scmp.ne.s32.totalorder %s130, %s131
    %p140 = scmp.eq.s32.totalorder %s31, 0
    %p141 = por %p139, %p140
    %p142 = scmp.ne.s32.totalorder %s130, %s131
    %p143 = scmp.eq.s32.totalorder %s32, 1
    %p144 = por %p142, %p143
    %p146 = scmp.ne.s32.totalorder %s131, %s145
    %p147 = scmp.eq.s32.totalorder %s32, 0
    %p148 = por %p146, %p147
    %s150 = sadd.s32 %s149, 1
    %p153 = scmp.eq.s32.totalorder %s26, 1
    %p154 = scmp.ne.s32.totalorder %s149, %s151
    %p155 = scmp.eq.s32.totalorder %s26, 0
    %p156 = por %p154, %p155
    %p157 = scmp.ne.s32.totalorder %s149, %s151
    %p158 = scmp.eq.s32.totalorder %s31, 1
    %p159 = por %p157, %p158
    %p160 = scmp.ne.s32.totalorder %s151, %s152
    %p161 = scmp.eq.s32.totalorder %s31, 0
    %p162 = por %p160, %p161
    %p163 = scmp.ne.s32.totalorder %s151, %s152
    %p164 = scmp.eq.s32.totalorder %s32, 1
    %p165 = por %p163, %p164
    %p167 = scmp.ne.s32.totalorder %s152, %s166
    %p168 = scmp.eq.s32.totalorder %s32, 0
    %p169 = por %p167, %p168
    %s171 = sadd.s32 %s170, 1
    %p174 = scmp.eq.s32.totalorder %s26, 1
    %p175 = scmp.ne.s32.totalorder %s170, %s172
    %p176 = scmp.eq.s32.totalorder %s26, 0
    %p177 = por %p175, %p176
    %p178 = scmp.ne.s32.totalorder %s170, %s172
    %p179 = scmp.eq.s32.totalorder %s31, 1
    %p180 = por %p178, %p179
    %p181 = scmp.ne.s32.totalorder %s172, %s173
    %p182 = scmp.eq.s32.totalorder %s31, 0
    %p183 = por %p181, %p182
    %p184 = scmp.ne.s32.totalorder %s172, %s173
    %p185 = scmp.eq.s32.totalorder %s32, 1
    %p186 = por %p184, %p185
    %p188 = scmp.ne.s32.totalorder %s173, %s187
    %p189 = scmp.eq.s32.totalorder %s32, 0
    %p190 = por %p188, %p189
    %s192 = sadd.s32 %s191, 1
    %p195 = scmp.eq.s32.totalorder %s26, 1
    %p196 = scmp.ne.s32.totalorder %s191, %s193
    %p197 = scmp.eq.s32.totalorder %s26, 0
    %p198 = por %p196, %p197
    %p199 = scmp.ne.s32.totalorder %s191, %s193
    %p200 = scmp.eq.s32.totalorder %s31, 1
    %p201 = por %p199, %p200
    %p202 = scmp.ne.s32.totalorder %s193, %s194
    %p203 = scmp.eq.s32.totalorder %s31, 0
    %p204 = por %p202, %p203
    %p205 = scmp.ne.s32.totalorder %s193, %s194
    %p206 = scmp.eq.s32.totalorder %s32, 1
    %p207 = por %p205, %p206
    %p209 = scmp.ne.s32.totalorder %s194, %s208
    %p210 = scmp.eq.s32.totalorder %s32, 0
    %p211 = por %p209, %p210
    %s213 = sadd.s32 %s212, 1
    %p216 = scmp.eq.s32.totalorder %s26, 1
    %p217 = scmp.ne.s32.totalorder %s212, %s214
    %p218 = scmp.eq.s32.totalorder %s26, 0
    %p219 = por %p217, %p218
    %p220 = scmp.ne.s32.totalorder %s212, %s214
    %p221 = scmp.eq.s32.totalorder %s31, 1
    %p222 = por %p220, %p221
    %p223 = scmp.ne.s32.totalorder %s214, %s215
    %p224 = scmp.eq.s32.totalorder %s31, 0
    %p225 = por %p223, %p224
    %p226 = scmp.ne.s32.totalorder %s214, %s215
    %p227 = scmp.eq.s32.totalorder %s32, 1
    %p228 = por %p226, %p227
    %p230 = scmp.ne.s32.totalorder %s215, %s229
    %p231 = scmp.eq.s32.totalorder %s32, 0
    %p232 = por %p230, %p231
    %s233 = ssub.s32 %s26, %s33
    %p234 = scmp.eq.s32.totalorder %s233, 0
    %s236 = sadd.s32 %s235, 1
    %s237 = scalar_select %p234, %s235, %s236
    %p240 = pneg %p234
    %p241 = scmp.eq.s32.totalorder %s26, 1
    %p242 = por %p240, %p241
    %p243 = scmp.ne.s32.totalorder %s235, %s238
    %p244 = scmp.eq.s32.totalorder %s26, 0
    %p245 = por %p243, %p244
    %p246 = scmp.ne.s32.totalorder %s235, %s238
    %p247 = scmp.eq.s32.totalorder %s31, 1
    %p248 = por %p246, %p247
    %p249 = scmp.ne.s32.totalorder %s238, %s239
    %p250 = scmp.eq.s32.totalorder %s31, 0
    %p251 = por %p249, %p250
    %p252 = scmp.ne.s32.totalorder %s238, %s239
    %p253 = scmp.eq.s32.totalorder %s32, 1
    %p254 = por %p252, %p253
    %p256 = scmp.ne.s32.totalorder %s239, %s255
    %p257 = scmp.eq.s32.totalorder %s32, 0
    %p258 = por %p256, %p257
    %s259 = ssub.s32 %s26, %s33
    %p260 = scmp.eq.s32.totalorder %s259, 0
    %s262 = sadd.s32 %s261, 1
    %s263 = scalar_select %p260, %s261, %s262
    %p266 = pneg %p260
    %p267 = scmp.eq.s32.totalorder %s26, 1
    %p268 = por %p266, %p267
    %p269 = scmp.ne.s32.totalorder %s261, %s264
    %p270 = scmp.eq.s32.totalorder %s26, 0
    %p271 = por %p269, %p270
    %p272 = scmp.ne.s32.totalorder %s261, %s264
    %p273 = scmp.eq.s32.totalorder %s31, 1
    %p274 = por %p272, %p273
    %p275 = scmp.ne.s32.totalorder %s264, %s265
    %p276 = scmp.eq.s32.totalorder %s31, 0
    %p277 = por %p275, %p276
    %p278 = scmp.ne.s32.totalorder %s264, %s265
    %p279 = scmp.eq.s32.totalorder %s32, 1
    %p280 = por %p278, %p279
    %p282 = scmp.ne.s32.totalorder %s265, %s281
    %p283 = scmp.eq.s32.totalorder %s32, 0
    %p284 = por %p282, %p283
    %p285 = scmp.le.s32.totalorder 1, %s26
    %p286 = scmp.lt.s32.totalorder %s26, 3
    %p287 = pnand %p285, %p286
    %p288 = pneg %p287
    // Predicated region
    $region9: #{_fastspeech2_forward.3} parent=5 // pred_check
      _
    $region10: #{_fastspeech2_forward.3} parent=5 // pred_check_branch
      %290 = sbr.rel (%p287) target = $region12
    $region11: #{_fastspeech2_forward.3} parent=5 // pred_region
      %s291 = ssub.s32 %s26, 1
      // Predicated region
      $region13: #{_fastspeech2_forward.3} parent=11 // pred_check
        %p292 = pneg %p99
      $region14: #{_fastspeech2_forward.3} parent=11 // pred_check_branch
        %294 = sbr.rel (%p292) target = $region16
      $region15: #{_fastspeech2_forward.3} parent=11 // pred_region
        _
      $region16: #{_fastspeech2_forward.3} parent=11 // pred_fallthru
        _
      // Predicated region
      $region17: #{_fastspeech2_forward.3} parent=11 // pred_check
        %p295 = pneg %p120
      $region18: #{_fastspeech2_forward.3} parent=11 // pred_check_branch
        %297 = sbr.rel (%p295) target = $region20
      $region19: #{_fastspeech2_forward.3} parent=11 // pred_region
        _
      $region20: #{_fastspeech2_forward.3} parent=11 // pred_fallthru
        _
      // Predicated region
      $region21: #{_fastspeech2_forward.3} parent=11 // pred_check
        %p298 = pneg %p141
      $region22: #{_fastspeech2_forward.3} parent=11 // pred_check_branch
        %300 = sbr.rel (%p298) target = $region24
      $region23: #{_fastspeech2_forward.3} parent=11 // pred_region
        _
      $region24: #{_fastspeech2_forward.3} parent=11 // pred_fallthru
        _
      // Predicated region
      $region25: #{_fastspeech2_forward.3} parent=11 // pred_check
        %p301 = pneg %p162
      $region26: #{_fastspeech2_forward.3} parent=11 // pred_check_branch
        %303 = sbr.rel (%p301) target = $region28
      $region27: #{_fastspeech2_forward.3} parent=11 // pred_region
        _
      $region28: #{_fastspeech2_forward.3} parent=11 // pred_fallthru
        _
      // Predicated region
      $region29: #{_fastspeech2_forward.3} parent=11 // pred_check
        %p304 = pneg %p183
      $region30: #{_fastspeech2_forward.3} parent=11 // pred_check_branch
        %306 = sbr.rel (%p304) target = $region32
      $region31: #{_fastspeech2_forward.3} parent=11 // pred_region
        _
      $region32: #{_fastspeech2_forward.3} parent=11 // pred_fallthru
        _
      // Predicated region
      $region33: #{_fastspeech2_forward.3} parent=11 // pred_check
        %p307 = pneg %p204
      $region34: #{_fastspeech2_forward.3} parent=11 // pred_check_branch
        %309 = sbr.rel (%p307) target = $region36
      $region35: #{_fastspeech2_forward.3} parent=11 // pred_region
        _
      $region36: #{_fastspeech2_forward.3} parent=11 // pred_fallthru
        _
      // Predicated region
      $region37: #{_fastspeech2_forward.3} parent=11 // pred_check
        %p310 = pneg %p225
      $region38: #{_fastspeech2_forward.3} parent=11 // pred_check_branch
        %312 = sbr.rel (%p310) target = $region40
      $region39: #{_fastspeech2_forward.3} parent=11 // pred_region
        _
      $region40: #{_fastspeech2_forward.3} parent=11 // pred_fallthru
        _
    $region12: #{_fastspeech2_forward.3} parent=5 // pred_fallthru
      _
    %p313 = scmp.lt.s32.totalorder %s26, 2
    // Predicated region
    $region41: #{_fastspeech2_forward.3} parent=5 // pred_check
      %p314 = pneg %p313
    $region42: #{_fastspeech2_forward.3} parent=5 // pred_check_branch
      %316 = sbr.rel (%p314) target = $region44
    $region43: #{_fastspeech2_forward.3} parent=5 // pred_region
      // Predicated region
      $region45: #{_fastspeech2_forward.3} parent=43 // pred_check
        %p317 = pneg %p46
      $region46: #{_fastspeech2_forward.3} parent=43 // pred_check_branch
        %319 = sbr.rel (%p317) target = $region48
      $region47: #{_fastspeech2_forward.3} parent=43 // pred_region
        %p320 = scmp.lt.s32.totalorder %s26, 1
        %s321 = scalar_select %p320, %s26, 1
        %s322 = smul.addr %s321, 8
        %s323 = scalar_lea.vmem %s1, %s322
      $region48: #{_fastspeech2_forward.3} parent=43 // pred_fallthru
        _
      // Predicated region
      $region49: #{_fastspeech2_forward.3} parent=43 // pred_check
        %p324 = pneg %p72
      $region50: #{_fastspeech2_forward.3} parent=43 // pred_check_branch
        %326 = sbr.rel (%p324) target = $region52
      $region51: #{_fastspeech2_forward.3} parent=43 // pred_region
        %p327 = scmp.lt.s32.totalorder %s26, 1
        %s328 = scalar_select %p327, %s26, 1
        %s329 = scalar_lea.vmem %s2, %s328
      $region52: #{_fastspeech2_forward.3} parent=43 // pred_fallthru
        _
    $region44: #{_fastspeech2_forward.3} parent=5 // pred_fallthru
      _
    %p330 = scmp.le.s32.totalorder 1, %s26
    %p331 = scmp.lt.s32.totalorder %s26, 3
    %p332 = pnand %p330, %p331
    %p333 = pneg %p332
    // Predicated region
    $region53: #{_fastspeech2_forward.3} parent=5 // pred_check
      _
    $region54: #{_fastspeech2_forward.3} parent=5 // pred_check_branch
      %335 = sbr.rel (%p332) target = $region56
    $region55: #{_fastspeech2_forward.3} parent=5 // pred_region
      %s336 = ssub.s32 %s26, 1
      %p337 = scmp.lt.s32.totalorder %s31, 1
      %s338 = scalar_select %p337, %s31, 1
      %s339 = smul.addr %s338, 8
      %s340 = scalar_lea.vmem %s1, %s339
      %p341 = pneg %p52
      %p342 = pneg %p49
      %p343 = scmp.lt.s32.totalorder %s31, 1
      %s344 = scalar_select %p343, %s31, 1
      %s345 = scalar_lea.vmem %s2, %s344
      %p346 = pneg %p78
      %p347 = pneg %p75
      %p348 = pneg %p99
      %p349 = pneg %p96
      %p350 = pneg %p120
      %p351 = pneg %p117
      %p352 = pneg %p141
      %p353 = pneg %p138
      %p354 = pneg %p162
      %p355 = pneg %p159
      %p356 = pneg %p183
      %p357 = pneg %p180
      %p358 = pneg %p204
      %p359 = pneg %p201
      %p360 = pneg %p225
      %p361 = pneg %p222
      %p362 = pneg %p251
      %p363 = pneg %p248
      %p364 = scmp.lt.s32.totalorder %s31, 1
      %s365 = scalar_select %p364, %s31, 1
      %s366 = smul.addr %s365, 8
      %s367 = scalar_lea.vmem %s10, %s366
      %p368 = pneg %p277
      %p369 = pneg %p274
      %p370 = scmp.lt.s32.totalorder %s31, 1
      %s371 = scalar_select %p370, %s31, 1
      %s372 = smul.addr %s371, 8
      %s373 = scalar_lea.vmem %s11, %s372
      %p374 = scmp.lt.s32.totalorder %s31, 1
      %s375 = scalar_select %p374, %s31, 1
      %s376 = smul.addr %s375, 8
      %s377 = scalar_lea.vmem %s1, %s376
      %p378 = scmp.lt.s32.totalorder %s31, 1
      %s379 = scalar_select %p378, %s31, 1
      %s380 = scalar_lea.vmem %s2, %s379
      %p381 = scmp.lt.s32.totalorder %s31, 1
      %s382 = scalar_select %p381, %s31, 1
      %s383 = smul.addr %s382, 8
      %s384 = scalar_lea.vmem %s10, %s383
      %p385 = scmp.lt.s32.totalorder %s31, 1
      %s386 = scalar_select %p385, %s31, 1
      %s387 = smul.addr %s386, 8
      %s388 = scalar_lea.vmem %s11, %s387
      %s389 = sld [smem:[#allocation3 + %s31]]
      %v390 = vlaneseq
      %v391 = vshrl.u32 %v390, 7
      %v392 = vlaneseq
      %v393 = vand.u32 %v392, 127
      %v394 = vstv %s389
      %vm395 = vcmp.lt.s32.totalorder %v391, %v394
      %v396 = vsel %vm395, 1, 0
      %v397 = vcvt.s32.f32 %v396
      %vm398 = vcmp.lt.s32.totalorder %v393, %v394
      %v399 = vsel %vm398, 0.0, -1e+09
      %v400 = vld [vmem:[%s377] sm:$0xff]
      %v401 = vld [vmem:[%s7] sm:$0xff]
      %v402 = vld [vmem:[%s3] sm:$0xff]
      %v403 = vld [vmem:[%s3 + $0x8] sm:$0xff]
      %v404 = vld [vmem:[%s3 + $0x10] sm:$0xff]
      %v405 = vld [vmem:[%s3 + $0x18] sm:$0xff]
      %v406 = vld [vmem:[%s4] sm:$0xff]
      %v407 = vld [vmem:[%s4 + $0x8] sm:$0xff]
      %v408 = vld [vmem:[%s4 + $0x10] sm:$0xff]
      %v409 = vld [vmem:[%s4 + $0x18] sm:$0xff]
      %v410 = vld [vmem:[%s5] sm:$0xff]
      %v411 = vld [vmem:[%s5 + $0x8] sm:$0xff]
      %v412 = vld [vmem:[%s5 + $0x10] sm:$0xff]
      %v413 = vld [vmem:[%s5 + $0x18] sm:$0xff]
      %v414 = vld [vmem:[%s5 + $0x20] sm:$0xff]
      %v415 = vld [vmem:[%s5 + $0x28] sm:$0xff]
      %v416 = vld [vmem:[%s5 + $0x30] sm:$0xff]
      %v417 = vld [vmem:[%s5 + $0x38] sm:$0xff]
      %v418 = vld [vmem:[%s5 + $0x40] sm:$0xff]
      %v419 = vld [vmem:[%s5 + $0x48] sm:$0xff]
      %v420 = vld [vmem:[%s5 + $0x50] sm:$0xff]
      %v421 = vld [vmem:[%s5 + $0x58] sm:$0xff]
      %v422 = vld [vmem:[%s6] sm:$0xff]
      %v423 = vld [vmem:[%s6 + $0x8] sm:$0xff]
      %v424 = vld [vmem:[%s6 + $0x10] sm:$0xff]
      %v425 = vld [vmem:[%s6 + $0x18] sm:$0xff]
      %v426 = vld [vmem:[%s6 + $0x20] sm:$0xff]
      %v427 = vld [vmem:[%s6 + $0x28] sm:$0xff]
      %v428 = vld [vmem:[%s6 + $0x30] sm:$0xff]
      %v429 = vld [vmem:[%s6 + $0x38] sm:$0xff]
      %v430 = vperm.slane %v401, 0
      %vm431 = vcmask 261120
      %v433 = vsel %vm431, %v400, 0
      %435 = vmatpush.msra.mxu0 0.0
      %436 = vmatpush.msra.mxu0 0.0
      %437 = vmatpush.msra.mxu0 0.0
      %438 = vmatpush.msra.mxu0 0.0
      %439 = vmatpush.msra.mxu0 0.0
      %440 = vmatpush.msra.mxu0 0.0
      %441 = vmatpush.msra.mxu0 0.0
      %442 = vmatpush.msra.mxu0 0.0
      %443 = vmatpush.msra.mxu0 0.0
      %444 = vmatpush.msra.mxu0 0.0
      %445 = vmatpush.msra.mxu0 0.0
      %446 = vmatpush.msra.mxu0 0.0
      %447 = vmatpush.msra.mxu0 %v405
      %448 = vmatpush.msra.mxu0 %v404
      %449 = vmatpush.msra.mxu0 %v403
      %450 = vmatpush.msra.mxu0 %v402
      %451 = vmatmul.f32.gmra.mxu0 %v433
      %v452 = vpop.f32.mrf.mxu0
      %v453 = vadd.f32 %v430, %v452
      %454 = vdwg.mxu0
      %456 = vrot.lane.b32.xlu0 %v453, 96
      %v457 = vpop.permute.xlu0 %456
      %vm458 = vcmask 130048
      %v459 = vsel %vm458, %v453, 0
      %v461 = vsel %vm458, %v457, 0
      %463 = vmatpush.xpose.msra.mxu0 0.0
      %464 = vmatpush.xpose.msra.mxu0 0.0
      %465 = vmatpush.xpose.msra.mxu0 0.0
      %466 = vmatpush.xpose.msra.mxu0 0.0
      %467 = vmatpush.xpose.msra.mxu0 0.0
      %468 = vmatpush.xpose.msra.mxu0 0.0
      %469 = vmatpush.xpose.msra.mxu0 0.0
      %470 = vmatpush.xpose.msra.mxu0 0.0
      %471 = vmatpush.xpose.msra.mxu0 0.0
      %472 = vmatpush.xpose.msra.mxu0 0.0
      %473 = vmatpush.xpose.msra.mxu0 0.0
      %474 = vmatpush.xpose.msra.mxu0 0.0
      %475 = vmatpush.xpose.msra.mxu0 0.0
      %476 = vmatpush.xpose.msra.mxu0 0.0
      %477 = vmatpush.xpose.msra.mxu0 0.0
      %478 = vmatpush.xpose.msra.mxu0 %v461
      %479 = vmatmul.f32.gmra.mxu0 %v459
      %v480 = vpop.f32.mrf.mxu0
      %v481 = vadd.f32 0.0, %v480
      %482 = vdwg.mxu0
      %v483 = vmul.f32 %v481, 0.25
      %v484 = vadd.f32 %v483, %v399
      %vm485 = vcmask 64512
      %v486 = vsel %vm485, %v484, -inf
      %487 = vmax.xlane.f32.xlu0 %v486
      %v488 = vpop.xlane.xlu0 %487
      %v489 = vsub.f32 %v484, %v488
      %v490 = vmul.f32 %v489, 1.442695
      %v491 = vpow.pop %v490
      %v492 = vsel %vm485, %v491, 0.0
      %493 = vadd.xlane.f32.xlu0 %v492
      %v494 = vpop.xlane.xlu0 %493
      %v495 = vrcp.pop %v494
      %v496 = vmul.f32 %v491, %v495
      %497 = vrot.lane.b32.xlu0 %v453, 64
      %v498 = vpop.permute.xlu0 %497
      %v501 = vsel %vm485, %v496, 0
      %503 = vmatpush.msra.mxu0 0.0
      %504 = vmatpush.msra.mxu0 0.0
      %505 = vmatpush.msra.mxu0 0.0
      %506 = vmatpush.msra.mxu0 0.0
      %507 = vmatpush.msra.mxu0 0.0
      %508 = vmatpush.msra.mxu0 0.0
      %509 = vmatpush.msra.mxu0 0.0
      %510 = vmatpush.msra.mxu0 0.0
      %511 = vmatpush.msra.mxu0 0.0
      %512 = vmatpush.msra.mxu0 0.0
      %513 = vmatpush.msra.mxu0 0.0
      %514 = vmatpush.msra.mxu0 0.0
      %515 = vmatpush.msra.mxu0 0.0
      %516 = vmatpush.msra.mxu0 0.0
      %517 = vmatpush.msra.mxu0 0.0
      %518 = vmatpush.msra.mxu0 %v498
      %519 = vmatmul.f32.gmra.mxu0 %v501
      %v520 = vpop.f32.mrf.mxu0
      %v521 = vadd.f32 0.0, %v520
      %522 = vdwg.mxu0
      %523 = vrot.lane.b32.xlu0 %v453, 112
      %v524 = vpop.permute.xlu0 %523
      %525 = vrot.lane.b32.xlu0 %v453, 80
      %v526 = vpop.permute.xlu0 %525
      %v527 = vsel %vm458, %v524, 0
      %v529 = vsel %vm458, %v526, 0
      %531 = vmatpush.xpose.msra.mxu0 0.0
      %532 = vmatpush.xpose.msra.mxu0 0.0
      %533 = vmatpush.xpose.msra.mxu0 0.0
      %534 = vmatpush.xpose.msra.mxu0 0.0
      %535 = vmatpush.xpose.msra.mxu0 0.0
      %536 = vmatpush.xpose.msra.mxu0 0.0
      %537 = vmatpush.xpose.msra.mxu0 0.0
      %538 = vmatpush.xpose.msra.mxu0 0.0
      %539 = vmatpush.xpose.msra.mxu0 0.0
      %540 = vmatpush.xpose.msra.mxu0 0.0
      %541 = vmatpush.xpose.msra.mxu0 0.0
      %542 = vmatpush.xpose.msra.mxu0 0.0
      %543 = vmatpush.xpose.msra.mxu0 0.0
      %544 = vmatpush.xpose.msra.mxu0 0.0
      %545 = vmatpush.xpose.msra.mxu0 0.0
      %546 = vmatpush.xpose.msra.mxu0 %v529
      %547 = vmatmul.f32.gmra.mxu0 %v527
      %v548 = vpop.f32.mrf.mxu0
      %v549 = vadd.f32 0.0, %v548
      %550 = vdwg.mxu0
      %v551 = vmul.f32 %v549, 0.25
      %v552 = vadd.f32 %v551, %v399
      %v553 = vsel %vm485, %v552, -inf
      %554 = vmax.xlane.f32.xlu0 %v553
      %v555 = vpop.xlane.xlu0 %554
      %v556 = vsub.f32 %v552, %v555
      %v557 = vmul.f32 %v556, 1.442695
      %v558 = vpow.pop %v557
      %v559 = vsel %vm485, %v558, 0.0
      %560 = vadd.xlane.f32.xlu0 %v559
      %v561 = vpop.xlane.xlu0 %560
      %v562 = vrcp.pop %v561
      %v563 = vmul.f32 %v558, %v562
      %564 = vrot.lane.b32.xlu0 %v453, 48
      %v565 = vpop.permute.xlu0 %564
      %v568 = vsel %vm485, %v563, 0
      %570 = vmatpush.msra.mxu0 0.0
      %571 = vmatpush.msra.mxu0 0.0
      %572 = vmatpush.msra.mxu0 0.0
      %573 = vmatpush.msra.mxu0 0.0
      %574 = vmatpush.msra.mxu0 0.0
      %575 = vmatpush.msra.mxu0 0.0
      %576 = vmatpush.msra.mxu0 0.0
      %577 = vmatpush.msra.mxu0 0.0
      %578 = vmatpush.msra.mxu0 0.0
      %579 = vmatpush.msra.mxu0 0.0
      %580 = vmatpush.msra.mxu0 0.0
      %581 = vmatpush.msra.mxu0 0.0
      %582 = vmatpush.msra.mxu0 0.0
      %583 = vmatpush.msra.mxu0 0.0
      %584 = vmatpush.msra.mxu0 0.0
      %585 = vmatpush.msra.mxu0 %v565
      %586 = vmatmul.f32.gmra.mxu0 %v568
      %v587 = vpop.f32.mrf.mxu0
      %v588 = vadd.f32 0.0, %v587
      %589 = vdwg.mxu0
      %591 = vrot.lane.b32.xlu0 %v588, 16
      %v592 = vpop.permute.xlu0 %591
      %v594 = vsel %vm458, %v521, %v592
      %v595 = vperm.slane %v401, 1
      %v597 = vsel %vm431, %v594, 0
      %599 = vmatpush.msra.mxu0 0.0
      %600 = vmatpush.msra.mxu0 0.0
      %601 = vmatpush.msra.mxu0 0.0
      %602 = vmatpush.msra.mxu0 0.0
      %603 = vmatpush.msra.mxu0 0.0
      %604 = vmatpush.msra.mxu0 0.0
      %605 = vmatpush.msra.mxu0 0.0
      %606 = vmatpush.msra.mxu0 0.0
      %607 = vmatpush.msra.mxu0 0.0
      %608 = vmatpush.msra.mxu0 0.0
      %609 = vmatpush.msra.mxu0 0.0
      %610 = vmatpush.msra.mxu0 0.0
      %611 = vmatpush.msra.mxu0 %v409
      %612 = vmatpush.msra.mxu0 %v408
      %613 = vmatpush.msra.mxu0 %v407
      %614 = vmatpush.msra.mxu0 %v406
      %615 = vmatmul.f32.gmra.mxu0 %v597
      %v616 = vpop.f32.mrf.mxu0
      %v617 = vadd.f32 %v595, %v616
      %618 = vdwg.mxu0
      %v619 = vadd.f32 %v617, %v400
      %v620 = vsel %vm431, %v619, 0.0
      %621 = vadd.xlane.f32.xlu0 %v620
      %v622 = vpop.xlane.xlu0 %621
      %v623 = vrcp.pop 32.0
      %v624 = vmul.f32 32.0, %v623
      %v625 = vsub.f32 1.0, %v624
      %v626 = vmul.f32 %v623, %v625
      %v627 = vadd.f32 %v623, %v626
      %vm628 = vweird.f32 %v623
      %v629 = vsel %vm628, %v623, %v627
      %v630 = vmul.f32 %v622, %v629
      %v631 = vsub.f32 %v619, %v630
      %v632 = vmul.f32 %v631, %v631
      %v633 = vsel %vm431, %v632, 0.0
      %634 = vadd.xlane.f32.xlu0 %v633
      %v635 = vpop.xlane.xlu0 %634
      %v636 = vmul.f32 %v635, %v629
      %v637 = vadd.f32 %v636, 1e-05
      %v638 = vrsqrt.pop %v637
      %v639 = vmul.f32 %v638, %v637
      %v640 = vmul.f32 %v639, %v638
      %v641 = vmul.f32 0.5, %v640
      %v642 = vsub.f32 1.5, %v641
      %v643 = vmul.f32 %v638, %v642
      %vm644 = vweird.f32 %v637
      %vm645 = vweird.f32 %v638
      %vm646 = vmor %vm644, %vm645
      %v647 = vsel %vm646, %v638, %v643
      %v648 = vmul.f32 %v631, %v647
      %v649 = vperm.slane %v401, 2
      %v650 = vmul.f32 %v648, %v649
      %v651 = vperm.slane %v401, 3
      %v652 = vadd.f32 %v650, %v651
      %v653 = vmul.f32 %v652, %v397
      %v654 = vrot.slane %v653, 7
      %vm655 = vcmp.ge.s32.totalorder %v391, 1
      %v656 = vsel %vm655, 1, 0
      %vm657 = vcmp.eq.s32.totalorder %v656, 1
      %v658 = vsel %vm657, %v654, 0.0
      %v659 = vrot.slane %v653, 1
      %vm660 = vcmp.lt.s32.totalorder %v391, 7
      %v661 = vsel %vm660, 1, 0
      %vm662 = vcmp.eq.s32.totalorder %v661, 1
      %v663 = vsel %vm662, %v659, 0.0
      %665 = vrot.lane.b32.xlu0 %v653, 32
      %v666 = vpop.permute.xlu0 %665
      %669 = vrot.lane.b32.xlu0 %v663, 64
      %v670 = vpop.permute.xlu0 %669
      %v672 = vsel %vm431, %v658, %v666
      %vm673 = vcmask 523264
      %v674 = vsel %vm673, %v672, %v670
      %v675 = vperm.slane %v401, 4
      %vm676 = vcmask 785408
      %v678 = vsel %vm676, %v674, 0
      %680 = vmatpush.msra.mxu0 0.0
      %681 = vmatpush.msra.mxu0 0.0
      %682 = vmatpush.msra.mxu0 0.0
      %683 = vmatpush.msra.mxu0 0.0
      %684 = vmatpush.msra.mxu0 %v421
      %685 = vmatpush.msra.mxu0 %v420
      %686 = vmatpush.msra.mxu0 %v419
      %687 = vmatpush.msra.mxu0 %v418
      %688 = vmatpush.msra.mxu0 %v417
      %689 = vmatpush.msra.mxu0 %v416
      %690 = vmatpush.msra.mxu0 %v415
      %691 = vmatpush.msra.mxu0 %v414
      %692 = vmatpush.msra.mxu0 %v413
      %693 = vmatpush.msra.mxu0 %v412
      %694 = vmatpush.msra.mxu0 %v411
      %695 = vmatpush.msra.mxu0 %v410
      %696 = vmatmul.f32.gmra.mxu0 %v678
      %v697 = vpop.f32.mrf.mxu0
      %v698 = vadd.f32 %v675, %v697
      %699 = vdwg.mxu0
      %v700 = vmax.f32 %v698, 0.0
      %v701 = vperm.slane %v401, 5
      %v703 = vsel %vm673, %v700, 0
      %705 = vmatpush.msra.mxu0 0.0
      %706 = vmatpush.msra.mxu0 0.0
      %707 = vmatpush.msra.mxu0 0.0
      %708 = vmatpush.msra.mxu0 0.0
      %709 = vmatpush.msra.mxu0 0.0
      %710 = vmatpush.msra.mxu0 0.0
      %711 = vmatpush.msra.mxu0 0.0
      %712 = vmatpush.msra.mxu0 0.0
      %713 = vmatpush.msra.mxu0 %v429
      %714 = vmatpush.msra.mxu0 %v428
      %715 = vmatpush.msra.mxu0 %v427
      %716 = vmatpush.msra.mxu0 %v426
      %717 = vmatpush.msra.mxu0 %v425
      %718 = vmatpush.msra.mxu0 %v424
      %719 = vmatpush.msra.mxu0 %v423
      %720 = vmatpush.msra.mxu0 %v422
      %721 = vmatmul.f32.gmra.mxu0 %v703
      %v722 = vpop.f32.mrf.mxu0
      %v723 = vadd.f32 %v701, %v722
      %724 = vdwg.mxu0
      %v725 = vadd.f32 %v723, %v653
      %v726 = vsel %vm431, %v725, 0.0
      %727 = vadd.xlane.f32.xlu0 %v726
      %v728 = vpop.xlane.xlu0 %727
      %v729 = vmul.f32 %v728, %v629
      %v730 = vsub.f32 %v725, %v729
      %v731 = vmul.f32 %v730, %v730
      %v732 = vsel %vm431, %v731, 0.0
      %733 = vadd.xlane.f32.xlu0 %v732
      %v734 = vpop.xlane.xlu0 %733
      %v735 = vmul.f32 %v734, %v629
      %v736 = vadd.f32 %v735, 1e-05
      %v737 = vrsqrt.pop %v736
      %v738 = vmul.f32 %v737, %v736
      %v739 = vmul.f32 %v738, %v737
      %v740 = vmul.f32 0.5, %v739
      %v741 = vsub.f32 1.5, %v740
      %v742 = vmul.f32 %v737, %v741
      %vm743 = vweird.f32 %v736
      %vm744 = vweird.f32 %v737
      %vm745 = vmor %vm743, %vm744
      %v746 = vsel %vm745, %v737, %v742
      %v747 = vmul.f32 %v730, %v746
      %v748 = vperm.slane %v401, 6
      %v749 = vmul.f32 %v747, %v748
      %v750 = vperm.slane %v401, 7
      %v751 = vadd.f32 %v749, %v750
      %v752 = vmul.f32 %v751, %v397
      %s753 = scalar_lea.vmem %s7, 8
      %v754 = vld [vmem:[%s753] sm:$0xff]
      %s755 = scalar_lea.vmem %s3, 32
      %v756 = vld [vmem:[%s755] sm:$0xff]
      %v757 = vld [vmem:[%s755 + $0x8] sm:$0xff]
      %v758 = vld [vmem:[%s755 + $0x10] sm:$0xff]
      %v759 = vld [vmem:[%s755 + $0x18] sm:$0xff]
      %s760 = scalar_lea.vmem %s4, 32
      %v761 = vld [vmem:[%s760] sm:$0xff]
      %v762 = vld [vmem:[%s760 + $0x8] sm:$0xff]
      %v763 = vld [vmem:[%s760 + $0x10] sm:$0xff]
      %v764 = vld [vmem:[%s760 + $0x18] sm:$0xff]
      %s765 = scalar_lea.vmem %s5, 96
      %v766 = vld [vmem:[%s765] sm:$0xff]
      %v767 = vld [vmem:[%s765 + $0x8] sm:$0xff]
      %v768 = vld [vmem:[%s765 + $0x10] sm:$0xff]
      %v769 = vld [vmem:[%s765 + $0x18] sm:$0xff]
      %v770 = vld [vmem:[%s765 + $0x20] sm:$0xff]
      %v771 = vld [vmem:[%s765 + $0x28] sm:$0xff]
      %v772 = vld [vmem:[%s765 + $0x30] sm:$0xff]
      %v773 = vld [vmem:[%s765 + $0x38] sm:$0xff]
      %v774 = vld [vmem:[%s765 + $0x40] sm:$0xff]
      %v775 = vld [vmem:[%s765 + $0x48] sm:$0xff]
      %v776 = vld [vmem:[%s765 + $0x50] sm:$0xff]
      %v777 = vld [vmem:[%s765 + $0x58] sm:$0xff]
      %s778 = scalar_lea.vmem %s6, 64
      %v779 = vld [vmem:[%s778] sm:$0xff]
      %v780 = vld [vmem:[%s778 + $0x8] sm:$0xff]
      %v781 = vld [vmem:[%s778 + $0x10] sm:$0xff]
      %v782 = vld [vmem:[%s778 + $0x18] sm:$0xff]
      %v783 = vld [vmem:[%s778 + $0x20] sm:$0xff]
      %v784 = vld [vmem:[%s778 + $0x28] sm:$0xff]
      %v785 = vld [vmem:[%s778 + $0x30] sm:$0xff]
      %v786 = vld [vmem:[%s778 + $0x38] sm:$0xff]
      %v787 = vperm.slane %v754, 0
      %v789 = vsel %vm431, %v752, 0
      %791 = vmatpush.msra.mxu0 0.0
      %792 = vmatpush.msra.mxu0 0.0
      %793 = vmatpush.msra.mxu0 0.0
      %794 = vmatpush.msra.mxu0 0.0
      %795 = vmatpush.msra.mxu0 0.0
      %796 = vmatpush.msra.mxu0 0.0
      %797 = vmatpush.msra.mxu0 0.0
      %798 = vmatpush.msra.mxu0 0.0
      %799 = vmatpush.msra.mxu0 0.0
      %800 = vmatpush.msra.mxu0 0.0
      %801 = vmatpush.msra.mxu0 0.0
      %802 = vmatpush.msra.mxu0 0.0
      %803 = vmatpush.msra.mxu0 %v759
      %804 = vmatpush.msra.mxu0 %v758
      %805 = vmatpush.msra.mxu0 %v757
      %806 = vmatpush.msra.mxu0 %v756
      %807 = vmatmul.f32.gmra.mxu0 %v789
      %v808 = vpop.f32.mrf.mxu0
      %v809 = vadd.f32 %v787, %v808
      %810 = vdwg.mxu0
      %812 = vrot.lane.b32.xlu0 %v809, 96
      %v813 = vpop.permute.xlu0 %812
      %v814 = vsel %vm458, %v809, 0
      %v816 = vsel %vm458, %v813, 0
      %818 = vmatpush.xpose.msra.mxu0 0.0
      %819 = vmatpush.xpose.msra.mxu0 0.0
      %820 = vmatpush.xpose.msra.mxu0 0.0
      %821 = vmatpush.xpose.msra.mxu0 0.0
      %822 = vmatpush.xpose.msra.mxu0 0.0
      %823 = vmatpush.xpose.msra.mxu0 0.0
      %824 = vmatpush.xpose.msra.mxu0 0.0
      %825 = vmatpush.xpose.msra.mxu0 0.0
      %826 = vmatpush.xpose.msra.mxu0 0.0
      %827 = vmatpush.xpose.msra.mxu0 0.0
      %828 = vmatpush.xpose.msra.mxu0 0.0
      %829 = vmatpush.xpose.msra.mxu0 0.0
      %830 = vmatpush.xpose.msra.mxu0 0.0
      %831 = vmatpush.xpose.msra.mxu0 0.0
      %832 = vmatpush.xpose.msra.mxu0 0.0
      %833 = vmatpush.xpose.msra.mxu0 %v816
      %834 = vmatmul.f32.gmra.mxu0 %v814
      %v835 = vpop.f32.mrf.mxu0
      %v836 = vadd.f32 0.0, %v835
      %837 = vdwg.mxu0
      %v838 = vmul.f32 %v836, 0.25
      %v839 = vadd.f32 %v838, %v399
      %v840 = vsel %vm485, %v839, -inf
      %841 = vmax.xlane.f32.xlu0 %v840
      %v842 = vpop.xlane.xlu0 %841
      %v843 = vsub.f32 %v839, %v842
      %v844 = vmul.f32 %v843, 1.442695
      %v845 = vpow.pop %v844
      %v846 = vsel %vm485, %v845, 0.0
      %847 = vadd.xlane.f32.xlu0 %v846
      %v848 = vpop.xlane.xlu0 %847
      %v849 = vrcp.pop %v848
      %v850 = vmul.f32 %v845, %v849
      %851 = vrot.lane.b32.xlu0 %v809, 64
      %v852 = vpop.permute.xlu0 %851
      %v855 = vsel %vm485, %v850, 0
      %857 = vmatpush.msra.mxu0 0.0
      %858 = vmatpush.msra.mxu0 0.0
      %859 = vmatpush.msra.mxu0 0.0
      %860 = vmatpush.msra.mxu0 0.0
      %861 = vmatpush.msra.mxu0 0.0
      %862 = vmatpush.msra.mxu0 0.0
      %863 = vmatpush.msra.mxu0 0.0
      %864 = vmatpush.msra.mxu0 0.0
      %865 = vmatpush.msra.mxu0 0.0
      %866 = vmatpush.msra.mxu0 0.0
      %867 = vmatpush.msra.mxu0 0.0
      %868 = vmatpush.msra.mxu0 0.0
      %869 = vmatpush.msra.mxu0 0.0
      %870 = vmatpush.msra.mxu0 0.0
      %871 = vmatpush.msra.mxu0 0.0
      %872 = vmatpush.msra.mxu0 %v852
      %873 = vmatmul.f32.gmra.mxu0 %v855
      %v874 = vpop.f32.mrf.mxu0
      %v875 = vadd.f32 0.0, %v874
      %876 = vdwg.mxu0
      %877 = vrot.lane.b32.xlu0 %v809, 112
      %v878 = vpop.permute.xlu0 %877
      %879 = vrot.lane.b32.xlu0 %v809, 80
      %v880 = vpop.permute.xlu0 %879
      %v881 = vsel %vm458, %v878, 0
      %v883 = vsel %vm458, %v880, 0
      %885 = vmatpush.xpose.msra.mxu0 0.0
      %886 = vmatpush.xpose.msra.mxu0 0.0
      %887 = vmatpush.xpose.msra.mxu0 0.0
      %888 = vmatpush.xpose.msra.mxu0 0.0
      %889 = vmatpush.xpose.msra.mxu0 0.0
      %890 = vmatpush.xpose.msra.mxu0 0.0
      %891 = vmatpush.xpose.msra.mxu0 0.0
      %892 = vmatpush.xpose.msra.mxu0 0.0
      %893 = vmatpush.xpose.msra.mxu0 0.0
      %894 = vmatpush.xpose.msra.mxu0 0.0
      %895 = vmatpush.xpose.msra.mxu0 0.0
      %896 = vmatpush.xpose.msra.mxu0 0.0
      %897 = vmatpush.xpose.msra.mxu0 0.0
      %898 = vmatpush.xpose.msra.mxu0 0.0
      %899 = vmatpush.xpose.msra.mxu0 0.0
      %900 = vmatpush.xpose.msra.mxu0 %v883
      %901 = vmatmul.f32.gmra.mxu0 %v881
      %v902 = vpop.f32.mrf.mxu0
      %v903 = vadd.f32 0.0, %v902
      %904 = vdwg.mxu0
      %v905 = vmul.f32 %v903, 0.25
      %v906 = vadd.f32 %v905, %v399
      %v907 = vsel %vm485, %v906, -inf
      %908 = vmax.xlane.f32.xlu0 %v907
      %v909 = vpop.xlane.xlu0 %908
      %v910 = vsub.f32 %v906, %v909
      %v911 = vmul.f32 %v910, 1.442695
      %v912 = vpow.pop %v911
      %v913 = vsel %vm485, %v912, 0.0
      %914 = vadd.xlane.f32.xlu0 %v913
      %v915 = vpop.xlane.xlu0 %914
      %v916 = vrcp.pop %v915
      %v917 = vmul.f32 %v912, %v916
      %918 = vrot.lane.b32.xlu0 %v809, 48
      %v919 = vpop.permute.xlu0 %918
      %v922 = vsel %vm485, %v917, 0
      %924 = vmatpush.msra.mxu0 0.0
      %925 = vmatpush.msra.mxu0 0.0
      %926 = vmatpush.msra.mxu0 0.0
      %927 = vmatpush.msra.mxu0 0.0
      %928 = vmatpush.msra.mxu0 0.0
      %929 = vmatpush.msra.mxu0 0.0
      %930 = vmatpush.msra.mxu0 0.0
      %931 = vmatpush.msra.mxu0 0.0
      %932 = vmatpush.msra.mxu0 0.0
      %933 = vmatpush.msra.mxu0 0.0
      %934 = vmatpush.msra.mxu0 0.0
      %935 = vmatpush.msra.mxu0 0.0
      %936 = vmatpush.msra.mxu0 0.0
      %937 = vmatpush.msra.mxu0 0.0
      %938 = vmatpush.msra.mxu0 0.0
      %939 = vmatpush.msra.mxu0 %v919
      %940 = vmatmul.f32.gmra.mxu0 %v922
      %v941 = vpop.f32.mrf.mxu0
      %v942 = vadd.f32 0.0, %v941
      %943 = vdwg.mxu0
      %945 = vrot.lane.b32.xlu0 %v942, 16
      %v946 = vpop.permute.xlu0 %945
      %v948 = vsel %vm458, %v875, %v946
      %v949 = vperm.slane %v754, 1
      %v951 = vsel %vm431, %v948, 0
      %953 = vmatpush.msra.mxu0 0.0
      %954 = vmatpush.msra.mxu0 0.0
      %955 = vmatpush.msra.mxu0 0.0
      %956 = vmatpush.msra.mxu0 0.0
      %957 = vmatpush.msra.mxu0 0.0
      %958 = vmatpush.msra.mxu0 0.0
      %959 = vmatpush.msra.mxu0 0.0
      %960 = vmatpush.msra.mxu0 0.0
      %961 = vmatpush.msra.mxu0 0.0
      %962 = vmatpush.msra.mxu0 0.0
      %963 = vmatpush.msra.mxu0 0.0
      %964 = vmatpush.msra.mxu0 0.0
      %965 = vmatpush.msra.mxu0 %v764
      %966 = vmatpush.msra.mxu0 %v763
      %967 = vmatpush.msra.mxu0 %v762
      %968 = vmatpush.msra.mxu0 %v761
      %969 = vmatmul.f32.gmra.mxu0 %v951
      %v970 = vpop.f32.mrf.mxu0
      %v971 = vadd.f32 %v949, %v970
      %972 = vdwg.mxu0
      %v973 = vadd.f32 %v971, %v752
      %v974 = vsel %vm431, %v973, 0.0
      %975 = vadd.xlane.f32.xlu0 %v974
      %v976 = vpop.xlane.xlu0 %975
      %v977 = vmul.f32 %v976, %v629
      %v978 = vsub.f32 %v973, %v977
      %v979 = vmul.f32 %v978, %v978
      %v980 = vsel %vm431, %v979, 0.0
      %981 = vadd.xlane.f32.xlu0 %v980
      %v982 = vpop.xlane.xlu0 %981
      %v983 = vmul.f32 %v982, %v629
      %v984 = vadd.f32 %v983, 1e-05
      %v985 = vrsqrt.pop %v984
      %v986 = vmul.f32 %v985, %v984
      %v987 = vmul.f32 %v986, %v985
      %v988 = vmul.f32 0.5, %v987
      %v989 = vsub.f32 1.5, %v988
      %v990 = vmul.f32 %v985, %v989
      %vm991 = vweird.f32 %v984
      %vm992 = vweird.f32 %v985
      %vm993 = vmor %vm991, %vm992
      %v994 = vsel %vm993, %v985, %v990
      %v995 = vmul.f32 %v978, %v994
      %v996 = vperm.slane %v754, 2
      %v997 = vmul.f32 %v995, %v996
      %v998 = vperm.slane %v754, 3
      %v999 = vadd.f32 %v997, %v998
      %v1000 = vmul.f32 %v999, %v397
      %v1001 = vrot.slane %v1000, 7
      %v1002 = vsel %vm657, %v1001, 0.0
      %v1003 = vrot.slane %v1000, 1
      %v1004 = vsel %vm662, %v1003, 0.0
      %1006 = vrot.lane.b32.xlu0 %v1000, 32
      %v1007 = vpop.permute.xlu0 %1006
      %1010 = vrot.lane.b32.xlu0 %v1004, 64
      %v1011 = vpop.permute.xlu0 %1010
      %v1013 = vsel %vm431, %v1002, %v1007
      %v1014 = vsel %vm673, %v1013, %v1011
      %v1015 = vperm.slane %v754, 4
      %v1017 = vsel %vm676, %v1014, 0
      %1019 = vmatpush.msra.mxu0 0.0
      %1020 = vmatpush.msra.mxu0 0.0
      %1021 = vmatpush.msra.mxu0 0.0
      %1022 = vmatpush.msra.mxu0 0.0
      %1023 = vmatpush.msra.mxu0 %v777
      %1024 = vmatpush.msra.mxu0 %v776
      %1025 = vmatpush.msra.mxu0 %v775
      %1026 = vmatpush.msra.mxu0 %v774
      %1027 = vmatpush.msra.mxu0 %v773
      %1028 = vmatpush.msra.mxu0 %v772
      %1029 = vmatpush.msra.mxu0 %v771
      %1030 = vmatpush.msra.mxu0 %v770
      %1031 = vmatpush.msra.mxu0 %v769
      %1032 = vmatpush.msra.mxu0 %v768
      %1033 = vmatpush.msra.mxu0 %v767
      %1034 = vmatpush.msra.mxu0 %v766
      %1035 = vmatmul.f32.gmra.mxu0 %v1017
      %v1036 = vpop.f32.mrf.mxu0
      %v1037 = vadd.f32 %v1015, %v1036
      %1038 = vdwg.mxu0
      %v1039 = vmax.f32 %v1037, 0.0
      %v1040 = vperm.slane %v754, 5
      %v1042 = vsel %vm673, %v1039, 0
      %1044 = vmatpush.msra.mxu0 0.0
      %1045 = vmatpush.msra.mxu0 0.0
      %1046 = vmatpush.msra.mxu0 0.0
      %1047 = vmatpush.msra.mxu0 0.0
      %1048 = vmatpush.msra.mxu0 0.0
      %1049 = vmatpush.msra.mxu0 0.0
      %1050 = vmatpush.msra.mxu0 0.0
      %1051 = vmatpush.msra.mxu0 0.0
      %1052 = vmatpush.msra.mxu0 %v786
      %1053 = vmatpush.msra.mxu0 %v785
      %1054 = vmatpush.msra.mxu0 %v784
      %1055 = vmatpush.msra.mxu0 %v783
      %1056 = vmatpush.msra.mxu0 %v782
      %1057 = vmatpush.msra.mxu0 %v781
      %1058 = vmatpush.msra.mxu0 %v780
      %1059 = vmatpush.msra.mxu0 %v779
      %1060 = vmatmul.f32.gmra.mxu0 %v1042
      %v1061 = vpop.f32.mrf.mxu0
      %v1062 = vadd.f32 %v1040, %v1061
      %1063 = vdwg.mxu0
      %v1064 = vadd.f32 %v1062, %v1000
      %v1065 = vsel %vm431, %v1064, 0.0
      %1066 = vadd.xlane.f32.xlu0 %v1065
      %v1067 = vpop.xlane.xlu0 %1066
      %v1068 = vmul.f32 %v1067, %v629
      %v1069 = vsub.f32 %v1064, %v1068
      %v1070 = vmul.f32 %v1069, %v1069
      %v1071 = vsel %vm431, %v1070, 0.0
      %1072 = vadd.xlane.f32.xlu0 %v1071
      %v1073 = vpop.xlane.xlu0 %1072
      %v1074 = vmul.f32 %v1073, %v629
      %v1075 = vadd.f32 %v1074, 1e-05
      %v1076 = vrsqrt.pop %v1075
      %v1077 = vmul.f32 %v1076, %v1075
      %v1078 = vmul.f32 %v1077, %v1076
      %v1079 = vmul.f32 0.5, %v1078
      %v1080 = vsub.f32 1.5, %v1079
      %v1081 = vmul.f32 %v1076, %v1080
      %vm1082 = vweird.f32 %v1075
      %vm1083 = vweird.f32 %v1076
      %vm1084 = vmor %vm1082, %vm1083
      %v1085 = vsel %vm1084, %v1076, %v1081
      %v1086 = vmul.f32 %v1069, %v1085
      %v1087 = vperm.slane %v754, 6
      %v1088 = vmul.f32 %v1086, %v1087
      %v1089 = vperm.slane %v754, 7
      %v1090 = vadd.f32 %v1088, %v1089
      %v1091 = vmul.f32 %v1090, %v397
      %v1092 = vld [vmem:[%s380] sm:$0x1]
      %v1094 = vperm.slane %v1092, 0
      %v1096 = vadd.f32 %v1091, %v1094
      %1097 = vst.msk [vmem:[%s384] sm:$0xff] %vm431, %v1096
      %v1098 = vld [vmem:[%s8] sm:$0xff]
      %v1099 = vld [vmem:[%s8 + $0x8] sm:$0xff]
      %v1100 = vld [vmem:[%s8 + $0x10] sm:$0xff]
      %v1101 = vld [vmem:[%s8 + $0x18] sm:$0xff]
      %v1102 = vld [vmem:[%s9] sm:$0x1]
      %v1104 = vperm.slane %v1102, 0
      %v1107 = vsel %vm431, %v1096, 0
      %1109 = vmatpush.msra.mxu0 0.0
      %1110 = vmatpush.msra.mxu0 0.0
      %1111 = vmatpush.msra.mxu0 0.0
      %1112 = vmatpush.msra.mxu0 0.0
      %1113 = vmatpush.msra.mxu0 0.0
      %1114 = vmatpush.msra.mxu0 0.0
      %1115 = vmatpush.msra.mxu0 0.0
      %1116 = vmatpush.msra.mxu0 0.0
      %1117 = vmatpush.msra.mxu0 0.0
      %1118 = vmatpush.msra.mxu0 0.0
      %1119 = vmatpush.msra.mxu0 0.0
      %1120 = vmatpush.msra.mxu0 0.0
      %1121 = vmatpush.msra.mxu0 %v1101
      %1122 = vmatpush.msra.mxu0 %v1100
      %1123 = vmatpush.msra.mxu0 %v1099
      %1124 = vmatpush.msra.mxu0 %v1098
      %1125 = vmatmul.f32.gmra.mxu0 %v1107
      %v1126 = vpop.f32.mrf.mxu0
      %v1127 = vadd.f32 %v1104, %v1126
      %1128 = vdwg.mxu0
      %1129 = vst [vmem:[%s388] sm:$0xff] %v1127
      %p1130 = scmp.lt.s32.totalorder %s31, 1
      %s1131 = scalar_select %p1130, %s31, 1
      %s1132 = smul.addr %s1131, 8
      %s1133 = scalar_lea.vmem %s10, %s1132
      %p1134 = scmp.lt.s32.totalorder %s31, 1
      %s1135 = scalar_select %p1134, %s31, 1
      %s1136 = smul.addr %s1135, 8
      %s1137 = scalar_lea.vmem %s11, %s1136
      // Predicated region
      $region57: #{_fastspeech2_forward.3} parent=55 // pred_check
        %p1138 = pneg %p248
      $region58: #{_fastspeech2_forward.3} parent=55 // pred_check_branch
        %1140 = sbr.rel (%p1138) target = $region60
      $region59: #{_fastspeech2_forward.3} parent=55 // pred_region
        _
      $region60: #{_fastspeech2_forward.3} parent=55 // pred_fallthru
        _
      // Predicated region
      $region61: #{_fastspeech2_forward.3} parent=55 // pred_check
        %p1141 = pneg %p274
      $region62: #{_fastspeech2_forward.3} parent=55 // pred_check_branch
        %1143 = sbr.rel (%p1141) target = $region64
      $region63: #{_fastspeech2_forward.3} parent=55 // pred_region
        _
      $region64: #{_fastspeech2_forward.3} parent=55 // pred_fallthru
        _
    $region56: #{_fastspeech2_forward.3} parent=5 // pred_fallthru
      _
    %p1144 = scmp.le.s32.totalorder 2, %s26
    // Predicated region
    $region65: #{_fastspeech2_forward.3} parent=5 // pred_check
      %p1145 = pneg %p1144
    $region66: #{_fastspeech2_forward.3} parent=5 // pred_check_branch
      %1147 = sbr.rel (%p1145) target = $region68
    $region67: #{_fastspeech2_forward.3} parent=5 // pred_region
      %s1148 = ssub.s32 %s26, 2
      // Predicated region
      $region69: #{_fastspeech2_forward.3} parent=67 // pred_check
        %p1149 = pneg %p254
      $region70: #{_fastspeech2_forward.3} parent=67 // pred_check_branch
        %1151 = sbr.rel (%p1149) target = $region72
      $region71: #{_fastspeech2_forward.3} parent=67 // pred_region
        %p1152 = scmp.lt.s32.totalorder %s32, 1
        %s1153 = scalar_select %p1152, %s32, 1
        %s1154 = smul.addr %s1153, 8
        %s1155 = scalar_lea.vmem %s10, %s1154
      $region72: #{_fastspeech2_forward.3} parent=67 // pred_fallthru
        _
      // Predicated region
      $region73: #{_fastspeech2_forward.3} parent=67 // pred_check
        %p1156 = pneg %p280
      $region74: #{_fastspeech2_forward.3} parent=67 // pred_check_branch
        %1158 = sbr.rel (%p1156) target = $region76
      $region75: #{_fastspeech2_forward.3} parent=67 // pred_region
        %p1159 = scmp.lt.s32.totalorder %s32, 1
        %s1160 = scalar_select %p1159, %s32, 1
        %s1161 = smul.addr %s1160, 8
        %s1162 = scalar_lea.vmem %s11, %s1161
      $region76: #{_fastspeech2_forward.3} parent=67 // pred_fallthru
        _
    $region68: #{_fastspeech2_forward.3} parent=5 // pred_fallthru
      _
  $region6: #{_fastspeech2_forward.3} parent=0 // loop_footer
    %s30 = sadd.s32 1, %s26
  $region7: #{_fastspeech2_forward.3} parent=0 // loop_footer_branch
    %25 = sbr.rel target = $region3
  $region8: #{_fastspeech2_forward.3} parent=0 // loop_exit
    _

// kernel: _fastspeech2_forward.4
$region0: #{_fastspeech2_forward.4}
  #allocation0 [shape = 'u32[]', space=smem, size = 0x4, offset = 0x4, fixed_abs, tag = 'smem constant byte address 0x4 - core index']
  #allocation1 [shape = 'u32[72,128]{1,0:T(1,128)}', space=vmem, size = 0x9000, scoped, tag = 'internal scratch']
  #allocation2 [shape = 's32[1]{0}', space=sflag, size = 0x4, scoped, tag = 'scoped memory for _fastspeech2_forward.4']
  #allocation3 [shape = 'u8[512]{0}', space=smem, size = 0x200, scoped, tag = 'prefetched SMEM operand 0']
  %s0 = inlined_call_operand.vmem [shape: s32[2], index: 0, kind: input, shape index: {}]
  %s1 = inlined_call_operand.vmem [shape: f32[2,8,32], index: 1, kind: input, shape index: {}]
  %s2 = inlined_call_operand.vmem [shape: f32[3,96,32], index: 2, kind: input, shape index: {}]
  %s3 = inlined_call_operand.vmem [shape: f32[3,96,32], index: 3, kind: input, shape index: {}]
  %s4 = inlined_call_operand.vmem [shape: f32[3,8,128], index: 4, kind: input, shape index: {}]
  %s5 = inlined_call_operand.vmem [shape: f32[1,8], index: 5, kind: input, shape index: {}]
  %s6 = inlined_call_operand.vmem [shape: f32[8,32], index: 6, kind: input, shape index: {}]
  %s7 = inlined_call_operand.vmem [shape: f32[1,8], index: 7, kind: input, shape index: {}]
  %s8 = inlined_call_operand.vmem [shape: f32[8,32], index: 8, kind: input, shape index: {}]
  %s9 = inlined_call_operand.vmem [shape: f32[2,8,32], index: 9, kind: output, shape index: {0}]
  %s10 = inlined_call_operand.vmem [shape: f32[2,8,128], index: 10, kind: output, shape index: {1}]
  %11 = xla_tuple %s9, %s10
  %s12 = sld [smem:[#allocation0]]
  $region73: #{_fastspeech2_forward.4} parent=0
    _
  %s14 = ssub.s32 1, %s12
  %s15 = scalar_select 0, %s14, %s12
  %s17 = sshll.u32 %s0, 4
  %s18 = int_to_ptr.vmem [resolvable:$true] %s17
  %20 = dma.vmem_to_smem %s18, 16, [#allocation3], [#allocation2]
  %22 = dma.done [#allocation2], 16
  %23 = sfence
  loop: start=0, step=1, limit=4
  $region2: #{_fastspeech2_forward.4} parent=0 // loop_pre_header
    _
  $region3: #{_fastspeech2_forward.4} parent=0 // loop_header
    %s25 = sphi 0, %s29
    %p26 = scmp.ge.s32.totalorder %s25, 4
    %s35 = sphi 0, %s37
    %s38 = sphi 0, %s35
    %s39 = sphi 0, %s38
    %s55 = sphi 0, %s39
    %s59 = sphi 0, %s59
    %s61 = sphi 0, %s59
    %s62 = sphi 0, %s61
    %s76 = sphi 0, %s62
    %s80 = sphi 0, %s80
    %s82 = sphi 0, %s80
    %s83 = sphi 0, %s82
    %s97 = sphi 0, %s83
    %s101 = sphi 0, %s101
    %s103 = sphi 0, %s101
    %s104 = sphi 0, %s103
    %s118 = sphi 0, %s104
    %s122 = sphi 0, %s122
    %s124 = sphi 0, %s122
    %s125 = sphi 0, %s124
    %s139 = sphi 0, %s125
    %s143 = sphi 0, %s143
    %s145 = sphi 0, %s143
    %s146 = sphi 0, %s145
    %s160 = sphi 0, %s146
    %s164 = sphi 0, %s164
    %s166 = sphi 0, %s164
    %s167 = sphi 0, %s166
    %s181 = sphi 0, %s167
    %s185 = sphi 0, %s185
    %s187 = sphi 0, %s185
    %s188 = sphi 0, %s187
    %s202 = sphi 0, %s188
    %s208 = sphi 0, %s210
    %s211 = sphi 0, %s208
    %s212 = sphi 0, %s211
    %s228 = sphi 0, %s212
    %s234 = sphi 0, %s236
    %s237 = sphi 0, %s234
    %s238 = sphi 0, %s237
    %s254 = sphi 0, %s238
  $region4: #{_fastspeech2_forward.4} parent=0 // loop_header_branch
    %28 = sbr.rel (%p26) target = $region8
  $region5: #{_fastspeech2_forward.4} parent=0 // loop_body
    %s30 = ssub.s32 %s25, 1
    %s31 = ssub.s32 %s25, 2
    %s32 = sadd.s32 %s25, 1
    %s33 = ssub.s32 %s25, %s32
    %p34 = scmp.eq.s32.totalorder %s33, 0
    %s36 = sadd.s32 %s35, 1
    %s37 = scalar_select %p34, %s35, %s36
    %p40 = pneg %p34
    %p41 = scmp.eq.s32.totalorder %s25, 1
    %p42 = por %p40, %p41
    %p43 = scmp.ne.s32.totalorder %s35, %s38
    %p44 = scmp.eq.s32.totalorder %s25, 0
    %p45 = por %p43, %p44
    %p46 = scmp.ne.s32.totalorder %s35, %s38
    %p47 = scmp.eq.s32.totalorder %s30, 1
    %p48 = por %p46, %p47
    %p49 = scmp.ne.s32.totalorder %s38, %s39
    %p50 = scmp.eq.s32.totalorder %s30, 0
    %p51 = por %p49, %p50
    %p52 = scmp.ne.s32.totalorder %s38, %s39
    %p53 = scmp.eq.s32.totalorder %s31, 1
    %p54 = por %p52, %p53
    %p56 = scmp.ne.s32.totalorder %s39, %s55
    %p57 = scmp.eq.s32.totalorder %s31, 0
    %p58 = por %p56, %p57
    %s60 = sadd.s32 %s59, 1
    %p63 = scmp.eq.s32.totalorder %s25, 1
    %p64 = scmp.ne.s32.totalorder %s59, %s61
    %p65 = scmp.eq.s32.totalorder %s25, 0
    %p66 = por %p64, %p65
    %p67 = scmp.ne.s32.totalorder %s59, %s61
    %p68 = scmp.eq.s32.totalorder %s30, 1
    %p69 = por %p67, %p68
    %p70 = scmp.ne.s32.totalorder %s61, %s62
    %p71 = scmp.eq.s32.totalorder %s30, 0
    %p72 = por %p70, %p71
    %p73 = scmp.ne.s32.totalorder %s61, %s62
    %p74 = scmp.eq.s32.totalorder %s31, 1
    %p75 = por %p73, %p74
    %p77 = scmp.ne.s32.totalorder %s62, %s76
    %p78 = scmp.eq.s32.totalorder %s31, 0
    %p79 = por %p77, %p78
    %s81 = sadd.s32 %s80, 1
    %p84 = scmp.eq.s32.totalorder %s25, 1
    %p85 = scmp.ne.s32.totalorder %s80, %s82
    %p86 = scmp.eq.s32.totalorder %s25, 0
    %p87 = por %p85, %p86
    %p88 = scmp.ne.s32.totalorder %s80, %s82
    %p89 = scmp.eq.s32.totalorder %s30, 1
    %p90 = por %p88, %p89
    %p91 = scmp.ne.s32.totalorder %s82, %s83
    %p92 = scmp.eq.s32.totalorder %s30, 0
    %p93 = por %p91, %p92
    %p94 = scmp.ne.s32.totalorder %s82, %s83
    %p95 = scmp.eq.s32.totalorder %s31, 1
    %p96 = por %p94, %p95
    %p98 = scmp.ne.s32.totalorder %s83, %s97
    %p99 = scmp.eq.s32.totalorder %s31, 0
    %p100 = por %p98, %p99
    %s102 = sadd.s32 %s101, 1
    %p105 = scmp.eq.s32.totalorder %s25, 1
    %p106 = scmp.ne.s32.totalorder %s101, %s103
    %p107 = scmp.eq.s32.totalorder %s25, 0
    %p108 = por %p106, %p107
    %p109 = scmp.ne.s32.totalorder %s101, %s103
    %p110 = scmp.eq.s32.totalorder %s30, 1
    %p111 = por %p109, %p110
    %p112 = scmp.ne.s32.totalorder %s103, %s104
    %p113 = scmp.eq.s32.totalorder %s30, 0
    %p114 = por %p112, %p113
    %p115 = scmp.ne.s32.totalorder %s103, %s104
    %p116 = scmp.eq.s32.totalorder %s31, 1
    %p117 = por %p115, %p116
    %p119 = scmp.ne.s32.totalorder %s104, %s118
    %p120 = scmp.eq.s32.totalorder %s31, 0
    %p121 = por %p119, %p120
    %s123 = sadd.s32 %s122, 1
    %p126 = scmp.eq.s32.totalorder %s25, 1
    %p127 = scmp.ne.s32.totalorder %s122, %s124
    %p128 = scmp.eq.s32.totalorder %s25, 0
    %p129 = por %p127, %p128
    %p130 = scmp.ne.s32.totalorder %s122, %s124
    %p131 = scmp.eq.s32.totalorder %s30, 1
    %p132 = por %p130, %p131
    %p133 = scmp.ne.s32.totalorder %s124, %s125
    %p134 = scmp.eq.s32.totalorder %s30, 0
    %p135 = por %p133, %p134
    %p136 = scmp.ne.s32.totalorder %s124, %s125
    %p137 = scmp.eq.s32.totalorder %s31, 1
    %p138 = por %p136, %p137
    %p140 = scmp.ne.s32.totalorder %s125, %s139
    %p141 = scmp.eq.s32.totalorder %s31, 0
    %p142 = por %p140, %p141
    %s144 = sadd.s32 %s143, 1
    %p147 = scmp.eq.s32.totalorder %s25, 1
    %p148 = scmp.ne.s32.totalorder %s143, %s145
    %p149 = scmp.eq.s32.totalorder %s25, 0
    %p150 = por %p148, %p149
    %p151 = scmp.ne.s32.totalorder %s143, %s145
    %p152 = scmp.eq.s32.totalorder %s30, 1
    %p153 = por %p151, %p152
    %p154 = scmp.ne.s32.totalorder %s145, %s146
    %p155 = scmp.eq.s32.totalorder %s30, 0
    %p156 = por %p154, %p155
    %p157 = scmp.ne.s32.totalorder %s145, %s146
    %p158 = scmp.eq.s32.totalorder %s31, 1
    %p159 = por %p157, %p158
    %p161 = scmp.ne.s32.totalorder %s146, %s160
    %p162 = scmp.eq.s32.totalorder %s31, 0
    %p163 = por %p161, %p162
    %s165 = sadd.s32 %s164, 1
    %p168 = scmp.eq.s32.totalorder %s25, 1
    %p169 = scmp.ne.s32.totalorder %s164, %s166
    %p170 = scmp.eq.s32.totalorder %s25, 0
    %p171 = por %p169, %p170
    %p172 = scmp.ne.s32.totalorder %s164, %s166
    %p173 = scmp.eq.s32.totalorder %s30, 1
    %p174 = por %p172, %p173
    %p175 = scmp.ne.s32.totalorder %s166, %s167
    %p176 = scmp.eq.s32.totalorder %s30, 0
    %p177 = por %p175, %p176
    %p178 = scmp.ne.s32.totalorder %s166, %s167
    %p179 = scmp.eq.s32.totalorder %s31, 1
    %p180 = por %p178, %p179
    %p182 = scmp.ne.s32.totalorder %s167, %s181
    %p183 = scmp.eq.s32.totalorder %s31, 0
    %p184 = por %p182, %p183
    %s186 = sadd.s32 %s185, 1
    %p189 = scmp.eq.s32.totalorder %s25, 1
    %p190 = scmp.ne.s32.totalorder %s185, %s187
    %p191 = scmp.eq.s32.totalorder %s25, 0
    %p192 = por %p190, %p191
    %p193 = scmp.ne.s32.totalorder %s185, %s187
    %p194 = scmp.eq.s32.totalorder %s30, 1
    %p195 = por %p193, %p194
    %p196 = scmp.ne.s32.totalorder %s187, %s188
    %p197 = scmp.eq.s32.totalorder %s30, 0
    %p198 = por %p196, %p197
    %p199 = scmp.ne.s32.totalorder %s187, %s188
    %p200 = scmp.eq.s32.totalorder %s31, 1
    %p201 = por %p199, %p200
    %p203 = scmp.ne.s32.totalorder %s188, %s202
    %p204 = scmp.eq.s32.totalorder %s31, 0
    %p205 = por %p203, %p204
    %s206 = ssub.s32 %s25, %s32
    %p207 = scmp.eq.s32.totalorder %s206, 0
    %s209 = sadd.s32 %s208, 1
    %s210 = scalar_select %p207, %s208, %s209
    %p213 = pneg %p207
    %p214 = scmp.eq.s32.totalorder %s25, 1
    %p215 = por %p213, %p214
    %p216 = scmp.ne.s32.totalorder %s208, %s211
    %p217 = scmp.eq.s32.totalorder %s25, 0
    %p218 = por %p216, %p217
    %p219 = scmp.ne.s32.totalorder %s208, %s211
    %p220 = scmp.eq.s32.totalorder %s30, 1
    %p221 = por %p219, %p220
    %p222 = scmp.ne.s32.totalorder %s211, %s212
    %p223 = scmp.eq.s32.totalorder %s30, 0
    %p224 = por %p222, %p223
    %p225 = scmp.ne.s32.totalorder %s211, %s212
    %p226 = scmp.eq.s32.totalorder %s31, 1
    %p227 = por %p225, %p226
    %p229 = scmp.ne.s32.totalorder %s212, %s228
    %p230 = scmp.eq.s32.totalorder %s31, 0
    %p231 = por %p229, %p230
    %s232 = ssub.s32 %s25, %s32
    %p233 = scmp.eq.s32.totalorder %s232, 0
    %s235 = sadd.s32 %s234, 1
    %s236 = scalar_select %p233, %s234, %s235
    %p239 = pneg %p233
    %p240 = scmp.eq.s32.totalorder %s25, 1
    %p241 = por %p239, %p240
    %p242 = scmp.ne.s32.totalorder %s234, %s237
    %p243 = scmp.eq.s32.totalorder %s25, 0
    %p244 = por %p242, %p243
    %p245 = scmp.ne.s32.totalorder %s234, %s237
    %p246 = scmp.eq.s32.totalorder %s30, 1
    %p247 = por %p245, %p246
    %p248 = scmp.ne.s32.totalorder %s237, %s238
    %p249 = scmp.eq.s32.totalorder %s30, 0
    %p250 = por %p248, %p249
    %p251 = scmp.ne.s32.totalorder %s237, %s238
    %p252 = scmp.eq.s32.totalorder %s31, 1
    %p253 = por %p251, %p252
    %p255 = scmp.ne.s32.totalorder %s238, %s254
    %p256 = scmp.eq.s32.totalorder %s31, 0
    %p257 = por %p255, %p256
    %p258 = scmp.le.s32.totalorder 1, %s25
    %p259 = scmp.lt.s32.totalorder %s25, 3
    %p260 = pnand %p258, %p259
    %p261 = pneg %p260
    // Predicated region
    $region9: #{_fastspeech2_forward.4} parent=5 // pred_check
      _
    $region10: #{_fastspeech2_forward.4} parent=5 // pred_check_branch
      %263 = sbr.rel (%p260) target = $region12
    $region11: #{_fastspeech2_forward.4} parent=5 // pred_region
      %s264 = ssub.s32 %s25, 1
      // Predicated region
      $region13: #{_fastspeech2_forward.4} parent=11 // pred_check
        %p265 = pneg %p72
      $region14: #{_fastspeech2_forward.4} parent=11 // pred_check_branch
        %267 = sbr.rel (%p265) target = $region16
      $region15: #{_fastspeech2_forward.4} parent=11 // pred_region
        _
      $region16: #{_fastspeech2_forward.4} parent=11 // pred_fallthru
        _
      // Predicated region
      $region17: #{_fastspeech2_forward.4} parent=11 // pred_check
        %p268 = pneg %p93
      $region18: #{_fastspeech2_forward.4} parent=11 // pred_check_branch
        %270 = sbr.rel (%p268) target = $region20
      $region19: #{_fastspeech2_forward.4} parent=11 // pred_region
        _
      $region20: #{_fastspeech2_forward.4} parent=11 // pred_fallthru
        _
      // Predicated region
      $region21: #{_fastspeech2_forward.4} parent=11 // pred_check
        %p271 = pneg %p114
      $region22: #{_fastspeech2_forward.4} parent=11 // pred_check_branch
        %273 = sbr.rel (%p271) target = $region24
      $region23: #{_fastspeech2_forward.4} parent=11 // pred_region
        _
      $region24: #{_fastspeech2_forward.4} parent=11 // pred_fallthru
        _
      // Predicated region
      $region25: #{_fastspeech2_forward.4} parent=11 // pred_check
        %p274 = pneg %p135
      $region26: #{_fastspeech2_forward.4} parent=11 // pred_check_branch
        %276 = sbr.rel (%p274) target = $region28
      $region27: #{_fastspeech2_forward.4} parent=11 // pred_region
        _
      $region28: #{_fastspeech2_forward.4} parent=11 // pred_fallthru
        _
      // Predicated region
      $region29: #{_fastspeech2_forward.4} parent=11 // pred_check
        %p277 = pneg %p156
      $region30: #{_fastspeech2_forward.4} parent=11 // pred_check_branch
        %279 = sbr.rel (%p277) target = $region32
      $region31: #{_fastspeech2_forward.4} parent=11 // pred_region
        _
      $region32: #{_fastspeech2_forward.4} parent=11 // pred_fallthru
        _
      // Predicated region
      $region33: #{_fastspeech2_forward.4} parent=11 // pred_check
        %p280 = pneg %p177
      $region34: #{_fastspeech2_forward.4} parent=11 // pred_check_branch
        %282 = sbr.rel (%p280) target = $region36
      $region35: #{_fastspeech2_forward.4} parent=11 // pred_region
        _
      $region36: #{_fastspeech2_forward.4} parent=11 // pred_fallthru
        _
      // Predicated region
      $region37: #{_fastspeech2_forward.4} parent=11 // pred_check
        %p283 = pneg %p198
      $region38: #{_fastspeech2_forward.4} parent=11 // pred_check_branch
        %285 = sbr.rel (%p283) target = $region40
      $region39: #{_fastspeech2_forward.4} parent=11 // pred_region
        _
      $region40: #{_fastspeech2_forward.4} parent=11 // pred_fallthru
        _
    $region12: #{_fastspeech2_forward.4} parent=5 // pred_fallthru
      _
    %p286 = scmp.lt.s32.totalorder %s25, 2
    // Predicated region
    $region41: #{_fastspeech2_forward.4} parent=5 // pred_check
      %p287 = pneg %p286
    $region42: #{_fastspeech2_forward.4} parent=5 // pred_check_branch
      %289 = sbr.rel (%p287) target = $region44
    $region43: #{_fastspeech2_forward.4} parent=5 // pred_region
      // Predicated region
      $region45: #{_fastspeech2_forward.4} parent=43 // pred_check
        %p290 = pneg %p45
      $region46: #{_fastspeech2_forward.4} parent=43 // pred_check_branch
        %292 = sbr.rel (%p290) target = $region48
      $region47: #{_fastspeech2_forward.4} parent=43 // pred_region
        %p293 = scmp.lt.s32.totalorder %s25, 1
        %s294 = scalar_select %p293, %s25, 1
        %s295 = smul.addr %s294, 8
        %s296 = scalar_lea.vmem %s1, %s295
      $region48: #{_fastspeech2_forward.4} parent=43 // pred_fallthru
        _
    $region44: #{_fastspeech2_forward.4} parent=5 // pred_fallthru
      _
    %p297 = scmp.le.s32.totalorder 1, %s25
    %p298 = scmp.lt.s32.totalorder %s25, 3
    %p299 = pnand %p297, %p298
    %p300 = pneg %p299
    // Predicated region
    $region49: #{_fastspeech2_forward.4} parent=5 // pred_check
      _
    $region50: #{_fastspeech2_forward.4} parent=5 // pred_check_branch
      %302 = sbr.rel (%p299) target = $region52
    $region51: #{_fastspeech2_forward.4} parent=5 // pred_region
      %s303 = ssub.s32 %s25, 1
      %p304 = scmp.lt.s32.totalorder %s30, 1
      %s305 = scalar_select %p304, %s30, 1
      %s306 = smul.addr %s305, 8
      %s307 = scalar_lea.vmem %s1, %s306
      %p308 = pneg %p51
      %p309 = pneg %p48
      %p310 = pneg %p72
      %p311 = pneg %p69
      %p312 = pneg %p93
      %p313 = pneg %p90
      %p314 = pneg %p114
      %p315 = pneg %p111
      %p316 = pneg %p135
      %p317 = pneg %p132
      %p318 = pneg %p156
      %p319 = pneg %p153
      %p320 = pneg %p177
      %p321 = pneg %p174
      %p322 = pneg %p198
      %p323 = pneg %p195
      %p324 = pneg %p224
      %p325 = pneg %p221
      %p326 = scmp.lt.s32.totalorder %s30, 1
      %s327 = scalar_select %p326, %s30, 1
      %s328 = smul.addr %s327, 8
      %s329 = scalar_lea.vmem %s9, %s328
      %p330 = pneg %p250
      %p331 = pneg %p247
      %p332 = scmp.lt.s32.totalorder %s30, 1
      %s333 = scalar_select %p332, %s30, 1
      %s334 = smul.addr %s333, 8
      %s335 = scalar_lea.vmem %s10, %s334
      %p336 = scmp.lt.s32.totalorder %s30, 1
      %s337 = scalar_select %p336, %s30, 1
      %s338 = smul.addr %s337, 8
      %s339 = scalar_lea.vmem %s1, %s338
      %p340 = scmp.lt.s32.totalorder %s30, 1
      %s341 = scalar_select %p340, %s30, 1
      %s342 = smul.addr %s341, 8
      %s343 = scalar_lea.vmem %s9, %s342
      %p344 = scmp.lt.s32.totalorder %s30, 1
      %s345 = scalar_select %p344, %s30, 1
      %s346 = smul.addr %s345, 8
      %s347 = scalar_lea.vmem %s10, %s346
      %v348 = vlaneseq
      %v349 = vshrl.u32 %v348, 7
      %s350 = sld [smem:[#allocation3 + %s30]]
      %v351 = vstv %s350
      %vm352 = vcmp.lt.s32.totalorder %v349, %v351
      %v353 = vsel %vm352, 1, 0
      %v354 = vcvt.s32.f32 %v353
      %v355 = vld [vmem:[%s339] sm:$0xff]
      %v356 = vld [vmem:[%s4] sm:$0xff]
      %v357 = vld [vmem:[%s2] sm:$0xff]
      %v358 = vld [vmem:[%s2 + $0x8] sm:$0xff]
      %v359 = vld [vmem:[%s2 + $0x10] sm:$0xff]
      %v360 = vld [vmem:[%s2 + $0x18] sm:$0xff]
      %v361 = vld [vmem:[%s2 + $0x20] sm:$0xff]
      %v362 = vld [vmem:[%s2 + $0x28] sm:$0xff]
      %v363 = vld [vmem:[%s2 + $0x30] sm:$0xff]
      %v364 = vld [vmem:[%s2 + $0x38] sm:$0xff]
      %v365 = vld [vmem:[%s2 + $0x40] sm:$0xff]
      %v366 = vld [vmem:[%s2 + $0x48] sm:$0xff]
      %v367 = vld [vmem:[%s2 + $0x50] sm:$0xff]
      %v368 = vld [vmem:[%s2 + $0x58] sm:$0xff]
      %v369 = vrot.slane %v355, 7
      %vm370 = vcmp.ge.s32.totalorder %v349, 1
      %v371 = vsel %vm370, 1, 0
      %vm372 = vcmp.eq.s32.totalorder %v371, 1
      %v373 = vsel %vm372, %v369, 0.0
      %v374 = vrot.slane %v355, 1
      %vm375 = vcmp.lt.s32.totalorder %v349, 7
      %v376 = vsel %vm375, 1, 0
      %vm377 = vcmp.eq.s32.totalorder %v376, 1
      %v378 = vsel %vm377, %v374, 0.0
      %380 = vrot.lane.b32.xlu0 %v355, 32
      %v381 = vpop.permute.xlu0 %380
      %384 = vrot.lane.b32.xlu0 %v378, 64
      %v385 = vpop.permute.xlu0 %384
      %vm387 = vcmask 261120
      %v388 = vsel %vm387, %v373, %v381
      %vm389 = vcmask 523264
      %v390 = vsel %vm389, %v388, %v385
      %v391 = vperm.slane %v356, 0
      %vm392 = vcmask 785408
      %v394 = vsel %vm392, %v390, 0
      %396 = vmatpush.msra.mxu0 0.0
      %397 = vmatpush.msra.mxu0 0.0
      %398 = vmatpush.msra.mxu0 0.0
      %399 = vmatpush.msra.mxu0 0.0
      %400 = vmatpush.msra.mxu0 %v368
      %401 = vmatpush.msra.mxu0 %v367
      %402 = vmatpush.msra.mxu0 %v366
      %403 = vmatpush.msra.mxu0 %v365
      %404 = vmatpush.msra.mxu0 %v364
      %405 = vmatpush.msra.mxu0 %v363
      %406 = vmatpush.msra.mxu0 %v362
      %407 = vmatpush.msra.mxu0 %v361
      %408 = vmatpush.msra.mxu0 %v360
      %409 = vmatpush.msra.mxu0 %v359
      %410 = vmatpush.msra.mxu0 %v358
      %411 = vmatpush.msra.mxu0 %v357
      %412 = vmatmul.f32.gmra.mxu0 %v394
      %v413 = vpop.f32.mrf.mxu0
      %v414 = vadd.f32 %v391, %v413
      %415 = vdwg.mxu0
      %v416 = vmax.f32 %v414, 0.0
      %v417 = vsel %vm387, %v416, 0.0
      %418 = vadd.xlane.f32.xlu0 %v417
      %v419 = vpop.xlane.xlu0 %418
      %v420 = vrcp.pop 32.0
      %v421 = vmul.f32 32.0, %v420
      %v422 = vsub.f32 1.0, %v421
      %v423 = vmul.f32 %v420, %v422
      %v424 = vadd.f32 %v420, %v423
      %vm425 = vweird.f32 %v420
      %v426 = vsel %vm425, %v420, %v424
      %v427 = vmul.f32 %v419, %v426
      %v428 = vsub.f32 %v416, %v427
      %v429 = vmul.f32 %v428, %v428
      %v430 = vsel %vm387, %v429, 0.0
      %431 = vadd.xlane.f32.xlu0 %v430
      %v432 = vpop.xlane.xlu0 %431
      %v433 = vmul.f32 %v432, %v426
      %v434 = vadd.f32 %v433, 1e-05
      %v435 = vrsqrt.pop %v434
      %v436 = vmul.f32 %v435, %v434
      %v437 = vmul.f32 %v436, %v435
      %v438 = vmul.f32 0.5, %v437
      %v439 = vsub.f32 1.5, %v438
      %v440 = vmul.f32 %v435, %v439
      %vm441 = vweird.f32 %v434
      %vm442 = vweird.f32 %v435
      %vm443 = vmor %vm441, %vm442
      %v444 = vsel %vm443, %v435, %v440
      %v445 = vmul.f32 %v428, %v444
      %v446 = vperm.slane %v356, 1
      %v447 = vmul.f32 %v445, %v446
      %v448 = vperm.slane %v356, 2
      %v449 = vadd.f32 %v447, %v448
      %v450 = vld [vmem:[%s3] sm:$0xff]
      %v451 = vld [vmem:[%s3 + $0x8] sm:$0xff]
      %v452 = vld [vmem:[%s3 + $0x10] sm:$0xff]
      %v453 = vld [vmem:[%s3 + $0x18] sm:$0xff]
      %v454 = vld [vmem:[%s3 + $0x20] sm:$0xff]
      %v455 = vld [vmem:[%s3 + $0x28] sm:$0xff]
      %v456 = vld [vmem:[%s3 + $0x30] sm:$0xff]
      %v457 = vld [vmem:[%s3 + $0x38] sm:$0xff]
      %v458 = vld [vmem:[%s3 + $0x40] sm:$0xff]
      %v459 = vld [vmem:[%s3 + $0x48] sm:$0xff]
      %v460 = vld [vmem:[%s3 + $0x50] sm:$0xff]
      %v461 = vld [vmem:[%s3 + $0x58] sm:$0xff]
      %v462 = vrot.slane %v449, 7
      %v463 = vsel %vm372, %v462, 0.0
      %v464 = vrot.slane %v449, 1
      %v465 = vsel %vm377, %v464, 0.0
      %467 = vrot.lane.b32.xlu0 %v449, 32
      %v468 = vpop.permute.xlu0 %467
      %471 = vrot.lane.b32.xlu0 %v465, 64
      %v472 = vpop.permute.xlu0 %471
      %v474 = vsel %vm387, %v463, %v468
      %v475 = vsel %vm389, %v474, %v472
      %v476 = vperm.slane %v356, 3
      %v478 = vsel %vm392, %v475, 0
      %480 = vmatpush.msra.mxu0 0.0
      %481 = vmatpush.msra.mxu0 0.0
      %482 = vmatpush.msra.mxu0 0.0
      %483 = vmatpush.msra.mxu0 0.0
      %484 = vmatpush.msra.mxu0 %v461
      %485 = vmatpush.msra.mxu0 %v460
      %486 = vmatpush.msra.mxu0 %v459
      %487 = vmatpush.msra.mxu0 %v458
      %488 = vmatpush.msra.mxu0 %v457
      %489 = vmatpush.msra.mxu0 %v456
      %490 = vmatpush.msra.mxu0 %v455
      %491 = vmatpush.msra.mxu0 %v454
      %492 = vmatpush.msra.mxu0 %v453
      %493 = vmatpush.msra.mxu0 %v452
      %494 = vmatpush.msra.mxu0 %v451
      %495 = vmatpush.msra.mxu0 %v450
      %496 = vmatmul.f32.gmra.mxu0 %v478
      %v497 = vpop.f32.mrf.mxu0
      %v498 = vadd.f32 %v476, %v497
      %499 = vdwg.mxu0
      %v500 = vmax.f32 %v498, 0.0
      %v501 = vsel %vm387, %v500, 0.0
      %502 = vadd.xlane.f32.xlu0 %v501
      %v503 = vpop.xlane.xlu0 %502
      %v504 = vmul.f32 %v503, %v426
      %v505 = vsub.f32 %v500, %v504
      %v506 = vmul.f32 %v505, %v505
      %v507 = vsel %vm387, %v506, 0.0
      %508 = vadd.xlane.f32.xlu0 %v507
      %v509 = vpop.xlane.xlu0 %508
      %v510 = vmul.f32 %v509, %v426
      %v511 = vadd.f32 %v510, 1e-05
      %v512 = vrsqrt.pop %v511
      %v513 = vmul.f32 %v512, %v511
      %v514 = vmul.f32 %v513, %v512
      %v515 = vmul.f32 0.5, %v514
      %v516 = vsub.f32 1.5, %v515
      %v517 = vmul.f32 %v512, %v516
      %vm518 = vweird.f32 %v511
      %vm519 = vweird.f32 %v512
      %vm520 = vmor %vm518, %vm519
      %v521 = vsel %vm520, %v512, %v517
      %v522 = vmul.f32 %v505, %v521
      %v523 = vperm.slane %v356, 4
      %v524 = vmul.f32 %v522, %v523
      %v525 = vperm.slane %v356, 5
      %v526 = vadd.f32 %v524, %v525
      %v527 = vperm.slane %v356, 6
      %v528 = vmul.f32 %v526, %v527
      %v529 = vsel %vm387, %v528, 0.0
      %530 = vadd.xlane.f32.xlu0 %v529
      %v531 = vpop.xlane.xlu0 %530
      %v532 = vperm.slane %v356, 7
      %v533 = vadd.f32 %v531, %v532
      %v534 = vmul.f32 %v533, %v354
      %s535 = scalar_lea.vmem %s4, 8
      %v536 = vld [vmem:[%s535] sm:$0xff]
      %s537 = scalar_lea.vmem %s2, 96
      %v538 = vld [vmem:[%s537] sm:$0xff]
      %v539 = vld [vmem:[%s537 + $0x8] sm:$0xff]
      %v540 = vld [vmem:[%s537 + $0x10] sm:$0xff]
      %v541 = vld [vmem:[%s537 + $0x18] sm:$0xff]
      %v542 = vld [vmem:[%s537 + $0x20] sm:$0xff]
      %v543 = vld [vmem:[%s537 + $0x28] sm:$0xff]
      %v544 = vld [vmem:[%s537 + $0x30] sm:$0xff]
      %v545 = vld [vmem:[%s537 + $0x38] sm:$0xff]
      %v546 = vld [vmem:[%s537 + $0x40] sm:$0xff]
      %v547 = vld [vmem:[%s537 + $0x48] sm:$0xff]
      %v548 = vld [vmem:[%s537 + $0x50] sm:$0xff]
      %v549 = vld [vmem:[%s537 + $0x58] sm:$0xff]
      %v550 = vperm.slane %v536, 0
      %551 = vmatpush.msra.mxu0 0.0
      %552 = vmatpush.msra.mxu0 0.0
      %553 = vmatpush.msra.mxu0 0.0
      %554 = vmatpush.msra.mxu0 0.0
      %555 = vmatpush.msra.mxu0 %v549
      %556 = vmatpush.msra.mxu0 %v548
      %557 = vmatpush.msra.mxu0 %v547
      %558 = vmatpush.msra.mxu0 %v546
      %559 = vmatpush.msra.mxu0 %v545
      %560 = vmatpush.msra.mxu0 %v544
      %561 = vmatpush.msra.mxu0 %v543
      %562 = vmatpush.msra.mxu0 %v542
      %563 = vmatpush.msra.mxu0 %v541
      %564 = vmatpush.msra.mxu0 %v540
      %565 = vmatpush.msra.mxu0 %v539
      %566 = vmatpush.msra.mxu0 %v538
      %567 = vmatmul.f32.gmra.mxu0 %v394
      %v568 = vpop.f32.mrf.mxu0
      %v569 = vadd.f32 %v550, %v568
      %570 = vdwg.mxu0
      %v571 = vmax.f32 %v569, 0.0
      %v572 = vsel %vm387, %v571, 0.0
      %573 = vadd.xlane.f32.xlu0 %v572
      %v574 = vpop.xlane.xlu0 %573
      %v575 = vmul.f32 %v574, %v426
      %v576 = vsub.f32 %v571, %v575
      %v577 = vmul.f32 %v576, %v576
      %v578 = vsel %vm387, %v577, 0.0
      %579 = vadd.xlane.f32.xlu0 %v578
      %v580 = vpop.xlane.xlu0 %579
      %v581 = vmul.f32 %v580, %v426
      %v582 = vadd.f32 %v581, 1e-05
      %v583 = vrsqrt.pop %v582
      %v584 = vmul.f32 %v583, %v582
      %v585 = vmul.f32 %v584, %v583
      %v586 = vmul.f32 0.5, %v585
      %v587 = vsub.f32 1.5, %v586
      %v588 = vmul.f32 %v583, %v587
      %vm589 = vweird.f32 %v582
      %vm590 = vweird.f32 %v583
      %vm591 = vmor %vm589, %vm590
      %v592 = vsel %vm591, %v583, %v588
      %v593 = vmul.f32 %v576, %v592
      %v594 = vperm.slane %v536, 1
      %v595 = vmul.f32 %v593, %v594
      %v596 = vperm.slane %v536, 2
      %v597 = vadd.f32 %v595, %v596
      %s598 = scalar_lea.vmem %s3, 96
      %v599 = vld [vmem:[%s598] sm:$0xff]
      %v600 = vld [vmem:[%s598 + $0x8] sm:$0xff]
      %v601 = vld [vmem:[%s598 + $0x10] sm:$0xff]
      %v602 = vld [vmem:[%s598 + $0x18] sm:$0xff]
      %v603 = vld [vmem:[%s598 + $0x20] sm:$0xff]
      %v604 = vld [vmem:[%s598 + $0x28] sm:$0xff]
      %v605 = vld [vmem:[%s598 + $0x30] sm:$0xff]
      %v606 = vld [vmem:[%s598 + $0x38] sm:$0xff]
      %v607 = vld [vmem:[%s598 + $0x40] sm:$0xff]
      %v608 = vld [vmem:[%s598 + $0x48] sm:$0xff]
      %v609 = vld [vmem:[%s598 + $0x50] sm:$0xff]
      %v610 = vld [vmem:[%s598 + $0x58] sm:$0xff]
      %v611 = vrot.slane %v597, 7
      %v612 = vsel %vm372, %v611, 0.0
      %v613 = vrot.slane %v597, 1
      %v614 = vsel %vm377, %v613, 0.0
      %616 = vrot.lane.b32.xlu0 %v597, 32
      %v617 = vpop.permute.xlu0 %616
      %620 = vrot.lane.b32.xlu0 %v614, 64
      %v621 = vpop.permute.xlu0 %620
      %v623 = vsel %vm387, %v612, %v617
      %v624 = vsel %vm389, %v623, %v621
      %v625 = vperm.slane %v536, 3
      %v627 = vsel %vm392, %v624, 0
      %629 = vmatpush.msra.mxu0 0.0
      %630 = vmatpush.msra.mxu0 0.0
      %631 = vmatpush.msra.mxu0 0.0
      %632 = vmatpush.msra.mxu0 0.0
      %633 = vmatpush.msra.mxu0 %v610
      %634 = vmatpush.msra.mxu0 %v609
      %635 = vmatpush.msra.mxu0 %v608
      %636 = vmatpush.msra.mxu0 %v607
      %637 = vmatpush.msra.mxu0 %v606
      %638 = vmatpush.msra.mxu0 %v605
      %639 = vmatpush.msra.mxu0 %v604
      %640 = vmatpush.msra.mxu0 %v603
      %641 = vmatpush.msra.mxu0 %v602
      %642 = vmatpush.msra.mxu0 %v601
      %643 = vmatpush.msra.mxu0 %v600
      %644 = vmatpush.msra.mxu0 %v599
      %645 = vmatmul.f32.gmra.mxu0 %v627
      %v646 = vpop.f32.mrf.mxu0
      %v647 = vadd.f32 %v625, %v646
      %648 = vdwg.mxu0
      %v649 = vmax.f32 %v647, 0.0
      %v650 = vsel %vm387, %v649, 0.0
      %651 = vadd.xlane.f32.xlu0 %v650
      %v652 = vpop.xlane.xlu0 %651
      %v653 = vmul.f32 %v652, %v426
      %v654 = vsub.f32 %v649, %v653
      %v655 = vmul.f32 %v654, %v654
      %v656 = vsel %vm387, %v655, 0.0
      %657 = vadd.xlane.f32.xlu0 %v656
      %v658 = vpop.xlane.xlu0 %657
      %v659 = vmul.f32 %v658, %v426
      %v660 = vadd.f32 %v659, 1e-05
      %v661 = vrsqrt.pop %v660
      %v662 = vmul.f32 %v661, %v660
      %v663 = vmul.f32 %v662, %v661
      %v664 = vmul.f32 0.5, %v663
      %v665 = vsub.f32 1.5, %v664
      %v666 = vmul.f32 %v661, %v665
      %vm667 = vweird.f32 %v660
      %vm668 = vweird.f32 %v661
      %vm669 = vmor %vm667, %vm668
      %v670 = vsel %vm669, %v661, %v666
      %v671 = vmul.f32 %v654, %v670
      %v672 = vperm.slane %v536, 4
      %v673 = vmul.f32 %v671, %v672
      %v674 = vperm.slane %v536, 5
      %v675 = vadd.f32 %v673, %v674
      %v676 = vperm.slane %v536, 6
      %v677 = vmul.f32 %v675, %v676
      %v678 = vsel %vm387, %v677, 0.0
      %679 = vadd.xlane.f32.xlu0 %v678
      %v680 = vpop.xlane.xlu0 %679
      %v681 = vperm.slane %v536, 7
      %v682 = vadd.f32 %v680, %v681
      %v683 = vmul.f32 %v682, %v354
      %v684 = vadd.f32 %v683, 0.0
      %v685 = vld [vmem:[%s5] sm:$0x1]
      %687 = vset.pattern.permute.xlu0 0
      %688 = vperm.xlu0 %687, %v684
      %v689 = vpop.permute.xlu0 %688
      %v692 = vperm.slane %v685, 0
      %vm694 = vcmp.gt.f32.partialorder %v689, %v692
      %v695 = vsel %vm694, 1, 0
      %vm696 = vcmask 56320
      %v697 = vsel %vm696, %v695, 0
      %v698 = vand.u32 %v697, 65535
      %v699 = vshrl.u32 %v697, 16
      %v700 = vcvt.s32.f32 %v698
      %v701 = vcvt.s32.f32 %v699
      %702 = vadd.xlane.f32.xlu0 %v700
      %v703 = vpop.xlane.xlu0 %702
      %704 = vadd.xlane.f32.xlu0 %v701
      %v705 = vpop.xlane.xlu0 %704
      %v706 = vcvt.f32.s32 %v703
      %v707 = vcvt.f32.s32 %v705
      %v708 = vshll.u32 %v707, 16
      %v709 = vadd.s32 %v708, %v706
      %v710 = vlaneseq
      %v711 = vand.u32 %v710, 127
      %vm712 = vcmp.eq.s32.totalorder %v709, %v711
      %v713 = vsel %vm712, 1, 0
      %v714 = vcvt.s32.f32 %v713
      %v715 = vld [vmem:[%s6] sm:$0xff]
      %vm716 = vcmask 64512
      %v718 = vsel %vm716, %v714, 0
      %720 = vmatpush.msra.mxu0 0.0
      %721 = vmatpush.msra.mxu0 0.0
      %722 = vmatpush.msra.mxu0 0.0
      %723 = vmatpush.msra.mxu0 0.0
      %724 = vmatpush.msra.mxu0 0.0
      %725 = vmatpush.msra.mxu0 0.0
      %726 = vmatpush.msra.mxu0 0.0
      %727 = vmatpush.msra.mxu0 0.0
      %728 = vmatpush.msra.mxu0 0.0
      %729 = vmatpush.msra.mxu0 0.0
      %730 = vmatpush.msra.mxu0 0.0
      %731 = vmatpush.msra.mxu0 0.0
      %732 = vmatpush.msra.mxu0 0.0
      %733 = vmatpush.msra.mxu0 0.0
      %734 = vmatpush.msra.mxu0 0.0
      %735 = vmatpush.msra.mxu0 %v715
      %736 = vmatmul.f32.gmra.mxu0 %v718
      %v737 = vpop.f32.mrf.mxu0
      %v738 = vadd.f32 0.0, %v737
      %739 = vdwg.mxu0
      %v740 = vadd.f32 %v355, %v738
      %s741 = scalar_lea.vmem %s4, 16
      %v742 = vld [vmem:[%s741] sm:$0xff]
      %s743 = scalar_lea.vmem %s2, 192
      %v744 = vld [vmem:[%s743] sm:$0xff]
      %v745 = vld [vmem:[%s743 + $0x8] sm:$0xff]
      %v746 = vld [vmem:[%s743 + $0x10] sm:$0xff]
      %v747 = vld [vmem:[%s743 + $0x18] sm:$0xff]
      %v748 = vld [vmem:[%s743 + $0x20] sm:$0xff]
      %v749 = vld [vmem:[%s743 + $0x28] sm:$0xff]
      %v750 = vld [vmem:[%s743 + $0x30] sm:$0xff]
      %v751 = vld [vmem:[%s743 + $0x38] sm:$0xff]
      %v752 = vld [vmem:[%s743 + $0x40] sm:$0xff]
      %v753 = vld [vmem:[%s743 + $0x48] sm:$0xff]
      %v754 = vld [vmem:[%s743 + $0x50] sm:$0xff]
      %v755 = vld [vmem:[%s743 + $0x58] sm:$0xff]
      %v756 = vrot.slane %v740, 7
      %v757 = vsel %vm372, %v756, 0.0
      %v758 = vrot.slane %v740, 1
      %v759 = vsel %vm377, %v758, 0.0
      %761 = vrot.lane.b32.xlu0 %v740, 32
      %v762 = vpop.permute.xlu0 %761
      %765 = vrot.lane.b32.xlu0 %v759, 64
      %v766 = vpop.permute.xlu0 %765
      %v768 = vsel %vm387, %v757, %v762
      %v769 = vsel %vm389, %v768, %v766
      %v770 = vperm.slane %v742, 0
      %v772 = vsel %vm392, %v769, 0
      %774 = vmatpush.msra.mxu0 0.0
      %775 = vmatpush.msra.mxu0 0.0
      %776 = vmatpush.msra.mxu0 0.0
      %777 = vmatpush.msra.mxu0 0.0
      %778 = vmatpush.msra.mxu0 %v755
      %779 = vmatpush.msra.mxu0 %v754
      %780 = vmatpush.msra.mxu0 %v753
      %781 = vmatpush.msra.mxu0 %v752
      %782 = vmatpush.msra.mxu0 %v751
      %783 = vmatpush.msra.mxu0 %v750
      %784 = vmatpush.msra.mxu0 %v749
      %785 = vmatpush.msra.mxu0 %v748
      %786 = vmatpush.msra.mxu0 %v747
      %787 = vmatpush.msra.mxu0 %v746
      %788 = vmatpush.msra.mxu0 %v745
      %789 = vmatpush.msra.mxu0 %v744
      %790 = vmatmul.f32.gmra.mxu0 %v772
      %v791 = vpop.f32.mrf.mxu0
      %v792 = vadd.f32 %v770, %v791
      %793 = vdwg.mxu0
      %v794 = vmax.f32 %v792, 0.0
      %v795 = vsel %vm387, %v794, 0.0
      %796 = vadd.xlane.f32.xlu0 %v795
      %v797 = vpop.xlane.xlu0 %796
      %v798 = vmul.f32 %v797, %v426
      %v799 = vsub.f32 %v794, %v798
      %v800 = vmul.f32 %v799, %v799
      %v801 = vsel %vm387, %v800, 0.0
      %802 = vadd.xlane.f32.xlu0 %v801
      %v803 = vpop.xlane.xlu0 %802
      %v804 = vmul.f32 %v803, %v426
      %v805 = vadd.f32 %v804, 1e-05
      %v806 = vrsqrt.pop %v805
      %v807 = vmul.f32 %v806, %v805
      %v808 = vmul.f32 %v807, %v806
      %v809 = vmul.f32 0.5, %v808
      %v810 = vsub.f32 1.5, %v809
      %v811 = vmul.f32 %v806, %v810
      %vm812 = vweird.f32 %v805
      %vm813 = vweird.f32 %v806
      %vm814 = vmor %vm812, %vm813
      %v815 = vsel %vm814, %v806, %v811
      %v816 = vmul.f32 %v799, %v815
      %v817 = vperm.slane %v742, 1
      %v818 = vmul.f32 %v816, %v817
      %v819 = vperm.slane %v742, 2
      %v820 = vadd.f32 %v818, %v819
      %s821 = scalar_lea.vmem %s3, 192
      %v822 = vld [vmem:[%s821] sm:$0xff]
      %v823 = vld [vmem:[%s821 + $0x8] sm:$0xff]
      %v824 = vld [vmem:[%s821 + $0x10] sm:$0xff]
      %v825 = vld [vmem:[%s821 + $0x18] sm:$0xff]
      %v826 = vld [vmem:[%s821 + $0x20] sm:$0xff]
      %v827 = vld [vmem:[%s821 + $0x28] sm:$0xff]
      %v828 = vld [vmem:[%s821 + $0x30] sm:$0xff]
      %v829 = vld [vmem:[%s821 + $0x38] sm:$0xff]
      %v830 = vld [vmem:[%s821 + $0x40] sm:$0xff]
      %v831 = vld [vmem:[%s821 + $0x48] sm:$0xff]
      %v832 = vld [vmem:[%s821 + $0x50] sm:$0xff]
      %v833 = vld [vmem:[%s821 + $0x58] sm:$0xff]
      %v834 = vrot.slane %v820, 7
      %v835 = vsel %vm372, %v834, 0.0
      %v836 = vrot.slane %v820, 1
      %v837 = vsel %vm377, %v836, 0.0
      %839 = vrot.lane.b32.xlu0 %v820, 32
      %v840 = vpop.permute.xlu0 %839
      %843 = vrot.lane.b32.xlu0 %v837, 64
      %v844 = vpop.permute.xlu0 %843
      %v846 = vsel %vm387, %v835, %v840
      %v847 = vsel %vm389, %v846, %v844
      %v848 = vperm.slane %v742, 3
      %v850 = vsel %vm392, %v847, 0
      %852 = vmatpush.msra.mxu0 0.0
      %853 = vmatpush.msra.mxu0 0.0
      %854 = vmatpush.msra.mxu0 0.0
      %855 = vmatpush.msra.mxu0 0.0
      %856 = vmatpush.msra.mxu0 %v833
      %857 = vmatpush.msra.mxu0 %v832
      %858 = vmatpush.msra.mxu0 %v831
      %859 = vmatpush.msra.mxu0 %v830
      %860 = vmatpush.msra.mxu0 %v829
      %861 = vmatpush.msra.mxu0 %v828
      %862 = vmatpush.msra.mxu0 %v827
      %863 = vmatpush.msra.mxu0 %v826
      %864 = vmatpush.msra.mxu0 %v825
      %865 = vmatpush.msra.mxu0 %v824
      %866 = vmatpush.msra.mxu0 %v823
      %867 = vmatpush.msra.mxu0 %v822
      %868 = vmatmul.f32.gmra.mxu0 %v850
      %v869 = vpop.f32.mrf.mxu0
      %v870 = vadd.f32 %v848, %v869
      %871 = vdwg.mxu0
      %v872 = vmax.f32 %v870, 0.0
      %v873 = vsel %vm387, %v872, 0.0
      %874 = vadd.xlane.f32.xlu0 %v873
      %v875 = vpop.xlane.xlu0 %874
      %v876 = vmul.f32 %v875, %v426
      %v877 = vsub.f32 %v872, %v876
      %v878 = vmul.f32 %v877, %v877
      %v879 = vsel %vm387, %v878, 0.0
      %880 = vadd.xlane.f32.xlu0 %v879
      %v881 = vpop.xlane.xlu0 %880
      %v882 = vmul.f32 %v881, %v426
      %v883 = vadd.f32 %v882, 1e-05
      %v884 = vrsqrt.pop %v883
      %v885 = vmul.f32 %v884, %v883
      %v886 = vmul.f32 %v885, %v884
      %v887 = vmul.f32 0.5, %v886
      %v888 = vsub.f32 1.5, %v887
      %v889 = vmul.f32 %v884, %v888
      %vm890 = vweird.f32 %v883
      %vm891 = vweird.f32 %v884
      %vm892 = vmor %vm890, %vm891
      %v893 = vsel %vm892, %v884, %v889
      %v894 = vmul.f32 %v877, %v893
      %v895 = vperm.slane %v742, 4
      %v896 = vmul.f32 %v894, %v895
      %v897 = vperm.slane %v742, 5
      %v898 = vadd.f32 %v896, %v897
      %v899 = vperm.slane %v742, 6
      %v900 = vmul.f32 %v898, %v899
      %v901 = vsel %vm387, %v900, 0.0
      %902 = vadd.xlane.f32.xlu0 %v901
      %v903 = vpop.xlane.xlu0 %902
      %v904 = vperm.slane %v742, 7
      %v905 = vadd.f32 %v903, %v904
      %v906 = vmul.f32 %v905, %v354
      %v907 = vadd.f32 %v906, 0.0
      %v908 = vld [vmem:[%s7] sm:$0x1]
      %910 = vset.pattern.permute.xlu0 0
      %911 = vperm.xlu0 %910, %v907
      %v912 = vpop.permute.xlu0 %911
      %v915 = vperm.slane %v908, 0
      %vm917 = vcmp.gt.f32.partialorder %v912, %v915
      %v918 = vsel %vm917, 1, 0
      %v919 = vsel %vm696, %v918, 0
      %v920 = vand.u32 %v919, 65535
      %v921 = vshrl.u32 %v919, 16
      %v922 = vcvt.s32.f32 %v920
      %v923 = vcvt.s32.f32 %v921
      %924 = vadd.xlane.f32.xlu0 %v922
      %v925 = vpop.xlane.xlu0 %924
      %926 = vadd.xlane.f32.xlu0 %v923
      %v927 = vpop.xlane.xlu0 %926
      %v928 = vcvt.f32.s32 %v925
      %v929 = vcvt.f32.s32 %v927
      %v930 = vshll.u32 %v929, 16
      %v931 = vadd.s32 %v930, %v928
      %vm932 = vcmp.eq.s32.totalorder %v931, %v711
      %v933 = vsel %vm932, 1, 0
      %v934 = vcvt.s32.f32 %v933
      %v935 = vld [vmem:[%s8] sm:$0xff]
      %v937 = vsel %vm716, %v934, 0
      %939 = vmatpush.msra.mxu0 0.0
      %940 = vmatpush.msra.mxu0 0.0
      %941 = vmatpush.msra.mxu0 0.0
      %942 = vmatpush.msra.mxu0 0.0
      %943 = vmatpush.msra.mxu0 0.0
      %944 = vmatpush.msra.mxu0 0.0
      %945 = vmatpush.msra.mxu0 0.0
      %946 = vmatpush.msra.mxu0 0.0
      %947 = vmatpush.msra.mxu0 0.0
      %948 = vmatpush.msra.mxu0 0.0
      %949 = vmatpush.msra.mxu0 0.0
      %950 = vmatpush.msra.mxu0 0.0
      %951 = vmatpush.msra.mxu0 0.0
      %952 = vmatpush.msra.mxu0 0.0
      %953 = vmatpush.msra.mxu0 0.0
      %954 = vmatpush.msra.mxu0 %v935
      %955 = vmatmul.f32.gmra.mxu0 %v937
      %v956 = vpop.f32.mrf.mxu0
      %v957 = vadd.f32 0.0, %v956
      %958 = vdwg.mxu0
      %v959 = vadd.f32 %v740, %v957
      %960 = vst.msk [vmem:[%s343] sm:$0xff] %vm387, %v959
      %vm961 = vcmp.eq.s32.totalorder %v711, 0
      %v962 = vsel %vm961, 1, 0
      %v963 = vcvt.s32.f32 %v962
      %965 = vset.pattern.permute.xlu0 0
      %966 = vperm.xlu0 %965, %v534
      %v967 = vpop.permute.xlu0 %966
      %v969 = vmul.f32 %v967, %v963
      %vm970 = vcmp.eq.s32.totalorder %v711, 1
      %v971 = vsel %vm970, 1, 0
      %v972 = vcvt.s32.f32 %v971
      %v973 = vmul.f32 %v689, %v972
      %v974 = vadd.f32 %v969, %v973
      %vm975 = vcmp.eq.s32.totalorder %v711, 2
      %v976 = vsel %vm975, 1, 0
      %v977 = vcvt.s32.f32 %v976
      %v978 = vmul.f32 %v912, %v977
      %v979 = vadd.f32 %v974, %v978
      %980 = vst [vmem:[%s347] sm:$0xff] %v979
      %p981 = scmp.lt.s32.totalorder %s30, 1
      %s982 = scalar_select %p981, %s30, 1
      %s983 = smul.addr %s982, 8
      %s984 = scalar_lea.vmem %s9, %s983
      %p985 = scmp.lt.s32.totalorder %s30, 1
      %s986 = scalar_select %p985, %s30, 1
      %s987 = smul.addr %s986, 8
      %s988 = scalar_lea.vmem %s10, %s987
      // Predicated region
      $region53: #{_fastspeech2_forward.4} parent=51 // pred_check
        %p989 = pneg %p221
      $region54: #{_fastspeech2_forward.4} parent=51 // pred_check_branch
        %991 = sbr.rel (%p989) target = $region56
      $region55: #{_fastspeech2_forward.4} parent=51 // pred_region
        _
      $region56: #{_fastspeech2_forward.4} parent=51 // pred_fallthru
        _
      // Predicated region
      $region57: #{_fastspeech2_forward.4} parent=51 // pred_check
        %p992 = pneg %p247
      $region58: #{_fastspeech2_forward.4} parent=51 // pred_check_branch
        %994 = sbr.rel (%p992) target = $region60
      $region59: #{_fastspeech2_forward.4} parent=51 // pred_region
        _
      $region60: #{_fastspeech2_forward.4} parent=51 // pred_fallthru
        _
    $region52: #{_fastspeech2_forward.4} parent=5 // pred_fallthru
      _
    %p995 = scmp.le.s32.totalorder 2, %s25
    // Predicated region
    $region61: #{_fastspeech2_forward.4} parent=5 // pred_check
      %p996 = pneg %p995
    $region62: #{_fastspeech2_forward.4} parent=5 // pred_check_branch
      %998 = sbr.rel (%p996) target = $region64
    $region63: #{_fastspeech2_forward.4} parent=5 // pred_region
      %s999 = ssub.s32 %s25, 2
      // Predicated region
      $region65: #{_fastspeech2_forward.4} parent=63 // pred_check
        %p1000 = pneg %p227
      $region66: #{_fastspeech2_forward.4} parent=63 // pred_check_branch
        %1002 = sbr.rel (%p1000) target = $region68
      $region67: #{_fastspeech2_forward.4} parent=63 // pred_region
        %p1003 = scmp.lt.s32.totalorder %s31, 1
        %s1004 = scalar_select %p1003, %s31, 1
        %s1005 = smul.addr %s1004, 8
        %s1006 = scalar_lea.vmem %s9, %s1005
      $region68: #{_fastspeech2_forward.4} parent=63 // pred_fallthru
        _
      // Predicated region
      $region69: #{_fastspeech2_forward.4} parent=63 // pred_check
        %p1007 = pneg %p253
      $region70: #{_fastspeech2_forward.4} parent=63 // pred_check_branch
        %1009 = sbr.rel (%p1007) target = $region72
      $region71: #{_fastspeech2_forward.4} parent=63 // pred_region
        %p1010 = scmp.lt.s32.totalorder %s31, 1
        %s1011 = scalar_select %p1010, %s31, 1
        %s1012 = smul.addr %s1011, 8
        %s1013 = scalar_lea.vmem %s10, %s1012
      $region72: #{_fastspeech2_forward.4} parent=63 // pred_fallthru
        _
    $region64: #{_fastspeech2_forward.4} parent=5 // pred_fallthru
      _
  $region6: #{_fastspeech2_forward.4} parent=0 // loop_footer
    %s29 = sadd.s32 1, %s25
  $region7: #{_fastspeech2_forward.4} parent=0 // loop_footer_branch
    %24 = sbr.rel target = $region3
  $region8: #{_fastspeech2_forward.4} parent=0 // loop_exit
    _

// kernel: _fastspeech2_forward.5
$region0: #{_fastspeech2_forward.5}
  #allocation0 [shape = 'u32[]', space=smem, size = 0x4, offset = 0x4, fixed_abs, tag = 'smem constant byte address 0x4 - core index']
  #allocation1 [shape = 'u32[72,128]{1,0:T(1,128)}', space=vmem, size = 0x9000, scoped, tag = 'internal scratch']
  #allocation2 [shape = 's32[1]{0}', space=sflag, size = 0x4, scoped, tag = 'scoped memory for _fastspeech2_forward.5']
  #allocation3 [shape = 'u8[512]{0}', space=smem, size = 0x200, scoped, tag = 'prefetched SMEM operand 0']
  %s0 = inlined_call_operand.vmem [shape: s32[2], index: 0, kind: input, shape index: {}]
  %s1 = inlined_call_operand.vmem [shape: f32[2,40,32], index: 1, kind: input, shape index: {}]
  %s2 = inlined_call_operand.vmem [shape: f32[2,32,96], index: 2, kind: input, shape index: {}]
  %s3 = inlined_call_operand.vmem [shape: f32[2,32,32], index: 3, kind: input, shape index: {}]
  %s4 = inlined_call_operand.vmem [shape: f32[2,96,64], index: 4, kind: input, shape index: {}]
  %s5 = inlined_call_operand.vmem [shape: f32[2,64,32], index: 5, kind: input, shape index: {}]
  %s6 = inlined_call_operand.vmem [shape: f32[2,8,128], index: 6, kind: input, shape index: {}]
  %s7 = inlined_call_operand.vmem [shape: f32[32,128], index: 7, kind: input, shape index: {}]
  %s8 = inlined_call_operand.vmem [shape: f32[1,128], index: 8, kind: input, shape index: {}]
  %s9 = inlined_call_operand.vmem [shape: f32[5,160,128], index: 9, kind: input, shape index: {}]
  %s10 = inlined_call_operand.vmem [shape: f32[5,1,128], index: 10, kind: input, shape index: {}]
  %s11 = inlined_call_operand.vmem [shape: f32[2,40,128], index: 11, kind: output, shape index: {0}]
  %s12 = inlined_call_operand.vmem [shape: f32[2,40,128], index: 12, kind: output, shape index: {1}]
  %13 = xla_tuple %s11, %s12
  %s14 = sld [smem:[#allocation0]]
  $region81: #{_fastspeech2_forward.5} parent=0
    _
  %s16 = ssub.s32 1, %s14
  %s17 = scalar_select 0, %s16, %s14
  %s19 = sshll.u32 %s0, 4
  %s20 = int_to_ptr.vmem [resolvable:$true] %s19
  %22 = dma.vmem_to_smem %s20, 16, [#allocation3], [#allocation2]
  %24 = dma.done [#allocation2], 16
  %25 = sfence
  loop: start=0, step=1, limit=4
  $region2: #{_fastspeech2_forward.5} parent=0 // loop_pre_header
    _
  $region3: #{_fastspeech2_forward.5} parent=0 // loop_header
    %s27 = sphi 0, %s31
    %p28 = scmp.ge.s32.totalorder %s27, 4
    %s37 = sphi 0, %s39
    %s40 = sphi 0, %s37
    %s41 = sphi 0, %s40
    %s57 = sphi 0, %s41
    %s61 = sphi 0, %s61
    %s63 = sphi 0, %s61
    %s64 = sphi 0, %s63
    %s78 = sphi 0, %s64
    %s82 = sphi 0, %s82
    %s84 = sphi 0, %s82
    %s85 = sphi 0, %s84
    %s99 = sphi 0, %s85
    %s103 = sphi 0, %s103
    %s105 = sphi 0, %s103
    %s106 = sphi 0, %s105
    %s120 = sphi 0, %s106
    %s124 = sphi 0, %s124
    %s126 = sphi 0, %s124
    %s127 = sphi 0, %s126
    %s141 = sphi 0, %s127
    %s145 = sphi 0, %s145
    %s147 = sphi 0, %s145
    %s148 = sphi 0, %s147
    %s162 = sphi 0, %s148
    %s166 = sphi 0, %s166
    %s168 = sphi 0, %s166
    %s169 = sphi 0, %s168
    %s183 = sphi 0, %s169
    %s187 = sphi 0, %s187
    %s189 = sphi 0, %s187
    %s190 = sphi 0, %s189
    %s204 = sphi 0, %s190
    %s208 = sphi 0, %s208
    %s210 = sphi 0, %s208
    %s211 = sphi 0, %s210
    %s225 = sphi 0, %s211
    %s229 = sphi 0, %s229
    %s231 = sphi 0, %s229
    %s232 = sphi 0, %s231
    %s246 = sphi 0, %s232
    %s252 = sphi 0, %s254
    %s255 = sphi 0, %s252
    %s256 = sphi 0, %s255
    %s272 = sphi 0, %s256
    %s278 = sphi 0, %s280
    %s281 = sphi 0, %s278
    %s282 = sphi 0, %s281
    %s298 = sphi 0, %s282
  $region4: #{_fastspeech2_forward.5} parent=0 // loop_header_branch
    %30 = sbr.rel (%p28) target = $region8
  $region5: #{_fastspeech2_forward.5} parent=0 // loop_body
    %s32 = ssub.s32 %s27, 1
    %s33 = ssub.s32 %s27, 2
    %s34 = sadd.s32 %s27, 1
    %s35 = ssub.s32 %s27, %s34
    %p36 = scmp.eq.s32.totalorder %s35, 0
    %s38 = sadd.s32 %s37, 1
    %s39 = scalar_select %p36, %s37, %s38
    %p42 = pneg %p36
    %p43 = scmp.eq.s32.totalorder %s27, 1
    %p44 = por %p42, %p43
    %p45 = scmp.ne.s32.totalorder %s37, %s40
    %p46 = scmp.eq.s32.totalorder %s27, 0
    %p47 = por %p45, %p46
    %p48 = scmp.ne.s32.totalorder %s37, %s40
    %p49 = scmp.eq.s32.totalorder %s32, 1
    %p50 = por %p48, %p49
    %p51 = scmp.ne.s32.totalorder %s40, %s41
    %p52 = scmp.eq.s32.totalorder %s32, 0
    %p53 = por %p51, %p52
    %p54 = scmp.ne.s32.totalorder %s40, %s41
    %p55 = scmp.eq.s32.totalorder %s33, 1
    %p56 = por %p54, %p55
    %p58 = scmp.ne.s32.totalorder %s41, %s57
    %p59 = scmp.eq.s32.totalorder %s33, 0
    %p60 = por %p58, %p59
    %s62 = sadd.s32 %s61, 1
    %p65 = scmp.eq.s32.totalorder %s27, 1
    %p66 = scmp.ne.s32.totalorder %s61, %s63
    %p67 = scmp.eq.s32.totalorder %s27, 0
    %p68 = por %p66, %p67
    %p69 = scmp.ne.s32.totalorder %s61, %s63
    %p70 = scmp.eq.s32.totalorder %s32, 1
    %p71 = por %p69, %p70
    %p72 = scmp.ne.s32.totalorder %s63, %s64
    %p73 = scmp.eq.s32.totalorder %s32, 0
    %p74 = por %p72, %p73
    %p75 = scmp.ne.s32.totalorder %s63, %s64
    %p76 = scmp.eq.s32.totalorder %s33, 1
    %p77 = por %p75, %p76
    %p79 = scmp.ne.s32.totalorder %s64, %s78
    %p80 = scmp.eq.s32.totalorder %s33, 0
    %p81 = por %p79, %p80
    %s83 = sadd.s32 %s82, 1
    %p86 = scmp.eq.s32.totalorder %s27, 1
    %p87 = scmp.ne.s32.totalorder %s82, %s84
    %p88 = scmp.eq.s32.totalorder %s27, 0
    %p89 = por %p87, %p88
    %p90 = scmp.ne.s32.totalorder %s82, %s84
    %p91 = scmp.eq.s32.totalorder %s32, 1
    %p92 = por %p90, %p91
    %p93 = scmp.ne.s32.totalorder %s84, %s85
    %p94 = scmp.eq.s32.totalorder %s32, 0
    %p95 = por %p93, %p94
    %p96 = scmp.ne.s32.totalorder %s84, %s85
    %p97 = scmp.eq.s32.totalorder %s33, 1
    %p98 = por %p96, %p97
    %p100 = scmp.ne.s32.totalorder %s85, %s99
    %p101 = scmp.eq.s32.totalorder %s33, 0
    %p102 = por %p100, %p101
    %s104 = sadd.s32 %s103, 1
    %p107 = scmp.eq.s32.totalorder %s27, 1
    %p108 = scmp.ne.s32.totalorder %s103, %s105
    %p109 = scmp.eq.s32.totalorder %s27, 0
    %p110 = por %p108, %p109
    %p111 = scmp.ne.s32.totalorder %s103, %s105
    %p112 = scmp.eq.s32.totalorder %s32, 1
    %p113 = por %p111, %p112
    %p114 = scmp.ne.s32.totalorder %s105, %s106
    %p115 = scmp.eq.s32.totalorder %s32, 0
    %p116 = por %p114, %p115
    %p117 = scmp.ne.s32.totalorder %s105, %s106
    %p118 = scmp.eq.s32.totalorder %s33, 1
    %p119 = por %p117, %p118
    %p121 = scmp.ne.s32.totalorder %s106, %s120
    %p122 = scmp.eq.s32.totalorder %s33, 0
    %p123 = por %p121, %p122
    %s125 = sadd.s32 %s124, 1
    %p128 = scmp.eq.s32.totalorder %s27, 1
    %p129 = scmp.ne.s32.totalorder %s124, %s126
    %p130 = scmp.eq.s32.totalorder %s27, 0
    %p131 = por %p129, %p130
    %p132 = scmp.ne.s32.totalorder %s124, %s126
    %p133 = scmp.eq.s32.totalorder %s32, 1
    %p134 = por %p132, %p133
    %p135 = scmp.ne.s32.totalorder %s126, %s127
    %p136 = scmp.eq.s32.totalorder %s32, 0
    %p137 = por %p135, %p136
    %p138 = scmp.ne.s32.totalorder %s126, %s127
    %p139 = scmp.eq.s32.totalorder %s33, 1
    %p140 = por %p138, %p139
    %p142 = scmp.ne.s32.totalorder %s127, %s141
    %p143 = scmp.eq.s32.totalorder %s33, 0
    %p144 = por %p142, %p143
    %s146 = sadd.s32 %s145, 1
    %p149 = scmp.eq.s32.totalorder %s27, 1
    %p150 = scmp.ne.s32.totalorder %s145, %s147
    %p151 = scmp.eq.s32.totalorder %s27, 0
    %p152 = por %p150, %p151
    %p153 = scmp.ne.s32.totalorder %s145, %s147
    %p154 = scmp.eq.s32.totalorder %s32, 1
    %p155 = por %p153, %p154
    %p156 = scmp.ne.s32.totalorder %s147, %s148
    %p157 = scmp.eq.s32.totalorder %s32, 0
    %p158 = por %p156, %p157
    %p159 = scmp.ne.s32.totalorder %s147, %s148
    %p160 = scmp.eq.s32.totalorder %s33, 1
    %p161 = por %p159, %p160
    %p163 = scmp.ne.s32.totalorder %s148, %s162
    %p164 = scmp.eq.s32.totalorder %s33, 0
    %p165 = por %p163, %p164
    %s167 = sadd.s32 %s166, 1
    %p170 = scmp.eq.s32.totalorder %s27, 1
    %p171 = scmp.ne.s32.totalorder %s166, %s168
    %p172 = scmp.eq.s32.totalorder %s27, 0
    %p173 = por %p171, %p172
    %p174 = scmp.ne.s32.totalorder %s166, %s168
    %p175 = scmp.eq.s32.totalorder %s32, 1
    %p176 = por %p174, %p175
    %p177 = scmp.ne.s32.totalorder %s168, %s169
    %p178 = scmp.eq.s32.totalorder %s32, 0
    %p179 = por %p177, %p178
    %p180 = scmp.ne.s32.totalorder %s168, %s169
    %p181 = scmp.eq.s32.totalorder %s33, 1
    %p182 = por %p180, %p181
    %p184 = scmp.ne.s32.totalorder %s169, %s183
    %p185 = scmp.eq.s32.totalorder %s33, 0
    %p186 = por %p184, %p185
    %s188 = sadd.s32 %s187, 1
    %p191 = scmp.eq.s32.totalorder %s27, 1
    %p192 = scmp.ne.s32.totalorder %s187, %s189
    %p193 = scmp.eq.s32.totalorder %s27, 0
    %p194 = por %p192, %p193
    %p195 = scmp.ne.s32.totalorder %s187, %s189
    %p196 = scmp.eq.s32.totalorder %s32, 1
    %p197 = por %p195, %p196
    %p198 = scmp.ne.s32.totalorder %s189, %s190
    %p199 = scmp.eq.s32.totalorder %s32, 0
    %p200 = por %p198, %p199
    %p201 = scmp.ne.s32.totalorder %s189, %s190
    %p202 = scmp.eq.s32.totalorder %s33, 1
    %p203 = por %p201, %p202
    %p205 = scmp.ne.s32.totalorder %s190, %s204
    %p206 = scmp.eq.s32.totalorder %s33, 0
    %p207 = por %p205, %p206
    %s209 = sadd.s32 %s208, 1
    %p212 = scmp.eq.s32.totalorder %s27, 1
    %p213 = scmp.ne.s32.totalorder %s208, %s210
    %p214 = scmp.eq.s32.totalorder %s27, 0
    %p215 = por %p213, %p214
    %p216 = scmp.ne.s32.totalorder %s208, %s210
    %p217 = scmp.eq.s32.totalorder %s32, 1
    %p218 = por %p216, %p217
    %p219 = scmp.ne.s32.totalorder %s210, %s211
    %p220 = scmp.eq.s32.totalorder %s32, 0
    %p221 = por %p219, %p220
    %p222 = scmp.ne.s32.totalorder %s210, %s211
    %p223 = scmp.eq.s32.totalorder %s33, 1
    %p224 = por %p222, %p223
    %p226 = scmp.ne.s32.totalorder %s211, %s225
    %p227 = scmp.eq.s32.totalorder %s33, 0
    %p228 = por %p226, %p227
    %s230 = sadd.s32 %s229, 1
    %p233 = scmp.eq.s32.totalorder %s27, 1
    %p234 = scmp.ne.s32.totalorder %s229, %s231
    %p235 = scmp.eq.s32.totalorder %s27, 0
    %p236 = por %p234, %p235
    %p237 = scmp.ne.s32.totalorder %s229, %s231
    %p238 = scmp.eq.s32.totalorder %s32, 1
    %p239 = por %p237, %p238
    %p240 = scmp.ne.s32.totalorder %s231, %s232
    %p241 = scmp.eq.s32.totalorder %s32, 0
    %p242 = por %p240, %p241
    %p243 = scmp.ne.s32.totalorder %s231, %s232
    %p244 = scmp.eq.s32.totalorder %s33, 1
    %p245 = por %p243, %p244
    %p247 = scmp.ne.s32.totalorder %s232, %s246
    %p248 = scmp.eq.s32.totalorder %s33, 0
    %p249 = por %p247, %p248
    %s250 = ssub.s32 %s27, %s34
    %p251 = scmp.eq.s32.totalorder %s250, 0
    %s253 = sadd.s32 %s252, 1
    %s254 = scalar_select %p251, %s252, %s253
    %p257 = pneg %p251
    %p258 = scmp.eq.s32.totalorder %s27, 1
    %p259 = por %p257, %p258
    %p260 = scmp.ne.s32.totalorder %s252, %s255
    %p261 = scmp.eq.s32.totalorder %s27, 0
    %p262 = por %p260, %p261
    %p263 = scmp.ne.s32.totalorder %s252, %s255
    %p264 = scmp.eq.s32.totalorder %s32, 1
    %p265 = por %p263, %p264
    %p266 = scmp.ne.s32.totalorder %s255, %s256
    %p267 = scmp.eq.s32.totalorder %s32, 0
    %p268 = por %p266, %p267
    %p269 = scmp.ne.s32.totalorder %s255, %s256
    %p270 = scmp.eq.s32.totalorder %s33, 1
    %p271 = por %p269, %p270
    %p273 = scmp.ne.s32.totalorder %s256, %s272
    %p274 = scmp.eq.s32.totalorder %s33, 0
    %p275 = por %p273, %p274
    %s276 = ssub.s32 %s27, %s34
    %p277 = scmp.eq.s32.totalorder %s276, 0
    %s279 = sadd.s32 %s278, 1
    %s280 = scalar_select %p277, %s278, %s279
    %p283 = pneg %p277
    %p284 = scmp.eq.s32.totalorder %s27, 1
    %p285 = por %p283, %p284
    %p286 = scmp.ne.s32.totalorder %s278, %s281
    %p287 = scmp.eq.s32.totalorder %s27, 0
    %p288 = por %p286, %p287
    %p289 = scmp.ne.s32.totalorder %s278, %s281
    %p290 = scmp.eq.s32.totalorder %s32, 1
    %p291 = por %p289, %p290
    %p292 = scmp.ne.s32.totalorder %s281, %s282
    %p293 = scmp.eq.s32.totalorder %s32, 0
    %p294 = por %p292, %p293
    %p295 = scmp.ne.s32.totalorder %s281, %s282
    %p296 = scmp.eq.s32.totalorder %s33, 1
    %p297 = por %p295, %p296
    %p299 = scmp.ne.s32.totalorder %s282, %s298
    %p300 = scmp.eq.s32.totalorder %s33, 0
    %p301 = por %p299, %p300
    %p302 = scmp.le.s32.totalorder 1, %s27
    %p303 = scmp.lt.s32.totalorder %s27, 3
    %p304 = pnand %p302, %p303
    %p305 = pneg %p304
    // Predicated region
    $region9: #{_fastspeech2_forward.5} parent=5 // pred_check
      _
    $region10: #{_fastspeech2_forward.5} parent=5 // pred_check_branch
      %307 = sbr.rel (%p304) target = $region12
    $region11: #{_fastspeech2_forward.5} parent=5 // pred_region
      %s308 = ssub.s32 %s27, 1
      // Predicated region
      $region13: #{_fastspeech2_forward.5} parent=11 // pred_check
        %p309 = pneg %p74
      $region14: #{_fastspeech2_forward.5} parent=11 // pred_check_branch
        %311 = sbr.rel (%p309) target = $region16
      $region15: #{_fastspeech2_forward.5} parent=11 // pred_region
        _
      $region16: #{_fastspeech2_forward.5} parent=11 // pred_fallthru
        _
      // Predicated region
      $region17: #{_fastspeech2_forward.5} parent=11 // pred_check
        %p312 = pneg %p95
      $region18: #{_fastspeech2_forward.5} parent=11 // pred_check_branch
        %314 = sbr.rel (%p312) target = $region20
      $region19: #{_fastspeech2_forward.5} parent=11 // pred_region
        _
      $region20: #{_fastspeech2_forward.5} parent=11 // pred_fallthru
        _
      // Predicated region
      $region21: #{_fastspeech2_forward.5} parent=11 // pred_check
        %p315 = pneg %p116
      $region22: #{_fastspeech2_forward.5} parent=11 // pred_check_branch
        %317 = sbr.rel (%p315) target = $region24
      $region23: #{_fastspeech2_forward.5} parent=11 // pred_region
        _
      $region24: #{_fastspeech2_forward.5} parent=11 // pred_fallthru
        _
      // Predicated region
      $region25: #{_fastspeech2_forward.5} parent=11 // pred_check
        %p318 = pneg %p137
      $region26: #{_fastspeech2_forward.5} parent=11 // pred_check_branch
        %320 = sbr.rel (%p318) target = $region28
      $region27: #{_fastspeech2_forward.5} parent=11 // pred_region
        _
      $region28: #{_fastspeech2_forward.5} parent=11 // pred_fallthru
        _
      // Predicated region
      $region29: #{_fastspeech2_forward.5} parent=11 // pred_check
        %p321 = pneg %p158
      $region30: #{_fastspeech2_forward.5} parent=11 // pred_check_branch
        %323 = sbr.rel (%p321) target = $region32
      $region31: #{_fastspeech2_forward.5} parent=11 // pred_region
        _
      $region32: #{_fastspeech2_forward.5} parent=11 // pred_fallthru
        _
      // Predicated region
      $region33: #{_fastspeech2_forward.5} parent=11 // pred_check
        %p324 = pneg %p179
      $region34: #{_fastspeech2_forward.5} parent=11 // pred_check_branch
        %326 = sbr.rel (%p324) target = $region36
      $region35: #{_fastspeech2_forward.5} parent=11 // pred_region
        _
      $region36: #{_fastspeech2_forward.5} parent=11 // pred_fallthru
        _
      // Predicated region
      $region37: #{_fastspeech2_forward.5} parent=11 // pred_check
        %p327 = pneg %p200
      $region38: #{_fastspeech2_forward.5} parent=11 // pred_check_branch
        %329 = sbr.rel (%p327) target = $region40
      $region39: #{_fastspeech2_forward.5} parent=11 // pred_region
        _
      $region40: #{_fastspeech2_forward.5} parent=11 // pred_fallthru
        _
      // Predicated region
      $region41: #{_fastspeech2_forward.5} parent=11 // pred_check
        %p330 = pneg %p221
      $region42: #{_fastspeech2_forward.5} parent=11 // pred_check_branch
        %332 = sbr.rel (%p330) target = $region44
      $region43: #{_fastspeech2_forward.5} parent=11 // pred_region
        _
      $region44: #{_fastspeech2_forward.5} parent=11 // pred_fallthru
        _
      // Predicated region
      $region45: #{_fastspeech2_forward.5} parent=11 // pred_check
        %p333 = pneg %p242
      $region46: #{_fastspeech2_forward.5} parent=11 // pred_check_branch
        %335 = sbr.rel (%p333) target = $region48
      $region47: #{_fastspeech2_forward.5} parent=11 // pred_region
        _
      $region48: #{_fastspeech2_forward.5} parent=11 // pred_fallthru
        _
    $region12: #{_fastspeech2_forward.5} parent=5 // pred_fallthru
      _
    %p336 = scmp.lt.s32.totalorder %s27, 2
    // Predicated region
    $region49: #{_fastspeech2_forward.5} parent=5 // pred_check
      %p337 = pneg %p336
    $region50: #{_fastspeech2_forward.5} parent=5 // pred_check_branch
      %339 = sbr.rel (%p337) target = $region52
    $region51: #{_fastspeech2_forward.5} parent=5 // pred_region
      // Predicated region
      $region53: #{_fastspeech2_forward.5} parent=51 // pred_check
        %p340 = pneg %p47
      $region54: #{_fastspeech2_forward.5} parent=51 // pred_check_branch
        %342 = sbr.rel (%p340) target = $region56
      $region55: #{_fastspeech2_forward.5} parent=51 // pred_region
        %p343 = scmp.lt.s32.totalorder %s27, 1
        %s344 = scalar_select %p343, %s27, 1
        %s345 = smul.addr %s344, 5
        %s346 = smul.addr %s345, 8
        %s347 = scalar_lea.vmem %s1, %s346
      $region56: #{_fastspeech2_forward.5} parent=51 // pred_fallthru
        _
    $region52: #{_fastspeech2_forward.5} parent=5 // pred_fallthru
      _
    %p348 = scmp.le.s32.totalorder 1, %s27
    %p349 = scmp.lt.s32.totalorder %s27, 3
    %p350 = pnand %p348, %p349
    %p351 = pneg %p350
    // Predicated region
    $region57: #{_fastspeech2_forward.5} parent=5 // pred_check
      _
    $region58: #{_fastspeech2_forward.5} parent=5 // pred_check_branch
      %353 = sbr.rel (%p350) target = $region60
    $region59: #{_fastspeech2_forward.5} parent=5 // pred_region
      %s354 = ssub.s32 %s27, 1
      %p355 = scmp.lt.s32.totalorder %s32, 1
      %s356 = scalar_select %p355, %s32, 1
      %s357 = smul.addr %s356, 5
      %s358 = smul.addr %s357, 8
      %s359 = scalar_lea.vmem %s1, %s358
      %p360 = pneg %p53
      %p361 = pneg %p50
      %p362 = pneg %p74
      %p363 = pneg %p71
      %p364 = pneg %p95
      %p365 = pneg %p92
      %p366 = pneg %p116
      %p367 = pneg %p113
      %p368 = pneg %p137
      %p369 = pneg %p134
      %p370 = pneg %p158
      %p371 = pneg %p155
      %p372 = pneg %p179
      %p373 = pneg %p176
      %p374 = pneg %p200
      %p375 = pneg %p197
      %p376 = pneg %p221
      %p377 = pneg %p218
      %p378 = pneg %p242
      %p379 = pneg %p239
      %p380 = pneg %p268
      %p381 = pneg %p265
      %p382 = scmp.lt.s32.totalorder %s32, 1
      %s383 = scalar_select %p382, %s32, 1
      %s384 = smul.addr %s383, 5
      %s385 = smul.addr %s384, 8
      %s386 = scalar_lea.vmem %s11, %s385
      %p387 = pneg %p294
      %p388 = pneg %p291
      %p389 = scmp.lt.s32.totalorder %s32, 1
      %s390 = scalar_select %p389, %s32, 1
      %s391 = smul.addr %s390, 5
      %s392 = smul.addr %s391, 8
      %s393 = scalar_lea.vmem %s12, %s392
      %p394 = scmp.lt.s32.totalorder %s32, 1
      %s395 = scalar_select %p394, %s32, 1
      %s396 = smul.addr %s395, 5
      %s397 = smul.addr %s396, 8
      %s398 = scalar_lea.vmem %s1, %s397
      %p399 = scmp.lt.s32.totalorder %s32, 1
      %s400 = scalar_select %p399, %s32, 1
      %s401 = smul.addr %s400, 5
      %s402 = smul.addr %s401, 8
      %s403 = scalar_lea.vmem %s11, %s402
      %p404 = scmp.lt.s32.totalorder %s32, 1
      %s405 = scalar_select %p404, %s32, 1
      %s406 = smul.addr %s405, 5
      %s407 = smul.addr %s406, 8
      %s408 = scalar_lea.vmem %s12, %s407
      %s409 = sld [smem:[#allocation3 + %s32]]
      %v410 = vlaneseq
      %v411 = vshrl.u32 %v410, 7
      %v412 = vadd.s32 %v411, 8
      %v413 = vadd.s32 %v411, 16
      %v414 = vadd.s32 %v411, 24
      %v415 = vadd.s32 %v411, 32
      %v416 = vlaneseq
      %v417 = vand.u32 %v416, 127
      %v418 = vstv %s409
      %vm419 = vcmp.lt.s32.totalorder %v411, %v418
      %vm420 = vcmp.lt.s32.totalorder %v412, %v418
      %vm421 = vcmp.lt.s32.totalorder %v413, %v418
      %vm422 = vcmp.lt.s32.totalorder %v414, %v418
      %vm423 = vcmp.lt.s32.totalorder %v415, %v418
      %v424 = vsel %vm419, 1, 0
      %v425 = vsel %vm420, 1, 0
      %v426 = vsel %vm421, 1, 0
      %v427 = vsel %vm422, 1, 0
      %v428 = vsel %vm423, 1, 0
      %v429 = vcvt.s32.f32 %v424
      %v430 = vcvt.s32.f32 %v425
      %v431 = vcvt.s32.f32 %v426
      %v432 = vcvt.s32.f32 %v427
      %v433 = vcvt.s32.f32 %v428
      %vm434 = vcmp.lt.s32.totalorder %v417, %v418
      %v435 = vsel %vm434, 0.0, -1e+09
      %v436 = vld [vmem:[%s398] sm:$0xff]
      %v437 = vld [vmem:[%s398 + $0x8] sm:$0xff]
      %v438 = vld [vmem:[%s398 + $0x10] sm:$0xff]
      %v439 = vld [vmem:[%s398 + $0x18] sm:$0xff]
      %v440 = vld [vmem:[%s398 + $0x20] sm:$0xff]
      %v441 = vld [vmem:[%s6] sm:$0xff]
      %v442 = vld [vmem:[%s2] sm:$0xff]
      %v443 = vld [vmem:[%s2 + $0x8] sm:$0xff]
      %v444 = vld [vmem:[%s2 + $0x10] sm:$0xff]
      %v445 = vld [vmem:[%s2 + $0x18] sm:$0xff]
      %v446 = vld [vmem:[%s3] sm:$0xff]
      %v447 = vld [vmem:[%s3 + $0x8] sm:$0xff]
      %v448 = vld [vmem:[%s3 + $0x10] sm:$0xff]
      %v449 = vld [vmem:[%s3 + $0x18] sm:$0xff]
      %v450 = vld [vmem:[%s4] sm:$0xff]
      %v451 = vld [vmem:[%s4 + $0x8] sm:$0xff]
      %v452 = vld [vmem:[%s4 + $0x10] sm:$0xff]
      %v453 = vld [vmem:[%s4 + $0x18] sm:$0xff]
      %v454 = vld [vmem:[%s4 + $0x20] sm:$0xff]
      %v455 = vld [vmem:[%s4 + $0x28] sm:$0xff]
      %v456 = vld [vmem:[%s4 + $0x30] sm:$0xff]
      %v457 = vld [vmem:[%s4 + $0x38] sm:$0xff]
      %v458 = vld [vmem:[%s4 + $0x40] sm:$0xff]
      %v459 = vld [vmem:[%s4 + $0x48] sm:$0xff]
      %v460 = vld [vmem:[%s4 + $0x50] sm:$0xff]
      %v461 = vld [vmem:[%s4 + $0x58] sm:$0xff]
      %v462 = vld [vmem:[%s5] sm:$0xff]
      %v463 = vld [vmem:[%s5 + $0x8] sm:$0xff]
      %v464 = vld [vmem:[%s5 + $0x10] sm:$0xff]
      %v465 = vld [vmem:[%s5 + $0x18] sm:$0xff]
      %v466 = vld [vmem:[%s5 + $0x20] sm:$0xff]
      %v467 = vld [vmem:[%s5 + $0x28] sm:$0xff]
      %v468 = vld [vmem:[%s5 + $0x30] sm:$0xff]
      %v469 = vld [vmem:[%s5 + $0x38] sm:$0xff]
      %v470 = vperm.slane %v441, 0
      %vm471 = vcmask 261120
      %v473 = vsel %vm471, %v436, 0
      %v476 = vsel %vm471, %v437, 0
      %v479 = vsel %vm471, %v438, 0
      %v482 = vsel %vm471, %v439, 0
      %v485 = vsel %vm471, %v440, 0
      %487 = vmatpush.msra.mxu0 0.0
      %488 = vmatpush.msra.mxu0 0.0
      %489 = vmatpush.msra.mxu0 0.0
      %490 = vmatpush.msra.mxu0 0.0
      %491 = vmatpush.msra.mxu0 0.0
      %492 = vmatpush.msra.mxu0 0.0
      %493 = vmatpush.msra.mxu0 0.0
      %494 = vmatpush.msra.mxu0 0.0
      %495 = vmatpush.msra.mxu0 0.0
      %496 = vmatpush.msra.mxu0 0.0
      %497 = vmatpush.msra.mxu0 0.0
      %498 = vmatpush.msra.mxu0 0.0
      %499 = vmatpush.msra.mxu0 %v445
      %500 = vmatpush.msra.mxu0 %v444
      %501 = vmatpush.msra.mxu0 %v443
      %502 = vmatpush.msra.mxu0 %v442
      %503 = vmatmul.f32.gmra.mxu0 %v473
      %v504 = vpop.f32.mrf.mxu0
      %v505 = vadd.f32 %v470, %v504
      %506 = vmatmul.f32.gmra.mxu0 %v476
      %v507 = vpop.f32.mrf.mxu0
      %v508 = vadd.f32 %v470, %v507
      %509 = vmatmul.f32.gmra.mxu0 %v479
      %v510 = vpop.f32.mrf.mxu0
      %v511 = vadd.f32 %v470, %v510
      %512 = vmatmul.f32.gmra.mxu0 %v482
      %v513 = vpop.f32.mrf.mxu0
      %v514 = vadd.f32 %v470, %v513
      %515 = vmatmul.f32.gmra.mxu0 %v485
      %v516 = vpop.f32.mrf.mxu0
      %v517 = vadd.f32 %v470, %v516
      %518 = vdwg.mxu0
      %524 = vrot.lane.b32.xlu0 %v505, 96
      %v525 = vpop.permute.xlu0 %524
      %526 = vrot.lane.b32.xlu0 %v508, 96
      %v527 = vpop.permute.xlu0 %526
      %528 = vrot.lane.b32.xlu0 %v511, 96
      %v529 = vpop.permute.xlu0 %528
      %530 = vrot.lane.b32.xlu0 %v514, 96
      %v531 = vpop.permute.xlu0 %530
      %532 = vrot.lane.b32.xlu0 %v517, 96
      %v533 = vpop.permute.xlu0 %532
      %vm534 = vcmask 130048
      %v535 = vsel %vm534, %v505, 0
      %v537 = vsel %vm534, %v508, 0
      %v539 = vsel %vm534, %v511, 0
      %v541 = vsel %vm534, %v514, 0
      %v543 = vsel %vm534, %v517, 0
      %v545 = vsel %vm534, %v525, 0
      %v547 = vsel %vm534, %v527, 0
      %v549 = vsel %vm534, %v529, 0
      %v551 = vsel %vm534, %v531, 0
      %v553 = vsel %vm534, %v533, 0
      %555 = vmatpush.xpose.msra.mxu0 0.0
      %556 = vmatpush.xpose.msra.mxu0 0.0
      %557 = vmatpush.xpose.msra.mxu0 0.0
      %558 = vmatpush.xpose.msra.mxu0 0.0
      %559 = vmatpush.xpose.msra.mxu0 0.0
      %560 = vmatpush.xpose.msra.mxu0 0.0
      %561 = vmatpush.xpose.msra.mxu0 0.0
      %562 = vmatpush.xpose.msra.mxu0 0.0
      %563 = vmatpush.xpose.msra.mxu0 0.0
      %564 = vmatpush.xpose.msra.mxu0 0.0
      %565 = vmatpush.xpose.msra.mxu0 0.0
      %566 = vmatpush.xpose.msra.mxu0 %v553
      %567 = vmatpush.xpose.msra.mxu0 %v551
      %568 = vmatpush.xpose.msra.mxu0 %v549
      %569 = vmatpush.xpose.msra.mxu0 %v547
      %570 = vmatpush.xpose.msra.mxu0 %v545
      %571 = vmatmul.f32.gmra.mxu0 %v535
      %v572 = vpop.f32.mrf.mxu0
      %v573 = vadd.f32 0.0, %v572
      %574 = vmatmul.f32.gmra.mxu0 %v537
      %v575 = vpop.f32.mrf.mxu0
      %v576 = vadd.f32 0.0, %v575
      %577 = vmatmul.f32.gmra.mxu0 %v539
      %v578 = vpop.f32.mrf.mxu0
      %v579 = vadd.f32 0.0, %v578
      %580 = vmatmul.f32.gmra.mxu0 %v541
      %v581 = vpop.f32.mrf.mxu0
      %v582 = vadd.f32 0.0, %v581
      %583 = vmatmul.f32.gmra.mxu0 %v543
      %v584 = vpop.f32.mrf.mxu0
      %v585 = vadd.f32 0.0, %v584
      %586 = vdwg.mxu0
      %v587 = vmul.f32 %v573, 0.25
      %v588 = vmul.f32 %v576, 0.25
      %v589 = vmul.f32 %v579, 0.25
      %v590 = vmul.f32 %v582, 0.25
      %v591 = vmul.f32 %v585, 0.25
      %v592 = vadd.f32 %v587, %v435
      %v593 = vadd.f32 %v588, %v435
      %v594 = vadd.f32 %v589, %v435
      %v595 = vadd.f32 %v590, %v435
      %v596 = vadd.f32 %v591, %v435
      %vm597 = vcmask 326656
      %v598 = vsel %vm597, %v592, -inf
      %599 = vmax.xlane.f32.xlu0 %v598
      %v600 = vpop.xlane.xlu0 %599
      %v601 = vsel %vm597, %v593, -inf
      %602 = vmax.xlane.f32.xlu0 %v601
      %v603 = vpop.xlane.xlu0 %602
      %v604 = vsel %vm597, %v594, -inf
      %605 = vmax.xlane.f32.xlu0 %v604
      %v606 = vpop.xlane.xlu0 %605
      %v607 = vsel %vm597, %v595, -inf
      %608 = vmax.xlane.f32.xlu0 %v607
      %v609 = vpop.xlane.xlu0 %608
      %v610 = vsel %vm597, %v596, -inf
      %611 = vmax.xlane.f32.xlu0 %v610
      %v612 = vpop.xlane.xlu0 %611
      %v613 = vsub.f32 %v592, %v600
      %v614 = vsub.f32 %v593, %v603
      %v615 = vsub.f32 %v594, %v606
      %v616 = vsub.f32 %v595, %v609
      %v617 = vsub.f32 %v596, %v612
      %v618 = vmul.f32 %v613, 1.442695
      %v619 = vpow.pop %v618
      %v620 = vmul.f32 %v614, 1.442695
      %v621 = vpow.pop %v620
      %v622 = vmul.f32 %v615, 1.442695
      %v623 = vpow.pop %v622
      %v624 = vmul.f32 %v616, 1.442695
      %v625 = vpow.pop %v624
      %v626 = vmul.f32 %v617, 1.442695
      %v627 = vpow.pop %v626
      %v628 = vsel %vm597, %v619, 0.0
      %629 = vadd.xlane.f32.xlu0 %v628
      %v630 = vpop.xlane.xlu0 %629
      %v631 = vsel %vm597, %v621, 0.0
      %632 = vadd.xlane.f32.xlu0 %v631
      %v633 = vpop.xlane.xlu0 %632
      %v634 = vsel %vm597, %v623, 0.0
      %635 = vadd.xlane.f32.xlu0 %v634
      %v636 = vpop.xlane.xlu0 %635
      %v637 = vsel %vm597, %v625, 0.0
      %638 = vadd.xlane.f32.xlu0 %v637
      %v639 = vpop.xlane.xlu0 %638
      %v640 = vsel %vm597, %v627, 0.0
      %641 = vadd.xlane.f32.xlu0 %v640
      %v642 = vpop.xlane.xlu0 %641
      %v643 = vrcp.pop %v630
      %v644 = vrcp.pop %v633
      %v645 = vrcp.pop %v636
      %v646 = vrcp.pop %v639
      %v647 = vrcp.pop %v642
      %v648 = vmul.f32 %v619, %v643
      %v649 = vmul.f32 %v621, %v644
      %v650 = vmul.f32 %v623, %v645
      %v651 = vmul.f32 %v625, %v646
      %v652 = vmul.f32 %v627, %v647
      %653 = vrot.lane.b32.xlu0 %v505, 64
      %v654 = vpop.permute.xlu0 %653
      %655 = vrot.lane.b32.xlu0 %v508, 64
      %v656 = vpop.permute.xlu0 %655
      %657 = vrot.lane.b32.xlu0 %v511, 64
      %v658 = vpop.permute.xlu0 %657
      %659 = vrot.lane.b32.xlu0 %v514, 64
      %v660 = vpop.permute.xlu0 %659
      %661 = vrot.lane.b32.xlu0 %v517, 64
      %v662 = vpop.permute.xlu0 %661
      %v669 = vsel %vm597, %v648, 0
      %v672 = vsel %vm597, %v649, 0
      %v675 = vsel %vm597, %v650, 0
      %v678 = vsel %vm597, %v651, 0
      %v681 = vsel %vm597, %v652, 0
      %683 = vmatpush.msra.mxu0 0.0
      %684 = vmatpush.msra.mxu0 0.0
      %685 = vmatpush.msra.mxu0 0.0
      %686 = vmatpush.msra.mxu0 0.0
      %687 = vmatpush.msra.mxu0 0.0
      %688 = vmatpush.msra.mxu0 0.0
      %689 = vmatpush.msra.mxu0 0.0
      %690 = vmatpush.msra.mxu0 0.0
      %691 = vmatpush.msra.mxu0 0.0
      %692 = vmatpush.msra.mxu0 0.0
      %693 = vmatpush.msra.mxu0 0.0
      %694 = vmatpush.msra.mxu0 %v662
      %695 = vmatpush.msra.mxu0 %v660
      %696 = vmatpush.msra.mxu0 %v658
      %697 = vmatpush.msra.mxu0 %v656
      %698 = vmatpush.msra.mxu0 %v654
      %699 = vmatmul.f32.gmra.mxu0 %v669
      %v700 = vpop.f32.mrf.mxu0
      %v701 = vadd.f32 0.0, %v700
      %702 = vmatmul.f32.gmra.mxu0 %v672
      %v703 = vpop.f32.mrf.mxu0
      %v704 = vadd.f32 0.0, %v703
      %705 = vmatmul.f32.gmra.mxu0 %v675
      %v706 = vpop.f32.mrf.mxu0
      %v707 = vadd.f32 0.0, %v706
      %708 = vmatmul.f32.gmra.mxu0 %v678
      %v709 = vpop.f32.mrf.mxu0
      %v710 = vadd.f32 0.0, %v709
      %711 = vmatmul.f32.gmra.mxu0 %v681
      %v712 = vpop.f32.mrf.mxu0
      %v713 = vadd.f32 0.0, %v712
      %714 = vdwg.mxu0
      %715 = vrot.lane.b32.xlu0 %v505, 112
      %v716 = vpop.permute.xlu0 %715
      %717 = vrot.lane.b32.xlu0 %v508, 112
      %v718 = vpop.permute.xlu0 %717
      %719 = vrot.lane.b32.xlu0 %v511, 112
      %v720 = vpop.permute.xlu0 %719
      %721 = vrot.lane.b32.xlu0 %v514, 112
      %v722 = vpop.permute.xlu0 %721
      %723 = vrot.lane.b32.xlu0 %v517, 112
      %v724 = vpop.permute.xlu0 %723
      %725 = vrot.lane.b32.xlu0 %v505, 80
      %v726 = vpop.permute.xlu0 %725
      %727 = vrot.lane.b32.xlu0 %v508, 80
      %v728 = vpop.permute.xlu0 %727
      %729 = vrot.lane.b32.xlu0 %v511, 80
      %v730 = vpop.permute.xlu0 %729
      %731 = vrot.lane.b32.xlu0 %v514, 80
      %v732 = vpop.permute.xlu0 %731
      %733 = vrot.lane.b32.xlu0 %v517, 80
      %v734 = vpop.permute.xlu0 %733
      %v735 = vsel %vm534, %v716, 0
      %v737 = vsel %vm534, %v718, 0
      %v739 = vsel %vm534, %v720, 0
      %v741 = vsel %vm534, %v722, 0
      %v743 = vsel %vm534, %v724, 0
      %v745 = vsel %vm534, %v726, 0
      %v747 = vsel %vm534, %v728, 0
      %v749 = vsel %vm534, %v730, 0
      %v751 = vsel %vm534, %v732, 0
      %v753 = vsel %vm534, %v734, 0
      %755 = vmatpush.xpose.msra.mxu0 0.0
      %756 = vmatpush.xpose.msra.mxu0 0.0
      %757 = vmatpush.xpose.msra.mxu0 0.0
      %758 = vmatpush.xpose.msra.mxu0 0.0
      %759 = vmatpush.xpose.msra.mxu0 0.0
      %760 = vmatpush.xpose.msra.mxu0 0.0
      %761 = vmatpush.xpose.msra.mxu0 0.0
      %762 = vmatpush.xpose.msra.mxu0 0.0
      %763 = vmatpush.xpose.msra.mxu0 0.0
      %764 = vmatpush.xpose.msra.mxu0 0.0
      %765 = vmatpush.xpose.msra.mxu0 0.0
      %766 = vmatpush.xpose.msra.mxu0 %v753
      %767 = vmatpush.xpose.msra.mxu0 %v751
      %768 = vmatpush.xpose.msra.mxu0 %v749
      %769 = vmatpush.xpose.msra.mxu0 %v747
      %770 = vmatpush.xpose.msra.mxu0 %v745
      %771 = vmatmul.f32.gmra.mxu0 %v735
      %v772 = vpop.f32.mrf.mxu0
      %v773 = vadd.f32 0.0, %v772
      %774 = vmatmul.f32.gmra.mxu0 %v737
      %v775 = vpop.f32.mrf.mxu0
      %v776 = vadd.f32 0.0, %v775
      %777 = vmatmul.f32.gmra.mxu0 %v739
      %v778 = vpop.f32.mrf.mxu0
      %v779 = vadd.f32 0.0, %v778
      %780 = vmatmul.f32.gmra.mxu0 %v741
      %v781 = vpop.f32.mrf.mxu0
      %v782 = vadd.f32 0.0, %v781
      %783 = vmatmul.f32.gmra.mxu0 %v743
      %v784 = vpop.f32.mrf.mxu0
      %v785 = vadd.f32 0.0, %v784
      %786 = vdwg.mxu0
      %v787 = vmul.f32 %v773, 0.25
      %v788 = vmul.f32 %v776, 0.25
      %v789 = vmul.f32 %v779, 0.25
      %v790 = vmul.f32 %v782, 0.25
      %v791 = vmul.f32 %v785, 0.25
      %v792 = vadd.f32 %v787, %v435
      %v793 = vadd.f32 %v788, %v435
      %v794 = vadd.f32 %v789, %v435
      %v795 = vadd.f32 %v790, %v435
      %v796 = vadd.f32 %v791, %v435
      %v797 = vsel %vm597, %v792, -inf
      %798 = vmax.xlane.f32.xlu0 %v797
      %v799 = vpop.xlane.xlu0 %798
      %v800 = vsel %vm597, %v793, -inf
      %801 = vmax.xlane.f32.xlu0 %v800
      %v802 = vpop.xlane.xlu0 %801
      %v803 = vsel %vm597, %v794, -inf
      %804 = vmax.xlane.f32.xlu0 %v803
      %v805 = vpop.xlane.xlu0 %804
      %v806 = vsel %vm597, %v795, -inf
      %807 = vmax.xlane.f32.xlu0 %v806
      %v808 = vpop.xlane.xlu0 %807
      %v809 = vsel %vm597, %v796, -inf
      %810 = vmax.xlane.f32.xlu0 %v809
      %v811 = vpop.xlane.xlu0 %810
      %v812 = vsub.f32 %v792, %v799
      %v813 = vsub.f32 %v793, %v802
      %v814 = vsub.f32 %v794, %v805
      %v815 = vsub.f32 %v795, %v808
      %v816 = vsub.f32 %v796, %v811
      %v817 = vmul.f32 %v812, 1.442695
      %v818 = vpow.pop %v817
      %v819 = vmul.f32 %v813, 1.442695
      %v820 = vpow.pop %v819
      %v821 = vmul.f32 %v814, 1.442695
      %v822 = vpow.pop %v821
      %v823 = vmul.f32 %v815, 1.442695
      %v824 = vpow.pop %v823
      %v825 = vmul.f32 %v816, 1.442695
      %v826 = vpow.pop %v825
      %v827 = vsel %vm597, %v818, 0.0
      %828 = vadd.xlane.f32.xlu0 %v827
      %v829 = vpop.xlane.xlu0 %828
      %v830 = vsel %vm597, %v820, 0.0
      %831 = vadd.xlane.f32.xlu0 %v830
      %v832 = vpop.xlane.xlu0 %831
      %v833 = vsel %vm597, %v822, 0.0
      %834 = vadd.xlane.f32.xlu0 %v833
      %v835 = vpop.xlane.xlu0 %834
      %v836 = vsel %vm597, %v824, 0.0
      %837 = vadd.xlane.f32.xlu0 %v836
      %v838 = vpop.xlane.xlu0 %837
      %v839 = vsel %vm597, %v826, 0.0
      %840 = vadd.xlane.f32.xlu0 %v839
      %v841 = vpop.xlane.xlu0 %840
      %v842 = vrcp.pop %v829
      %v843 = vrcp.pop %v832
      %v844 = vrcp.pop %v835
      %v845 = vrcp.pop %v838
      %v846 = vrcp.pop %v841
      %v847 = vmul.f32 %v818, %v842
      %v848 = vmul.f32 %v820, %v843
      %v849 = vmul.f32 %v822, %v844
      %v850 = vmul.f32 %v824, %v845
      %v851 = vmul.f32 %v826, %v846
      %852 = vrot.lane.b32.xlu0 %v505, 48
      %v853 = vpop.permute.xlu0 %852
      %854 = vrot.lane.b32.xlu0 %v508, 48
      %v855 = vpop.permute.xlu0 %854
      %856 = vrot.lane.b32.xlu0 %v511, 48
      %v857 = vpop.permute.xlu0 %856
      %858 = vrot.lane.b32.xlu0 %v514, 48
      %v859 = vpop.permute.xlu0 %858
      %860 = vrot.lane.b32.xlu0 %v517, 48
      %v861 = vpop.permute.xlu0 %860
      %v868 = vsel %vm597, %v847, 0
      %v871 = vsel %vm597, %v848, 0
      %v874 = vsel %vm597, %v849, 0
      %v877 = vsel %vm597, %v850, 0
      %v880 = vsel %vm597, %v851, 0
      %882 = vmatpush.msra.mxu0 0.0
      %883 = vmatpush.msra.mxu0 0.0
      %884 = vmatpush.msra.mxu0 0.0
      %885 = vmatpush.msra.mxu0 0.0
      %886 = vmatpush.msra.mxu0 0.0
      %887 = vmatpush.msra.mxu0 0.0
      %888 = vmatpush.msra.mxu0 0.0
      %889 = vmatpush.msra.mxu0 0.0
      %890 = vmatpush.msra.mxu0 0.0
      %891 = vmatpush.msra.mxu0 0.0
      %892 = vmatpush.msra.mxu0 0.0
      %893 = vmatpush.msra.mxu0 %v861
      %894 = vmatpush.msra.mxu0 %v859
      %895 = vmatpush.msra.mxu0 %v857
      %896 = vmatpush.msra.mxu0 %v855
      %897 = vmatpush.msra.mxu0 %v853
      %898 = vmatmul.f32.gmra.mxu0 %v868
      %v899 = vpop.f32.mrf.mxu0
      %v900 = vadd.f32 0.0, %v899
      %901 = vmatmul.f32.gmra.mxu0 %v871
      %v902 = vpop.f32.mrf.mxu0
      %v903 = vadd.f32 0.0, %v902
      %904 = vmatmul.f32.gmra.mxu0 %v874
      %v905 = vpop.f32.mrf.mxu0
      %v906 = vadd.f32 0.0, %v905
      %907 = vmatmul.f32.gmra.mxu0 %v877
      %v908 = vpop.f32.mrf.mxu0
      %v909 = vadd.f32 0.0, %v908
      %910 = vmatmul.f32.gmra.mxu0 %v880
      %v911 = vpop.f32.mrf.mxu0
      %v912 = vadd.f32 0.0, %v911
      %913 = vdwg.mxu0
      %919 = vrot.lane.b32.xlu0 %v900, 16
      %v920 = vpop.permute.xlu0 %919
      %921 = vrot.lane.b32.xlu0 %v903, 16
      %v922 = vpop.permute.xlu0 %921
      %923 = vrot.lane.b32.xlu0 %v906, 16
      %v924 = vpop.permute.xlu0 %923
      %925 = vrot.lane.b32.xlu0 %v909, 16
      %v926 = vpop.permute.xlu0 %925
      %927 = vrot.lane.b32.xlu0 %v912, 16
      %v928 = vpop.permute.xlu0 %927
      %v934 = vsel %vm534, %v701, %v920
      %v935 = vsel %vm534, %v704, %v922
      %v936 = vsel %vm534, %v707, %v924
      %v937 = vsel %vm534, %v710, %v926
      %v938 = vsel %vm534, %v713, %v928
      %v939 = vperm.slane %v441, 1
      %v941 = vsel %vm471, %v934, 0
      %v944 = vsel %vm471, %v935, 0
      %v947 = vsel %vm471, %v936, 0
      %v950 = vsel %vm471, %v937, 0
      %v953 = vsel %vm471, %v938, 0
      %955 = vmatpush.msra.mxu0 0.0
      %956 = vmatpush.msra.mxu0 0.0
      %957 = vmatpush.msra.mxu0 0.0
      %958 = vmatpush.msra.mxu0 0.0
      %959 = vmatpush.msra.mxu0 0.0
      %960 = vmatpush.msra.mxu0 0.0
      %961 = vmatpush.msra.mxu0 0.0
      %962 = vmatpush.msra.mxu0 0.0
      %963 = vmatpush.msra.mxu0 0.0
      %964 = vmatpush.msra.mxu0 0.0
      %965 = vmatpush.msra.mxu0 0.0
      %966 = vmatpush.msra.mxu0 0.0
      %967 = vmatpush.msra.mxu0 %v449
      %968 = vmatpush.msra.mxu0 %v448
      %969 = vmatpush.msra.mxu0 %v447
      %970 = vmatpush.msra.mxu0 %v446
      %971 = vmatmul.f32.gmra.mxu0 %v941
      %v972 = vpop.f32.mrf.mxu0
      %v973 = vadd.f32 %v939, %v972
      %974 = vmatmul.f32.gmra.mxu0 %v944
      %v975 = vpop.f32.mrf.mxu0
      %v976 = vadd.f32 %v939, %v975
      %977 = vmatmul.f32.gmra.mxu0 %v947
      %v978 = vpop.f32.mrf.mxu0
      %v979 = vadd.f32 %v939, %v978
      %980 = vmatmul.f32.gmra.mxu0 %v950
      %v981 = vpop.f32.mrf.mxu0
      %v982 = vadd.f32 %v939, %v981
      %983 = vmatmul.f32.gmra.mxu0 %v953
      %v984 = vpop.f32.mrf.mxu0
      %v985 = vadd.f32 %v939, %v984
      %986 = vdwg.mxu0
      %v987 = vadd.f32 %v973, %v436
      %v988 = vadd.f32 %v976, %v437
      %v989 = vadd.f32 %v979, %v438
      %v990 = vadd.f32 %v982, %v439
      %v991 = vadd.f32 %v985, %v440
      %v992 = vsel %vm471, %v987, 0.0
      %993 = vadd.xlane.f32.xlu0 %v992
      %v994 = vpop.xlane.xlu0 %993
      %v995 = vsel %vm471, %v988, 0.0
      %996 = vadd.xlane.f32.xlu0 %v995
      %v997 = vpop.xlane.xlu0 %996
      %v998 = vsel %vm471, %v989, 0.0
      %999 = vadd.xlane.f32.xlu0 %v998
      %v1000 = vpop.xlane.xlu0 %999
      %v1001 = vsel %vm471, %v990, 0.0
      %1002 = vadd.xlane.f32.xlu0 %v1001
      %v1003 = vpop.xlane.xlu0 %1002
      %v1004 = vsel %vm471, %v991, 0.0
      %1005 = vadd.xlane.f32.xlu0 %v1004
      %v1006 = vpop.xlane.xlu0 %1005
      %v1007 = vrcp.pop 32.0
      %v1008 = vmul.f32 32.0, %v1007
      %v1009 = vsub.f32 1.0, %v1008
      %v1010 = vmul.f32 %v1007, %v1009
      %v1011 = vadd.f32 %v1007, %v1010
      %vm1012 = vweird.f32 %v1007
      %v1013 = vsel %vm1012, %v1007, %v1011
      %v1014 = vmul.f32 %v994, %v1013
      %v1015 = vmul.f32 %v997, %v1013
      %v1016 = vmul.f32 %v1000, %v1013
      %v1017 = vmul.f32 %v1003, %v1013
      %v1018 = vmul.f32 %v1006, %v1013
      %v1019 = vsub.f32 %v987, %v1014
      %v1020 = vsub.f32 %v988, %v1015
      %v1021 = vsub.f32 %v989, %v1016
      %v1022 = vsub.f32 %v990, %v1017
      %v1023 = vsub.f32 %v991, %v1018
      %v1024 = vmul.f32 %v1019, %v1019
      %v1025 = vmul.f32 %v1020, %v1020
      %v1026 = vmul.f32 %v1021, %v1021
      %v1027 = vmul.f32 %v1022, %v1022
      %v1028 = vmul.f32 %v1023, %v1023
      %v1029 = vsel %vm471, %v1024, 0.0
      %1030 = vadd.xlane.f32.xlu0 %v1029
      %v1031 = vpop.xlane.xlu0 %1030
      %v1032 = vsel %vm471, %v1025, 0.0
      %1033 = vadd.xlane.f32.xlu0 %v1032
      %v1034 = vpop.xlane.xlu0 %1033
      %v1035 = vsel %vm471, %v1026, 0.0
      %1036 = vadd.xlane.f32.xlu0 %v1035
      %v1037 = vpop.xlane.xlu0 %1036
      %v1038 = vsel %vm471, %v1027, 0.0
      %1039 = vadd.xlane.f32.xlu0 %v1038
      %v1040 = vpop.xlane.xlu0 %1039
      %v1041 = vsel %vm471, %v1028, 0.0
      %1042 = vadd.xlane.f32.xlu0 %v1041
      %v1043 = vpop.xlane.xlu0 %1042
      %v1044 = vmul.f32 %v1031, %v1013
      %v1045 = vmul.f32 %v1034, %v1013
      %v1046 = vmul.f32 %v1037, %v1013
      %v1047 = vmul.f32 %v1040, %v1013
      %v1048 = vmul.f32 %v1043, %v1013
      %v1049 = vadd.f32 %v1044, 1e-05
      %v1050 = vadd.f32 %v1045, 1e-05
      %v1051 = vadd.f32 %v1046, 1e-05
      %v1052 = vadd.f32 %v1047, 1e-05
      %v1053 = vadd.f32 %v1048, 1e-05
      %v1054 = vrsqrt.pop %v1049
      %v1055 = vmul.f32 %v1054, %v1049
      %v1056 = vmul.f32 %v1055, %v1054
      %v1057 = vmul.f32 0.5, %v1056
      %v1058 = vsub.f32 1.5, %v1057
      %v1059 = vmul.f32 %v1054, %v1058
      %vm1060 = vweird.f32 %v1049
      %vm1061 = vweird.f32 %v1054
      %vm1062 = vmor %vm1060, %vm1061
      %v1063 = vsel %vm1062, %v1054, %v1059
      %v1064 = vrsqrt.pop %v1050
      %v1065 = vmul.f32 %v1064, %v1050
      %v1066 = vmul.f32 %v1065, %v1064
      %v1067 = vmul.f32 0.5, %v1066
      %v1068 = vsub.f32 1.5, %v1067
      %v1069 = vmul.f32 %v1064, %v1068
      %vm1070 = vweird.f32 %v1050
      %vm1071 = vweird.f32 %v1064
      %vm1072 = vmor %vm1070, %vm1071
      %v1073 = vsel %vm1072, %v1064, %v1069
      %v1074 = vrsqrt.pop %v1051
      %v1075 = vmul.f32 %v1074, %v1051
      %v1076 = vmul.f32 %v1075, %v1074
      %v1077 = vmul.f32 0.5, %v1076
      %v1078 = vsub.f32 1.5, %v1077
      %v1079 = vmul.f32 %v1074, %v1078
      %vm1080 = vweird.f32 %v1051
      %vm1081 = vweird.f32 %v1074
      %vm1082 = vmor %vm1080, %vm1081
      %v1083 = vsel %vm1082, %v1074, %v1079
      %v1084 = vrsqrt.pop %v1052
      %v1085 = vmul.f32 %v1084, %v1052
      %v1086 = vmul.f32 %v1085, %v1084
      %v1087 = vmul.f32 0.5, %v1086
      %v1088 = vsub.f32 1.5, %v1087
      %v1089 = vmul.f32 %v1084, %v1088
      %vm1090 = vweird.f32 %v1052
      %vm1091 = vweird.f32 %v1084
      %vm1092 = vmor %vm1090, %vm1091
      %v1093 = vsel %vm1092, %v1084, %v1089
      %v1094 = vrsqrt.pop %v1053
      %v1095 = vmul.f32 %v1094, %v1053
      %v1096 = vmul.f32 %v1095, %v1094
      %v1097 = vmul.f32 0.5, %v1096
      %v1098 = vsub.f32 1.5, %v1097
      %v1099 = vmul.f32 %v1094, %v1098
      %vm1100 = vweird.f32 %v1053
      %vm1101 = vweird.f32 %v1094
      %vm1102 = vmor %vm1100, %vm1101
      %v1103 = vsel %vm1102, %v1094, %v1099
      %v1104 = vmul.f32 %v1019, %v1063
      %v1105 = vmul.f32 %v1020, %v1073
      %v1106 = vmul.f32 %v1021, %v1083
      %v1107 = vmul.f32 %v1022, %v1093
      %v1108 = vmul.f32 %v1023, %v1103
      %v1109 = vperm.slane %v441, 2
      %v1110 = vmul.f32 %v1104, %v1109
      %v1111 = vmul.f32 %v1105, %v1109
      %v1112 = vmul.f32 %v1106, %v1109
      %v1113 = vmul.f32 %v1107, %v1109
      %v1114 = vmul.f32 %v1108, %v1109
      %v1115 = vperm.slane %v441, 3
      %v1116 = vadd.f32 %v1110, %v1115
      %v1117 = vadd.f32 %v1111, %v1115
      %v1118 = vadd.f32 %v1112, %v1115
      %v1119 = vadd.f32 %v1113, %v1115
      %v1120 = vadd.f32 %v1114, %v1115
      %v1121 = vmul.f32 %v1116, %v429
      %v1122 = vmul.f32 %v1117, %v430
      %v1123 = vmul.f32 %v1118, %v431
      %v1124 = vmul.f32 %v1119, %v432
      %v1125 = vmul.f32 %v1120, %v433
      %v1126 = vrot.slane %v1121, 7
      %v1127 = vrot.slane %v1122, 7
      %v1128 = vrot.slane %v1123, 7
      %v1129 = vrot.slane %v1124, 7
      %v1130 = vrot.slane %v1125, 7
      %vm1131 = vcmp.lt.s32.totalorder %v411, 1
      %v1132 = vsel %vm1131, %v1129, %v1130
      %v1133 = vsel %vm1131, %v1128, %v1129
      %v1134 = vsel %vm1131, %v1127, %v1128
      %v1135 = vsel %vm1131, %v1126, %v1127
      %v1136 = vsel %vm1131, %v1130, %v1126
      %vm1137 = vcmp.ge.s32.totalorder %v411, 1
      %vm1138 = vcmp.ge.s32.totalorder %v412, 1
      %vm1139 = vcmp.ge.s32.totalorder %v413, 1
      %vm1140 = vcmp.ge.s32.totalorder %v414, 1
      %vm1141 = vcmp.ge.s32.totalorder %v415, 1
      %v1142 = vsel %vm1137, 1, 0
      %v1143 = vsel %vm1138, 1, 0
      %v1144 = vsel %vm1139, 1, 0
      %v1145 = vsel %vm1140, 1, 0
      %v1146 = vsel %vm1141, 1, 0
      %vm1147 = vcmp.eq.s32.totalorder %v1142, 1
      %vm1148 = vcmp.eq.s32.totalorder %v1143, 1
      %vm1149 = vcmp.eq.s32.totalorder %v1144, 1
      %vm1150 = vcmp.eq.s32.totalorder %v1145, 1
      %vm1151 = vcmp.eq.s32.totalorder %v1146, 1
      %v1152 = vsel %vm1147, %v1136, 0.0
      %v1153 = vsel %vm1148, %v1135, 0.0
      %v1154 = vsel %vm1149, %v1134, 0.0
      %v1155 = vsel %vm1150, %v1133, 0.0
      %v1156 = vsel %vm1151, %v1132, 0.0
      %v1157 = vrot.slane %v1121, 1
      %v1158 = vrot.slane %v1122, 1
      %v1159 = vrot.slane %v1123, 1
      %v1160 = vrot.slane %v1124, 1
      %v1161 = vrot.slane %v1125, 1
      %vm1162 = vcmp.lt.s32.totalorder %v411, 7
      %v1163 = vsel %vm1162, %v1160, %v1161
      %v1164 = vsel %vm1162, %v1159, %v1160
      %v1165 = vsel %vm1162, %v1158, %v1159
      %v1166 = vsel %vm1162, %v1157, %v1158
      %v1167 = vsel %vm1162, %v1161, %v1157
      %vm1168 = vcmp.lt.s32.totalorder %v411, 39
      %vm1169 = vcmp.lt.s32.totalorder %v412, 39
      %vm1170 = vcmp.lt.s32.totalorder %v413, 39
      %vm1171 = vcmp.lt.s32.totalorder %v414, 39
      %vm1172 = vcmp.lt.s32.totalorder %v415, 39
      %v1173 = vsel %vm1168, 1, 0
      %v1174 = vsel %vm1169, 1, 0
      %v1175 = vsel %vm1170, 1, 0
      %v1176 = vsel %vm1171, 1, 0
      %v1177 = vsel %vm1172, 1, 0
      %vm1178 = vcmp.eq.s32.totalorder %v1173, 1
      %vm1179 = vcmp.eq.s32.totalorder %v1174, 1
      %vm1180 = vcmp.eq.s32.totalorder %v1175, 1
      %vm1181 = vcmp.eq.s32.totalorder %v1176, 1
      %vm1182 = vcmp.eq.s32.totalorder %v1177, 1
      %v1183 = vsel %vm1178, %v1166, 0.0
      %v1184 = vsel %vm1179, %v1165, 0.0
      %v1185 = vsel %vm1180, %v1164, 0.0
      %v1186 = vsel %vm1181, %v1163, 0.0
      %v1187 = vsel %vm1182, %v1167, 0.0
      %1193 = vrot.lane.b32.xlu0 %v1121, 32
      %v1194 = vpop.permute.xlu0 %1193
      %1195 = vrot.lane.b32.xlu0 %v1122, 32
      %v1196 = vpop.permute.xlu0 %1195
      %1197 = vrot.lane.b32.xlu0 %v1123, 32
      %v1198 = vpop.permute.xlu0 %1197
      %1199 = vrot.lane.b32.xlu0 %v1124, 32
      %v1200 = vpop.permute.xlu0 %1199
      %1201 = vrot.lane.b32.xlu0 %v1125, 32
      %v1202 = vpop.permute.xlu0 %1201
      %1213 = vrot.lane.b32.xlu0 %v1183, 64
      %v1214 = vpop.permute.xlu0 %1213
      %1215 = vrot.lane.b32.xlu0 %v1184, 64
      %v1216 = vpop.permute.xlu0 %1215
      %1217 = vrot.lane.b32.xlu0 %v1185, 64
      %v1218 = vpop.permute.xlu0 %1217
      %1219 = vrot.lane.b32.xlu0 %v1186, 64
      %v1220 = vpop.permute.xlu0 %1219
      %1221 = vrot.lane.b32.xlu0 %v1187, 64
      %v1222 = vpop.permute.xlu0 %1221
      %v1228 = vsel %vm471, %v1152, %v1194
      %v1229 = vsel %vm471, %v1153, %v1196
      %v1230 = vsel %vm471, %v1154, %v1198
      %v1231 = vsel %vm471, %v1155, %v1200
      %v1232 = vsel %vm471, %v1156, %v1202
      %vm1233 = vcmask 523264
      %v1234 = vsel %vm1233, %v1228, %v1214
      %v1235 = vsel %vm1233, %v1229, %v1216
      %v1236 = vsel %vm1233, %v1230, %v1218
      %v1237 = vsel %vm1233, %v1231, %v1220
      %v1238 = vsel %vm1233, %v1232, %v1222
      %v1239 = vperm.slane %v441, 4
      %vm1240 = vcmask 785408
      %v1242 = vsel %vm1240, %v1234, 0
      %v1245 = vsel %vm1240, %v1235, 0
      %v1248 = vsel %vm1240, %v1236, 0
      %v1251 = vsel %vm1240, %v1237, 0
      %v1254 = vsel %vm1240, %v1238, 0
      %1256 = vmatpush.msra.mxu0 0.0
      %1257 = vmatpush.msra.mxu0 0.0
      %1258 = vmatpush.msra.mxu0 0.0
      %1259 = vmatpush.msra.mxu0 0.0
      %1260 = vmatpush.msra.mxu0 %v461
      %1261 = vmatpush.msra.mxu0 %v460
      %1262 = vmatpush.msra.mxu0 %v459
      %1263 = vmatpush.msra.mxu0 %v458
      %1264 = vmatpush.msra.mxu0 %v457
      %1265 = vmatpush.msra.mxu0 %v456
      %1266 = vmatpush.msra.mxu0 %v455
      %1267 = vmatpush.msra.mxu0 %v454
      %1268 = vmatpush.msra.mxu0 %v453
      %1269 = vmatpush.msra.mxu0 %v452
      %1270 = vmatpush.msra.mxu0 %v451
      %1271 = vmatpush.msra.mxu0 %v450
      %1272 = vmatmul.f32.gmra.mxu0 %v1242
      %v1273 = vpop.f32.mrf.mxu0
      %v1274 = vadd.f32 %v1239, %v1273
      %1275 = vmatmul.f32.gmra.mxu0 %v1245
      %v1276 = vpop.f32.mrf.mxu0
      %v1277 = vadd.f32 %v1239, %v1276
      %1278 = vmatmul.f32.gmra.mxu0 %v1248
      %v1279 = vpop.f32.mrf.mxu0
      %v1280 = vadd.f32 %v1239, %v1279
      %1281 = vmatmul.f32.gmra.mxu0 %v1251
      %v1282 = vpop.f32.mrf.mxu0
      %v1283 = vadd.f32 %v1239, %v1282
      %1284 = vmatmul.f32.gmra.mxu0 %v1254
      %v1285 = vpop.f32.mrf.mxu0
      %v1286 = vadd.f32 %v1239, %v1285
      %1287 = vdwg.mxu0
      %v1288 = vmax.f32 %v1274, 0.0
      %v1289 = vmax.f32 %v1277, 0.0
      %v1290 = vmax.f32 %v1280, 0.0
      %v1291 = vmax.f32 %v1283, 0.0
      %v1292 = vmax.f32 %v1286, 0.0
      %v1293 = vperm.slane %v441, 5
      %v1295 = vsel %vm1233, %v1288, 0
      %v1298 = vsel %vm1233, %v1289, 0
      %v1301 = vsel %vm1233, %v1290, 0
      %v1304 = vsel %vm1233, %v1291, 0
      %v1307 = vsel %vm1233, %v1292, 0
      %1309 = vmatpush.msra.mxu0 0.0
      %1310 = vmatpush.msra.mxu0 0.0
      %1311 = vmatpush.msra.mxu0 0.0
      %1312 = vmatpush.msra.mxu0 0.0
      %1313 = vmatpush.msra.mxu0 0.0
      %1314 = vmatpush.msra.mxu0 0.0
      %1315 = vmatpush.msra.mxu0 0.0
      %1316 = vmatpush.msra.mxu0 0.0
      %1317 = vmatpush.msra.mxu0 %v469
      %1318 = vmatpush.msra.mxu0 %v468
      %1319 = vmatpush.msra.mxu0 %v467
      %1320 = vmatpush.msra.mxu0 %v466
      %1321 = vmatpush.msra.mxu0 %v465
      %1322 = vmatpush.msra.mxu0 %v464
      %1323 = vmatpush.msra.mxu0 %v463
      %1324 = vmatpush.msra.mxu0 %v462
      %1325 = vmatmul.f32.gmra.mxu0 %v1295
      %v1326 = vpop.f32.mrf.mxu0
      %v1327 = vadd.f32 %v1293, %v1326
      %1328 = vmatmul.f32.gmra.mxu0 %v1298
      %v1329 = vpop.f32.mrf.mxu0
      %v1330 = vadd.f32 %v1293, %v1329
      %1331 = vmatmul.f32.gmra.mxu0 %v1301
      %v1332 = vpop.f32.mrf.mxu0
      %v1333 = vadd.f32 %v1293, %v1332
      %1334 = vmatmul.f32.gmra.mxu0 %v1304
      %v1335 = vpop.f32.mrf.mxu0
      %v1336 = vadd.f32 %v1293, %v1335
      %1337 = vmatmul.f32.gmra.mxu0 %v1307
      %v1338 = vpop.f32.mrf.mxu0
      %v1339 = vadd.f32 %v1293, %v1338
      %1340 = vdwg.mxu0
      %v1341 = vadd.f32 %v1327, %v1121
      %v1342 = vadd.f32 %v1330, %v1122
      %v1343 = vadd.f32 %v1333, %v1123
      %v1344 = vadd.f32 %v1336, %v1124
      %v1345 = vadd.f32 %v1339, %v1125
      %v1346 = vsel %vm471, %v1341, 0.0
      %1347 = vadd.xlane.f32.xlu0 %v1346
      %v1348 = vpop.xlane.xlu0 %1347
      %v1349 = vsel %vm471, %v1342, 0.0
      %1350 = vadd.xlane.f32.xlu0 %v1349
      %v1351 = vpop.xlane.xlu0 %1350
      %v1352 = vsel %vm471, %v1343, 0.0
      %1353 = vadd.xlane.f32.xlu0 %v1352
      %v1354 = vpop.xlane.xlu0 %1353
      %v1355 = vsel %vm471, %v1344, 0.0
      %1356 = vadd.xlane.f32.xlu0 %v1355
      %v1357 = vpop.xlane.xlu0 %1356
      %v1358 = vsel %vm471, %v1345, 0.0
      %1359 = vadd.xlane.f32.xlu0 %v1358
      %v1360 = vpop.xlane.xlu0 %1359
      %v1361 = vmul.f32 %v1348, %v1013
      %v1362 = vmul.f32 %v1351, %v1013
      %v1363 = vmul.f32 %v1354, %v1013
      %v1364 = vmul.f32 %v1357, %v1013
      %v1365 = vmul.f32 %v1360, %v1013
      %v1366 = vsub.f32 %v1341, %v1361
      %v1367 = vsub.f32 %v1342, %v1362
      %v1368 = vsub.f32 %v1343, %v1363
      %v1369 = vsub.f32 %v1344, %v1364
      %v1370 = vsub.f32 %v1345, %v1365
      %v1371 = vmul.f32 %v1366, %v1366
      %v1372 = vmul.f32 %v1367, %v1367
      %v1373 = vmul.f32 %v1368, %v1368
      %v1374 = vmul.f32 %v1369, %v1369
      %v1375 = vmul.f32 %v1370, %v1370
      %v1376 = vsel %vm471, %v1371, 0.0
      %1377 = vadd.xlane.f32.xlu0 %v1376
      %v1378 = vpop.xlane.xlu0 %1377
      %v1379 = vsel %vm471, %v1372, 0.0
      %1380 = vadd.xlane.f32.xlu0 %v1379
      %v1381 = vpop.xlane.xlu0 %1380
      %v1382 = vsel %vm471, %v1373, 0.0
      %1383 = vadd.xlane.f32.xlu0 %v1382
      %v1384 = vpop.xlane.xlu0 %1383
      %v1385 = vsel %vm471, %v1374, 0.0
      %1386 = vadd.xlane.f32.xlu0 %v1385
      %v1387 = vpop.xlane.xlu0 %1386
      %v1388 = vsel %vm471, %v1375, 0.0
      %1389 = vadd.xlane.f32.xlu0 %v1388
      %v1390 = vpop.xlane.xlu0 %1389
      %v1391 = vmul.f32 %v1378, %v1013
      %v1392 = vmul.f32 %v1381, %v1013
      %v1393 = vmul.f32 %v1384, %v1013
      %v1394 = vmul.f32 %v1387, %v1013
      %v1395 = vmul.f32 %v1390, %v1013
      %v1396 = vadd.f32 %v1391, 1e-05
      %v1397 = vadd.f32 %v1392, 1e-05
      %v1398 = vadd.f32 %v1393, 1e-05
      %v1399 = vadd.f32 %v1394, 1e-05
      %v1400 = vadd.f32 %v1395, 1e-05
      %v1401 = vrsqrt.pop %v1396
      %v1402 = vmul.f32 %v1401, %v1396
      %v1403 = vmul.f32 %v1402, %v1401
      %v1404 = vmul.f32 0.5, %v1403
      %v1405 = vsub.f32 1.5, %v1404
      %v1406 = vmul.f32 %v1401, %v1405
      %vm1407 = vweird.f32 %v1396
      %vm1408 = vweird.f32 %v1401
      %vm1409 = vmor %vm1407, %vm1408
      %v1410 = vsel %vm1409, %v1401, %v1406
      %v1411 = vrsqrt.pop %v1397
      %v1412 = vmul.f32 %v1411, %v1397
      %v1413 = vmul.f32 %v1412, %v1411
      %v1414 = vmul.f32 0.5, %v1413
      %v1415 = vsub.f32 1.5, %v1414
      %v1416 = vmul.f32 %v1411, %v1415
      %vm1417 = vweird.f32 %v1397
      %vm1418 = vweird.f32 %v1411
      %vm1419 = vmor %vm1417, %vm1418
      %v1420 = vsel %vm1419, %v1411, %v1416
      %v1421 = vrsqrt.pop %v1398
      %v1422 = vmul.f32 %v1421, %v1398
      %v1423 = vmul.f32 %v1422, %v1421
      %v1424 = vmul.f32 0.5, %v1423
      %v1425 = vsub.f32 1.5, %v1424
      %v1426 = vmul.f32 %v1421, %v1425
      %vm1427 = vweird.f32 %v1398
      %vm1428 = vweird.f32 %v1421
      %vm1429 = vmor %vm1427, %vm1428
      %v1430 = vsel %vm1429, %v1421, %v1426
      %v1431 = vrsqrt.pop %v1399
      %v1432 = vmul.f32 %v1431, %v1399
      %v1433 = vmul.f32 %v1432, %v1431
      %v1434 = vmul.f32 0.5, %v1433
      %v1435 = vsub.f32 1.5, %v1434
      %v1436 = vmul.f32 %v1431, %v1435
      %vm1437 = vweird.f32 %v1399
      %vm1438 = vweird.f32 %v1431
      %vm1439 = vmor %vm1437, %vm1438
      %v1440 = vsel %vm1439, %v1431, %v1436
      %v1441 = vrsqrt.pop %v1400
      %v1442 = vmul.f32 %v1441, %v1400
      %v1443 = vmul.f32 %v1442, %v1441
      %v1444 = vmul.f32 0.5, %v1443
      %v1445 = vsub.f32 1.5, %v1444
      %v1446 = vmul.f32 %v1441, %v1445
      %vm1447 = vweird.f32 %v1400
      %vm1448 = vweird.f32 %v1441
      %vm1449 = vmor %vm1447, %vm1448
      %v1450 = vsel %vm1449, %v1441, %v1446
      %v1451 = vmul.f32 %v1366, %v1410
      %v1452 = vmul.f32 %v1367, %v1420
      %v1453 = vmul.f32 %v1368, %v1430
      %v1454 = vmul.f32 %v1369, %v1440
      %v1455 = vmul.f32 %v1370, %v1450
      %v1456 = vperm.slane %v441, 6
      %v1457 = vmul.f32 %v1451, %v1456
      %v1458 = vmul.f32 %v1452, %v1456
      %v1459 = vmul.f32 %v1453, %v1456
      %v1460 = vmul.f32 %v1454, %v1456
      %v1461 = vmul.f32 %v1455, %v1456
      %v1462 = vperm.slane %v441, 7
      %v1463 = vadd.f32 %v1457, %v1462
      %v1464 = vadd.f32 %v1458, %v1462
      %v1465 = vadd.f32 %v1459, %v1462
      %v1466 = vadd.f32 %v1460, %v1462
      %v1467 = vadd.f32 %v1461, %v1462
      %v1468 = vmul.f32 %v1463, %v429
      %v1469 = vmul.f32 %v1464, %v430
      %v1470 = vmul.f32 %v1465, %v431
      %v1471 = vmul.f32 %v1466, %v432
      %v1472 = vmul.f32 %v1467, %v433
      %s1473 = scalar_lea.vmem %s6, 8
      %v1474 = vld [vmem:[%s1473] sm:$0xff]
      %s1475 = scalar_lea.vmem %s2, 32
      %v1476 = vld [vmem:[%s1475] sm:$0xff]
      %v1477 = vld [vmem:[%s1475 + $0x8] sm:$0xff]
      %v1478 = vld [vmem:[%s1475 + $0x10] sm:$0xff]
      %v1479 = vld [vmem:[%s1475 + $0x18] sm:$0xff]
      %s1480 = scalar_lea.vmem %s3, 32
      %v1481 = vld [vmem:[%s1480] sm:$0xff]
      %v1482 = vld [vmem:[%s1480 + $0x8] sm:$0xff]
      %v1483 = vld [vmem:[%s1480 + $0x10] sm:$0xff]
      %v1484 = vld [vmem:[%s1480 + $0x18] sm:$0xff]
      %s1485 = scalar_lea.vmem %s4, 96
      %v1486 = vld [vmem:[%s1485] sm:$0xff]
      %v1487 = vld [vmem:[%s1485 + $0x8] sm:$0xff]
      %v1488 = vld [vmem:[%s1485 + $0x10] sm:$0xff]
      %v1489 = vld [vmem:[%s1485 + $0x18] sm:$0xff]
      %v1490 = vld [vmem:[%s1485 + $0x20] sm:$0xff]
      %v1491 = vld [vmem:[%s1485 + $0x28] sm:$0xff]
      %v1492 = vld [vmem:[%s1485 + $0x30] sm:$0xff]
      %v1493 = vld [vmem:[%s1485 + $0x38] sm:$0xff]
      %v1494 = vld [vmem:[%s1485 + $0x40] sm:$0xff]
      %v1495 = vld [vmem:[%s1485 + $0x48] sm:$0xff]
      %v1496 = vld [vmem:[%s1485 + $0x50] sm:$0xff]
      %v1497 = vld [vmem:[%s1485 + $0x58] sm:$0xff]
      %s1498 = scalar_lea.vmem %s5, 64
      %v1499 = vld [vmem:[%s1498] sm:$0xff]
      %v1500 = vld [vmem:[%s1498 + $0x8] sm:$0xff]
      %v1501 = vld [vmem:[%s1498 + $0x10] sm:$0xff]
      %v1502 = vld [vmem:[%s1498 + $0x18] sm:$0xff]
      %v1503 = vld [vmem:[%s1498 + $0x20] sm:$0xff]
      %v1504 = vld [vmem:[%s1498 + $0x28] sm:$0xff]
      %v1505 = vld [vmem:[%s1498 + $0x30] sm:$0xff]
      %v1506 = vld [vmem:[%s1498 + $0x38] sm:$0xff]
      %v1507 = vperm.slane %v1474, 0
      %v1509 = vsel %vm471, %v1468, 0
      %v1512 = vsel %vm471, %v1469, 0
      %v1515 = vsel %vm471, %v1470, 0
      %v1518 = vsel %vm471, %v1471, 0
      %v1521 = vsel %vm471, %v1472, 0
      %1523 = vmatpush.msra.mxu0 0.0
      %1524 = vmatpush.msra.mxu0 0.0
      %1525 = vmatpush.msra.mxu0 0.0
      %1526 = vmatpush.msra.mxu0 0.0
      %1527 = vmatpush.msra.mxu0 0.0
      %1528 = vmatpush.msra.mxu0 0.0
      %1529 = vmatpush.msra.mxu0 0.0
      %1530 = vmatpush.msra.mxu0 0.0
      %1531 = vmatpush.msra.mxu0 0.0
      %1532 = vmatpush.msra.mxu0 0.0
      %1533 = vmatpush.msra.mxu0 0.0
      %1534 = vmatpush.msra.mxu0 0.0
      %1535 = vmatpush.msra.mxu0 %v1479
      %1536 = vmatpush.msra.mxu0 %v1478
      %1537 = vmatpush.msra.mxu0 %v1477
      %1538 = vmatpush.msra.mxu0 %v1476
      %1539 = vmatmul.f32.gmra.mxu0 %v1509
      %v1540 = vpop.f32.mrf.mxu0
      %v1541 = vadd.f32 %v1507, %v1540
      %1542 = vmatmul.f32.gmra.mxu0 %v1512
      %v1543 = vpop.f32.mrf.mxu0
      %v1544 = vadd.f32 %v1507, %v1543
      %1545 = vmatmul.f32.gmra.mxu0 %v1515
      %v1546 = vpop.f32.mrf.mxu0
      %v1547 = vadd.f32 %v1507, %v1546
      %1548 = vmatmul.f32.gmra.mxu0 %v1518
      %v1549 = vpop.f32.mrf.mxu0
      %v1550 = vadd.f32 %v1507, %v1549
      %1551 = vmatmul.f32.gmra.mxu0 %v1521
      %v1552 = vpop.f32.mrf.mxu0
      %v1553 = vadd.f32 %v1507, %v1552
      %1554 = vdwg.mxu0
      %1560 = vrot.lane.b32.xlu0 %v1541, 96
      %v1561 = vpop.permute.xlu0 %1560
      %1562 = vrot.lane.b32.xlu0 %v1544, 96
      %v1563 = vpop.permute.xlu0 %1562
      %1564 = vrot.lane.b32.xlu0 %v1547, 96
      %v1565 = vpop.permute.xlu0 %1564
      %1566 = vrot.lane.b32.xlu0 %v1550, 96
      %v1567 = vpop.permute.xlu0 %1566
      %1568 = vrot.lane.b32.xlu0 %v1553, 96
      %v1569 = vpop.permute.xlu0 %1568
      %v1570 = vsel %vm534, %v1541, 0
      %v1572 = vsel %vm534, %v1544, 0
      %v1574 = vsel %vm534, %v1547, 0
      %v1576 = vsel %vm534, %v1550, 0
      %v1578 = vsel %vm534, %v1553, 0
      %v1580 = vsel %vm534, %v1561, 0
      %v1582 = vsel %vm534, %v1563, 0
      %v1584 = vsel %vm534, %v1565, 0
      %v1586 = vsel %vm534, %v1567, 0
      %v1588 = vsel %vm534, %v1569, 0
      %1590 = vmatpush.xpose.msra.mxu0 0.0
      %1591 = vmatpush.xpose.msra.mxu0 0.0
      %1592 = vmatpush.xpose.msra.mxu0 0.0
      %1593 = vmatpush.xpose.msra.mxu0 0.0
      %1594 = vmatpush.xpose.msra.mxu0 0.0
      %1595 = vmatpush.xpose.msra.mxu0 0.0
      %1596 = vmatpush.xpose.msra.mxu0 0.0
      %1597 = vmatpush.xpose.msra.mxu0 0.0
      %1598 = vmatpush.xpose.msra.mxu0 0.0
      %1599 = vmatpush.xpose.msra.mxu0 0.0
      %1600 = vmatpush.xpose.msra.mxu0 0.0
      %1601 = vmatpush.xpose.msra.mxu0 %v1588
      %1602 = vmatpush.xpose.msra.mxu0 %v1586
      %1603 = vmatpush.xpose.msra.mxu0 %v1584
      %1604 = vmatpush.xpose.msra.mxu0 %v1582
      %1605 = vmatpush.xpose.msra.mxu0 %v1580
      %1606 = vmatmul.f32.gmra.mxu0 %v1570
      %v1607 = vpop.f32.mrf.mxu0
      %v1608 = vadd.f32 0.0, %v1607
      %1609 = vmatmul.f32.gmra.mxu0 %v1572
      %v1610 = vpop.f32.mrf.mxu0
      %v1611 = vadd.f32 0.0, %v1610
      %1612 = vmatmul.f32.gmra.mxu0 %v1574
      %v1613 = vpop.f32.mrf.mxu0
      %v1614 = vadd.f32 0.0, %v1613
      %1615 = vmatmul.f32.gmra.mxu0 %v1576
      %v1616 = vpop.f32.mrf.mxu0
      %v1617 = vadd.f32 0.0, %v1616
      %1618 = vmatmul.f32.gmra.mxu0 %v1578
      %v1619 = vpop.f32.mrf.mxu0
      %v1620 = vadd.f32 0.0, %v1619
      %1621 = vdwg.mxu0
      %v1622 = vmul.f32 %v1608, 0.25
      %v1623 = vmul.f32 %v1611, 0.25
      %v1624 = vmul.f32 %v1614, 0.25
      %v1625 = vmul.f32 %v1617, 0.25
      %v1626 = vmul.f32 %v1620, 0.25
      %v1627 = vadd.f32 %v1622, %v435
      %v1628 = vadd.f32 %v1623, %v435
      %v1629 = vadd.f32 %v1624, %v435
      %v1630 = vadd.f32 %v1625, %v435
      %v1631 = vadd.f32 %v1626, %v435
      %v1632 = vsel %vm597, %v1627, -inf
      %1633 = vmax.xlane.f32.xlu0 %v1632
      %v1634 = vpop.xlane.xlu0 %1633
      %v1635 = vsel %vm597, %v1628, -inf
      %1636 = vmax.xlane.f32.xlu0 %v1635
      %v1637 = vpop.xlane.xlu0 %1636
      %v1638 = vsel %vm597, %v1629, -inf
      %1639 = vmax.xlane.f32.xlu0 %v1638
      %v1640 = vpop.xlane.xlu0 %1639
      %v1641 = vsel %vm597, %v1630, -inf
      %1642 = vmax.xlane.f32.xlu0 %v1641
      %v1643 = vpop.xlane.xlu0 %1642
      %v1644 = vsel %vm597, %v1631, -inf
      %1645 = vmax.xlane.f32.xlu0 %v1644
      %v1646 = vpop.xlane.xlu0 %1645
      %v1647 = vsub.f32 %v1627, %v1634
      %v1648 = vsub.f32 %v1628, %v1637
      %v1649 = vsub.f32 %v1629, %v1640
      %v1650 = vsub.f32 %v1630, %v1643
      %v1651 = vsub.f32 %v1631, %v1646
      %v1652 = vmul.f32 %v1647, 1.442695
      %v1653 = vpow.pop %v1652
      %v1654 = vmul.f32 %v1648, 1.442695
      %v1655 = vpow.pop %v1654
      %v1656 = vmul.f32 %v1649, 1.442695
      %v1657 = vpow.pop %v1656
      %v1658 = vmul.f32 %v1650, 1.442695
      %v1659 = vpow.pop %v1658
      %v1660 = vmul.f32 %v1651, 1.442695
      %v1661 = vpow.pop %v1660
      %v1662 = vsel %vm597, %v1653, 0.0
      %1663 = vadd.xlane.f32.xlu0 %v1662
      %v1664 = vpop.xlane.xlu0 %1663
      %v1665 = vsel %vm597, %v1655, 0.0
      %1666 = vadd.xlane.f32.xlu0 %v1665
      %v1667 = vpop.xlane.xlu0 %1666
      %v1668 = vsel %vm597, %v1657, 0.0
      %1669 = vadd.xlane.f32.xlu0 %v1668
      %v1670 = vpop.xlane.xlu0 %1669
      %v1671 = vsel %vm597, %v1659, 0.0
      %1672 = vadd.xlane.f32.xlu0 %v1671
      %v1673 = vpop.xlane.xlu0 %1672
      %v1674 = vsel %vm597, %v1661, 0.0
      %1675 = vadd.xlane.f32.xlu0 %v1674
      %v1676 = vpop.xlane.xlu0 %1675
      %v1677 = vrcp.pop %v1664
      %v1678 = vrcp.pop %v1667
      %v1679 = vrcp.pop %v1670
      %v1680 = vrcp.pop %v1673
      %v1681 = vrcp.pop %v1676
      %v1682 = vmul.f32 %v1653, %v1677
      %v1683 = vmul.f32 %v1655, %v1678
      %v1684 = vmul.f32 %v1657, %v1679
      %v1685 = vmul.f32 %v1659, %v1680
      %v1686 = vmul.f32 %v1661, %v1681
      %1687 = vrot.lane.b32.xlu0 %v1541, 64
      %v1688 = vpop.permute.xlu0 %1687
      %1689 = vrot.lane.b32.xlu0 %v1544, 64
      %v1690 = vpop.permute.xlu0 %1689
      %1691 = vrot.lane.b32.xlu0 %v1547, 64
      %v1692 = vpop.permute.xlu0 %1691
      %1693 = vrot.lane.b32.xlu0 %v1550, 64
      %v1694 = vpop.permute.xlu0 %1693
      %1695 = vrot.lane.b32.xlu0 %v1553, 64
      %v1696 = vpop.permute.xlu0 %1695
      %v1703 = vsel %vm597, %v1682, 0
      %v1706 = vsel %vm597, %v1683, 0
      %v1709 = vsel %vm597, %v1684, 0
      %v1712 = vsel %vm597, %v1685, 0
      %v1715 = vsel %vm597, %v1686, 0
      %1717 = vmatpush.msra.mxu0 0.0
      %1718 = vmatpush.msra.mxu0 0.0
      %1719 = vmatpush.msra.mxu0 0.0
      %1720 = vmatpush.msra.mxu0 0.0
      %1721 = vmatpush.msra.mxu0 0.0
      %1722 = vmatpush.msra.mxu0 0.0
      %1723 = vmatpush.msra.mxu0 0.0
      %1724 = vmatpush.msra.mxu0 0.0
      %1725 = vmatpush.msra.mxu0 0.0
      %1726 = vmatpush.msra.mxu0 0.0
      %1727 = vmatpush.msra.mxu0 0.0
      %1728 = vmatpush.msra.mxu0 %v1696
      %1729 = vmatpush.msra.mxu0 %v1694
      %1730 = vmatpush.msra.mxu0 %v1692
      %1731 = vmatpush.msra.mxu0 %v1690
      %1732 = vmatpush.msra.mxu0 %v1688
      %1733 = vmatmul.f32.gmra.mxu0 %v1703
      %v1734 = vpop.f32.mrf.mxu0
      %v1735 = vadd.f32 0.0, %v1734
      %1736 = vmatmul.f32.gmra.mxu0 %v1706
      %v1737 = vpop.f32.mrf.mxu0
      %v1738 = vadd.f32 0.0, %v1737
      %1739 = vmatmul.f32.gmra.mxu0 %v1709
      %v1740 = vpop.f32.mrf.mxu0
      %v1741 = vadd.f32 0.0, %v1740
      %1742 = vmatmul.f32.gmra.mxu0 %v1712
      %v1743 = vpop.f32.mrf.mxu0
      %v1744 = vadd.f32 0.0, %v1743
      %1745 = vmatmul.f32.gmra.mxu0 %v1715
      %v1746 = vpop.f32.mrf.mxu0
      %v1747 = vadd.f32 0.0, %v1746
      %1748 = vdwg.mxu0
      %1749 = vrot.lane.b32.xlu0 %v1541, 112
      %v1750 = vpop.permute.xlu0 %1749
      %1751 = vrot.lane.b32.xlu0 %v1544, 112
      %v1752 = vpop.permute.xlu0 %1751
      %1753 = vrot.lane.b32.xlu0 %v1547, 112
      %v1754 = vpop.permute.xlu0 %1753
      %1755 = vrot.lane.b32.xlu0 %v1550, 112
      %v1756 = vpop.permute.xlu0 %1755
      %1757 = vrot.lane.b32.xlu0 %v1553, 112
      %v1758 = vpop.permute.xlu0 %1757
      %1759 = vrot.lane.b32.xlu0 %v1541, 80
      %v1760 = vpop.permute.xlu0 %1759
      %1761 = vrot.lane.b32.xlu0 %v1544, 80
      %v1762 = vpop.permute.xlu0 %1761
      %1763 = vrot.lane.b32.xlu0 %v1547, 80
      %v1764 = vpop.permute.xlu0 %1763
      %1765 = vrot.lane.b32.xlu0 %v1550, 80
      %v1766 = vpop.permute.xlu0 %1765
      %1767 = vrot.lane.b32.xlu0 %v1553, 80
      %v1768 = vpop.permute.xlu0 %1767
      %v1769 = vsel %vm534, %v1750, 0
      %v1771 = vsel %vm534, %v1752, 0
      %v1773 = vsel %vm534, %v1754, 0
      %v1775 = vsel %vm534, %v1756, 0
      %v1777 = vsel %vm534, %v1758, 0
      %v1779 = vsel %vm534, %v1760, 0
      %v1781 = vsel %vm534, %v1762, 0
      %v1783 = vsel %vm534, %v1764, 0
      %v1785 = vsel %vm534, %v1766, 0
      %v1787 = vsel %vm534, %v1768, 0
      %1789 = vmatpush.xpose.msra.mxu0 0.0
      %1790 = vmatpush.xpose.msra.mxu0 0.0
      %1791 = vmatpush.xpose.msra.mxu0 0.0
      %1792 = vmatpush.xpose.msra.mxu0 0.0
      %1793 = vmatpush.xpose.msra.mxu0 0.0
      %1794 = vmatpush.xpose.msra.mxu0 0.0
      %1795 = vmatpush.xpose.msra.mxu0 0.0
      %1796 = vmatpush.xpose.msra.mxu0 0.0
      %1797 = vmatpush.xpose.msra.mxu0 0.0
      %1798 = vmatpush.xpose.msra.mxu0 0.0
      %1799 = vmatpush.xpose.msra.mxu0 0.0
      %1800 = vmatpush.xpose.msra.mxu0 %v1787
      %1801 = vmatpush.xpose.msra.mxu0 %v1785
      %1802 = vmatpush.xpose.msra.mxu0 %v1783
      %1803 = vmatpush.xpose.msra.mxu0 %v1781
      %1804 = vmatpush.xpose.msra.mxu0 %v1779
      %1805 = vmatmul.f32.gmra.mxu0 %v1769
      %v1806 = vpop.f32.mrf.mxu0
      %v1807 = vadd.f32 0.0, %v1806
      %1808 = vmatmul.f32.gmra.mxu0 %v1771
      %v1809 = vpop.f32.mrf.mxu0
      %v1810 = vadd.f32 0.0, %v1809
      %1811 = vmatmul.f32.gmra.mxu0 %v1773
      %v1812 = vpop.f32.mrf.mxu0
      %v1813 = vadd.f32 0.0, %v1812
      %1814 = vmatmul.f32.gmra.mxu0 %v1775
      %v1815 = vpop.f32.mrf.mxu0
      %v1816 = vadd.f32 0.0, %v1815
      %1817 = vmatmul.f32.gmra.mxu0 %v1777
      %v1818 = vpop.f32.mrf.mxu0
      %v1819 = vadd.f32 0.0, %v1818
      %1820 = vdwg.mxu0
      %v1821 = vmul.f32 %v1807, 0.25
      %v1822 = vmul.f32 %v1810, 0.25
      %v1823 = vmul.f32 %v1813, 0.25
      %v1824 = vmul.f32 %v1816, 0.25
      %v1825 = vmul.f32 %v1819, 0.25
      %v1826 = vadd.f32 %v1821, %v435
      %v1827 = vadd.f32 %v1822, %v435
      %v1828 = vadd.f32 %v1823, %v435
      %v1829 = vadd.f32 %v1824, %v435
      %v1830 = vadd.f32 %v1825, %v435
      %v1831 = vsel %vm597, %v1826, -inf
      %1832 = vmax.xlane.f32.xlu0 %v1831
      %v1833 = vpop.xlane.xlu0 %1832
      %v1834 = vsel %vm597, %v1827, -inf
      %1835 = vmax.xlane.f32.xlu0 %v1834
      %v1836 = vpop.xlane.xlu0 %1835
      %v1837 = vsel %vm597, %v1828, -inf
      %1838 = vmax.xlane.f32.xlu0 %v1837
      %v1839 = vpop.xlane.xlu0 %1838
      %v1840 = vsel %vm597, %v1829, -inf
      %1841 = vmax.xlane.f32.xlu0 %v1840
      %v1842 = vpop.xlane.xlu0 %1841
      %v1843 = vsel %vm597, %v1830, -inf
      %1844 = vmax.xlane.f32.xlu0 %v1843
      %v1845 = vpop.xlane.xlu0 %1844
      %v1846 = vsub.f32 %v1826, %v1833
      %v1847 = vsub.f32 %v1827, %v1836
      %v1848 = vsub.f32 %v1828, %v1839
      %v1849 = vsub.f32 %v1829, %v1842
      %v1850 = vsub.f32 %v1830, %v1845
      %v1851 = vmul.f32 %v1846, 1.442695
      %v1852 = vpow.pop %v1851
      %v1853 = vmul.f32 %v1847, 1.442695
      %v1854 = vpow.pop %v1853
      %v1855 = vmul.f32 %v1848, 1.442695
      %v1856 = vpow.pop %v1855
      %v1857 = vmul.f32 %v1849, 1.442695
      %v1858 = vpow.pop %v1857
      %v1859 = vmul.f32 %v1850, 1.442695
      %v1860 = vpow.pop %v1859
      %v1861 = vsel %vm597, %v1852, 0.0
      %1862 = vadd.xlane.f32.xlu0 %v1861
      %v1863 = vpop.xlane.xlu0 %1862
      %v1864 = vsel %vm597, %v1854, 0.0
      %1865 = vadd.xlane.f32.xlu0 %v1864
      %v1866 = vpop.xlane.xlu0 %1865
      %v1867 = vsel %vm597, %v1856, 0.0
      %1868 = vadd.xlane.f32.xlu0 %v1867
      %v1869 = vpop.xlane.xlu0 %1868
      %v1870 = vsel %vm597, %v1858, 0.0
      %1871 = vadd.xlane.f32.xlu0 %v1870
      %v1872 = vpop.xlane.xlu0 %1871
      %v1873 = vsel %vm597, %v1860, 0.0
      %1874 = vadd.xlane.f32.xlu0 %v1873
      %v1875 = vpop.xlane.xlu0 %1874
      %v1876 = vrcp.pop %v1863
      %v1877 = vrcp.pop %v1866
      %v1878 = vrcp.pop %v1869
      %v1879 = vrcp.pop %v1872
      %v1880 = vrcp.pop %v1875
      %v1881 = vmul.f32 %v1852, %v1876
      %v1882 = vmul.f32 %v1854, %v1877
      %v1883 = vmul.f32 %v1856, %v1878
      %v1884 = vmul.f32 %v1858, %v1879
      %v1885 = vmul.f32 %v1860, %v1880
      %1886 = vrot.lane.b32.xlu0 %v1541, 48
      %v1887 = vpop.permute.xlu0 %1886
      %1888 = vrot.lane.b32.xlu0 %v1544, 48
      %v1889 = vpop.permute.xlu0 %1888
      %1890 = vrot.lane.b32.xlu0 %v1547, 48
      %v1891 = vpop.permute.xlu0 %1890
      %1892 = vrot.lane.b32.xlu0 %v1550, 48
      %v1893 = vpop.permute.xlu0 %1892
      %1894 = vrot.lane.b32.xlu0 %v1553, 48
      %v1895 = vpop.permute.xlu0 %1894
      %v1902 = vsel %vm597, %v1881, 0
      %v1905 = vsel %vm597, %v1882, 0
      %v1908 = vsel %vm597, %v1883, 0
      %v1911 = vsel %vm597, %v1884, 0
      %v1914 = vsel %vm597, %v1885, 0
      %1916 = vmatpush.msra.mxu0 0.0
      %1917 = vmatpush.msra.mxu0 0.0
      %1918 = vmatpush.msra.mxu0 0.0
      %1919 = vmatpush.msra.mxu0 0.0
      %1920 = vmatpush.msra.mxu0 0.0
      %1921 = vmatpush.msra.mxu0 0.0
      %1922 = vmatpush.msra.mxu0 0.0
      %1923 = vmatpush.msra.mxu0 0.0
      %1924 = vmatpush.msra.mxu0 0.0
      %1925 = vmatpush.msra.mxu0 0.0
      %1926 = vmatpush.msra.mxu0 0.0
      %1927 = vmatpush.msra.mxu0 %v1895
      %1928 = vmatpush.msra.mxu0 %v1893
      %1929 = vmatpush.msra.mxu0 %v1891
      %1930 = vmatpush.msra.mxu0 %v1889
      %1931 = vmatpush.msra.mxu0 %v1887
      %1932 = vmatmul.f32.gmra.mxu0 %v1902
      %v1933 = vpop.f32.mrf.mxu0
      %v1934 = vadd.f32 0.0, %v1933
      %1935 = vmatmul.f32.gmra.mxu0 %v1905
      %v1936 = vpop.f32.mrf.mxu0
      %v1937 = vadd.f32 0.0, %v1936
      %1938 = vmatmul.f32.gmra.mxu0 %v1908
      %v1939 = vpop.f32.mrf.mxu0
      %v1940 = vadd.f32 0.0, %v1939
      %1941 = vmatmul.f32.gmra.mxu0 %v1911
      %v1942 = vpop.f32.mrf.mxu0
      %v1943 = vadd.f32 0.0, %v1942
      %1944 = vmatmul.f32.gmra.mxu0 %v1914
      %v1945 = vpop.f32.mrf.mxu0
      %v1946 = vadd.f32 0.0, %v1945
      %1947 = vdwg.mxu0
      %1953 = vrot.lane.b32.xlu0 %v1934, 16
      %v1954 = vpop.permute.xlu0 %1953
      %1955 = vrot.lane.b32.xlu0 %v1937, 16
      %v1956 = vpop.permute.xlu0 %1955
      %1957 = vrot.lane.b32.xlu0 %v1940, 16
      %v1958 = vpop.permute.xlu0 %1957
      %1959 = vrot.lane.b32.xlu0 %v1943, 16
      %v1960 = vpop.permute.xlu0 %1959
      %1961 = vrot.lane.b32.xlu0 %v1946, 16
      %v1962 = vpop.permute.xlu0 %1961
      %v1968 = vsel %vm534, %v1735, %v1954
      %v1969 = vsel %vm534, %v1738, %v1956
      %v1970 = vsel %vm534, %v1741, %v1958
      %v1971 = vsel %vm534, %v1744, %v1960
      %v1972 = vsel %vm534, %v1747, %v1962
      %v1973 = vperm.slane %v1474, 1
      %v1975 = vsel %vm471, %v1968, 0
      %v1978 = vsel %vm471, %v1969, 0
      %v1981 = vsel %vm471, %v1970, 0
      %v1984 = vsel %vm471, %v1971, 0
      %v1987 = vsel %vm471, %v1972, 0
      %1989 = vmatpush.msra.mxu0 0.0
      %1990 = vmatpush.msra.mxu0 0.0
      %1991 = vmatpush.msra.mxu0 0.0
      %1992 = vmatpush.msra.mxu0 0.0
      %1993 = vmatpush.msra.mxu0 0.0
      %1994 = vmatpush.msra.mxu0 0.0
      %1995 = vmatpush.msra.mxu0 0.0
      %1996 = vmatpush.msra.mxu0 0.0
      %1997 = vmatpush.msra.mxu0 0.0
      %1998 = vmatpush.msra.mxu0 0.0
      %1999 = vmatpush.msra.mxu0 0.0
      %2000 = vmatpush.msra.mxu0 0.0
      %2001 = vmatpush.msra.mxu0 %v1484
      %2002 = vmatpush.msra.mxu0 %v1483
      %2003 = vmatpush.msra.mxu0 %v1482
      %2004 = vmatpush.msra.mxu0 %v1481
      %2005 = vmatmul.f32.gmra.mxu0 %v1975
      %v2006 = vpop.f32.mrf.mxu0
      %v2007 = vadd.f32 %v1973, %v2006
      %2008 = vmatmul.f32.gmra.mxu0 %v1978
      %v2009 = vpop.f32.mrf.mxu0
      %v2010 = vadd.f32 %v1973, %v2009
      %2011 = vmatmul.f32.gmra.mxu0 %v1981
      %v2012 = vpop.f32.mrf.mxu0
      %v2013 = vadd.f32 %v1973, %v2012
      %2014 = vmatmul.f32.gmra.mxu0 %v1984
      %v2015 = vpop.f32.mrf.mxu0
      %v2016 = vadd.f32 %v1973, %v2015
      %2017 = vmatmul.f32.gmra.mxu0 %v1987
      %v2018 = vpop.f32.mrf.mxu0
      %v2019 = vadd.f32 %v1973, %v2018
      %2020 = vdwg.mxu0
      %v2021 = vadd.f32 %v2007, %v1468
      %v2022 = vadd.f32 %v2010, %v1469
      %v2023 = vadd.f32 %v2013, %v1470
      %v2024 = vadd.f32 %v2016, %v1471
      %v2025 = vadd.f32 %v2019, %v1472
      %v2026 = vsel %vm471, %v2021, 0.0
      %2027 = vadd.xlane.f32.xlu0 %v2026
      %v2028 = vpop.xlane.xlu0 %2027
      %v2029 = vsel %vm471, %v2022, 0.0
      %2030 = vadd.xlane.f32.xlu0 %v2029
      %v2031 = vpop.xlane.xlu0 %2030
      %v2032 = vsel %vm471, %v2023, 0.0
      %2033 = vadd.xlane.f32.xlu0 %v2032
      %v2034 = vpop.xlane.xlu0 %2033
      %v2035 = vsel %vm471, %v2024, 0.0
      %2036 = vadd.xlane.f32.xlu0 %v2035
      %v2037 = vpop.xlane.xlu0 %2036
      %v2038 = vsel %vm471, %v2025, 0.0
      %2039 = vadd.xlane.f32.xlu0 %v2038
      %v2040 = vpop.xlane.xlu0 %2039
      %v2041 = vmul.f32 %v2028, %v1013
      %v2042 = vmul.f32 %v2031, %v1013
      %v2043 = vmul.f32 %v2034, %v1013
      %v2044 = vmul.f32 %v2037, %v1013
      %v2045 = vmul.f32 %v2040, %v1013
      %v2046 = vsub.f32 %v2021, %v2041
      %v2047 = vsub.f32 %v2022, %v2042
      %v2048 = vsub.f32 %v2023, %v2043
      %v2049 = vsub.f32 %v2024, %v2044
      %v2050 = vsub.f32 %v2025, %v2045
      %v2051 = vmul.f32 %v2046, %v2046
      %v2052 = vmul.f32 %v2047, %v2047
      %v2053 = vmul.f32 %v2048, %v2048
      %v2054 = vmul.f32 %v2049, %v2049
      %v2055 = vmul.f32 %v2050, %v2050
      %v2056 = vsel %vm471, %v2051, 0.0
      %2057 = vadd.xlane.f32.xlu0 %v2056
      %v2058 = vpop.xlane.xlu0 %2057
      %v2059 = vsel %vm471, %v2052, 0.0
      %2060 = vadd.xlane.f32.xlu0 %v2059
      %v2061 = vpop.xlane.xlu0 %2060
      %v2062 = vsel %vm471, %v2053, 0.0
      %2063 = vadd.xlane.f32.xlu0 %v2062
      %v2064 = vpop.xlane.xlu0 %2063
      %v2065 = vsel %vm471, %v2054, 0.0
      %2066 = vadd.xlane.f32.xlu0 %v2065
      %v2067 = vpop.xlane.xlu0 %2066
      %v2068 = vsel %vm471, %v2055, 0.0
      %2069 = vadd.xlane.f32.xlu0 %v2068
      %v2070 = vpop.xlane.xlu0 %2069
      %v2071 = vmul.f32 %v2058, %v1013
      %v2072 = vmul.f32 %v2061, %v1013
      %v2073 = vmul.f32 %v2064, %v1013
      %v2074 = vmul.f32 %v2067, %v1013
      %v2075 = vmul.f32 %v2070, %v1013
      %v2076 = vadd.f32 %v2071, 1e-05
      %v2077 = vadd.f32 %v2072, 1e-05
      %v2078 = vadd.f32 %v2073, 1e-05
      %v2079 = vadd.f32 %v2074, 1e-05
      %v2080 = vadd.f32 %v2075, 1e-05
      %v2081 = vrsqrt.pop %v2076
      %v2082 = vmul.f32 %v2081, %v2076
      %v2083 = vmul.f32 %v2082, %v2081
      %v2084 = vmul.f32 0.5, %v2083
      %v2085 = vsub.f32 1.5, %v2084
      %v2086 = vmul.f32 %v2081, %v2085
      %vm2087 = vweird.f32 %v2076
      %vm2088 = vweird.f32 %v2081
      %vm2089 = vmor %vm2087, %vm2088
      %v2090 = vsel %vm2089, %v2081, %v2086
      %v2091 = vrsqrt.pop %v2077
      %v2092 = vmul.f32 %v2091, %v2077
      %v2093 = vmul.f32 %v2092, %v2091
      %v2094 = vmul.f32 0.5, %v2093
      %v2095 = vsub.f32 1.5, %v2094
      %v2096 = vmul.f32 %v2091, %v2095
      %vm2097 = vweird.f32 %v2077
      %vm2098 = vweird.f32 %v2091
      %vm2099 = vmor %vm2097, %vm2098
      %v2100 = vsel %vm2099, %v2091, %v2096
      %v2101 = vrsqrt.pop %v2078
      %v2102 = vmul.f32 %v2101, %v2078
      %v2103 = vmul.f32 %v2102, %v2101
      %v2104 = vmul.f32 0.5, %v2103
      %v2105 = vsub.f32 1.5, %v2104
      %v2106 = vmul.f32 %v2101, %v2105
      %vm2107 = vweird.f32 %v2078
      %vm2108 = vweird.f32 %v2101
      %vm2109 = vmor %vm2107, %vm2108
      %v2110 = vsel %vm2109, %v2101, %v2106
      %v2111 = vrsqrt.pop %v2079
      %v2112 = vmul.f32 %v2111, %v2079
      %v2113 = vmul.f32 %v2112, %v2111
      %v2114 = vmul.f32 0.5, %v2113
      %v2115 = vsub.f32 1.5, %v2114
      %v2116 = vmul.f32 %v2111, %v2115
      %vm2117 = vweird.f32 %v2079
      %vm2118 = vweird.f32 %v2111
      %vm2119 = vmor %vm2117, %vm2118
      %v2120 = vsel %vm2119, %v2111, %v2116
      %v2121 = vrsqrt.pop %v2080
      %v2122 = vmul.f32 %v2121, %v2080
      %v2123 = vmul.f32 %v2122, %v2121
      %v2124 = vmul.f32 0.5, %v2123
      %v2125 = vsub.f32 1.5, %v2124
      %v2126 = vmul.f32 %v2121, %v2125
      %vm2127 = vweird.f32 %v2080
      %vm2128 = vweird.f32 %v2121
      %vm2129 = vmor %vm2127, %vm2128
      %v2130 = vsel %vm2129, %v2121, %v2126
      %v2131 = vmul.f32 %v2046, %v2090
      %v2132 = vmul.f32 %v2047, %v2100
      %v2133 = vmul.f32 %v2048, %v2110
      %v2134 = vmul.f32 %v2049, %v2120
      %v2135 = vmul.f32 %v2050, %v2130
      %v2136 = vperm.slane %v1474, 2
      %v2137 = vmul.f32 %v2131, %v2136
      %v2138 = vmul.f32 %v2132, %v2136
      %v2139 = vmul.f32 %v2133, %v2136
      %v2140 = vmul.f32 %v2134, %v2136
      %v2141 = vmul.f32 %v2135, %v2136
      %v2142 = vperm.slane %v1474, 3
      %v2143 = vadd.f32 %v2137, %v2142
      %v2144 = vadd.f32 %v2138, %v2142
      %v2145 = vadd.f32 %v2139, %v2142
      %v2146 = vadd.f32 %v2140, %v2142
      %v2147 = vadd.f32 %v2141, %v2142
      %v2148 = vmul.f32 %v2143, %v429
      %v2149 = vmul.f32 %v2144, %v430
      %v2150 = vmul.f32 %v2145, %v431
      %v2151 = vmul.f32 %v2146, %v432
      %v2152 = vmul.f32 %v2147, %v433
      %v2153 = vrot.slane %v2148, 7
      %v2154 = vrot.slane %v2149, 7
      %v2155 = vrot.slane %v2150, 7
      %v2156 = vrot.slane %v2151, 7
      %v2157 = vrot.slane %v2152, 7
      %v2158 = vsel %vm1131, %v2156, %v2157
      %v2159 = vsel %vm1131, %v2155, %v2156
      %v2160 = vsel %vm1131, %v2154, %v2155
      %v2161 = vsel %vm1131, %v2153, %v2154
      %v2162 = vsel %vm1131, %v2157, %v2153
      %v2163 = vsel %vm1147, %v2162, 0.0
      %v2164 = vsel %vm1148, %v2161, 0.0
      %v2165 = vsel %vm1149, %v2160, 0.0
      %v2166 = vsel %vm1150, %v2159, 0.0
      %v2167 = vsel %vm1151, %v2158, 0.0
      %v2168 = vrot.slane %v2148, 1
      %v2169 = vrot.slane %v2149, 1
      %v2170 = vrot.slane %v2150, 1
      %v2171 = vrot.slane %v2151, 1
      %v2172 = vrot.slane %v2152, 1
      %v2173 = vsel %vm1162, %v2171, %v2172
      %v2174 = vsel %vm1162, %v2170, %v2171
      %v2175 = vsel %vm1162, %v2169, %v2170
      %v2176 = vsel %vm1162, %v2168, %v2169
      %v2177 = vsel %vm1162, %v2172, %v2168
      %v2178 = vsel %vm1178, %v2176, 0.0
      %v2179 = vsel %vm1179, %v2175, 0.0
      %v2180 = vsel %vm1180, %v2174, 0.0
      %v2181 = vsel %vm1181, %v2173, 0.0
      %v2182 = vsel %vm1182, %v2177, 0.0
      %2188 = vrot.lane.b32.xlu0 %v2148, 32
      %v2189 = vpop.permute.xlu0 %2188
      %2190 = vrot.lane.b32.xlu0 %v2149, 32
      %v2191 = vpop.permute.xlu0 %2190
      %2192 = vrot.lane.b32.xlu0 %v2150, 32
      %v2193 = vpop.permute.xlu0 %2192
      %2194 = vrot.lane.b32.xlu0 %v2151, 32
      %v2195 = vpop.permute.xlu0 %2194
      %2196 = vrot.lane.b32.xlu0 %v2152, 32
      %v2197 = vpop.permute.xlu0 %2196
      %2208 = vrot.lane.b32.xlu0 %v2178, 64
      %v2209 = vpop.permute.xlu0 %2208
      %2210 = vrot.lane.b32.xlu0 %v2179, 64
      %v2211 = vpop.permute.xlu0 %2210
      %2212 = vrot.lane.b32.xlu0 %v2180, 64
      %v2213 = vpop.permute.xlu0 %2212
      %2214 = vrot.lane.b32.xlu0 %v2181, 64
      %v2215 = vpop.permute.xlu0 %2214
      %2216 = vrot.lane.b32.xlu0 %v2182, 64
      %v2217 = vpop.permute.xlu0 %2216
      %v2223 = vsel %vm471, %v2163, %v2189
      %v2224 = vsel %vm471, %v2164, %v2191
      %v2225 = vsel %vm471, %v2165, %v2193
      %v2226 = vsel %vm471, %v2166, %v2195
      %v2227 = vsel %vm471, %v2167, %v2197
      %v2228 = vsel %vm1233, %v2223, %v2209
      %v2229 = vsel %vm1233, %v2224, %v2211
      %v2230 = vsel %vm1233, %v2225, %v2213
      %v2231 = vsel %vm1233, %v2226, %v2215
      %v2232 = vsel %vm1233, %v2227, %v2217
      %v2233 = vperm.slane %v1474, 4
      %v2235 = vsel %vm1240, %v2228, 0
      %v2238 = vsel %vm1240, %v2229, 0
      %v2241 = vsel %vm1240, %v2230, 0
      %v2244 = vsel %vm1240, %v2231, 0
      %v2247 = vsel %vm1240, %v2232, 0
      %2249 = vmatpush.msra.mxu0 0.0
      %2250 = vmatpush.msra.mxu0 0.0
      %2251 = vmatpush.msra.mxu0 0.0
      %2252 = vmatpush.msra.mxu0 0.0
      %2253 = vmatpush.msra.mxu0 %v1497
      %2254 = vmatpush.msra.mxu0 %v1496
      %2255 = vmatpush.msra.mxu0 %v1495
      %2256 = vmatpush.msra.mxu0 %v1494
      %2257 = vmatpush.msra.mxu0 %v1493
      %2258 = vmatpush.msra.mxu0 %v1492
      %2259 = vmatpush.msra.mxu0 %v1491
      %2260 = vmatpush.msra.mxu0 %v1490
      %2261 = vmatpush.msra.mxu0 %v1489
      %2262 = vmatpush.msra.mxu0 %v1488
      %2263 = vmatpush.msra.mxu0 %v1487
      %2264 = vmatpush.msra.mxu0 %v1486
      %2265 = vmatmul.f32.gmra.mxu0 %v2235
      %v2266 = vpop.f32.mrf.mxu0
      %v2267 = vadd.f32 %v2233, %v2266
      %2268 = vmatmul.f32.gmra.mxu0 %v2238
      %v2269 = vpop.f32.mrf.mxu0
      %v2270 = vadd.f32 %v2233, %v2269
      %2271 = vmatmul.f32.gmra.mxu0 %v2241
      %v2272 = vpop.f32.mrf.mxu0
      %v2273 = vadd.f32 %v2233, %v2272
      %2274 = vmatmul.f32.gmra.mxu0 %v2244
      %v2275 = vpop.f32.mrf.mxu0
      %v2276 = vadd.f32 %v2233, %v2275
      %2277 = vmatmul.f32.gmra.mxu0 %v2247
      %v2278 = vpop.f32.mrf.mxu0
      %v2279 = vadd.f32 %v2233, %v2278
      %2280 = vdwg.mxu0
      %v2281 = vmax.f32 %v2267, 0.0
      %v2282 = vmax.f32 %v2270, 0.0
      %v2283 = vmax.f32 %v2273, 0.0
      %v2284 = vmax.f32 %v2276, 0.0
      %v2285 = vmax.f32 %v2279, 0.0
      %v2286 = vperm.slane %v1474, 5
      %v2288 = vsel %vm1233, %v2281, 0
      %v2291 = vsel %vm1233, %v2282, 0
      %v2294 = vsel %vm1233, %v2283, 0
      %v2297 = vsel %vm1233, %v2284, 0
      %v2300 = vsel %vm1233, %v2285, 0
      %2302 = vmatpush.msra.mxu0 0.0
      %2303 = vmatpush.msra.mxu0 0.0
      %2304 = vmatpush.msra.mxu0 0.0
      %2305 = vmatpush.msra.mxu0 0.0
      %2306 = vmatpush.msra.mxu0 0.0
      %2307 = vmatpush.msra.mxu0 0.0
      %2308 = vmatpush.msra.mxu0 0.0
      %2309 = vmatpush.msra.mxu0 0.0
      %2310 = vmatpush.msra.mxu0 %v1506
      %2311 = vmatpush.msra.mxu0 %v1505
      %2312 = vmatpush.msra.mxu0 %v1504
      %2313 = vmatpush.msra.mxu0 %v1503
      %2314 = vmatpush.msra.mxu0 %v1502
      %2315 = vmatpush.msra.mxu0 %v1501
      %2316 = vmatpush.msra.mxu0 %v1500
      %2317 = vmatpush.msra.mxu0 %v1499
      %2318 = vmatmul.f32.gmra.mxu0 %v2288
      %v2319 = vpop.f32.mrf.mxu0
      %v2320 = vadd.f32 %v2286, %v2319
      %2321 = vmatmul.f32.gmra.mxu0 %v2291
      %v2322 = vpop.f32.mrf.mxu0
      %v2323 = vadd.f32 %v2286, %v2322
      %2324 = vmatmul.f32.gmra.mxu0 %v2294
      %v2325 = vpop.f32.mrf.mxu0
      %v2326 = vadd.f32 %v2286, %v2325
      %2327 = vmatmul.f32.gmra.mxu0 %v2297
      %v2328 = vpop.f32.mrf.mxu0
      %v2329 = vadd.f32 %v2286, %v2328
      %2330 = vmatmul.f32.gmra.mxu0 %v2300
      %v2331 = vpop.f32.mrf.mxu0
      %v2332 = vadd.f32 %v2286, %v2331
      %2333 = vdwg.mxu0
      %v2334 = vadd.f32 %v2320, %v2148
      %v2335 = vadd.f32 %v2323, %v2149
      %v2336 = vadd.f32 %v2326, %v2150
      %v2337 = vadd.f32 %v2329, %v2151
      %v2338 = vadd.f32 %v2332, %v2152
      %v2339 = vsel %vm471, %v2334, 0.0
      %2340 = vadd.xlane.f32.xlu0 %v2339
      %v2341 = vpop.xlane.xlu0 %2340
      %v2342 = vsel %vm471, %v2335, 0.0
      %2343 = vadd.xlane.f32.xlu0 %v2342
      %v2344 = vpop.xlane.xlu0 %2343
      %v2345 = vsel %vm471, %v2336, 0.0
      %2346 = vadd.xlane.f32.xlu0 %v2345
      %v2347 = vpop.xlane.xlu0 %2346
      %v2348 = vsel %vm471, %v2337, 0.0
      %2349 = vadd.xlane.f32.xlu0 %v2348
      %v2350 = vpop.xlane.xlu0 %2349
      %v2351 = vsel %vm471, %v2338, 0.0
      %2352 = vadd.xlane.f32.xlu0 %v2351
      %v2353 = vpop.xlane.xlu0 %2352
      %v2354 = vmul.f32 %v2341, %v1013
      %v2355 = vmul.f32 %v2344, %v1013
      %v2356 = vmul.f32 %v2347, %v1013
      %v2357 = vmul.f32 %v2350, %v1013
      %v2358 = vmul.f32 %v2353, %v1013
      %v2359 = vsub.f32 %v2334, %v2354
      %v2360 = vsub.f32 %v2335, %v2355
      %v2361 = vsub.f32 %v2336, %v2356
      %v2362 = vsub.f32 %v2337, %v2357
      %v2363 = vsub.f32 %v2338, %v2358
      %v2364 = vmul.f32 %v2359, %v2359
      %v2365 = vmul.f32 %v2360, %v2360
      %v2366 = vmul.f32 %v2361, %v2361
      %v2367 = vmul.f32 %v2362, %v2362
      %v2368 = vmul.f32 %v2363, %v2363
      %v2369 = vsel %vm471, %v2364, 0.0
      %2370 = vadd.xlane.f32.xlu0 %v2369
      %v2371 = vpop.xlane.xlu0 %2370
      %v2372 = vsel %vm471, %v2365, 0.0
      %2373 = vadd.xlane.f32.xlu0 %v2372
      %v2374 = vpop.xlane.xlu0 %2373
      %v2375 = vsel %vm471, %v2366, 0.0
      %2376 = vadd.xlane.f32.xlu0 %v2375
      %v2377 = vpop.xlane.xlu0 %2376
      %v2378 = vsel %vm471, %v2367, 0.0
      %2379 = vadd.xlane.f32.xlu0 %v2378
      %v2380 = vpop.xlane.xlu0 %2379
      %v2381 = vsel %vm471, %v2368, 0.0
      %2382 = vadd.xlane.f32.xlu0 %v2381
      %v2383 = vpop.xlane.xlu0 %2382
      %v2384 = vmul.f32 %v2371, %v1013
      %v2385 = vmul.f32 %v2374, %v1013
      %v2386 = vmul.f32 %v2377, %v1013
      %v2387 = vmul.f32 %v2380, %v1013
      %v2388 = vmul.f32 %v2383, %v1013
      %v2389 = vadd.f32 %v2384, 1e-05
      %v2390 = vadd.f32 %v2385, 1e-05
      %v2391 = vadd.f32 %v2386, 1e-05
      %v2392 = vadd.f32 %v2387, 1e-05
      %v2393 = vadd.f32 %v2388, 1e-05
      %v2394 = vrsqrt.pop %v2389
      %v2395 = vmul.f32 %v2394, %v2389
      %v2396 = vmul.f32 %v2395, %v2394
      %v2397 = vmul.f32 0.5, %v2396
      %v2398 = vsub.f32 1.5, %v2397
      %v2399 = vmul.f32 %v2394, %v2398
      %vm2400 = vweird.f32 %v2389
      %vm2401 = vweird.f32 %v2394
      %vm2402 = vmor %vm2400, %vm2401
      %v2403 = vsel %vm2402, %v2394, %v2399
      %v2404 = vrsqrt.pop %v2390
      %v2405 = vmul.f32 %v2404, %v2390
      %v2406 = vmul.f32 %v2405, %v2404
      %v2407 = vmul.f32 0.5, %v2406
      %v2408 = vsub.f32 1.5, %v2407
      %v2409 = vmul.f32 %v2404, %v2408
      %vm2410 = vweird.f32 %v2390
      %vm2411 = vweird.f32 %v2404
      %vm2412 = vmor %vm2410, %vm2411
      %v2413 = vsel %vm2412, %v2404, %v2409
      %v2414 = vrsqrt.pop %v2391
      %v2415 = vmul.f32 %v2414, %v2391
      %v2416 = vmul.f32 %v2415, %v2414
      %v2417 = vmul.f32 0.5, %v2416
      %v2418 = vsub.f32 1.5, %v2417
      %v2419 = vmul.f32 %v2414, %v2418
      %vm2420 = vweird.f32 %v2391
      %vm2421 = vweird.f32 %v2414
      %vm2422 = vmor %vm2420, %vm2421
      %v2423 = vsel %vm2422, %v2414, %v2419
      %v2424 = vrsqrt.pop %v2392
      %v2425 = vmul.f32 %v2424, %v2392
      %v2426 = vmul.f32 %v2425, %v2424
      %v2427 = vmul.f32 0.5, %v2426
      %v2428 = vsub.f32 1.5, %v2427
      %v2429 = vmul.f32 %v2424, %v2428
      %vm2430 = vweird.f32 %v2392
      %vm2431 = vweird.f32 %v2424
      %vm2432 = vmor %vm2430, %vm2431
      %v2433 = vsel %vm2432, %v2424, %v2429
      %v2434 = vrsqrt.pop %v2393
      %v2435 = vmul.f32 %v2434, %v2393
      %v2436 = vmul.f32 %v2435, %v2434
      %v2437 = vmul.f32 0.5, %v2436
      %v2438 = vsub.f32 1.5, %v2437
      %v2439 = vmul.f32 %v2434, %v2438
      %vm2440 = vweird.f32 %v2393
      %vm2441 = vweird.f32 %v2434
      %vm2442 = vmor %vm2440, %vm2441
      %v2443 = vsel %vm2442, %v2434, %v2439
      %v2444 = vmul.f32 %v2359, %v2403
      %v2445 = vmul.f32 %v2360, %v2413
      %v2446 = vmul.f32 %v2361, %v2423
      %v2447 = vmul.f32 %v2362, %v2433
      %v2448 = vmul.f32 %v2363, %v2443
      %v2449 = vperm.slane %v1474, 6
      %v2450 = vmul.f32 %v2444, %v2449
      %v2451 = vmul.f32 %v2445, %v2449
      %v2452 = vmul.f32 %v2446, %v2449
      %v2453 = vmul.f32 %v2447, %v2449
      %v2454 = vmul.f32 %v2448, %v2449
      %v2455 = vperm.slane %v1474, 7
      %v2456 = vadd.f32 %v2450, %v2455
      %v2457 = vadd.f32 %v2451, %v2455
      %v2458 = vadd.f32 %v2452, %v2455
      %v2459 = vadd.f32 %v2453, %v2455
      %v2460 = vadd.f32 %v2454, %v2455
      %v2461 = vmul.f32 %v2456, %v429
      %v2462 = vmul.f32 %v2457, %v430
      %v2463 = vmul.f32 %v2458, %v431
      %v2464 = vmul.f32 %v2459, %v432
      %v2465 = vmul.f32 %v2460, %v433
      %v2466 = vld [vmem:[%s7] sm:$0xff]
      %v2467 = vld [vmem:[%s7 + $0x8] sm:$0xff]
      %v2468 = vld [vmem:[%s7 + $0x10] sm:$0xff]
      %v2469 = vld [vmem:[%s7 + $0x18] sm:$0xff]
      %v2470 = vld [vmem:[%s8] sm:$0x1]
      %v2472 = vperm.slane %v2470, 0
      %v2475 = vsel %vm471, %v2461, 0
      %v2478 = vsel %vm471, %v2462, 0
      %v2481 = vsel %vm471, %v2463, 0
      %v2484 = vsel %vm471, %v2464, 0
      %v2487 = vsel %vm471, %v2465, 0
      %2489 = vmatpush.msra.mxu0 0.0
      %2490 = vmatpush.msra.mxu0 0.0
      %2491 = vmatpush.msra.mxu0 0.0
      %2492 = vmatpush.msra.mxu0 0.0
      %2493 = vmatpush.msra.mxu0 0.0
      %2494 = vmatpush.msra.mxu0 0.0
      %2495 = vmatpush.msra.mxu0 0.0
      %2496 = vmatpush.msra.mxu0 0.0
      %2497 = vmatpush.msra.mxu0 0.0
      %2498 = vmatpush.msra.mxu0 0.0
      %2499 = vmatpush.msra.mxu0 0.0
      %2500 = vmatpush.msra.mxu0 0.0
      %2501 = vmatpush.msra.mxu0 %v2469
      %2502 = vmatpush.msra.mxu0 %v2468
      %2503 = vmatpush.msra.mxu0 %v2467
      %2504 = vmatpush.msra.mxu0 %v2466
      %2505 = vmatmul.f32.gmra.mxu0 %v2475
      %v2506 = vpop.f32.mrf.mxu0
      %v2507 = vadd.f32 %v2472, %v2506
      %2508 = vmatmul.f32.gmra.mxu0 %v2478
      %v2509 = vpop.f32.mrf.mxu0
      %v2510 = vadd.f32 %v2472, %v2509
      %2511 = vmatmul.f32.gmra.mxu0 %v2481
      %v2512 = vpop.f32.mrf.mxu0
      %v2513 = vadd.f32 %v2472, %v2512
      %2514 = vmatmul.f32.gmra.mxu0 %v2484
      %v2515 = vpop.f32.mrf.mxu0
      %v2516 = vadd.f32 %v2472, %v2515
      %2517 = vmatmul.f32.gmra.mxu0 %v2487
      %v2518 = vpop.f32.mrf.mxu0
      %v2519 = vadd.f32 %v2472, %v2518
      %2520 = vdwg.mxu0
      %2521 = vst [vmem:[%s403] sm:$0xff] %v2507
      %2522 = vst [vmem:[%s403 + $0x8] sm:$0xff] %v2510
      %2523 = vst [vmem:[%s403 + $0x10] sm:$0xff] %v2513
      %2524 = vst [vmem:[%s403 + $0x18] sm:$0xff] %v2516
      %2525 = vst [vmem:[%s403 + $0x20] sm:$0xff] %v2519
      %v2526 = vld [vmem:[%s9] sm:$0xff]
      %v2527 = vld [vmem:[%s9 + $0x8] sm:$0xff]
      %v2528 = vld [vmem:[%s9 + $0x10] sm:$0xff]
      %v2529 = vld [vmem:[%s9 + $0x18] sm:$0xff]
      %v2530 = vld [vmem:[%s9 + $0x20] sm:$0xff]
      %v2531 = vld [vmem:[%s9 + $0x28] sm:$0xff]
      %v2532 = vld [vmem:[%s9 + $0x30] sm:$0xff]
      %v2533 = vld [vmem:[%s9 + $0x38] sm:$0xff]
      %v2534 = vld [vmem:[%s9 + $0x40] sm:$0xff]
      %v2535 = vld [vmem:[%s9 + $0x48] sm:$0xff]
      %v2536 = vld [vmem:[%s9 + $0x50] sm:$0xff]
      %v2537 = vld [vmem:[%s9 + $0x58] sm:$0xff]
      %v2538 = vld [vmem:[%s9 + $0x60] sm:$0xff]
      %v2539 = vld [vmem:[%s9 + $0x68] sm:$0xff]
      %v2540 = vld [vmem:[%s9 + $0x70] sm:$0xff]
      %v2541 = vld [vmem:[%s9 + $0x78] sm:$0xff]
      %v2542 = vld [vmem:[%s9 + $0x80] sm:$0xff]
      %v2543 = vld [vmem:[%s9 + $0x88] sm:$0xff]
      %v2544 = vld [vmem:[%s9 + $0x90] sm:$0xff]
      %v2545 = vld [vmem:[%s9 + $0x98] sm:$0xff]
      %v2546 = vld [vmem:[%s10] sm:$0x1]
      %v2547 = vrot.slane %v2507, 6
      %v2548 = vrot.slane %v2510, 6
      %v2549 = vrot.slane %v2513, 6
      %v2550 = vrot.slane %v2516, 6
      %v2551 = vrot.slane %v2519, 6
      %vm2552 = vcmp.lt.s32.totalorder %v411, 2
      %v2553 = vsel %vm2552, %v2550, %v2551
      %v2554 = vsel %vm2552, %v2549, %v2550
      %v2555 = vsel %vm2552, %v2548, %v2549
      %v2556 = vsel %vm2552, %v2547, %v2548
      %v2557 = vsel %vm2552, %v2551, %v2547
      %vm2558 = vcmp.ge.s32.totalorder %v411, 2
      %vm2559 = vcmp.ge.s32.totalorder %v412, 2
      %vm2560 = vcmp.ge.s32.totalorder %v413, 2
      %vm2561 = vcmp.ge.s32.totalorder %v414, 2
      %vm2562 = vcmp.ge.s32.totalorder %v415, 2
      %v2563 = vsel %vm2558, 1, 0
      %v2564 = vsel %vm2559, 1, 0
      %v2565 = vsel %vm2560, 1, 0
      %v2566 = vsel %vm2561, 1, 0
      %v2567 = vsel %vm2562, 1, 0
      %vm2568 = vcmp.eq.s32.totalorder %v2563, 1
      %vm2569 = vcmp.eq.s32.totalorder %v2564, 1
      %vm2570 = vcmp.eq.s32.totalorder %v2565, 1
      %vm2571 = vcmp.eq.s32.totalorder %v2566, 1
      %vm2572 = vcmp.eq.s32.totalorder %v2567, 1
      %v2573 = vsel %vm2568, %v2557, 0.0
      %v2574 = vsel %vm2569, %v2556, 0.0
      %v2575 = vsel %vm2570, %v2555, 0.0
      %v2576 = vsel %vm2571, %v2554, 0.0
      %v2577 = vsel %vm2572, %v2553, 0.0
      %v2578 = vrot.slane %v2507, 7
      %v2579 = vrot.slane %v2510, 7
      %v2580 = vrot.slane %v2513, 7
      %v2581 = vrot.slane %v2516, 7
      %v2582 = vrot.slane %v2519, 7
      %v2583 = vsel %vm1131, %v2581, %v2582
      %v2584 = vsel %vm1131, %v2580, %v2581
      %v2585 = vsel %vm1131, %v2579, %v2580
      %v2586 = vsel %vm1131, %v2578, %v2579
      %v2587 = vsel %vm1131, %v2582, %v2578
      %v2588 = vsel %vm1147, %v2587, 0.0
      %v2589 = vsel %vm1148, %v2586, 0.0
      %v2590 = vsel %vm1149, %v2585, 0.0
      %v2591 = vsel %vm1150, %v2584, 0.0
      %v2592 = vsel %vm1151, %v2583, 0.0
      %v2593 = vrot.slane %v2507, 1
      %v2594 = vrot.slane %v2510, 1
      %v2595 = vrot.slane %v2513, 1
      %v2596 = vrot.slane %v2516, 1
      %v2597 = vrot.slane %v2519, 1
      %v2598 = vsel %vm1162, %v2596, %v2597
      %v2599 = vsel %vm1162, %v2595, %v2596
      %v2600 = vsel %vm1162, %v2594, %v2595
      %v2601 = vsel %vm1162, %v2593, %v2594
      %v2602 = vsel %vm1162, %v2597, %v2593
      %v2603 = vsel %vm1178, %v2601, 0.0
      %v2604 = vsel %vm1179, %v2600, 0.0
      %v2605 = vsel %vm1180, %v2599, 0.0
      %v2606 = vsel %vm1181, %v2598, 0.0
      %v2607 = vsel %vm1182, %v2602, 0.0
      %v2608 = vrot.slane %v2507, 2
      %v2609 = vrot.slane %v2510, 2
      %v2610 = vrot.slane %v2513, 2
      %v2611 = vrot.slane %v2516, 2
      %v2612 = vrot.slane %v2519, 2
      %vm2613 = vcmp.lt.s32.totalorder %v411, 6
      %v2614 = vsel %vm2613, %v2611, %v2612
      %v2615 = vsel %vm2613, %v2610, %v2611
      %v2616 = vsel %vm2613, %v2609, %v2610
      %v2617 = vsel %vm2613, %v2608, %v2609
      %v2618 = vsel %vm2613, %v2612, %v2608
      %vm2619 = vcmp.lt.s32.totalorder %v411, 38
      %vm2620 = vcmp.lt.s32.totalorder %v412, 38
      %vm2621 = vcmp.lt.s32.totalorder %v413, 38
      %vm2622 = vcmp.lt.s32.totalorder %v414, 38
      %vm2623 = vcmp.lt.s32.totalorder %v415, 38
      %v2624 = vsel %vm2619, 1, 0
      %v2625 = vsel %vm2620, 1, 0
      %v2626 = vsel %vm2621, 1, 0
      %v2627 = vsel %vm2622, 1, 0
      %v2628 = vsel %vm2623, 1, 0
      %vm2629 = vcmp.eq.s32.totalorder %v2624, 1
      %vm2630 = vcmp.eq.s32.totalorder %v2625, 1
      %vm2631 = vcmp.eq.s32.totalorder %v2626, 1
      %vm2632 = vcmp.eq.s32.totalorder %v2627, 1
      %vm2633 = vcmp.eq.s32.totalorder %v2628, 1
      %v2634 = vsel %vm2629, %v2617, 0.0
      %v2635 = vsel %vm2630, %v2616, 0.0
      %v2636 = vsel %vm2631, %v2615, 0.0
      %v2637 = vsel %vm2632, %v2614, 0.0
      %v2638 = vsel %vm2633, %v2618, 0.0
      %2644 = vrot.lane.b32.xlu0 %v2588, 32
      %v2645 = vpop.permute.xlu0 %2644
      %2646 = vrot.lane.b32.xlu0 %v2589, 32
      %v2647 = vpop.permute.xlu0 %2646
      %2648 = vrot.lane.b32.xlu0 %v2590, 32
      %v2649 = vpop.permute.xlu0 %2648
      %2650 = vrot.lane.b32.xlu0 %v2591, 32
      %v2651 = vpop.permute.xlu0 %2650
      %2652 = vrot.lane.b32.xlu0 %v2592, 32
      %v2653 = vpop.permute.xlu0 %2652
      %2664 = vrot.lane.b32.xlu0 %v2507, 64
      %v2665 = vpop.permute.xlu0 %2664
      %2666 = vrot.lane.b32.xlu0 %v2510, 64
      %v2667 = vpop.permute.xlu0 %2666
      %2668 = vrot.lane.b32.xlu0 %v2513, 64
      %v2669 = vpop.permute.xlu0 %2668
      %2670 = vrot.lane.b32.xlu0 %v2516, 64
      %v2671 = vpop.permute.xlu0 %2670
      %2672 = vrot.lane.b32.xlu0 %v2519, 64
      %v2673 = vpop.permute.xlu0 %2672
      %2684 = vrot.lane.b32.xlu0 %v2603, 96
      %v2685 = vpop.permute.xlu0 %2684
      %2686 = vrot.lane.b32.xlu0 %v2604, 96
      %v2687 = vpop.permute.xlu0 %2686
      %2688 = vrot.lane.b32.xlu0 %v2605, 96
      %v2689 = vpop.permute.xlu0 %2688
      %2690 = vrot.lane.b32.xlu0 %v2606, 96
      %v2691 = vpop.permute.xlu0 %2690
      %2692 = vrot.lane.b32.xlu0 %v2607, 96
      %v2693 = vpop.permute.xlu0 %2692
      %v2699 = vsel %vm471, %v2573, %v2645
      %v2700 = vsel %vm471, %v2574, %v2647
      %v2701 = vsel %vm471, %v2575, %v2649
      %v2702 = vsel %vm471, %v2576, %v2651
      %v2703 = vsel %vm471, %v2577, %v2653
      %v2704 = vsel %vm1233, %v2699, %v2665
      %v2705 = vsel %vm1233, %v2700, %v2667
      %v2706 = vsel %vm1233, %v2701, %v2669
      %v2707 = vsel %vm1233, %v2702, %v2671
      %v2708 = vsel %vm1233, %v2703, %v2673
      %v2709 = vsel %vm1240, %v2704, %v2685
      %v2710 = vsel %vm1240, %v2705, %v2687
      %v2711 = vsel %vm1240, %v2706, %v2689
      %v2712 = vsel %vm1240, %v2707, %v2691
      %v2713 = vsel %vm1240, %v2708, %v2693
      %v2715 = vperm.slane %v2546, 0
      %v2718 = vsel %vm471, %v2634, 0
      %v2721 = vsel %vm471, %v2635, 0
      %v2724 = vsel %vm471, %v2636, 0
      %v2727 = vsel %vm471, %v2637, 0
      %v2730 = vsel %vm471, %v2638, 0
      %2732 = vmatpush.msra.mxu0 %v2541
      %2733 = vmatpush.msra.mxu0 %v2540
      %2734 = vmatpush.msra.mxu0 %v2539
      %2735 = vmatpush.msra.mxu0 %v2538
      %2736 = vmatpush.msra.mxu0 %v2537
      %2737 = vmatpush.msra.mxu0 %v2536
      %2738 = vmatpush.msra.mxu0 %v2535
      %2739 = vmatpush.msra.mxu0 %v2534
      %2740 = vmatpush.msra.mxu0 %v2533
      %2741 = vmatpush.msra.mxu0 %v2532
      %2742 = vmatpush.msra.mxu0 %v2531
      %2743 = vmatpush.msra.mxu0 %v2530
      %2744 = vmatpush.msra.mxu0 %v2529
      %2745 = vmatpush.msra.mxu0 %v2528
      %2746 = vmatpush.msra.mxu0 %v2527
      %2747 = vmatpush.msra.mxu0 %v2526
      %2748 = vmatmul.f32.gmra.mxu0 %v2709
      %v2749 = vpop.f32.mrf.mxu0
      %v2750 = vadd.f32 %v2715, %v2749
      %2751 = vmatmul.f32.gmra.mxu0 %v2710
      %v2752 = vpop.f32.mrf.mxu0
      %v2753 = vadd.f32 %v2715, %v2752
      %2754 = vmatmul.f32.gmra.mxu0 %v2711
      %v2755 = vpop.f32.mrf.mxu0
      %v2756 = vadd.f32 %v2715, %v2755
      %2757 = vmatmul.f32.gmra.mxu0 %v2712
      %v2758 = vpop.f32.mrf.mxu0
      %v2759 = vadd.f32 %v2715, %v2758
      %2760 = vmatmul.f32.gmra.mxu0 %v2713
      %v2761 = vpop.f32.mrf.mxu0
      %v2762 = vadd.f32 %v2715, %v2761
      %2763 = vdwg.mxu0
      %2764 = vmatpush.msra.mxu0 0.0
      %2765 = vmatpush.msra.mxu0 0.0
      %2766 = vmatpush.msra.mxu0 0.0
      %2767 = vmatpush.msra.mxu0 0.0
      %2768 = vmatpush.msra.mxu0 0.0
      %2769 = vmatpush.msra.mxu0 0.0
      %2770 = vmatpush.msra.mxu0 0.0
      %2771 = vmatpush.msra.mxu0 0.0
      %2772 = vmatpush.msra.mxu0 0.0
      %2773 = vmatpush.msra.mxu0 0.0
      %2774 = vmatpush.msra.mxu0 0.0
      %2775 = vmatpush.msra.mxu0 0.0
      %2776 = vmatpush.msra.mxu0 %v2545
      %2777 = vmatpush.msra.mxu0 %v2544
      %2778 = vmatpush.msra.mxu0 %v2543
      %2779 = vmatpush.msra.mxu0 %v2542
      %2780 = vmatmul.f32.gmra.mxu0 %v2718
      %v2781 = vpop.f32.mrf.mxu0
      %v2782 = vadd.f32 %v2750, %v2781
      %2783 = vmatmul.f32.gmra.mxu0 %v2721
      %v2784 = vpop.f32.mrf.mxu0
      %v2785 = vadd.f32 %v2753, %v2784
      %2786 = vmatmul.f32.gmra.mxu0 %v2724
      %v2787 = vpop.f32.mrf.mxu0
      %v2788 = vadd.f32 %v2756, %v2787
      %2789 = vmatmul.f32.gmra.mxu0 %v2727
      %v2790 = vpop.f32.mrf.mxu0
      %v2791 = vadd.f32 %v2759, %v2790
      %2792 = vmatmul.f32.gmra.mxu0 %v2730
      %v2793 = vpop.f32.mrf.mxu0
      %v2794 = vadd.f32 %v2762, %v2793
      %2795 = vdwg.mxu0
      %v2796 = vtanh.pop %v2782
      %v2797 = vtanh.pop %v2785
      %v2798 = vtanh.pop %v2788
      %v2799 = vtanh.pop %v2791
      %v2800 = vtanh.pop %v2794
      %s2801 = scalar_lea.vmem %s9, 160
      %v2802 = vld [vmem:[%s2801] sm:$0xff]
      %v2803 = vld [vmem:[%s2801 + $0x8] sm:$0xff]
      %v2804 = vld [vmem:[%s2801 + $0x10] sm:$0xff]
      %v2805 = vld [vmem:[%s2801 + $0x18] sm:$0xff]
      %v2806 = vld [vmem:[%s2801 + $0x20] sm:$0xff]
      %v2807 = vld [vmem:[%s2801 + $0x28] sm:$0xff]
      %v2808 = vld [vmem:[%s2801 + $0x30] sm:$0xff]
      %v2809 = vld [vmem:[%s2801 + $0x38] sm:$0xff]
      %v2810 = vld [vmem:[%s2801 + $0x40] sm:$0xff]
      %v2811 = vld [vmem:[%s2801 + $0x48] sm:$0xff]
      %v2812 = vld [vmem:[%s2801 + $0x50] sm:$0xff]
      %v2813 = vld [vmem:[%s2801 + $0x58] sm:$0xff]
      %v2814 = vld [vmem:[%s2801 + $0x60] sm:$0xff]
      %v2815 = vld [vmem:[%s2801 + $0x68] sm:$0xff]
      %v2816 = vld [vmem:[%s2801 + $0x70] sm:$0xff]
      %v2817 = vld [vmem:[%s2801 + $0x78] sm:$0xff]
      %v2818 = vld [vmem:[%s2801 + $0x80] sm:$0xff]
      %v2819 = vld [vmem:[%s2801 + $0x88] sm:$0xff]
      %v2820 = vld [vmem:[%s2801 + $0x90] sm:$0xff]
      %v2821 = vld [vmem:[%s2801 + $0x98] sm:$0xff]
      %s2822 = scalar_lea.vmem %s10, 1
      %v2823 = vld [vmem:[%s2822] sm:$0x1]
      %v2824 = vrot.slane %v2796, 6
      %v2825 = vrot.slane %v2797, 6
      %v2826 = vrot.slane %v2798, 6
      %v2827 = vrot.slane %v2799, 6
      %v2828 = vrot.slane %v2800, 6
      %v2829 = vsel %vm2552, %v2827, %v2828
      %v2830 = vsel %vm2552, %v2826, %v2827
      %v2831 = vsel %vm2552, %v2825, %v2826
      %v2832 = vsel %vm2552, %v2824, %v2825
      %v2833 = vsel %vm2552, %v2828, %v2824
      %v2834 = vsel %vm2568, %v2833, 0.0
      %v2835 = vsel %vm2569, %v2832, 0.0
      %v2836 = vsel %vm2570, %v2831, 0.0
      %v2837 = vsel %vm2571, %v2830, 0.0
      %v2838 = vsel %vm2572, %v2829, 0.0
      %v2839 = vrot.slane %v2796, 7
      %v2840 = vrot.slane %v2797, 7
      %v2841 = vrot.slane %v2798, 7
      %v2842 = vrot.slane %v2799, 7
      %v2843 = vrot.slane %v2800, 7
      %v2844 = vsel %vm1131, %v2842, %v2843
      %v2845 = vsel %vm1131, %v2841, %v2842
      %v2846 = vsel %vm1131, %v2840, %v2841
      %v2847 = vsel %vm1131, %v2839, %v2840
      %v2848 = vsel %vm1131, %v2843, %v2839
      %v2849 = vsel %vm1147, %v2848, 0.0
      %v2850 = vsel %vm1148, %v2847, 0.0
      %v2851 = vsel %vm1149, %v2846, 0.0
      %v2852 = vsel %vm1150, %v2845, 0.0
      %v2853 = vsel %vm1151, %v2844, 0.0
      %v2854 = vrot.slane %v2796, 1
      %v2855 = vrot.slane %v2797, 1
      %v2856 = vrot.slane %v2798, 1
      %v2857 = vrot.slane %v2799, 1
      %v2858 = vrot.slane %v2800, 1
      %v2859 = vsel %vm1162, %v2857, %v2858
      %v2860 = vsel %vm1162, %v2856, %v2857
      %v2861 = vsel %vm1162, %v2855, %v2856
      %v2862 = vsel %vm1162, %v2854, %v2855
      %v2863 = vsel %vm1162, %v2858, %v2854
      %v2864 = vsel %vm1178, %v2862, 0.0
      %v2865 = vsel %vm1179, %v2861, 0.0
      %v2866 = vsel %vm1180, %v2860, 0.0
      %v2867 = vsel %vm1181, %v2859, 0.0
      %v2868 = vsel %vm1182, %v2863, 0.0
      %v2869 = vrot.slane %v2796, 2
      %v2870 = vrot.slane %v2797, 2
      %v2871 = vrot.slane %v2798, 2
      %v2872 = vrot.slane %v2799, 2
      %v2873 = vrot.slane %v2800, 2
      %v2874 = vsel %vm2613, %v2872, %v2873
      %v2875 = vsel %vm2613, %v2871, %v2872
      %v2876 = vsel %vm2613, %v2870, %v2871
      %v2877 = vsel %vm2613, %v2869, %v2870
      %v2878 = vsel %vm2613, %v2873, %v2869
      %v2879 = vsel %vm2629, %v2877, 0.0
      %v2880 = vsel %vm2630, %v2876, 0.0
      %v2881 = vsel %vm2631, %v2875, 0.0
      %v2882 = vsel %vm2632, %v2874, 0.0
      %v2883 = vsel %vm2633, %v2878, 0.0
      %2889 = vrot.lane.b32.xlu0 %v2849, 32
      %v2890 = vpop.permute.xlu0 %2889
      %2891 = vrot.lane.b32.xlu0 %v2850, 32
      %v2892 = vpop.permute.xlu0 %2891
      %2893 = vrot.lane.b32.xlu0 %v2851, 32
      %v2894 = vpop.permute.xlu0 %2893
      %2895 = vrot.lane.b32.xlu0 %v2852, 32
      %v2896 = vpop.permute.xlu0 %2895
      %2897 = vrot.lane.b32.xlu0 %v2853, 32
      %v2898 = vpop.permute.xlu0 %2897
      %2909 = vrot.lane.b32.xlu0 %v2796, 64
      %v2910 = vpop.permute.xlu0 %2909
      %2911 = vrot.lane.b32.xlu0 %v2797, 64
      %v2912 = vpop.permute.xlu0 %2911
      %2913 = vrot.lane.b32.xlu0 %v2798, 64
      %v2914 = vpop.permute.xlu0 %2913
      %2915 = vrot.lane.b32.xlu0 %v2799, 64
      %v2916 = vpop.permute.xlu0 %2915
      %2917 = vrot.lane.b32.xlu0 %v2800, 64
      %v2918 = vpop.permute.xlu0 %2917
      %2929 = vrot.lane.b32.xlu0 %v2864, 96
      %v2930 = vpop.permute.xlu0 %2929
      %2931 = vrot.lane.b32.xlu0 %v2865, 96
      %v2932 = vpop.permute.xlu0 %2931
      %2933 = vrot.lane.b32.xlu0 %v2866, 96
      %v2934 = vpop.permute.xlu0 %2933
      %2935 = vrot.lane.b32.xlu0 %v2867, 96
      %v2936 = vpop.permute.xlu0 %2935
      %2937 = vrot.lane.b32.xlu0 %v2868, 96
      %v2938 = vpop.permute.xlu0 %2937
      %v2944 = vsel %vm471, %v2834, %v2890
      %v2945 = vsel %vm471, %v2835, %v2892
      %v2946 = vsel %vm471, %v2836, %v2894
      %v2947 = vsel %vm471, %v2837, %v2896
      %v2948 = vsel %vm471, %v2838, %v2898
      %v2949 = vsel %vm1233, %v2944, %v2910
      %v2950 = vsel %vm1233, %v2945, %v2912
      %v2951 = vsel %vm1233, %v2946, %v2914
      %v2952 = vsel %vm1233, %v2947, %v2916
      %v2953 = vsel %vm1233, %v2948, %v2918
      %v2954 = vsel %vm1240, %v2949, %v2930
      %v2955 = vsel %vm1240, %v2950, %v2932
      %v2956 = vsel %vm1240, %v2951, %v2934
      %v2957 = vsel %vm1240, %v2952, %v2936
      %v2958 = vsel %vm1240, %v2953, %v2938
      %v2960 = vperm.slane %v2823, 0
      %v2963 = vsel %vm471, %v2879, 0
      %v2966 = vsel %vm471, %v2880, 0
      %v2969 = vsel %vm471, %v2881, 0
      %v2972 = vsel %vm471, %v2882, 0
      %v2975 = vsel %vm471, %v2883, 0
      %2977 = vmatpush.msra.mxu0 %v2817
      %2978 = vmatpush.msra.mxu0 %v2816
      %2979 = vmatpush.msra.mxu0 %v2815
      %2980 = vmatpush.msra.mxu0 %v2814
      %2981 = vmatpush.msra.mxu0 %v2813
      %2982 = vmatpush.msra.mxu0 %v2812
      %2983 = vmatpush.msra.mxu0 %v2811
      %2984 = vmatpush.msra.mxu0 %v2810
      %2985 = vmatpush.msra.mxu0 %v2809
      %2986 = vmatpush.msra.mxu0 %v2808
      %2987 = vmatpush.msra.mxu0 %v2807
      %2988 = vmatpush.msra.mxu0 %v2806
      %2989 = vmatpush.msra.mxu0 %v2805
      %2990 = vmatpush.msra.mxu0 %v2804
      %2991 = vmatpush.msra.mxu0 %v2803
      %2992 = vmatpush.msra.mxu0 %v2802
      %2993 = vmatmul.f32.gmra.mxu0 %v2954
      %v2994 = vpop.f32.mrf.mxu0
      %v2995 = vadd.f32 %v2960, %v2994
      %2996 = vmatmul.f32.gmra.mxu0 %v2955
      %v2997 = vpop.f32.mrf.mxu0
      %v2998 = vadd.f32 %v2960, %v2997
      %2999 = vmatmul.f32.gmra.mxu0 %v2956
      %v3000 = vpop.f32.mrf.mxu0
      %v3001 = vadd.f32 %v2960, %v3000
      %3002 = vmatmul.f32.gmra.mxu0 %v2957
      %v3003 = vpop.f32.mrf.mxu0
      %v3004 = vadd.f32 %v2960, %v3003
      %3005 = vmatmul.f32.gmra.mxu0 %v2958
      %v3006 = vpop.f32.mrf.mxu0
      %v3007 = vadd.f32 %v2960, %v3006
      %3008 = vdwg.mxu0
      %3009 = vmatpush.msra.mxu0 0.0
      %3010 = vmatpush.msra.mxu0 0.0
      %3011 = vmatpush.msra.mxu0 0.0
      %3012 = vmatpush.msra.mxu0 0.0
      %3013 = vmatpush.msra.mxu0 0.0
      %3014 = vmatpush.msra.mxu0 0.0
      %3015 = vmatpush.msra.mxu0 0.0
      %3016 = vmatpush.msra.mxu0 0.0
      %3017 = vmatpush.msra.mxu0 0.0
      %3018 = vmatpush.msra.mxu0 0.0
      %3019 = vmatpush.msra.mxu0 0.0
      %3020 = vmatpush.msra.mxu0 0.0
      %3021 = vmatpush.msra.mxu0 %v2821
      %3022 = vmatpush.msra.mxu0 %v2820
      %3023 = vmatpush.msra.mxu0 %v2819
      %3024 = vmatpush.msra.mxu0 %v2818
      %3025 = vmatmul.f32.gmra.mxu0 %v2963
      %v3026 = vpop.f32.mrf.mxu0
      %v3027 = vadd.f32 %v2995, %v3026
      %3028 = vmatmul.f32.gmra.mxu0 %v2966
      %v3029 = vpop.f32.mrf.mxu0
      %v3030 = vadd.f32 %v2998, %v3029
      %3031 = vmatmul.f32.gmra.mxu0 %v2969
      %v3032 = vpop.f32.mrf.mxu0
      %v3033 = vadd.f32 %v3001, %v3032
      %3034 = vmatmul.f32.gmra.mxu0 %v2972
      %v3035 = vpop.f32.mrf.mxu0
      %v3036 = vadd.f32 %v3004, %v3035
      %3037 = vmatmul.f32.gmra.mxu0 %v2975
      %v3038 = vpop.f32.mrf.mxu0
      %v3039 = vadd.f32 %v3007, %v3038
      %3040 = vdwg.mxu0
      %v3041 = vtanh.pop %v3027
      %v3042 = vtanh.pop %v3030
      %v3043 = vtanh.pop %v3033
      %v3044 = vtanh.pop %v3036
      %v3045 = vtanh.pop %v3039
      %s3046 = scalar_lea.vmem %s9, 320
      %v3047 = vld [vmem:[%s3046] sm:$0xff]
      %v3048 = vld [vmem:[%s3046 + $0x8] sm:$0xff]
      %v3049 = vld [vmem:[%s3046 + $0x10] sm:$0xff]
      %v3050 = vld [vmem:[%s3046 + $0x18] sm:$0xff]
      %v3051 = vld [vmem:[%s3046 + $0x20] sm:$0xff]
      %v3052 = vld [vmem:[%s3046 + $0x28] sm:$0xff]
      %v3053 = vld [vmem:[%s3046 + $0x30] sm:$0xff]
      %v3054 = vld [vmem:[%s3046 + $0x38] sm:$0xff]
      %v3055 = vld [vmem:[%s3046 + $0x40] sm:$0xff]
      %v3056 = vld [vmem:[%s3046 + $0x48] sm:$0xff]
      %v3057 = vld [vmem:[%s3046 + $0x50] sm:$0xff]
      %v3058 = vld [vmem:[%s3046 + $0x58] sm:$0xff]
      %v3059 = vld [vmem:[%s3046 + $0x60] sm:$0xff]
      %v3060 = vld [vmem:[%s3046 + $0x68] sm:$0xff]
      %v3061 = vld [vmem:[%s3046 + $0x70] sm:$0xff]
      %v3062 = vld [vmem:[%s3046 + $0x78] sm:$0xff]
      %v3063 = vld [vmem:[%s3046 + $0x80] sm:$0xff]
      %v3064 = vld [vmem:[%s3046 + $0x88] sm:$0xff]
      %v3065 = vld [vmem:[%s3046 + $0x90] sm:$0xff]
      %v3066 = vld [vmem:[%s3046 + $0x98] sm:$0xff]
      %s3067 = scalar_lea.vmem %s10, 2
      %v3068 = vld [vmem:[%s3067] sm:$0x1]
      %v3069 = vrot.slane %v3041, 6
      %v3070 = vrot.slane %v3042, 6
      %v3071 = vrot.slane %v3043, 6
      %v3072 = vrot.slane %v3044, 6
      %v3073 = vrot.slane %v3045, 6
      %v3074 = vsel %vm2552, %v3072, %v3073
      %v3075 = vsel %vm2552, %v3071, %v3072
      %v3076 = vsel %vm2552, %v3070, %v3071
      %v3077 = vsel %vm2552, %v3069, %v3070
      %v3078 = vsel %vm2552, %v3073, %v3069
      %v3079 = vsel %vm2568, %v3078, 0.0
      %v3080 = vsel %vm2569, %v3077, 0.0
      %v3081 = vsel %vm2570, %v3076, 0.0
      %v3082 = vsel %vm2571, %v3075, 0.0
      %v3083 = vsel %vm2572, %v3074, 0.0
      %v3084 = vrot.slane %v3041, 7
      %v3085 = vrot.slane %v3042, 7
      %v3086 = vrot.slane %v3043, 7
      %v3087 = vrot.slane %v3044, 7
      %v3088 = vrot.slane %v3045, 7
      %v3089 = vsel %vm1131, %v3087, %v3088
      %v3090 = vsel %vm1131, %v3086, %v3087
      %v3091 = vsel %vm1131, %v3085, %v3086
      %v3092 = vsel %vm1131, %v3084, %v3085
      %v3093 = vsel %vm1131, %v3088, %v3084
      %v3094 = vsel %vm1147, %v3093, 0.0
      %v3095 = vsel %vm1148, %v3092, 0.0
      %v3096 = vsel %vm1149, %v3091, 0.0
      %v3097 = vsel %vm1150, %v3090, 0.0
      %v3098 = vsel %vm1151, %v3089, 0.0
      %v3099 = vrot.slane %v3041, 1
      %v3100 = vrot.slane %v3042, 1
      %v3101 = vrot.slane %v3043, 1
      %v3102 = vrot.slane %v3044, 1
      %v3103 = vrot.slane %v3045, 1
      %v3104 = vsel %vm1162, %v3102, %v3103
      %v3105 = vsel %vm1162, %v3101, %v3102
      %v3106 = vsel %vm1162, %v3100, %v3101
      %v3107 = vsel %vm1162, %v3099, %v3100
      %v3108 = vsel %vm1162, %v3103, %v3099
      %v3109 = vsel %vm1178, %v3107, 0.0
      %v3110 = vsel %vm1179, %v3106, 0.0
      %v3111 = vsel %vm1180, %v3105, 0.0
      %v3112 = vsel %vm1181, %v3104, 0.0
      %v3113 = vsel %vm1182, %v3108, 0.0
      %v3114 = vrot.slane %v3041, 2
      %v3115 = vrot.slane %v3042, 2
      %v3116 = vrot.slane %v3043, 2
      %v3117 = vrot.slane %v3044, 2
      %v3118 = vrot.slane %v3045, 2
      %v3119 = vsel %vm2613, %v3117, %v3118
      %v3120 = vsel %vm2613, %v3116, %v3117
      %v3121 = vsel %vm2613, %v3115, %v3116
      %v3122 = vsel %vm2613, %v3114, %v3115
      %v3123 = vsel %vm2613, %v3118, %v3114
      %v3124 = vsel %vm2629, %v3122, 0.0
      %v3125 = vsel %vm2630, %v3121, 0.0
      %v3126 = vsel %vm2631, %v3120, 0.0
      %v3127 = vsel %vm2632, %v3119, 0.0
      %v3128 = vsel %vm2633, %v3123, 0.0
      %3134 = vrot.lane.b32.xlu0 %v3094, 32
      %v3135 = vpop.permute.xlu0 %3134
      %3136 = vrot.lane.b32.xlu0 %v3095, 32
      %v3137 = vpop.permute.xlu0 %3136
      %3138 = vrot.lane.b32.xlu0 %v3096, 32
      %v3139 = vpop.permute.xlu0 %3138
      %3140 = vrot.lane.b32.xlu0 %v3097, 32
      %v3141 = vpop.permute.xlu0 %3140
      %3142 = vrot.lane.b32.xlu0 %v3098, 32
      %v3143 = vpop.permute.xlu0 %3142
      %3154 = vrot.lane.b32.xlu0 %v3041, 64
      %v3155 = vpop.permute.xlu0 %3154
      %3156 = vrot.lane.b32.xlu0 %v3042, 64
      %v3157 = vpop.permute.xlu0 %3156
      %3158 = vrot.lane.b32.xlu0 %v3043, 64
      %v3159 = vpop.permute.xlu0 %3158
      %3160 = vrot.lane.b32.xlu0 %v3044, 64
      %v3161 = vpop.permute.xlu0 %3160
      %3162 = vrot.lane.b32.xlu0 %v3045, 64
      %v3163 = vpop.permute.xlu0 %3162
      %3174 = vrot.lane.b32.xlu0 %v3109, 96
      %v3175 = vpop.permute.xlu0 %3174
      %3176 = vrot.lane.b32.xlu0 %v3110, 96
      %v3177 = vpop.permute.xlu0 %3176
      %3178 = vrot.lane.b32.xlu0 %v3111, 96
      %v3179 = vpop.permute.xlu0 %3178
      %3180 = vrot.lane.b32.xlu0 %v3112, 96
      %v3181 = vpop.permute.xlu0 %3180
      %3182 = vrot.lane.b32.xlu0 %v3113, 96
      %v3183 = vpop.permute.xlu0 %3182
      %v3189 = vsel %vm471, %v3079, %v3135
      %v3190 = vsel %vm471, %v3080, %v3137
      %v3191 = vsel %vm471, %v3081, %v3139
      %v3192 = vsel %vm471, %v3082, %v3141
      %v3193 = vsel %vm471, %v3083, %v3143
      %v3194 = vsel %vm1233, %v3189, %v3155
      %v3195 = vsel %vm1233, %v3190, %v3157
      %v3196 = vsel %vm1233, %v3191, %v3159
      %v3197 = vsel %vm1233, %v3192, %v3161
      %v3198 = vsel %vm1233, %v3193, %v3163
      %v3199 = vsel %vm1240, %v3194, %v3175
      %v3200 = vsel %vm1240, %v3195, %v3177
      %v3201 = vsel %vm1240, %v3196, %v3179
      %v3202 = vsel %vm1240, %v3197, %v3181
      %v3203 = vsel %vm1240, %v3198, %v3183
      %v3205 = vperm.slane %v3068, 0
      %v3208 = vsel %vm471, %v3124, 0
      %v3211 = vsel %vm471, %v3125, 0
      %v3214 = vsel %vm471, %v3126, 0
      %v3217 = vsel %vm471, %v3127, 0
      %v3220 = vsel %vm471, %v3128, 0
      %3222 = vmatpush.msra.mxu0 %v3062
      %3223 = vmatpush.msra.mxu0 %v3061
      %3224 = vmatpush.msra.mxu0 %v3060
      %3225 = vmatpush.msra.mxu0 %v3059
      %3226 = vmatpush.msra.mxu0 %v3058
      %3227 = vmatpush.msra.mxu0 %v3057
      %3228 = vmatpush.msra.mxu0 %v3056
      %3229 = vmatpush.msra.mxu0 %v3055
      %3230 = vmatpush.msra.mxu0 %v3054
      %3231 = vmatpush.msra.mxu0 %v3053
      %3232 = vmatpush.msra.mxu0 %v3052
      %3233 = vmatpush.msra.mxu0 %v3051
      %3234 = vmatpush.msra.mxu0 %v3050
      %3235 = vmatpush.msra.mxu0 %v3049
      %3236 = vmatpush.msra.mxu0 %v3048
      %3237 = vmatpush.msra.mxu0 %v3047
      %3238 = vmatmul.f32.gmra.mxu0 %v3199
      %v3239 = vpop.f32.mrf.mxu0
      %v3240 = vadd.f32 %v3205, %v3239
      %3241 = vmatmul.f32.gmra.mxu0 %v3200
      %v3242 = vpop.f32.mrf.mxu0
      %v3243 = vadd.f32 %v3205, %v3242
      %3244 = vmatmul.f32.gmra.mxu0 %v3201
      %v3245 = vpop.f32.mrf.mxu0
      %v3246 = vadd.f32 %v3205, %v3245
      %3247 = vmatmul.f32.gmra.mxu0 %v3202
      %v3248 = vpop.f32.mrf.mxu0
      %v3249 = vadd.f32 %v3205, %v3248
      %3250 = vmatmul.f32.gmra.mxu0 %v3203
      %v3251 = vpop.f32.mrf.mxu0
      %v3252 = vadd.f32 %v3205, %v3251
      %3253 = vdwg.mxu0
      %3254 = vmatpush.msra.mxu0 0.0
      %3255 = vmatpush.msra.mxu0 0.0
      %3256 = vmatpush.msra.mxu0 0.0
      %3257 = vmatpush.msra.mxu0 0.0
      %3258 = vmatpush.msra.mxu0 0.0
      %3259 = vmatpush.msra.mxu0 0.0
      %3260 = vmatpush.msra.mxu0 0.0
      %3261 = vmatpush.msra.mxu0 0.0
      %3262 = vmatpush.msra.mxu0 0.0
      %3263 = vmatpush.msra.mxu0 0.0
      %3264 = vmatpush.msra.mxu0 0.0
      %3265 = vmatpush.msra.mxu0 0.0
      %3266 = vmatpush.msra.mxu0 %v3066
      %3267 = vmatpush.msra.mxu0 %v3065
      %3268 = vmatpush.msra.mxu0 %v3064
      %3269 = vmatpush.msra.mxu0 %v3063
      %3270 = vmatmul.f32.gmra.mxu0 %v3208
      %v3271 = vpop.f32.mrf.mxu0
      %v3272 = vadd.f32 %v3240, %v3271
      %3273 = vmatmul.f32.gmra.mxu0 %v3211
      %v3274 = vpop.f32.mrf.mxu0
      %v3275 = vadd.f32 %v3243, %v3274
      %3276 = vmatmul.f32.gmra.mxu0 %v3214
      %v3277 = vpop.f32.mrf.mxu0
      %v3278 = vadd.f32 %v3246, %v3277
      %3279 = vmatmul.f32.gmra.mxu0 %v3217
      %v3280 = vpop.f32.mrf.mxu0
      %v3281 = vadd.f32 %v3249, %v3280
      %3282 = vmatmul.f32.gmra.mxu0 %v3220
      %v3283 = vpop.f32.mrf.mxu0
      %v3284 = vadd.f32 %v3252, %v3283
      %3285 = vdwg.mxu0
      %v3286 = vtanh.pop %v3272
      %v3287 = vtanh.pop %v3275
      %v3288 = vtanh.pop %v3278
      %v3289 = vtanh.pop %v3281
      %v3290 = vtanh.pop %v3284
      %s3291 = scalar_lea.vmem %s9, 480
      %v3292 = vld [vmem:[%s3291] sm:$0xff]
      %v3293 = vld [vmem:[%s3291 + $0x8] sm:$0xff]
      %v3294 = vld [vmem:[%s3291 + $0x10] sm:$0xff]
      %v3295 = vld [vmem:[%s3291 + $0x18] sm:$0xff]
      %v3296 = vld [vmem:[%s3291 + $0x20] sm:$0xff]
      %v3297 = vld [vmem:[%s3291 + $0x28] sm:$0xff]
      %v3298 = vld [vmem:[%s3291 + $0x30] sm:$0xff]
      %v3299 = vld [vmem:[%s3291 + $0x38] sm:$0xff]
      %v3300 = vld [vmem:[%s3291 + $0x40] sm:$0xff]
      %v3301 = vld [vmem:[%s3291 + $0x48] sm:$0xff]
      %v3302 = vld [vmem:[%s3291 + $0x50] sm:$0xff]
      %v3303 = vld [vmem:[%s3291 + $0x58] sm:$0xff]
      %v3304 = vld [vmem:[%s3291 + $0x60] sm:$0xff]
      %v3305 = vld [vmem:[%s3291 + $0x68] sm:$0xff]
      %v3306 = vld [vmem:[%s3291 + $0x70] sm:$0xff]
      %v3307 = vld [vmem:[%s3291 + $0x78] sm:$0xff]
      %v3308 = vld [vmem:[%s3291 + $0x80] sm:$0xff]
      %v3309 = vld [vmem:[%s3291 + $0x88] sm:$0xff]
      %v3310 = vld [vmem:[%s3291 + $0x90] sm:$0xff]
      %v3311 = vld [vmem:[%s3291 + $0x98] sm:$0xff]
      %s3312 = scalar_lea.vmem %s10, 3
      %v3313 = vld [vmem:[%s3312] sm:$0x1]
      %v3314 = vrot.slane %v3286, 6
      %v3315 = vrot.slane %v3287, 6
      %v3316 = vrot.slane %v3288, 6
      %v3317 = vrot.slane %v3289, 6
      %v3318 = vrot.slane %v3290, 6
      %v3319 = vsel %vm2552, %v3317, %v3318
      %v3320 = vsel %vm2552, %v3316, %v3317
      %v3321 = vsel %vm2552, %v3315, %v3316
      %v3322 = vsel %vm2552, %v3314, %v3315
      %v3323 = vsel %vm2552, %v3318, %v3314
      %v3324 = vsel %vm2568, %v3323, 0.0
      %v3325 = vsel %vm2569, %v3322, 0.0
      %v3326 = vsel %vm2570, %v3321, 0.0
      %v3327 = vsel %vm2571, %v3320, 0.0
      %v3328 = vsel %vm2572, %v3319, 0.0
      %v3329 = vrot.slane %v3286, 7
      %v3330 = vrot.slane %v3287, 7
      %v3331 = vrot.slane %v3288, 7
      %v3332 = vrot.slane %v3289, 7
      %v3333 = vrot.slane %v3290, 7
      %v3334 = vsel %vm1131, %v3332, %v3333
      %v3335 = vsel %vm1131, %v3331, %v3332
      %v3336 = vsel %vm1131, %v3330, %v3331
      %v3337 = vsel %vm1131, %v3329, %v3330
      %v3338 = vsel %vm1131, %v3333, %v3329
      %v3339 = vsel %vm1147, %v3338, 0.0
      %v3340 = vsel %vm1148, %v3337, 0.0
      %v3341 = vsel %vm1149, %v3336, 0.0
      %v3342 = vsel %vm1150, %v3335, 0.0
      %v3343 = vsel %vm1151, %v3334, 0.0
      %v3344 = vrot.slane %v3286, 1
      %v3345 = vrot.slane %v3287, 1
      %v3346 = vrot.slane %v3288, 1
      %v3347 = vrot.slane %v3289, 1
      %v3348 = vrot.slane %v3290, 1
      %v3349 = vsel %vm1162, %v3347, %v3348
      %v3350 = vsel %vm1162, %v3346, %v3347
      %v3351 = vsel %vm1162, %v3345, %v3346
      %v3352 = vsel %vm1162, %v3344, %v3345
      %v3353 = vsel %vm1162, %v3348, %v3344
      %v3354 = vsel %vm1178, %v3352, 0.0
      %v3355 = vsel %vm1179, %v3351, 0.0
      %v3356 = vsel %vm1180, %v3350, 0.0
      %v3357 = vsel %vm1181, %v3349, 0.0
      %v3358 = vsel %vm1182, %v3353, 0.0
      %v3359 = vrot.slane %v3286, 2
      %v3360 = vrot.slane %v3287, 2
      %v3361 = vrot.slane %v3288, 2
      %v3362 = vrot.slane %v3289, 2
      %v3363 = vrot.slane %v3290, 2
      %v3364 = vsel %vm2613, %v3362, %v3363
      %v3365 = vsel %vm2613, %v3361, %v3362
      %v3366 = vsel %vm2613, %v3360, %v3361
      %v3367 = vsel %vm2613, %v3359, %v3360
      %v3368 = vsel %vm2613, %v3363, %v3359
      %v3369 = vsel %vm2629, %v3367, 0.0
      %v3370 = vsel %vm2630, %v3366, 0.0
      %v3371 = vsel %vm2631, %v3365, 0.0
      %v3372 = vsel %vm2632, %v3364, 0.0
      %v3373 = vsel %vm2633, %v3368, 0.0
      %3379 = vrot.lane.b32.xlu0 %v3339, 32
      %v3380 = vpop.permute.xlu0 %3379
      %3381 = vrot.lane.b32.xlu0 %v3340, 32
      %v3382 = vpop.permute.xlu0 %3381
      %3383 = vrot.lane.b32.xlu0 %v3341, 32
      %v3384 = vpop.permute.xlu0 %3383
      %3385 = vrot.lane.b32.xlu0 %v3342, 32
      %v3386 = vpop.permute.xlu0 %3385
      %3387 = vrot.lane.b32.xlu0 %v3343, 32
      %v3388 = vpop.permute.xlu0 %3387
      %3399 = vrot.lane.b32.xlu0 %v3286, 64
      %v3400 = vpop.permute.xlu0 %3399
      %3401 = vrot.lane.b32.xlu0 %v3287, 64
      %v3402 = vpop.permute.xlu0 %3401
      %3403 = vrot.lane.b32.xlu0 %v3288, 64
      %v3404 = vpop.permute.xlu0 %3403
      %3405 = vrot.lane.b32.xlu0 %v3289, 64
      %v3406 = vpop.permute.xlu0 %3405
      %3407 = vrot.lane.b32.xlu0 %v3290, 64
      %v3408 = vpop.permute.xlu0 %3407
      %3419 = vrot.lane.b32.xlu0 %v3354, 96
      %v3420 = vpop.permute.xlu0 %3419
      %3421 = vrot.lane.b32.xlu0 %v3355, 96
      %v3422 = vpop.permute.xlu0 %3421
      %3423 = vrot.lane.b32.xlu0 %v3356, 96
      %v3424 = vpop.permute.xlu0 %3423
      %3425 = vrot.lane.b32.xlu0 %v3357, 96
      %v3426 = vpop.permute.xlu0 %3425
      %3427 = vrot.lane.b32.xlu0 %v3358, 96
      %v3428 = vpop.permute.xlu0 %3427
      %v3434 = vsel %vm471, %v3324, %v3380
      %v3435 = vsel %vm471, %v3325, %v3382
      %v3436 = vsel %vm471, %v3326, %v3384
      %v3437 = vsel %vm471, %v3327, %v3386
      %v3438 = vsel %vm471, %v3328, %v3388
      %v3439 = vsel %vm1233, %v3434, %v3400
      %v3440 = vsel %vm1233, %v3435, %v3402
      %v3441 = vsel %vm1233, %v3436, %v3404
      %v3442 = vsel %vm1233, %v3437, %v3406
      %v3443 = vsel %vm1233, %v3438, %v3408
      %v3444 = vsel %vm1240, %v3439, %v3420
      %v3445 = vsel %vm1240, %v3440, %v3422
      %v3446 = vsel %vm1240, %v3441, %v3424
      %v3447 = vsel %vm1240, %v3442, %v3426
      %v3448 = vsel %vm1240, %v3443, %v3428
      %v3450 = vperm.slane %v3313, 0
      %v3453 = vsel %vm471, %v3369, 0
      %v3456 = vsel %vm471, %v3370, 0
      %v3459 = vsel %vm471, %v3371, 0
      %v3462 = vsel %vm471, %v3372, 0
      %v3465 = vsel %vm471, %v3373, 0
      %3467 = vmatpush.msra.mxu0 %v3307
      %3468 = vmatpush.msra.mxu0 %v3306
      %3469 = vmatpush.msra.mxu0 %v3305
      %3470 = vmatpush.msra.mxu0 %v3304
      %3471 = vmatpush.msra.mxu0 %v3303
      %3472 = vmatpush.msra.mxu0 %v3302
      %3473 = vmatpush.msra.mxu0 %v3301
      %3474 = vmatpush.msra.mxu0 %v3300
      %3475 = vmatpush.msra.mxu0 %v3299
      %3476 = vmatpush.msra.mxu0 %v3298
      %3477 = vmatpush.msra.mxu0 %v3297
      %3478 = vmatpush.msra.mxu0 %v3296
      %3479 = vmatpush.msra.mxu0 %v3295
      %3480 = vmatpush.msra.mxu0 %v3294
      %3481 = vmatpush.msra.mxu0 %v3293
      %3482 = vmatpush.msra.mxu0 %v3292
      %3483 = vmatmul.f32.gmra.mxu0 %v3444
      %v3484 = vpop.f32.mrf.mxu0
      %v3485 = vadd.f32 %v3450, %v3484
      %3486 = vmatmul.f32.gmra.mxu0 %v3445
      %v3487 = vpop.f32.mrf.mxu0
      %v3488 = vadd.f32 %v3450, %v3487
      %3489 = vmatmul.f32.gmra.mxu0 %v3446
      %v3490 = vpop.f32.mrf.mxu0
      %v3491 = vadd.f32 %v3450, %v3490
      %3492 = vmatmul.f32.gmra.mxu0 %v3447
      %v3493 = vpop.f32.mrf.mxu0
      %v3494 = vadd.f32 %v3450, %v3493
      %3495 = vmatmul.f32.gmra.mxu0 %v3448
      %v3496 = vpop.f32.mrf.mxu0
      %v3497 = vadd.f32 %v3450, %v3496
      %3498 = vdwg.mxu0
      %3499 = vmatpush.msra.mxu0 0.0
      %3500 = vmatpush.msra.mxu0 0.0
      %3501 = vmatpush.msra.mxu0 0.0
      %3502 = vmatpush.msra.mxu0 0.0
      %3503 = vmatpush.msra.mxu0 0.0
      %3504 = vmatpush.msra.mxu0 0.0
      %3505 = vmatpush.msra.mxu0 0.0
      %3506 = vmatpush.msra.mxu0 0.0
      %3507 = vmatpush.msra.mxu0 0.0
      %3508 = vmatpush.msra.mxu0 0.0
      %3509 = vmatpush.msra.mxu0 0.0
      %3510 = vmatpush.msra.mxu0 0.0
      %3511 = vmatpush.msra.mxu0 %v3311
      %3512 = vmatpush.msra.mxu0 %v3310
      %3513 = vmatpush.msra.mxu0 %v3309
      %3514 = vmatpush.msra.mxu0 %v3308
      %3515 = vmatmul.f32.gmra.mxu0 %v3453
      %v3516 = vpop.f32.mrf.mxu0
      %v3517 = vadd.f32 %v3485, %v3516
      %3518 = vmatmul.f32.gmra.mxu0 %v3456
      %v3519 = vpop.f32.mrf.mxu0
      %v3520 = vadd.f32 %v3488, %v3519
      %3521 = vmatmul.f32.gmra.mxu0 %v3459
      %v3522 = vpop.f32.mrf.mxu0
      %v3523 = vadd.f32 %v3491, %v3522
      %3524 = vmatmul.f32.gmra.mxu0 %v3462
      %v3525 = vpop.f32.mrf.mxu0
      %v3526 = vadd.f32 %v3494, %v3525
      %3527 = vmatmul.f32.gmra.mxu0 %v3465
      %v3528 = vpop.f32.mrf.mxu0
      %v3529 = vadd.f32 %v3497, %v3528
      %3530 = vdwg.mxu0
      %v3531 = vtanh.pop %v3517
      %v3532 = vtanh.pop %v3520
      %v3533 = vtanh.pop %v3523
      %v3534 = vtanh.pop %v3526
      %v3535 = vtanh.pop %v3529
      %s3536 = scalar_lea.vmem %s9, 640
      %v3537 = vld [vmem:[%s3536] sm:$0xff]
      %v3538 = vld [vmem:[%s3536 + $0x8] sm:$0xff]
      %v3539 = vld [vmem:[%s3536 + $0x10] sm:$0xff]
      %v3540 = vld [vmem:[%s3536 + $0x18] sm:$0xff]
      %v3541 = vld [vmem:[%s3536 + $0x20] sm:$0xff]
      %v3542 = vld [vmem:[%s3536 + $0x28] sm:$0xff]
      %v3543 = vld [vmem:[%s3536 + $0x30] sm:$0xff]
      %v3544 = vld [vmem:[%s3536 + $0x38] sm:$0xff]
      %v3545 = vld [vmem:[%s3536 + $0x40] sm:$0xff]
      %v3546 = vld [vmem:[%s3536 + $0x48] sm:$0xff]
      %v3547 = vld [vmem:[%s3536 + $0x50] sm:$0xff]
      %v3548 = vld [vmem:[%s3536 + $0x58] sm:$0xff]
      %v3549 = vld [vmem:[%s3536 + $0x60] sm:$0xff]
      %v3550 = vld [vmem:[%s3536 + $0x68] sm:$0xff]
      %v3551 = vld [vmem:[%s3536 + $0x70] sm:$0xff]
      %v3552 = vld [vmem:[%s3536 + $0x78] sm:$0xff]
      %v3553 = vld [vmem:[%s3536 + $0x80] sm:$0xff]
      %v3554 = vld [vmem:[%s3536 + $0x88] sm:$0xff]
      %v3555 = vld [vmem:[%s3536 + $0x90] sm:$0xff]
      %v3556 = vld [vmem:[%s3536 + $0x98] sm:$0xff]
      %s3557 = scalar_lea.vmem %s10, 4
      %v3558 = vld [vmem:[%s3557] sm:$0x1]
      %v3559 = vrot.slane %v3531, 6
      %v3560 = vrot.slane %v3532, 6
      %v3561 = vrot.slane %v3533, 6
      %v3562 = vrot.slane %v3534, 6
      %v3563 = vrot.slane %v3535, 6
      %v3564 = vsel %vm2552, %v3562, %v3563
      %v3565 = vsel %vm2552, %v3561, %v3562
      %v3566 = vsel %vm2552, %v3560, %v3561
      %v3567 = vsel %vm2552, %v3559, %v3560
      %v3568 = vsel %vm2552, %v3563, %v3559
      %v3569 = vsel %vm2568, %v3568, 0.0
      %v3570 = vsel %vm2569, %v3567, 0.0
      %v3571 = vsel %vm2570, %v3566, 0.0
      %v3572 = vsel %vm2571, %v3565, 0.0
      %v3573 = vsel %vm2572, %v3564, 0.0
      %v3574 = vrot.slane %v3531, 7
      %v3575 = vrot.slane %v3532, 7
      %v3576 = vrot.slane %v3533, 7
      %v3577 = vrot.slane %v3534, 7
      %v3578 = vrot.slane %v3535, 7
      %v3579 = vsel %vm1131, %v3577, %v3578
      %v3580 = vsel %vm1131, %v3576, %v3577
      %v3581 = vsel %vm1131, %v3575, %v3576
      %v3582 = vsel %vm1131, %v3574, %v3575
      %v3583 = vsel %vm1131, %v3578, %v3574
      %v3584 = vsel %vm1147, %v3583, 0.0
      %v3585 = vsel %vm1148, %v3582, 0.0
      %v3586 = vsel %vm1149, %v3581, 0.0
      %v3587 = vsel %vm1150, %v3580, 0.0
      %v3588 = vsel %vm1151, %v3579, 0.0
      %v3589 = vrot.slane %v3531, 1
      %v3590 = vrot.slane %v3532, 1
      %v3591 = vrot.slane %v3533, 1
      %v3592 = vrot.slane %v3534, 1
      %v3593 = vrot.slane %v3535, 1
      %v3594 = vsel %vm1162, %v3592, %v3593
      %v3595 = vsel %vm1162, %v3591, %v3592
      %v3596 = vsel %vm1162, %v3590, %v3591
      %v3597 = vsel %vm1162, %v3589, %v3590
      %v3598 = vsel %vm1162, %v3593, %v3589
      %v3599 = vsel %vm1178, %v3597, 0.0
      %v3600 = vsel %vm1179, %v3596, 0.0
      %v3601 = vsel %vm1180, %v3595, 0.0
      %v3602 = vsel %vm1181, %v3594, 0.0
      %v3603 = vsel %vm1182, %v3598, 0.0
      %v3604 = vrot.slane %v3531, 2
      %v3605 = vrot.slane %v3532, 2
      %v3606 = vrot.slane %v3533, 2
      %v3607 = vrot.slane %v3534, 2
      %v3608 = vrot.slane %v3535, 2
      %v3609 = vsel %vm2613, %v3607, %v3608
      %v3610 = vsel %vm2613, %v3606, %v3607
      %v3611 = vsel %vm2613, %v3605, %v3606
      %v3612 = vsel %vm2613, %v3604, %v3605
      %v3613 = vsel %vm2613, %v3608, %v3604
      %v3614 = vsel %vm2629, %v3612, 0.0
      %v3615 = vsel %vm2630, %v3611, 0.0
      %v3616 = vsel %vm2631, %v3610, 0.0
      %v3617 = vsel %vm2632, %v3609, 0.0
      %v3618 = vsel %vm2633, %v3613, 0.0
      %3624 = vrot.lane.b32.xlu0 %v3584, 32
      %v3625 = vpop.permute.xlu0 %3624
      %3626 = vrot.lane.b32.xlu0 %v3585, 32
      %v3627 = vpop.permute.xlu0 %3626
      %3628 = vrot.lane.b32.xlu0 %v3586, 32
      %v3629 = vpop.permute.xlu0 %3628
      %3630 = vrot.lane.b32.xlu0 %v3587, 32
      %v3631 = vpop.permute.xlu0 %3630
      %3632 = vrot.lane.b32.xlu0 %v3588, 32
      %v3633 = vpop.permute.xlu0 %3632
      %3644 = vrot.lane.b32.xlu0 %v3531, 64
      %v3645 = vpop.permute.xlu0 %3644
      %3646 = vrot.lane.b32.xlu0 %v3532, 64
      %v3647 = vpop.permute.xlu0 %3646
      %3648 = vrot.lane.b32.xlu0 %v3533, 64
      %v3649 = vpop.permute.xlu0 %3648
      %3650 = vrot.lane.b32.xlu0 %v3534, 64
      %v3651 = vpop.permute.xlu0 %3650
      %3652 = vrot.lane.b32.xlu0 %v3535, 64
      %v3653 = vpop.permute.xlu0 %3652
      %3664 = vrot.lane.b32.xlu0 %v3599, 96
      %v3665 = vpop.permute.xlu0 %3664
      %3666 = vrot.lane.b32.xlu0 %v3600, 96
      %v3667 = vpop.permute.xlu0 %3666
      %3668 = vrot.lane.b32.xlu0 %v3601, 96
      %v3669 = vpop.permute.xlu0 %3668
      %3670 = vrot.lane.b32.xlu0 %v3602, 96
      %v3671 = vpop.permute.xlu0 %3670
      %3672 = vrot.lane.b32.xlu0 %v3603, 96
      %v3673 = vpop.permute.xlu0 %3672
      %v3679 = vsel %vm471, %v3569, %v3625
      %v3680 = vsel %vm471, %v3570, %v3627
      %v3681 = vsel %vm471, %v3571, %v3629
      %v3682 = vsel %vm471, %v3572, %v3631
      %v3683 = vsel %vm471, %v3573, %v3633
      %v3684 = vsel %vm1233, %v3679, %v3645
      %v3685 = vsel %vm1233, %v3680, %v3647
      %v3686 = vsel %vm1233, %v3681, %v3649
      %v3687 = vsel %vm1233, %v3682, %v3651
      %v3688 = vsel %vm1233, %v3683, %v3653
      %v3689 = vsel %vm1240, %v3684, %v3665
      %v3690 = vsel %vm1240, %v3685, %v3667
      %v3691 = vsel %vm1240, %v3686, %v3669
      %v3692 = vsel %vm1240, %v3687, %v3671
      %v3693 = vsel %vm1240, %v3688, %v3673
      %v3695 = vperm.slane %v3558, 0
      %v3698 = vsel %vm471, %v3614, 0
      %v3701 = vsel %vm471, %v3615, 0
      %v3704 = vsel %vm471, %v3616, 0
      %v3707 = vsel %vm471, %v3617, 0
      %v3710 = vsel %vm471, %v3618, 0
      %3712 = vmatpush.msra.mxu0 %v3552
      %3713 = vmatpush.msra.mxu0 %v3551
      %3714 = vmatpush.msra.mxu0 %v3550
      %3715 = vmatpush.msra.mxu0 %v3549
      %3716 = vmatpush.msra.mxu0 %v3548
      %3717 = vmatpush.msra.mxu0 %v3547
      %3718 = vmatpush.msra.mxu0 %v3546
      %3719 = vmatpush.msra.mxu0 %v3545
      %3720 = vmatpush.msra.mxu0 %v3544
      %3721 = vmatpush.msra.mxu0 %v3543
      %3722 = vmatpush.msra.mxu0 %v3542
      %3723 = vmatpush.msra.mxu0 %v3541
      %3724 = vmatpush.msra.mxu0 %v3540
      %3725 = vmatpush.msra.mxu0 %v3539
      %3726 = vmatpush.msra.mxu0 %v3538
      %3727 = vmatpush.msra.mxu0 %v3537
      %3728 = vmatmul.f32.gmra.mxu0 %v3689
      %v3729 = vpop.f32.mrf.mxu0
      %v3730 = vadd.f32 %v3695, %v3729
      %3731 = vmatmul.f32.gmra.mxu0 %v3690
      %v3732 = vpop.f32.mrf.mxu0
      %v3733 = vadd.f32 %v3695, %v3732
      %3734 = vmatmul.f32.gmra.mxu0 %v3691
      %v3735 = vpop.f32.mrf.mxu0
      %v3736 = vadd.f32 %v3695, %v3735
      %3737 = vmatmul.f32.gmra.mxu0 %v3692
      %v3738 = vpop.f32.mrf.mxu0
      %v3739 = vadd.f32 %v3695, %v3738
      %3740 = vmatmul.f32.gmra.mxu0 %v3693
      %v3741 = vpop.f32.mrf.mxu0
      %v3742 = vadd.f32 %v3695, %v3741
      %3743 = vdwg.mxu0
      %3744 = vmatpush.msra.mxu0 0.0
      %3745 = vmatpush.msra.mxu0 0.0
      %3746 = vmatpush.msra.mxu0 0.0
      %3747 = vmatpush.msra.mxu0 0.0
      %3748 = vmatpush.msra.mxu0 0.0
      %3749 = vmatpush.msra.mxu0 0.0
      %3750 = vmatpush.msra.mxu0 0.0
      %3751 = vmatpush.msra.mxu0 0.0
      %3752 = vmatpush.msra.mxu0 0.0
      %3753 = vmatpush.msra.mxu0 0.0
      %3754 = vmatpush.msra.mxu0 0.0
      %3755 = vmatpush.msra.mxu0 0.0
      %3756 = vmatpush.msra.mxu0 %v3556
      %3757 = vmatpush.msra.mxu0 %v3555
      %3758 = vmatpush.msra.mxu0 %v3554
      %3759 = vmatpush.msra.mxu0 %v3553
      %3760 = vmatmul.f32.gmra.mxu0 %v3698
      %v3761 = vpop.f32.mrf.mxu0
      %v3762 = vadd.f32 %v3730, %v3761
      %3763 = vmatmul.f32.gmra.mxu0 %v3701
      %v3764 = vpop.f32.mrf.mxu0
      %v3765 = vadd.f32 %v3733, %v3764
      %3766 = vmatmul.f32.gmra.mxu0 %v3704
      %v3767 = vpop.f32.mrf.mxu0
      %v3768 = vadd.f32 %v3736, %v3767
      %3769 = vmatmul.f32.gmra.mxu0 %v3707
      %v3770 = vpop.f32.mrf.mxu0
      %v3771 = vadd.f32 %v3739, %v3770
      %3772 = vmatmul.f32.gmra.mxu0 %v3710
      %v3773 = vpop.f32.mrf.mxu0
      %v3774 = vadd.f32 %v3742, %v3773
      %3775 = vdwg.mxu0
      %v3776 = vadd.f32 %v3762, %v2507
      %v3777 = vadd.f32 %v3765, %v2510
      %v3778 = vadd.f32 %v3768, %v2513
      %v3779 = vadd.f32 %v3771, %v2516
      %v3780 = vadd.f32 %v3774, %v2519
      %3781 = vst [vmem:[%s408] sm:$0xff] %v3776
      %3782 = vst [vmem:[%s408 + $0x8] sm:$0xff] %v3777
      %3783 = vst [vmem:[%s408 + $0x10] sm:$0xff] %v3778
      %3784 = vst [vmem:[%s408 + $0x18] sm:$0xff] %v3779
      %3785 = vst [vmem:[%s408 + $0x20] sm:$0xff] %v3780
      %p3786 = scmp.lt.s32.totalorder %s32, 1
      %s3787 = scalar_select %p3786, %s32, 1
      %s3788 = smul.addr %s3787, 5
      %s3789 = smul.addr %s3788, 8
      %s3790 = scalar_lea.vmem %s11, %s3789
      %p3791 = scmp.lt.s32.totalorder %s32, 1
      %s3792 = scalar_select %p3791, %s32, 1
      %s3793 = smul.addr %s3792, 5
      %s3794 = smul.addr %s3793, 8
      %s3795 = scalar_lea.vmem %s12, %s3794
      // Predicated region
      $region61: #{_fastspeech2_forward.5} parent=59 // pred_check
        %p3796 = pneg %p265
      $region62: #{_fastspeech2_forward.5} parent=59 // pred_check_branch
        %3798 = sbr.rel (%p3796) target = $region64
      $region63: #{_fastspeech2_forward.5} parent=59 // pred_region
        _
      $region64: #{_fastspeech2_forward.5} parent=59 // pred_fallthru
        _
      // Predicated region
      $region65: #{_fastspeech2_forward.5} parent=59 // pred_check
        %p3799 = pneg %p291
      $region66: #{_fastspeech2_forward.5} parent=59 // pred_check_branch
        %3801 = sbr.rel (%p3799) target = $region68
      $region67: #{_fastspeech2_forward.5} parent=59 // pred_region
        _
      $region68: #{_fastspeech2_forward.5} parent=59 // pred_fallthru
        _
    $region60: #{_fastspeech2_forward.5} parent=5 // pred_fallthru
      _
    %p3802 = scmp.le.s32.totalorder 2, %s27
    // Predicated region
    $region69: #{_fastspeech2_forward.5} parent=5 // pred_check
      %p3803 = pneg %p3802
    $region70: #{_fastspeech2_forward.5} parent=5 // pred_check_branch
      %3805 = sbr.rel (%p3803) target = $region72
    $region71: #{_fastspeech2_forward.5} parent=5 // pred_region
      %s3806 = ssub.s32 %s27, 2
      // Predicated region
      $region73: #{_fastspeech2_forward.5} parent=71 // pred_check
        %p3807 = pneg %p271
      $region74: #{_fastspeech2_forward.5} parent=71 // pred_check_branch
        %3809 = sbr.rel (%p3807) target = $region76
      $region75: #{_fastspeech2_forward.5} parent=71 // pred_region
        %p3810 = scmp.lt.s32.totalorder %s33, 1
        %s3811 = scalar_select %p3810, %s33, 1
        %s3812 = smul.addr %s3811, 5
        %s3813 = smul.addr %s3812, 8
        %s3814 = scalar_lea.vmem %s11, %s3813
      $region76: #{_fastspeech2_forward.5} parent=71 // pred_fallthru
        _
      // Predicated region
      $region77: #{_fastspeech2_forward.5} parent=71 // pred_check
        %p3815 = pneg %p297
      $region78: #{_fastspeech2_forward.5} parent=71 // pred_check_branch
        %3817 = sbr.rel (%p3815) target = $region80
      $region79: #{_fastspeech2_forward.5} parent=71 // pred_region
        %p3818 = scmp.lt.s32.totalorder %s33, 1
        %s3819 = scalar_select %p3818, %s33, 1
        %s3820 = smul.addr %s3819, 5
        %s3821 = smul.addr %s3820, 8
        %s3822 = scalar_lea.vmem %s12, %s3821
      $region80: #{_fastspeech2_forward.5} parent=71 // pred_fallthru
        _
    $region72: #{_fastspeech2_forward.5} parent=5 // pred_fallthru
      _
  $region6: #{_fastspeech2_forward.5} parent=0 // loop_footer
    %s31 = sadd.s32 1, %s27
  $region7: #{_fastspeech2_forward.5} parent=0 // loop_footer_branch
    %26 = sbr.rel target = $region3
  $region8: #{_fastspeech2_forward.5} parent=0 // loop_exit
    _

</llo_original>
